<compile_context>
chip_gen: v7x
topology: tpu7x:2x2x1
jax: 0.10.0
libtpu: 0.0.40
codegen_flags: <defaults>
</compile_context>

<pallas_src>
import functools

import jax
import jax.numpy as jnp
from jax.experimental import pallas as pl
from jax.experimental.pallas import tpu as pltpu


# ---------------------------------------------------------------------------
# Fused per-branch kernel: conv0+BN+ReLU+pool -> 3x same-conv+BN+ReLU -> pool
# ---------------------------------------------------------------------------
def _branch_kernel(cols0_ref, w0_ref, b0_ref,
                   w1_ref, b1_ref, w2_ref, b2_ref, w3_ref, b3_ref,
                   out_ref, pad_a, pad_b,
                   *, n_seq, lp0, pool0, k_same, pool_f, lp_f):
    lpad = lp0 + k_same - 1                 # per-sequence padded segment length ('same' conv)
    m0 = n_seq * lp0                        # folded width after the first pool
    mc = n_seq * lpad - (k_same - 1)        # same-conv output width (garbage at segment pads)
    off = (k_same - 1) // 2                 # symmetric 'same' padding (odd K)

    # ---- layer 0: one big lane-dense MXU matmul over all sequences & pool phases ----
    y0 = jnp.dot(w0_ref[...], cols0_ref[...], preferred_element_type=jnp.float32)
    pooled = y0[:, 0:m0]
    for ph in range(1, pool0):              # MaxPool1d(pool0) == max over the phase slices
        pooled = jnp.maximum(pooled, y0[:, ph * m0:(ph + 1) * m0])
    h = jnp.maximum(pooled + b0_ref[...], 0.0)      # folded BN bias + ReLU (commute with max)

    # ---- build per-sequence zero-padded segments for the 'same' convs ----
    pad_a[...] = jnp.zeros_like(pad_a)
    pad_b[...] = jnp.zeros_like(pad_b)
    for n in range(n_seq):
        pad_a[:, n * lpad + off: n * lpad + off + lp0] = (
            h[:, n * lp0:(n + 1) * lp0].astype(pad_a.dtype))

    def same_conv(pad_ref, w_ref, b_ref):
        cout = w_ref.shape[1]
        acc = jnp.zeros((cout, mc), jnp.float32)
        for k in range(k_same):             # K shifted (Cout,Cin)@(Cin,mc) MXU matmuls
            acc = acc + jnp.dot(w_ref[k], pad_ref[:, k:k + mc],
                                preferred_element_type=jnp.float32)
        # valid outputs live at columns n*lpad + [0, lp0); pad-zone columns are never consumed
        return jnp.maximum(acc + b_ref[...], 0.0)

    h1 = same_conv(pad_a, w1_ref, b1_ref)
    for n in range(n_seq):
        pad_b[:, n * lpad + off: n * lpad + off + lp0] = (
            h1[:, n * lpad: n * lpad + lp0].astype(pad_b.dtype))
    h2 = same_conv(pad_b, w2_ref, b2_ref)
    for n in range(n_seq):
        pad_b[:, n * lpad + off: n * lpad + off + lp0] = (
            h2[:, n * lpad: n * lpad + lp0].astype(pad_b.dtype))
    h3 = same_conv(pad_b, w3_ref, b3_ref)

    # ---- final MaxPool1d(pool_f), floor mode, over the valid columns ----
    for n in range(n_seq):
        for q in range(lp_f):
            c = n * lp_f + q
            win = h3[:, n * lpad + q * pool_f: n * lpad + (q + 1) * pool_f]
            out_ref[:, c:c + 1] = jnp.max(win, axis=-1, keepdims=True)


# ---------------------------------------------------------------------------
# Branch wrapper: layer-0 im2col (phase-ordered), BN folding, pallas_call
# ---------------------------------------------------------------------------
def _cnn_branch(x_seq, params, *, k0, stride0, pool0, k_same, pool_f):
    n_seq, length = x_seq.shape
    lout0 = (length - k0) // stride0 + 1
    lp0 = lout0 // pool0                    # MaxPool floor mode
    lp_f = lp0 // pool_f
    lpad = lp0 + k_same - 1
    cout0 = params[0]["w"].shape[0]
    cout = params[1]["w"].shape[0]
    cin1 = params[1]["w"].shape[1]

    # layer-0 im2col, phase-ordered: column index = phase*(N*lp0) + n*lp0 + p, only the conv
    # output positions that survive the first pool are materialized.
    t = jnp.arange(k0)
    ph = jnp.arange(pool0)
    p = jnp.arange(lp0)
    l = ph[:, None] + pool0 * p[None, :]                       # (pool0, lp0): l = pool0*p + ph
    idx = l[None, :, :] * stride0 + t[:, None, None]           # (k0, pool0, lp0)
    cols0 = x_seq[:, idx]                                      # (N, k0, pool0, lp0)
    cols0 = cols0.transpose(1, 2, 0, 3).reshape(k0, pool0 * n_seq * lp0)
    ncols = cols0.shape[1]
    ncols_pad = ((ncols + 255) // 256) * 256                   # 256-aligned RHS (v6e/v7x MXU)
    cols0 = jnp.pad(cols0, ((0, 0), (0, ncols_pad - ncols))).astype(jnp.bfloat16)

    # fold conv bias + eval-mode BatchNorm; the scale goes straight into the bf16 weights
    eps = 1e-5

    def fold(q):
        scale = q["gamma"] / jnp.sqrt(q["var"] + eps)
        bias = (scale * (q["b"] - q["mean"]) + q["beta"]).astype(jnp.float32)
        return scale, bias

    s0, bias0 = fold(params[0])
    w0 = (params[0]["w"].reshape(cout0, k0) * s0[:, None]).astype(jnp.bfloat16)
    b0 = bias0[:, None]

    ws, bs = [], []
    for i in (1, 2, 3):
        s, bias = fold(params[i])
        w = (params[i]["w"] * s[:, None, None]).transpose(2, 0, 1).astype(jnp.bfloat16)
        ws.append(w)                                            # (K, Cout, Cin), BN-scaled
        bs.append(bias[:, None])

    kernel = functools.partial(
        _branch_kernel, n_seq=n_seq, lp0=lp0, pool0=pool0,
        k_same=k_same, pool_f=pool_f, lp_f=lp_f)

    out = pl.pallas_call(
        kernel,
        out_shape=jax.ShapeDtypeStruct((cout, n_seq * lp_f), jnp.float32),
        grid=(1,),
        in_specs=[
            pl.BlockSpec(cols0.shape, lambda i: (0, 0)),
            pl.BlockSpec(w0.shape, lambda i: (0, 0)),
            pl.BlockSpec(b0.shape, lambda i: (0, 0)),
            pl.BlockSpec(ws[0].shape, lambda i: (0, 0, 0)),
            pl.BlockSpec(bs[0].shape, lambda i: (0, 0)),
            pl.BlockSpec(ws[1].shape, lambda i: (0, 0, 0)),
            pl.BlockSpec(bs[1].shape, lambda i: (0, 0)),
            pl.BlockSpec(ws[2].shape, lambda i: (0, 0, 0)),
            pl.BlockSpec(bs[2].shape, lambda i: (0, 0)),
        ],
        out_specs=pl.BlockSpec((cout, n_seq * lp_f), lambda i: (0, 0)),
        scratch_shapes=[
            pltpu.VMEM((cin1, n_seq * lpad), jnp.bfloat16),
            pltpu.VMEM((cout, n_seq * lpad), jnp.bfloat16),
        ],
        compiler_params=pltpu.CompilerParams(dimension_semantics=("arbitrary",)),
    )(cols0, w0, b0, ws[0], bs[0], ws[1], bs[1], ws[2], bs[2])

    # (cout, N*lp_f) -> (N, cout*lp_f), matching PyTorch's (N, C, L).view(B, C, -1) flattening
    return out.reshape(cout, n_seq, lp_f).transpose(1, 0, 2).reshape(n_seq, cout * lp_f)


# ---------------------------------------------------------------------------
# FeatureExtractor forward
# ---------------------------------------------------------------------------
def feature_extractor(x, params):
    # x: (batch, time_step, channels, freq); torch .view on contiguous == row-major reshape
    B, T, C, F = x.shape
    x_seq = x.reshape(B * C, F * T)

    # TODO(synk): on v7x the two independent branches could additionally be split across the two
    #             TensorCores with pl.core_map; they currently run back-to-back on one core.
    feat_small = _cnn_branch(x_seq, params["small"],
                             k0=49, stride0=6, pool0=16, k_same=7, pool_f=8)
    feat_large = _cnn_branch(x_seq, params["large"],
                             k0=399, stride0=50, pool0=8, k_same=5, pool_f=4)

    feats = jnp.concatenate([feat_small, feat_large], axis=1)   # (B*C, 192 + 64)
    return feats.reshape(B, C, -1)


# ---------------------------------------------------------------------------
# Deterministic parameter init (shapes from the module's __init__)
# ---------------------------------------------------------------------------
def _init_conv_bn(key, cout, cin, k):
    k1, k2, k3, k4, k5 = jax.random.split(key, 5)
    fan_in = cin * k
    return dict(
        w=jax.random.normal(k1, (cout, cin, k), jnp.float32) / jnp.sqrt(fan_in),
        b=0.1 * jax.random.normal(k2, (cout,), jnp.float32),
        gamma=1.0 + 0.1 * jax.random.normal(k3, (cout,), jnp.float32),
        beta=0.1 * jax.random.normal(k4, (cout,), jnp.float32),
        mean=0.1 * jax.random.normal(k5, (cout,), jnp.float32),
        var=jnp.ones((cout,), jnp.float32),
    )


if __name__ == "__main__":
    key = jax.random.PRNGKey(0)
    # batch=2, time_second=30, channels=2, freq=100 -> per-sequence length 3000
    B, T, C, F = 2, 30, 2, 100
    kx, kp = jax.random.split(key)
    x = jax.random.normal(kx, (B, T, C, F), jnp.float32)

    ks = jax.random.split(kp, 8)
    params = {
        "small": [
            _init_conv_bn(ks[0], 32, 1, 49),
            _init_conv_bn(ks[1], 64, 32, 7),
            _init_conv_bn(ks[2], 64, 64, 7),
            _init_conv_bn(ks[3], 64, 64, 7),
        ],
        "large": [
            _init_conv_bn(ks[4], 64, 1, 399),
            _init_conv_bn(ks[5], 64, 64, 5),
            _init_conv_bn(ks[6], 64, 64, 5),
            _init_conv_bn(ks[7], 64, 64, 5),
        ],
    }

    out = jax.jit(feature_extractor)(x, params)
    out = jax.block_until_ready(out)
    # small branch: 3000 -> 492 -> pool16 -> 30 -> pool8 -> 3  => 64*3 = 192 feats
    # large branch: 3000 -> 53  -> pool8  -> 6  -> pool4 -> 1  => 64*1 = 64 feats
    assert out.shape == (B, C, 192 + 64), out.shape
    assert bool(jnp.all(jnp.isfinite(out)))
    print("KERNEL_OK")
</pallas_src>

<mosaic_0001>
module attributes {stable_mosaic.version = 11 : i64} {
  func.func @_branch_kernel(%arg0: i32, %arg1: memref<399x256xbf16, #tpu.memory_space<vmem>>, %arg2: memref<64x399xbf16, #tpu.memory_space<vmem>>, %arg3: memref<64x1xf32, #tpu.memory_space<vmem>>, %arg4: memref<5x64x64xbf16, #tpu.memory_space<vmem>>, %arg5: memref<64x1xf32, #tpu.memory_space<vmem>>, %arg6: memref<5x64x64xbf16, #tpu.memory_space<vmem>>, %arg7: memref<64x1xf32, #tpu.memory_space<vmem>>, %arg8: memref<5x64x64xbf16, #tpu.memory_space<vmem>>, %arg9: memref<64x1xf32, #tpu.memory_space<vmem>>, %arg10: memref<64x4xf32, #tpu.memory_space<vmem>>, %arg11: memref<64x40xbf16, #tpu.memory_space<vmem>>, %arg12: memref<64x40xbf16, #tpu.memory_space<vmem>>) attributes {dimension_semantics = [#tpu.dimension_semantics<arbitrary>], iteration_bounds = array<i64: 1>, scalar_prefetch = 0 : i64, scratch_operands = 2 : i64, tpu.core_type = #tpu.core_type<tc>, window_params = [{pipeline_mode = #tpu.pipeline_mode<synchronous>, transform_indices = @transform_0, window_bounds = array<i64: 399, 256>}, {pipeline_mode = #tpu.pipeline_mode<synchronous>, transform_indices = @transform_1, window_bounds = array<i64: 64, 399>}, {pipeline_mode = #tpu.pipeline_mode<synchronous>, transform_indices = @transform_2, window_bounds = array<i64: 64, 1>}, {pipeline_mode = #tpu.pipeline_mode<synchronous>, transform_indices = @transform_3, window_bounds = array<i64: 5, 64, 64>}, {pipeline_mode = #tpu.pipeline_mode<synchronous>, transform_indices = @transform_4, window_bounds = array<i64: 64, 1>}, {pipeline_mode = #tpu.pipeline_mode<synchronous>, transform_indices = @transform_5, window_bounds = array<i64: 5, 64, 64>}, {pipeline_mode = #tpu.pipeline_mode<synchronous>, transform_indices = @transform_6, window_bounds = array<i64: 64, 1>}, {pipeline_mode = #tpu.pipeline_mode<synchronous>, transform_indices = @transform_7, window_bounds = array<i64: 5, 64, 64>}, {pipeline_mode = #tpu.pipeline_mode<synchronous>, transform_indices = @transform_8, window_bounds = array<i64: 64, 1>}, {pipeline_mode = #tpu.pipeline_mode<synchronous>, transform_indices = @transform_9, window_bounds = array<i64: 64, 4>}]} {
    %c0 = arith.constant 0 : index
    %c0_0 = arith.constant 0 : index
    %0 = vector.load %arg2[%c0, %c0_0] : memref<64x399xbf16, #tpu.memory_space<vmem>>, vector<64x399xbf16>
    %c0_1 = arith.constant 0 : index
    %c0_2 = arith.constant 0 : index
    %1 = vector.load %arg1[%c0_1, %c0_2] : memref<399x256xbf16, #tpu.memory_space<vmem>>, vector<399x256xbf16>
    %cst = arith.constant dense<0.000000e+00> : vector<64x256xf32>
    %2 = tpu.matmul %0, %1, %cst {dimension_numbers = #tpu.dot_dimension_numbers<[1], [0], [0], [1], [0, 0, 1, 1], [], []>} : vector<64x399xbf16>, vector<399x256xbf16>, vector<64x256xf32> -> vector<64x256xf32>
    %3 = vector.extract_strided_slice %2 {offsets = [0, 0], sizes = [64, 24], strides = [1, 1]} : vector<64x256xf32> to vector<64x24xf32>
    %4 = vector.extract_strided_slice %2 {offsets = [0, 24], sizes = [64, 24], strides = [1, 1]} : vector<64x256xf32> to vector<64x24xf32>
    %5 = arith.maximumf %3, %4 : vector<64x24xf32>
    %6 = vector.extract_strided_slice %2 {offsets = [0, 48], sizes = [64, 24], strides = [1, 1]} : vector<64x256xf32> to vector<64x24xf32>
    %7 = arith.maximumf %5, %6 : vector<64x24xf32>
    %8 = vector.extract_strided_slice %2 {offsets = [0, 72], sizes = [64, 24], strides = [1, 1]} : vector<64x256xf32> to vector<64x24xf32>
    %9 = arith.maximumf %7, %8 : vector<64x24xf32>
    %10 = vector.extract_strided_slice %2 {offsets = [0, 96], sizes = [64, 24], strides = [1, 1]} : vector<64x256xf32> to vector<64x24xf32>
    %11 = arith.maximumf %9, %10 : vector<64x24xf32>
    %12 = vector.extract_strided_slice %2 {offsets = [0, 120], sizes = [64, 24], strides = [1, 1]} : vector<64x256xf32> to vector<64x24xf32>
    %13 = arith.maximumf %11, %12 : vector<64x24xf32>
    %14 = vector.extract_strided_slice %2 {offsets = [0, 144], sizes = [64, 24], strides = [1, 1]} : vector<64x256xf32> to vector<64x24xf32>
    %15 = arith.maximumf %13, %14 : vector<64x24xf32>
    %16 = vector.extract_strided_slice %2 {offsets = [0, 168], sizes = [64, 24], strides = [1, 1]} : vector<64x256xf32> to vector<64x24xf32>
    %17 = arith.maximumf %15, %16 : vector<64x24xf32>
    %c0_3 = arith.constant 0 : index
    %c0_4 = arith.constant 0 : index
    %18 = vector.load %arg3[%c0_3, %c0_4] : memref<64x1xf32, #tpu.memory_space<vmem>>, vector<64x1xf32>
    %19 = vector.broadcast %18 : vector<64x1xf32> to vector<64x24xf32>
    %20 = arith.addf %17, %19 : vector<64x24xf32>
    %cst_5 = arith.constant 0.000000e+00 : f32
    %21 = vector.broadcast %cst_5 : f32 to vector<64x24xf32>
    %22 = arith.maximumf %20, %21 : vector<64x24xf32>
    %cst_6 = arith.constant 0.000000e+00 : bf16
    %23 = vector.broadcast %cst_6 : bf16 to vector<64x40xbf16>
    %c0_7 = arith.constant 0 : index
    %c0_8 = arith.constant 0 : index
    %24 = vector.load %arg11[%c0_7, %c0_8] : memref<64x40xbf16, #tpu.memory_space<vmem>>, vector<64x40xbf16>
    tpu.vector_store %arg11[%c0_7, %c0_8], %23 {strides = array<i32>} : memref<64x40xbf16, #tpu.memory_space<vmem>>, vector<64x40xbf16>,
    %cst_9 = arith.constant 0.000000e+00 : bf16
    %25 = vector.broadcast %cst_9 : bf16 to vector<64x40xbf16>
    %c0_10 = arith.constant 0 : index
    %c0_11 = arith.constant 0 : index
    %26 = vector.load %arg12[%c0_10, %c0_11] : memref<64x40xbf16, #tpu.memory_space<vmem>>, vector<64x40xbf16>
    tpu.vector_store %arg12[%c0_10, %c0_11], %25 {strides = array<i32>} : memref<64x40xbf16, #tpu.memory_space<vmem>>, vector<64x40xbf16>,
    %27 = vector.extract_strided_slice %22 {offsets = [0, 0], sizes = [64, 6], strides = [1, 1]} : vector<64x24xf32> to vector<64x6xf32>
    %28 = arith.truncf %27 : vector<64x6xf32> to vector<64x6xbf16>
    %c0_12 = arith.constant 0 : index
    %c2 = arith.constant 2 : index
    %29 = vector.load %arg11[%c0_12, %c2] : memref<64x40xbf16, #tpu.memory_space<vmem>>, vector<64x6xbf16>
    tpu.vector_store %arg11[%c0_12, %c2], %28 {strides = array<i32>} : memref<64x40xbf16, #tpu.memory_space<vmem>>, vector<64x6xbf16>,
    %30 = vector.extract_strided_slice %22 {offsets = [0, 6], sizes = [64, 6], strides = [1, 1]} : vector<64x24xf32> to vector<64x6xf32>
    %31 = arith.truncf %30 : vector<64x6xf32> to vector<64x6xbf16>
    %c0_13 = arith.constant 0 : index
    %c12 = arith.constant 12 : index
    %32 = vector.load %arg11[%c0_13, %c12] : memref<64x40xbf16, #tpu.memory_space<vmem>>, vector<64x6xbf16>
    tpu.vector_store %arg11[%c0_13, %c12], %31 {strides = array<i32>} : memref<64x40xbf16, #tpu.memory_space<vmem>>, vector<64x6xbf16>,
    %33 = vector.extract_strided_slice %22 {offsets = [0, 12], sizes = [64, 6], strides = [1, 1]} : vector<64x24xf32> to vector<64x6xf32>
    %34 = arith.truncf %33 : vector<64x6xf32> to vector<64x6xbf16>
    %c0_14 = arith.constant 0 : index
    %c22 = arith.constant 22 : index
    %35 = vector.load %arg11[%c0_14, %c22] : memref<64x40xbf16, #tpu.memory_space<vmem>>, vector<64x6xbf16>
    tpu.vector_store %arg11[%c0_14, %c22], %34 {strides = array<i32>} : memref<64x40xbf16, #tpu.memory_space<vmem>>, vector<64x6xbf16>,
    %36 = vector.extract_strided_slice %22 {offsets = [0, 18], sizes = [64, 6], strides = [1, 1]} : vector<64x24xf32> to vector<64x6xf32>
    %37 = arith.truncf %36 : vector<64x6xf32> to vector<64x6xbf16>
    %c0_15 = arith.constant 0 : index
    %c32 = arith.constant 32 : index
    %38 = vector.load %arg11[%c0_15, %c32] : memref<64x40xbf16, #tpu.memory_space<vmem>>, vector<64x6xbf16>
    tpu.vector_store %arg11[%c0_15, %c32], %37 {strides = array<i32>} : memref<64x40xbf16, #tpu.memory_space<vmem>>, vector<64x6xbf16>,
    %cst_16 = arith.constant 0.000000e+00 : f32
    %39 = vector.broadcast %cst_16 : f32 to vector<64x36xf32>
    %c0_17 = arith.constant 0 : index
    %c0_18 = arith.constant 0 : index
    %c0_19 = arith.constant 0 : index
    %40 = vector.load %arg4[%c0_17, %c0_18, %c0_19] : memref<5x64x64xbf16, #tpu.memory_space<vmem>>, vector<1x64x64xbf16>
    %41 = vector.shape_cast %40 : vector<1x64x64xbf16> to vector<64x64xbf16>
    %c0_20 = arith.constant 0 : index
    %c0_21 = arith.constant 0 : index
    %42 = vector.load %arg11[%c0_20, %c0_21] : memref<64x40xbf16, #tpu.memory_space<vmem>>, vector<64x36xbf16>
    %cst_22 = arith.constant dense<0.000000e+00> : vector<64x36xf32>
    %43 = tpu.matmul %41, %42, %cst_22 {dimension_numbers = #tpu.dot_dimension_numbers<[1], [0], [0], [1], [0, 0, 1, 1], [], []>} : vector<64x64xbf16>, vector<64x36xbf16>, vector<64x36xf32> -> vector<64x36xf32>
    %44 = arith.addf %39, %43 : vector<64x36xf32>
    %c1 = arith.constant 1 : index
    %c0_23 = arith.constant 0 : index
    %c0_24 = arith.constant 0 : index
    %45 = vector.load %arg4[%c1, %c0_23, %c0_24] : memref<5x64x64xbf16, #tpu.memory_space<vmem>>, vector<1x64x64xbf16>
    %46 = vector.shape_cast %45 : vector<1x64x64xbf16> to vector<64x64xbf16>
    %c0_25 = arith.constant 0 : index
    %c1_26 = arith.constant 1 : index
    %47 = vector.load %arg11[%c0_25, %c1_26] : memref<64x40xbf16, #tpu.memory_space<vmem>>, vector<64x36xbf16>
    %cst_27 = arith.constant dense<0.000000e+00> : vector<64x36xf32>
    %48 = tpu.matmul %46, %47, %cst_27 {dimension_numbers = #tpu.dot_dimension_numbers<[1], [0], [0], [1], [0, 0, 1, 1], [], []>} : vector<64x64xbf16>, vector<64x36xbf16>, vector<64x36xf32> -> vector<64x36xf32>
    %49 = arith.addf %44, %48 : vector<64x36xf32>
    %c2_28 = arith.constant 2 : index
    %c0_29 = arith.constant 0 : index
    %c0_30 = arith.constant 0 : index
    %50 = vector.load %arg4[%c2_28, %c0_29, %c0_30] : memref<5x64x64xbf16, #tpu.memory_space<vmem>>, vector<1x64x64xbf16>
    %51 = vector.shape_cast %50 : vector<1x64x64xbf16> to vector<64x64xbf16>
    %c0_31 = arith.constant 0 : index
    %c2_32 = arith.constant 2 : index
    %52 = vector.load %arg11[%c0_31, %c2_32] : memref<64x40xbf16, #tpu.memory_space<vmem>>, vector<64x36xbf16>
    %cst_33 = arith.constant dense<0.000000e+00> : vector<64x36xf32>
    %53 = tpu.matmul %51, %52, %cst_33 {dimension_numbers = #tpu.dot_dimension_numbers<[1], [0], [0], [1], [0, 0, 1, 1], [], []>} : vector<64x64xbf16>, vector<64x36xbf16>, vector<64x36xf32> -> vector<64x36xf32>
    %54 = arith.addf %49, %53 : vector<64x36xf32>
    %c3 = arith.constant 3 : index
    %c0_34 = arith.constant 0 : index
    %c0_35 = arith.constant 0 : index
    %55 = vector.load %arg4[%c3, %c0_34, %c0_35] : memref<5x64x64xbf16, #tpu.memory_space<vmem>>, vector<1x64x64xbf16>
    %56 = vector.shape_cast %55 : vector<1x64x64xbf16> to vector<64x64xbf16>
    %c0_36 = arith.constant 0 : index
    %c3_37 = arith.constant 3 : index
    %57 = vector.load %arg11[%c0_36, %c3_37] : memref<64x40xbf16, #tpu.memory_space<vmem>>, vector<64x36xbf16>
    %cst_38 = arith.constant dense<0.000000e+00> : vector<64x36xf32>
    %58 = tpu.matmul %56, %57, %cst_38 {dimension_numbers = #tpu.dot_dimension_numbers<[1], [0], [0], [1], [0, 0, 1, 1], [], []>} : vector<64x64xbf16>, vector<64x36xbf16>, vector<64x36xf32> -> vector<64x36xf32>
    %59 = arith.addf %54, %58 : vector<64x36xf32>
    %c4 = arith.constant 4 : index
    %c0_39 = arith.constant 0 : index
    %c0_40 = arith.constant 0 : index
    %60 = vector.load %arg4[%c4, %c0_39, %c0_40] : memref<5x64x64xbf16, #tpu.memory_space<vmem>>, vector<1x64x64xbf16>
    %61 = vector.shape_cast %60 : vector<1x64x64xbf16> to vector<64x64xbf16>
    %c0_41 = arith.constant 0 : index
    %c4_42 = arith.constant 4 : index
    %62 = vector.load %arg11[%c0_41, %c4_42] : memref<64x40xbf16, #tpu.memory_space<vmem>>, vector<64x36xbf16>
    %cst_43 = arith.constant dense<0.000000e+00> : vector<64x36xf32>
    %63 = tpu.matmul %61, %62, %cst_43 {dimension_numbers = #tpu.dot_dimension_numbers<[1], [0], [0], [1], [0, 0, 1, 1], [], []>} : vector<64x64xbf16>, vector<64x36xbf16>, vector<64x36xf32> -> vector<64x36xf32>
    %64 = arith.addf %59, %63 : vector<64x36xf32>
    %c0_44 = arith.constant 0 : index
    %c0_45 = arith.constant 0 : index
    %65 = vector.load %arg5[%c0_44, %c0_45] : memref<64x1xf32, #tpu.memory_space<vmem>>, vector<64x1xf32>
    %66 = vector.broadcast %65 : vector<64x1xf32> to vector<64x36xf32>
    %67 = arith.addf %64, %66 : vector<64x36xf32>
    %cst_46 = arith.constant 0.000000e+00 : f32
    %68 = vector.broadcast %cst_46 : f32 to vector<64x36xf32>
    %69 = arith.maximumf %67, %68 : vector<64x36xf32>
    %70 = vector.extract_strided_slice %69 {offsets = [0, 0], sizes = [64, 6], strides = [1, 1]} : vector<64x36xf32> to vector<64x6xf32>
    %71 = arith.truncf %70 : vector<64x6xf32> to vector<64x6xbf16>
    %c0_47 = arith.constant 0 : index
    %c2_48 = arith.constant 2 : index
    %72 = vector.load %arg12[%c0_47, %c2_48] : memref<64x40xbf16, #tpu.memory_space<vmem>>, vector<64x6xbf16>
    tpu.vector_store %arg12[%c0_47, %c2_48], %71 {strides = array<i32>} : memref<64x40xbf16, #tpu.memory_space<vmem>>, vector<64x6xbf16>,
    %73 = vector.extract_strided_slice %69 {offsets = [0, 10], sizes = [64, 6], strides = [1, 1]} : vector<64x36xf32> to vector<64x6xf32>
    %74 = arith.truncf %73 : vector<64x6xf32> to vector<64x6xbf16>
    %c0_49 = arith.constant 0 : index
    %c12_50 = arith.constant 12 : index
    %75 = vector.load %arg12[%c0_49, %c12_50] : memref<64x40xbf16, #tpu.memory_space<vmem>>, vector<64x6xbf16>
    tpu.vector_store %arg12[%c0_49, %c12_50], %74 {strides = array<i32>} : memref<64x40xbf16, #tpu.memory_space<vmem>>, vector<64x6xbf16>,
    %76 = vector.extract_strided_slice %69 {offsets = [0, 20], sizes = [64, 6], strides = [1, 1]} : vector<64x36xf32> to vector<64x6xf32>
    %77 = arith.truncf %76 : vector<64x6xf32> to vector<64x6xbf16>
    %c0_51 = arith.constant 0 : index
    %c22_52 = arith.constant 22 : index
    %78 = vector.load %arg12[%c0_51, %c22_52] : memref<64x40xbf16, #tpu.memory_space<vmem>>, vector<64x6xbf16>
    tpu.vector_store %arg12[%c0_51, %c22_52], %77 {strides = array<i32>} : memref<64x40xbf16, #tpu.memory_space<vmem>>, vector<64x6xbf16>,
    %79 = vector.extract_strided_slice %69 {offsets = [0, 30], sizes = [64, 6], strides = [1, 1]} : vector<64x36xf32> to vector<64x6xf32>
    %80 = arith.truncf %79 : vector<64x6xf32> to vector<64x6xbf16>
    %c0_53 = arith.constant 0 : index
    %c32_54 = arith.constant 32 : index
    %81 = vector.load %arg12[%c0_53, %c32_54] : memref<64x40xbf16, #tpu.memory_space<vmem>>, vector<64x6xbf16>
    tpu.vector_store %arg12[%c0_53, %c32_54], %80 {strides = array<i32>} : memref<64x40xbf16, #tpu.memory_space<vmem>>, vector<64x6xbf16>,
    %cst_55 = arith.constant 0.000000e+00 : f32
    %82 = vector.broadcast %cst_55 : f32 to vector<64x36xf32>
    %c0_56 = arith.constant 0 : index
    %c0_57 = arith.constant 0 : index
    %c0_58 = arith.constant 0 : index
    %83 = vector.load %arg6[%c0_56, %c0_57, %c0_58] : memref<5x64x64xbf16, #tpu.memory_space<vmem>>, vector<1x64x64xbf16>
    %84 = vector.shape_cast %83 : vector<1x64x64xbf16> to vector<64x64xbf16>
    %c0_59 = arith.constant 0 : index
    %c0_60 = arith.constant 0 : index
    %85 = vector.load %arg12[%c0_59, %c0_60] : memref<64x40xbf16, #tpu.memory_space<vmem>>, vector<64x36xbf16>
    %cst_61 = arith.constant dense<0.000000e+00> : vector<64x36xf32>
    %86 = tpu.matmul %84, %85, %cst_61 {dimension_numbers = #tpu.dot_dimension_numbers<[1], [0], [0], [1], [0, 0, 1, 1], [], []>} : vector<64x64xbf16>, vector<64x36xbf16>, vector<64x36xf32> -> vector<64x36xf32>
    %87 = arith.addf %82, %86 : vector<64x36xf32>
    %c1_62 = arith.constant 1 : index
    %c0_63 = arith.constant 0 : index
    %c0_64 = arith.constant 0 : index
    %88 = vector.load %arg6[%c1_62, %c0_63, %c0_64] : memref<5x64x64xbf16, #tpu.memory_space<vmem>>, vector<1x64x64xbf16>
    %89 = vector.shape_cast %88 : vector<1x64x64xbf16> to vector<64x64xbf16>
    %c0_65 = arith.constant 0 : index
    %c1_66 = arith.constant 1 : index
    %90 = vector.load %arg12[%c0_65, %c1_66] : memref<64x40xbf16, #tpu.memory_space<vmem>>, vector<64x36xbf16>
    %cst_67 = arith.constant dense<0.000000e+00> : vector<64x36xf32>
    %91 = tpu.matmul %89, %90, %cst_67 {dimension_numbers = #tpu.dot_dimension_numbers<[1], [0], [0], [1], [0, 0, 1, 1], [], []>} : vector<64x64xbf16>, vector<64x36xbf16>, vector<64x36xf32> -> vector<64x36xf32>
    %92 = arith.addf %87, %91 : vector<64x36xf32>
    %c2_68 = arith.constant 2 : index
    %c0_69 = arith.constant 0 : index
    %c0_70 = arith.constant 0 : index
    %93 = vector.load %arg6[%c2_68, %c0_69, %c0_70] : memref<5x64x64xbf16, #tpu.memory_space<vmem>>, vector<1x64x64xbf16>
    %94 = vector.shape_cast %93 : vector<1x64x64xbf16> to vector<64x64xbf16>
    %c0_71 = arith.constant 0 : index
    %c2_72 = arith.constant 2 : index
    %95 = vector.load %arg12[%c0_71, %c2_72] : memref<64x40xbf16, #tpu.memory_space<vmem>>, vector<64x36xbf16>
    %cst_73 = arith.constant dense<0.000000e+00> : vector<64x36xf32>
    %96 = tpu.matmul %94, %95, %cst_73 {dimension_numbers = #tpu.dot_dimension_numbers<[1], [0], [0], [1], [0, 0, 1, 1], [], []>} : vector<64x64xbf16>, vector<64x36xbf16>, vector<64x36xf32> -> vector<64x36xf32>
    %97 = arith.addf %92, %96 : vector<64x36xf32>
    %c3_74 = arith.constant 3 : index
    %c0_75 = arith.constant 0 : index
    %c0_76 = arith.constant 0 : index
    %98 = vector.load %arg6[%c3_74, %c0_75, %c0_76] : memref<5x64x64xbf16, #tpu.memory_space<vmem>>, vector<1x64x64xbf16>
    %99 = vector.shape_cast %98 : vector<1x64x64xbf16> to vector<64x64xbf16>
    %c0_77 = arith.constant 0 : index
    %c3_78 = arith.constant 3 : index
    %100 = vector.load %arg12[%c0_77, %c3_78] : memref<64x40xbf16, #tpu.memory_space<vmem>>, vector<64x36xbf16>
    %cst_79 = arith.constant dense<0.000000e+00> : vector<64x36xf32>
    %101 = tpu.matmul %99, %100, %cst_79 {dimension_numbers = #tpu.dot_dimension_numbers<[1], [0], [0], [1], [0, 0, 1, 1], [], []>} : vector<64x64xbf16>, vector<64x36xbf16>, vector<64x36xf32> -> vector<64x36xf32>
    %102 = arith.addf %97, %101 : vector<64x36xf32>
    %c4_80 = arith.constant 4 : index
    %c0_81 = arith.constant 0 : index
    %c0_82 = arith.constant 0 : index
    %103 = vector.load %arg6[%c4_80, %c0_81, %c0_82] : memref<5x64x64xbf16, #tpu.memory_space<vmem>>, vector<1x64x64xbf16>
    %104 = vector.shape_cast %103 : vector<1x64x64xbf16> to vector<64x64xbf16>
    %c0_83 = arith.constant 0 : index
    %c4_84 = arith.constant 4 : index
    %105 = vector.load %arg12[%c0_83, %c4_84] : memref<64x40xbf16, #tpu.memory_space<vmem>>, vector<64x36xbf16>
    %cst_85 = arith.constant dense<0.000000e+00> : vector<64x36xf32>
    %106 = tpu.matmul %104, %105, %cst_85 {dimension_numbers = #tpu.dot_dimension_numbers<[1], [0], [0], [1], [0, 0, 1, 1], [], []>} : vector<64x64xbf16>, vector<64x36xbf16>, vector<64x36xf32> -> vector<64x36xf32>
    %107 = arith.addf %102, %106 : vector<64x36xf32>
    %c0_86 = arith.constant 0 : index
    %c0_87 = arith.constant 0 : index
    %108 = vector.load %arg7[%c0_86, %c0_87] : memref<64x1xf32, #tpu.memory_space<vmem>>, vector<64x1xf32>
    %109 = vector.broadcast %108 : vector<64x1xf32> to vector<64x36xf32>
    %110 = arith.addf %107, %109 : vector<64x36xf32>
    %cst_88 = arith.constant 0.000000e+00 : f32
    %111 = vector.broadcast %cst_88 : f32 to vector<64x36xf32>
    %112 = arith.maximumf %110, %111 : vector<64x36xf32>
    %113 = vector.extract_strided_slice %112 {offsets = [0, 0], sizes = [64, 6], strides = [1, 1]} : vector<64x36xf32> to vector<64x6xf32>
    %114 = arith.truncf %113 : vector<64x6xf32> to vector<64x6xbf16>
    %c0_89 = arith.constant 0 : index
    %c2_90 = arith.constant 2 : index
    %115 = vector.load %arg12[%c0_89, %c2_90] : memref<64x40xbf16, #tpu.memory_space<vmem>>, vector<64x6xbf16>
    tpu.vector_store %arg12[%c0_89, %c2_90], %114 {strides = array<i32>} : memref<64x40xbf16, #tpu.memory_space<vmem>>, vector<64x6xbf16>,
    %116 = vector.extract_strided_slice %112 {offsets = [0, 10], sizes = [64, 6], strides = [1, 1]} : vector<64x36xf32> to vector<64x6xf32>
    %117 = arith.truncf %116 : vector<64x6xf32> to vector<64x6xbf16>
    %c0_91 = arith.constant 0 : index
    %c12_92 = arith.constant 12 : index
    %118 = vector.load %arg12[%c0_91, %c12_92] : memref<64x40xbf16, #tpu.memory_space<vmem>>, vector<64x6xbf16>
    tpu.vector_store %arg12[%c0_91, %c12_92], %117 {strides = array<i32>} : memref<64x40xbf16, #tpu.memory_space<vmem>>, vector<64x6xbf16>,
    %119 = vector.extract_strided_slice %112 {offsets = [0, 20], sizes = [64, 6], strides = [1, 1]} : vector<64x36xf32> to vector<64x6xf32>
    %120 = arith.truncf %119 : vector<64x6xf32> to vector<64x6xbf16>
    %c0_93 = arith.constant 0 : index
    %c22_94 = arith.constant 22 : index
    %121 = vector.load %arg12[%c0_93, %c22_94] : memref<64x40xbf16, #tpu.memory_space<vmem>>, vector<64x6xbf16>
    tpu.vector_store %arg12[%c0_93, %c22_94], %120 {strides = array<i32>} : memref<64x40xbf16, #tpu.memory_space<vmem>>, vector<64x6xbf16>,
    %122 = vector.extract_strided_slice %112 {offsets = [0, 30], sizes = [64, 6], strides = [1, 1]} : vector<64x36xf32> to vector<64x6xf32>
    %123 = arith.truncf %122 : vector<64x6xf32> to vector<64x6xbf16>
    %c0_95 = arith.constant 0 : index
    %c32_96 = arith.constant 32 : index
    %124 = vector.load %arg12[%c0_95, %c32_96] : memref<64x40xbf16, #tpu.memory_space<vmem>>, vector<64x6xbf16>
    tpu.vector_store %arg12[%c0_95, %c32_96], %123 {strides = array<i32>} : memref<64x40xbf16, #tpu.memory_space<vmem>>, vector<64x6xbf16>,
    %cst_97 = arith.constant 0.000000e+00 : f32
    %125 = vector.broadcast %cst_97 : f32 to vector<64x36xf32>
    %c0_98 = arith.constant 0 : index
    %c0_99 = arith.constant 0 : index
    %c0_100 = arith.constant 0 : index
    %126 = vector.load %arg8[%c0_98, %c0_99, %c0_100] : memref<5x64x64xbf16, #tpu.memory_space<vmem>>, vector<1x64x64xbf16>
    %127 = vector.shape_cast %126 : vector<1x64x64xbf16> to vector<64x64xbf16>
    %c0_101 = arith.constant 0 : index
    %c0_102 = arith.constant 0 : index
    %128 = vector.load %arg12[%c0_101, %c0_102] : memref<64x40xbf16, #tpu.memory_space<vmem>>, vector<64x36xbf16>
    %cst_103 = arith.constant dense<0.000000e+00> : vector<64x36xf32>
    %129 = tpu.matmul %127, %128, %cst_103 {dimension_numbers = #tpu.dot_dimension_numbers<[1], [0], [0], [1], [0, 0, 1, 1], [], []>} : vector<64x64xbf16>, vector<64x36xbf16>, vector<64x36xf32> -> vector<64x36xf32>
    %130 = arith.addf %125, %129 : vector<64x36xf32>
    %c1_104 = arith.constant 1 : index
    %c0_105 = arith.constant 0 : index
    %c0_106 = arith.constant 0 : index
    %131 = vector.load %arg8[%c1_104, %c0_105, %c0_106] : memref<5x64x64xbf16, #tpu.memory_space<vmem>>, vector<1x64x64xbf16>
    %132 = vector.shape_cast %131 : vector<1x64x64xbf16> to vector<64x64xbf16>
    %c0_107 = arith.constant 0 : index
    %c1_108 = arith.constant 1 : index
    %133 = vector.load %arg12[%c0_107, %c1_108] : memref<64x40xbf16, #tpu.memory_space<vmem>>, vector<64x36xbf16>
    %cst_109 = arith.constant dense<0.000000e+00> : vector<64x36xf32>
    %134 = tpu.matmul %132, %133, %cst_109 {dimension_numbers = #tpu.dot_dimension_numbers<[1], [0], [0], [1], [0, 0, 1, 1], [], []>} : vector<64x64xbf16>, vector<64x36xbf16>, vector<64x36xf32> -> vector<64x36xf32>
    %135 = arith.addf %130, %134 : vector<64x36xf32>
    %c2_110 = arith.constant 2 : index
    %c0_111 = arith.constant 0 : index
    %c0_112 = arith.constant 0 : index
    %136 = vector.load %arg8[%c2_110, %c0_111, %c0_112] : memref<5x64x64xbf16, #tpu.memory_space<vmem>>, vector<1x64x64xbf16>
    %137 = vector.shape_cast %136 : vector<1x64x64xbf16> to vector<64x64xbf16>
    %c0_113 = arith.constant 0 : index
    %c2_114 = arith.constant 2 : index
    %138 = vector.load %arg12[%c0_113, %c2_114] : memref<64x40xbf16, #tpu.memory_space<vmem>>, vector<64x36xbf16>
    %cst_115 = arith.constant dense<0.000000e+00> : vector<64x36xf32>
    %139 = tpu.matmul %137, %138, %cst_115 {dimension_numbers = #tpu.dot_dimension_numbers<[1], [0], [0], [1], [0, 0, 1, 1], [], []>} : vector<64x64xbf16>, vector<64x36xbf16>, vector<64x36xf32> -> vector<64x36xf32>
    %140 = arith.addf %135, %139 : vector<64x36xf32>
    %c3_116 = arith.constant 3 : index
    %c0_117 = arith.constant 0 : index
    %c0_118 = arith.constant 0 : index
    %141 = vector.load %arg8[%c3_116, %c0_117, %c0_118] : memref<5x64x64xbf16, #tpu.memory_space<vmem>>, vector<1x64x64xbf16>
    %142 = vector.shape_cast %141 : vector<1x64x64xbf16> to vector<64x64xbf16>
    %c0_119 = arith.constant 0 : index
    %c3_120 = arith.constant 3 : index
    %143 = vector.load %arg12[%c0_119, %c3_120] : memref<64x40xbf16, #tpu.memory_space<vmem>>, vector<64x36xbf16>
    %cst_121 = arith.constant dense<0.000000e+00> : vector<64x36xf32>
    %144 = tpu.matmul %142, %143, %cst_121 {dimension_numbers = #tpu.dot_dimension_numbers<[1], [0], [0], [1], [0, 0, 1, 1], [], []>} : vector<64x64xbf16>, vector<64x36xbf16>, vector<64x36xf32> -> vector<64x36xf32>
    %145 = arith.addf %140, %144 : vector<64x36xf32>
    %c4_122 = arith.constant 4 : index
    %c0_123 = arith.constant 0 : index
    %c0_124 = arith.constant 0 : index
    %146 = vector.load %arg8[%c4_122, %c0_123, %c0_124] : memref<5x64x64xbf16, #tpu.memory_space<vmem>>, vector<1x64x64xbf16>
    %147 = vector.shape_cast %146 : vector<1x64x64xbf16> to vector<64x64xbf16>
    %c0_125 = arith.constant 0 : index
    %c4_126 = arith.constant 4 : index
    %148 = vector.load %arg12[%c0_125, %c4_126] : memref<64x40xbf16, #tpu.memory_space<vmem>>, vector<64x36xbf16>
    %cst_127 = arith.constant dense<0.000000e+00> : vector<64x36xf32>
    %149 = tpu.matmul %147, %148, %cst_127 {dimension_numbers = #tpu.dot_dimension_numbers<[1], [0], [0], [1], [0, 0, 1, 1], [], []>} : vector<64x64xbf16>, vector<64x36xbf16>, vector<64x36xf32> -> vector<64x36xf32>
    %150 = arith.addf %145, %149 : vector<64x36xf32>
    %c0_128 = arith.constant 0 : index
    %c0_129 = arith.constant 0 : index
    %151 = vector.load %arg9[%c0_128, %c0_129] : memref<64x1xf32, #tpu.memory_space<vmem>>, vector<64x1xf32>
    %152 = vector.broadcast %151 : vector<64x1xf32> to vector<64x36xf32>
    %153 = arith.addf %150, %152 : vector<64x36xf32>
    %cst_130 = arith.constant 0.000000e+00 : f32
    %154 = vector.broadcast %cst_130 : f32 to vector<64x36xf32>
    %155 = arith.maximumf %153, %154 : vector<64x36xf32>
    %156 = vector.extract_strided_slice %155 {offsets = [0, 0], sizes = [64, 4], strides = [1, 1]} : vector<64x36xf32> to vector<64x4xf32>
    %cst_131 = arith.constant dense<0xFF800000> : vector<64xf32>
    %157 = vector.multi_reduction <maximumf>, %156, %cst_131 [1] : vector<64x4xf32> to vector<64xf32>
    %158 = vector.shape_cast %157 : vector<64xf32> to vector<64x1xf32>
    %c0_132 = arith.constant 0 : index
    %c0_133 = arith.constant 0 : index
    %159 = vector.load %arg10[%c0_132, %c0_133] : memref<64x4xf32, #tpu.memory_space<vmem>>, vector<64x1xf32>
    tpu.vector_store %arg10[%c0_132, %c0_133], %158 {strides = array<i32>} : memref<64x4xf32, #tpu.memory_space<vmem>>, vector<64x1xf32>,
    %160 = vector.extract_strided_slice %155 {offsets = [0, 10], sizes = [64, 4], strides = [1, 1]} : vector<64x36xf32> to vector<64x4xf32>
    %cst_134 = arith.constant dense<0xFF800000> : vector<64xf32>
    %161 = vector.multi_reduction <maximumf>, %160, %cst_134 [1] : vector<64x4xf32> to vector<64xf32>
    %162 = vector.shape_cast %161 : vector<64xf32> to vector<64x1xf32>
    %c0_135 = arith.constant 0 : index
    %c1_136 = arith.constant 1 : index
    %163 = vector.load %arg10[%c0_135, %c1_136] : memref<64x4xf32, #tpu.memory_space<vmem>>, vector<64x1xf32>
    tpu.vector_store %arg10[%c0_135, %c1_136], %162 {strides = array<i32>} : memref<64x4xf32, #tpu.memory_space<vmem>>, vector<64x1xf32>,
    %164 = vector.extract_strided_slice %155 {offsets = [0, 20], sizes = [64, 4], strides = [1, 1]} : vector<64x36xf32> to vector<64x4xf32>
    %cst_137 = arith.constant dense<0xFF800000> : vector<64xf32>
    %165 = vector.multi_reduction <maximumf>, %164, %cst_137 [1] : vector<64x4xf32> to vector<64xf32>
    %166 = vector.shape_cast %165 : vector<64xf32> to vector<64x1xf32>
    %c0_138 = arith.constant 0 : index
    %c2_139 = arith.constant 2 : index
    %167 = vector.load %arg10[%c0_138, %c2_139] : memref<64x4xf32, #tpu.memory_space<vmem>>, vector<64x1xf32>
    tpu.vector_store %arg10[%c0_138, %c2_139], %166 {strides = array<i32>} : memref<64x4xf32, #tpu.memory_space<vmem>>, vector<64x1xf32>,
    %168 = vector.extract_strided_slice %155 {offsets = [0, 30], sizes = [64, 4], strides = [1, 1]} : vector<64x36xf32> to vector<64x4xf32>
    %cst_140 = arith.constant dense<0xFF800000> : vector<64xf32>
    %169 = vector.multi_reduction <maximumf>, %168, %cst_140 [1] : vector<64x4xf32> to vector<64xf32>
    %170 = vector.shape_cast %169 : vector<64xf32> to vector<64x1xf32>
    %c0_141 = arith.constant 0 : index
    %c3_142 = arith.constant 3 : index
    %171 = vector.load %arg10[%c0_141, %c3_142] : memref<64x4xf32, #tpu.memory_space<vmem>>, vector<64x1xf32>
    tpu.vector_store %arg10[%c0_141, %c3_142], %170 {strides = array<i32>} : memref<64x4xf32, #tpu.memory_space<vmem>>, vector<64x1xf32>,
    return
  }
  func.func @transform_0(%arg0: i32) -> (i32, i32) {
    %c0_i32 = arith.constant 0 : i32
    %c0_i32_0 = arith.constant 0 : i32
    %c0_i32_1 = arith.constant 0 : i32
    return %c0_i32, %c0_i32_0 : i32, i32
  }
  func.func @transform_1(%arg0: i32) -> (i32, i32) {
    %c0_i32 = arith.constant 0 : i32
    %c0_i32_0 = arith.constant 0 : i32
    %c0_i32_1 = arith.constant 0 : i32
    return %c0_i32, %c0_i32_0 : i32, i32
  }
  func.func @transform_2(%arg0: i32) -> (i32, i32) {
    %c0_i32 = arith.constant 0 : i32
    %c0_i32_0 = arith.constant 0 : i32
    %c0_i32_1 = arith.constant 0 : i32
    return %c0_i32, %c0_i32_0 : i32, i32
  }
  func.func @transform_3(%arg0: i32) -> (i32, i32, i32) {
    %c0_i32 = arith.constant 0 : i32
    %c0_i32_0 = arith.constant 0 : i32
    %c0_i32_1 = arith.constant 0 : i32
    %c0_i32_2 = arith.constant 0 : i32
    return %c0_i32, %c0_i32_0, %c0_i32_1 : i32, i32, i32
  }
  func.func @transform_4(%arg0: i32) -> (i32, i32) {
    %c0_i32 = arith.constant 0 : i32
    %c0_i32_0 = arith.constant 0 : i32
    %c0_i32_1 = arith.constant 0 : i32
    return %c0_i32, %c0_i32_0 : i32, i32
  }
  func.func @transform_5(%arg0: i32) -> (i32, i32, i32) {
    %c0_i32 = arith.constant 0 : i32
    %c0_i32_0 = arith.constant 0 : i32
    %c0_i32_1 = arith.constant 0 : i32
    %c0_i32_2 = arith.constant 0 : i32
    return %c0_i32, %c0_i32_0, %c0_i32_1 : i32, i32, i32
  }
  func.func @transform_6(%arg0: i32) -> (i32, i32) {
    %c0_i32 = arith.constant 0 : i32
    %c0_i32_0 = arith.constant 0 : i32
    %c0_i32_1 = arith.constant 0 : i32
    return %c0_i32, %c0_i32_0 : i32, i32
  }
  func.func @transform_7(%arg0: i32) -> (i32, i32, i32) {
    %c0_i32 = arith.constant 0 : i32
    %c0_i32_0 = arith.constant 0 : i32
    %c0_i32_1 = arith.constant 0 : i32
    %c0_i32_2 = arith.constant 0 : i32
    return %c0_i32, %c0_i32_0, %c0_i32_1 : i32, i32, i32
  }
  func.func @transform_8(%arg0: i32) -> (i32, i32) {
    %c0_i32 = arith.constant 0 : i32
    %c0_i32_0 = arith.constant 0 : i32
    %c0_i32_1 = arith.constant 0 : i32
    return %c0_i32, %c0_i32_0 : i32, i32
  }
  func.func @transform_9(%arg0: i32) -> (i32, i32) {
    %c0_i32 = arith.constant 0 : i32
    %c0_i32_0 = arith.constant 0 : i32
    %c0_i32_1 = arith.constant 0 : i32
    return %c0_i32, %c0_i32_0 : i32, i32
  }
}

module attributes {stable_mosaic.version = 11 : i64} {
  func.func @_branch_kernel(%arg0: i32, %arg1: memref<49x2048xbf16, #tpu.memory_space<vmem>>, %arg2: memref<32x49xbf16, #tpu.memory_space<vmem>>, %arg3: memref<32x1xf32, #tpu.memory_space<vmem>>, %arg4: memref<7x64x32xbf16, #tpu.memory_space<vmem>>, %arg5: memref<64x1xf32, #tpu.memory_space<vmem>>, %arg6: memref<7x64x64xbf16, #tpu.memory_space<vmem>>, %arg7: memref<64x1xf32, #tpu.memory_space<vmem>>, %arg8: memref<7x64x64xbf16, #tpu.memory_space<vmem>>, %arg9: memref<64x1xf32, #tpu.memory_space<vmem>>, %arg10: memref<64x12xf32, #tpu.memory_space<vmem>>, %arg11: memref<32x144xbf16, #tpu.memory_space<vmem>>, %arg12: memref<64x144xbf16, #tpu.memory_space<vmem>>) attributes {dimension_semantics = [#tpu.dimension_semantics<arbitrary>], iteration_bounds = array<i64: 1>, scalar_prefetch = 0 : i64, scratch_operands = 2 : i64, tpu.core_type = #tpu.core_type<tc>, window_params = [{pipeline_mode = #tpu.pipeline_mode<synchronous>, transform_indices = @transform_0, window_bounds = array<i64: 49, 2048>}, {pipeline_mode = #tpu.pipeline_mode<synchronous>, transform_indices = @transform_1, window_bounds = array<i64: 32, 49>}, {pipeline_mode = #tpu.pipeline_mode<synchronous>, transform_indices = @transform_2, window_bounds = array<i64: 32, 1>}, {pipeline_mode = #tpu.pipeline_mode<synchronous>, transform_indices = @transform_3, window_bounds = array<i64: 7, 64, 32>}, {pipeline_mode = #tpu.pipeline_mode<synchronous>, transform_indices = @transform_4, window_bounds = array<i64: 64, 1>}, {pipeline_mode = #tpu.pipeline_mode<synchronous>, transform_indices = @transform_5, window_bounds = array<i64: 7, 64, 64>}, {pipeline_mode = #tpu.pipeline_mode<synchronous>, transform_indices = @transform_6, window_bounds = array<i64: 64, 1>}, {pipeline_mode = #tpu.pipeline_mode<synchronous>, transform_indices = @transform_7, window_bounds = array<i64: 7, 64, 64>}, {pipeline_mode = #tpu.pipeline_mode<synchronous>, transform_indices = @transform_8, window_bounds = array<i64: 64, 1>}, {pipeline_mode = #tpu.pipeline_mode<synchronous>, transform_indices = @transform_9, window_bounds = array<i64: 64, 12>}]} {
    %c0 = arith.constant 0 : index
    %c0_0 = arith.constant 0 : index
    %0 = vector.load %arg2[%c0, %c0_0] : memref<32x49xbf16, #tpu.memory_space<vmem>>, vector<32x49xbf16>
    %c0_1 = arith.constant 0 : index
    %c0_2 = arith.constant 0 : index
    %1 = vector.load %arg1[%c0_1, %c0_2] : memref<49x2048xbf16, #tpu.memory_space<vmem>>, vector<49x2048xbf16>
    %cst = arith.constant dense<0.000000e+00> : vector<32x2048xf32>
    %2 = tpu.matmul %0, %1, %cst {dimension_numbers = #tpu.dot_dimension_numbers<[1], [0], [0], [1], [0, 0, 1, 1], [], []>} : vector<32x49xbf16>, vector<49x2048xbf16>, vector<32x2048xf32> -> vector<32x2048xf32>
    %3 = vector.extract_strided_slice %2 {offsets = [0, 0], sizes = [32, 120], strides = [1, 1]} : vector<32x2048xf32> to vector<32x120xf32>
    %4 = vector.extract_strided_slice %2 {offsets = [0, 120], sizes = [32, 120], strides = [1, 1]} : vector<32x2048xf32> to vector<32x120xf32>
    %5 = arith.maximumf %3, %4 : vector<32x120xf32>
    %6 = vector.extract_strided_slice %2 {offsets = [0, 240], sizes = [32, 120], strides = [1, 1]} : vector<32x2048xf32> to vector<32x120xf32>
    %7 = arith.maximumf %5, %6 : vector<32x120xf32>
    %8 = vector.extract_strided_slice %2 {offsets = [0, 360], sizes = [32, 120], strides = [1, 1]} : vector<32x2048xf32> to vector<32x120xf32>
    %9 = arith.maximumf %7, %8 : vector<32x120xf32>
    %10 = vector.extract_strided_slice %2 {offsets = [0, 480], sizes = [32, 120], strides = [1, 1]} : vector<32x2048xf32> to vector<32x120xf32>
    %11 = arith.maximumf %9, %10 : vector<32x120xf32>
    %12 = vector.extract_strided_slice %2 {offsets = [0, 600], sizes = [32, 120], strides = [1, 1]} : vector<32x2048xf32> to vector<32x120xf32>
    %13 = arith.maximumf %11, %12 : vector<32x120xf32>
    %14 = vector.extract_strided_slice %2 {offsets = [0, 720], sizes = [32, 120], strides = [1, 1]} : vector<32x2048xf32> to vector<32x120xf32>
    %15 = arith.maximumf %13, %14 : vector<32x120xf32>
    %16 = vector.extract_strided_slice %2 {offsets = [0, 840], sizes = [32, 120], strides = [1, 1]} : vector<32x2048xf32> to vector<32x120xf32>
    %17 = arith.maximumf %15, %16 : vector<32x120xf32>
    %18 = vector.extract_strided_slice %2 {offsets = [0, 960], sizes = [32, 120], strides = [1, 1]} : vector<32x2048xf32> to vector<32x120xf32>
    %19 = arith.maximumf %17, %18 : vector<32x120xf32>
    %20 = vector.extract_strided_slice %2 {offsets = [0, 1080], sizes = [32, 120], strides = [1, 1]} : vector<32x2048xf32> to vector<32x120xf32>
    %21 = arith.maximumf %19, %20 : vector<32x120xf32>
    %22 = vector.extract_strided_slice %2 {offsets = [0, 1200], sizes = [32, 120], strides = [1, 1]} : vector<32x2048xf32> to vector<32x120xf32>
    %23 = arith.maximumf %21, %22 : vector<32x120xf32>
    %24 = vector.extract_strided_slice %2 {offsets = [0, 1320], sizes = [32, 120], strides = [1, 1]} : vector<32x2048xf32> to vector<32x120xf32>
    %25 = arith.maximumf %23, %24 : vector<32x120xf32>
    %26 = vector.extract_strided_slice %2 {offsets = [0, 1440], sizes = [32, 120], strides = [1, 1]} : vector<32x2048xf32> to vector<32x120xf32>
    %27 = arith.maximumf %25, %26 : vector<32x120xf32>
    %28 = vector.extract_strided_slice %2 {offsets = [0, 1560], sizes = [32, 120], strides = [1, 1]} : vector<32x2048xf32> to vector<32x120xf32>
    %29 = arith.maximumf %27, %28 : vector<32x120xf32>
    %30 = vector.extract_strided_slice %2 {offsets = [0, 1680], sizes = [32, 120], strides = [1, 1]} : vector<32x2048xf32> to vector<32x120xf32>
    %31 = arith.maximumf %29, %30 : vector<32x120xf32>
    %32 = vector.extract_strided_slice %2 {offsets = [0, 1800], sizes = [32, 120], strides = [1, 1]} : vector<32x2048xf32> to vector<32x120xf32>
    %33 = arith.maximumf %31, %32 : vector<32x120xf32>
    %c0_3 = arith.constant 0 : index
    %c0_4 = arith.constant 0 : index
    %34 = vector.load %arg3[%c0_3, %c0_4] : memref<32x1xf32, #tpu.memory_space<vmem>>, vector<32x1xf32>
    %35 = vector.broadcast %34 : vector<32x1xf32> to vector<32x120xf32>
    %36 = arith.addf %33, %35 : vector<32x120xf32>
    %cst_5 = arith.constant 0.000000e+00 : f32
    %37 = vector.broadcast %cst_5 : f32 to vector<32x120xf32>
    %38 = arith.maximumf %36, %37 : vector<32x120xf32>
    %cst_6 = arith.constant 0.000000e+00 : bf16
    %39 = vector.broadcast %cst_6 : bf16 to vector<32x144xbf16>
    %c0_7 = arith.constant 0 : index
    %c0_8 = arith.constant 0 : index
    %40 = vector.load %arg11[%c0_7, %c0_8] : memref<32x144xbf16, #tpu.memory_space<vmem>>, vector<32x144xbf16>
    tpu.vector_store %arg11[%c0_7, %c0_8], %39 {strides = array<i32>} : memref<32x144xbf16, #tpu.memory_space<vmem>>, vector<32x144xbf16>,
    %cst_9 = arith.constant 0.000000e+00 : bf16
    %41 = vector.broadcast %cst_9 : bf16 to vector<64x144xbf16>
    %c0_10 = arith.constant 0 : index
    %c0_11 = arith.constant 0 : index
    %42 = vector.load %arg12[%c0_10, %c0_11] : memref<64x144xbf16, #tpu.memory_space<vmem>>, vector<64x144xbf16>
    tpu.vector_store %arg12[%c0_10, %c0_11], %41 {strides = array<i32>} : memref<64x144xbf16, #tpu.memory_space<vmem>>, vector<64x144xbf16>,
    %43 = vector.extract_strided_slice %38 {offsets = [0, 0], sizes = [32, 30], strides = [1, 1]} : vector<32x120xf32> to vector<32x30xf32>
    %44 = arith.truncf %43 : vector<32x30xf32> to vector<32x30xbf16>
    %c0_12 = arith.constant 0 : index
    %c3 = arith.constant 3 : index
    %45 = vector.load %arg11[%c0_12, %c3] : memref<32x144xbf16, #tpu.memory_space<vmem>>, vector<32x30xbf16>
    tpu.vector_store %arg11[%c0_12, %c3], %44 {strides = array<i32>} : memref<32x144xbf16, #tpu.memory_space<vmem>>, vector<32x30xbf16>,
    %46 = vector.extract_strided_slice %38 {offsets = [0, 30], sizes = [32, 30], strides = [1, 1]} : vector<32x120xf32> to vector<32x30xf32>
    %47 = arith.truncf %46 : vector<32x30xf32> to vector<32x30xbf16>
    %c0_13 = arith.constant 0 : index
    %c39 = arith.constant 39 : index
    %48 = vector.load %arg11[%c0_13, %c39] : memref<32x144xbf16, #tpu.memory_space<vmem>>, vector<32x30xbf16>
    tpu.vector_store %arg11[%c0_13, %c39], %47 {strides = array<i32>} : memref<32x144xbf16, #tpu.memory_space<vmem>>, vector<32x30xbf16>,
    %49 = vector.extract_strided_slice %38 {offsets = [0, 60], sizes = [32, 30], strides = [1, 1]} : vector<32x120xf32> to vector<32x30xf32>
    %50 = arith.truncf %49 : vector<32x30xf32> to vector<32x30xbf16>
    %c0_14 = arith.constant 0 : index
    %c75 = arith.constant 75 : index
    %51 = vector.load %arg11[%c0_14, %c75] : memref<32x144xbf16, #tpu.memory_space<vmem>>, vector<32x30xbf16>
    tpu.vector_store %arg11[%c0_14, %c75], %50 {strides = array<i32>} : memref<32x144xbf16, #tpu.memory_space<vmem>>, vector<32x30xbf16>,
    %52 = vector.extract_strided_slice %38 {offsets = [0, 90], sizes = [32, 30], strides = [1, 1]} : vector<32x120xf32> to vector<32x30xf32>
    %53 = arith.truncf %52 : vector<32x30xf32> to vector<32x30xbf16>
    %c0_15 = arith.constant 0 : index
    %c111 = arith.constant 111 : index
    %54 = vector.load %arg11[%c0_15, %c111] : memref<32x144xbf16, #tpu.memory_space<vmem>>, vector<32x30xbf16>
    tpu.vector_store %arg11[%c0_15, %c111], %53 {strides = array<i32>} : memref<32x144xbf16, #tpu.memory_space<vmem>>, vector<32x30xbf16>,
    %cst_16 = arith.constant 0.000000e+00 : f32
    %55 = vector.broadcast %cst_16 : f32 to vector<64x138xf32>
    %c0_17 = arith.constant 0 : index
    %c0_18 = arith.constant 0 : index
    %c0_19 = arith.constant 0 : index
    %56 = vector.load %arg4[%c0_17, %c0_18, %c0_19] : memref<7x64x32xbf16, #tpu.memory_space<vmem>>, vector<1x64x32xbf16>
    %57 = vector.shape_cast %56 : vector<1x64x32xbf16> to vector<64x32xbf16>
    %c0_20 = arith.constant 0 : index
    %c0_21 = arith.constant 0 : index
    %58 = vector.load %arg11[%c0_20, %c0_21] : memref<32x144xbf16, #tpu.memory_space<vmem>>, vector<32x138xbf16>
    %cst_22 = arith.constant dense<0.000000e+00> : vector<64x138xf32>
    %59 = tpu.matmul %57, %58, %cst_22 {dimension_numbers = #tpu.dot_dimension_numbers<[1], [0], [0], [1], [0, 0, 1, 1], [], []>} : vector<64x32xbf16>, vector<32x138xbf16>, vector<64x138xf32> -> vector<64x138xf32>
    %60 = arith.addf %55, %59 : vector<64x138xf32>
    %c1 = arith.constant 1 : index
    %c0_23 = arith.constant 0 : index
    %c0_24 = arith.constant 0 : index
    %61 = vector.load %arg4[%c1, %c0_23, %c0_24] : memref<7x64x32xbf16, #tpu.memory_space<vmem>>, vector<1x64x32xbf16>
    %62 = vector.shape_cast %61 : vector<1x64x32xbf16> to vector<64x32xbf16>
    %c0_25 = arith.constant 0 : index
    %c1_26 = arith.constant 1 : index
    %63 = vector.load %arg11[%c0_25, %c1_26] : memref<32x144xbf16, #tpu.memory_space<vmem>>, vector<32x138xbf16>
    %cst_27 = arith.constant dense<0.000000e+00> : vector<64x138xf32>
    %64 = tpu.matmul %62, %63, %cst_27 {dimension_numbers = #tpu.dot_dimension_numbers<[1], [0], [0], [1], [0, 0, 1, 1], [], []>} : vector<64x32xbf16>, vector<32x138xbf16>, vector<64x138xf32> -> vector<64x138xf32>
    %65 = arith.addf %60, %64 : vector<64x138xf32>
    %c2 = arith.constant 2 : index
    %c0_28 = arith.constant 0 : index
    %c0_29 = arith.constant 0 : index
    %66 = vector.load %arg4[%c2, %c0_28, %c0_29] : memref<7x64x32xbf16, #tpu.memory_space<vmem>>, vector<1x64x32xbf16>
    %67 = vector.shape_cast %66 : vector<1x64x32xbf16> to vector<64x32xbf16>
    %c0_30 = arith.constant 0 : index
    %c2_31 = arith.constant 2 : index
    %68 = vector.load %arg11[%c0_30, %c2_31] : memref<32x144xbf16, #tpu.memory_space<vmem>>, vector<32x138xbf16>
    %cst_32 = arith.constant dense<0.000000e+00> : vector<64x138xf32>
    %69 = tpu.matmul %67, %68, %cst_32 {dimension_numbers = #tpu.dot_dimension_numbers<[1], [0], [0], [1], [0, 0, 1, 1], [], []>} : vector<64x32xbf16>, vector<32x138xbf16>, vector<64x138xf32> -> vector<64x138xf32>
    %70 = arith.addf %65, %69 : vector<64x138xf32>
    %c3_33 = arith.constant 3 : index
    %c0_34 = arith.constant 0 : index
    %c0_35 = arith.constant 0 : index
    %71 = vector.load %arg4[%c3_33, %c0_34, %c0_35] : memref<7x64x32xbf16, #tpu.memory_space<vmem>>, vector<1x64x32xbf16>
    %72 = vector.shape_cast %71 : vector<1x64x32xbf16> to vector<64x32xbf16>
    %c0_36 = arith.constant 0 : index
    %c3_37 = arith.constant 3 : index
    %73 = vector.load %arg11[%c0_36, %c3_37] : memref<32x144xbf16, #tpu.memory_space<vmem>>, vector<32x138xbf16>
    %cst_38 = arith.constant dense<0.000000e+00> : vector<64x138xf32>
    %74 = tpu.matmul %72, %73, %cst_38 {dimension_numbers = #tpu.dot_dimension_numbers<[1], [0], [0], [1], [0, 0, 1, 1], [], []>} : vector<64x32xbf16>, vector<32x138xbf16>, vector<64x138xf32> -> vector<64x138xf32>
    %75 = arith.addf %70, %74 : vector<64x138xf32>
    %c4 = arith.constant 4 : index
    %c0_39 = arith.constant 0 : index
    %c0_40 = arith.constant 0 : index
    %76 = vector.load %arg4[%c4, %c0_39, %c0_40] : memref<7x64x32xbf16, #tpu.memory_space<vmem>>, vector<1x64x32xbf16>
    %77 = vector.shape_cast %76 : vector<1x64x32xbf16> to vector<64x32xbf16>
    %c0_41 = arith.constant 0 : index
    %c4_42 = arith.constant 4 : index
    %78 = vector.load %arg11[%c0_41, %c4_42] : memref<32x144xbf16, #tpu.memory_space<vmem>>, vector<32x138xbf16>
    %cst_43 = arith.constant dense<0.000000e+00> : vector<64x138xf32>
    %79 = tpu.matmul %77, %78, %cst_43 {dimension_numbers = #tpu.dot_dimension_numbers<[1], [0], [0], [1], [0, 0, 1, 1], [], []>} : vector<64x32xbf16>, vector<32x138xbf16>, vector<64x138xf32> -> vector<64x138xf32>
    %80 = arith.addf %75, %79 : vector<64x138xf32>
    %c5 = arith.constant 5 : index
    %c0_44 = arith.constant 0 : index
    %c0_45 = arith.constant 0 : index
    %81 = vector.load %arg4[%c5, %c0_44, %c0_45] : memref<7x64x32xbf16, #tpu.memory_space<vmem>>, vector<1x64x32xbf16>
    %82 = vector.shape_cast %81 : vector<1x64x32xbf16> to vector<64x32xbf16>
    %c0_46 = arith.constant 0 : index
    %c5_47 = arith.constant 5 : index
    %83 = vector.load %arg11[%c0_46, %c5_47] : memref<32x144xbf16, #tpu.memory_space<vmem>>, vector<32x138xbf16>
    %cst_48 = arith.constant dense<0.000000e+00> : vector<64x138xf32>
    %84 = tpu.matmul %82, %83, %cst_48 {dimension_numbers = #tpu.dot_dimension_numbers<[1], [0], [0], [1], [0, 0, 1, 1], [], []>} : vector<64x32xbf16>, vector<32x138xbf16>, vector<64x138xf32> -> vector<64x138xf32>
    %85 = arith.addf %80, %84 : vector<64x138xf32>
    %c6 = arith.constant 6 : index
    %c0_49 = arith.constant 0 : index
    %c0_50 = arith.constant 0 : index
    %86 = vector.load %arg4[%c6, %c0_49, %c0_50] : memref<7x64x32xbf16, #tpu.memory_space<vmem>>, vector<1x64x32xbf16>
    %87 = vector.shape_cast %86 : vector<1x64x32xbf16> to vector<64x32xbf16>
    %c0_51 = arith.constant 0 : index
    %c6_52 = arith.constant 6 : index
    %88 = vector.load %arg11[%c0_51, %c6_52] : memref<32x144xbf16, #tpu.memory_space<vmem>>, vector<32x138xbf16>
    %cst_53 = arith.constant dense<0.000000e+00> : vector<64x138xf32>
    %89 = tpu.matmul %87, %88, %cst_53 {dimension_numbers = #tpu.dot_dimension_numbers<[1], [0], [0], [1], [0, 0, 1, 1], [], []>} : vector<64x32xbf16>, vector<32x138xbf16>, vector<64x138xf32> -> vector<64x138xf32>
    %90 = arith.addf %85, %89 : vector<64x138xf32>
    %c0_54 = arith.constant 0 : index
    %c0_55 = arith.constant 0 : index
    %91 = vector.load %arg5[%c0_54, %c0_55] : memref<64x1xf32, #tpu.memory_space<vmem>>, vector<64x1xf32>
    %92 = vector.broadcast %91 : vector<64x1xf32> to vector<64x138xf32>
    %93 = arith.addf %90, %92 : vector<64x138xf32>
    %cst_56 = arith.constant 0.000000e+00 : f32
    %94 = vector.broadcast %cst_56 : f32 to vector<64x138xf32>
    %95 = arith.maximumf %93, %94 : vector<64x138xf32>
    %96 = vector.extract_strided_slice %95 {offsets = [0, 0], sizes = [64, 30], strides = [1, 1]} : vector<64x138xf32> to vector<64x30xf32>
    %97 = arith.truncf %96 : vector<64x30xf32> to vector<64x30xbf16>
    %c0_57 = arith.constant 0 : index
    %c3_58 = arith.constant 3 : index
    %98 = vector.load %arg12[%c0_57, %c3_58] : memref<64x144xbf16, #tpu.memory_space<vmem>>, vector<64x30xbf16>
    tpu.vector_store %arg12[%c0_57, %c3_58], %97 {strides = array<i32>} : memref<64x144xbf16, #tpu.memory_space<vmem>>, vector<64x30xbf16>,
    %99 = vector.extract_strided_slice %95 {offsets = [0, 36], sizes = [64, 30], strides = [1, 1]} : vector<64x138xf32> to vector<64x30xf32>
    %100 = arith.truncf %99 : vector<64x30xf32> to vector<64x30xbf16>
    %c0_59 = arith.constant 0 : index
    %c39_60 = arith.constant 39 : index
    %101 = vector.load %arg12[%c0_59, %c39_60] : memref<64x144xbf16, #tpu.memory_space<vmem>>, vector<64x30xbf16>
    tpu.vector_store %arg12[%c0_59, %c39_60], %100 {strides = array<i32>} : memref<64x144xbf16, #tpu.memory_space<vmem>>, vector<64x30xbf16>,
    %102 = vector.extract_strided_slice %95 {offsets = [0, 72], sizes = [64, 30], strides = [1, 1]} : vector<64x138xf32> to vector<64x30xf32>
    %103 = arith.truncf %102 : vector<64x30xf32> to vector<64x30xbf16>
    %c0_61 = arith.constant 0 : index
    %c75_62 = arith.constant 75 : index
    %104 = vector.load %arg12[%c0_61, %c75_62] : memref<64x144xbf16, #tpu.memory_space<vmem>>, vector<64x30xbf16>
    tpu.vector_store %arg12[%c0_61, %c75_62], %103 {strides = array<i32>} : memref<64x144xbf16, #tpu.memory_space<vmem>>, vector<64x30xbf16>,
    %105 = vector.extract_strided_slice %95 {offsets = [0, 108], sizes = [64, 30], strides = [1, 1]} : vector<64x138xf32> to vector<64x30xf32>
    %106 = arith.truncf %105 : vector<64x30xf32> to vector<64x30xbf16>
    %c0_63 = arith.constant 0 : index
    %c111_64 = arith.constant 111 : index
    %107 = vector.load %arg12[%c0_63, %c111_64] : memref<64x144xbf16, #tpu.memory_space<vmem>>, vector<64x30xbf16>
    tpu.vector_store %arg12[%c0_63, %c111_64], %106 {strides = array<i32>} : memref<64x144xbf16, #tpu.memory_space<vmem>>, vector<64x30xbf16>,
    %cst_65 = arith.constant 0.000000e+00 : f32
    %108 = vector.broadcast %cst_65 : f32 to vector<64x138xf32>
    %c0_66 = arith.constant 0 : index
    %c0_67 = arith.constant 0 : index
    %c0_68 = arith.constant 0 : index
    %109 = vector.load %arg6[%c0_66, %c0_67, %c0_68] : memref<7x64x64xbf16, #tpu.memory_space<vmem>>, vector<1x64x64xbf16>
    %110 = vector.shape_cast %109 : vector<1x64x64xbf16> to vector<64x64xbf16>
    %c0_69 = arith.constant 0 : index
    %c0_70 = arith.constant 0 : index
    %111 = vector.load %arg12[%c0_69, %c0_70] : memref<64x144xbf16, #tpu.memory_space<vmem>>, vector<64x138xbf16>
    %cst_71 = arith.constant dense<0.000000e+00> : vector<64x138xf32>
    %112 = tpu.matmul %110, %111, %cst_71 {dimension_numbers = #tpu.dot_dimension_numbers<[1], [0], [0], [1], [0, 0, 1, 1], [], []>} : vector<64x64xbf16>, vector<64x138xbf16>, vector<64x138xf32> -> vector<64x138xf32>
    %113 = arith.addf %108, %112 : vector<64x138xf32>
    %c1_72 = arith.constant 1 : index
    %c0_73 = arith.constant 0 : index
    %c0_74 = arith.constant 0 : index
    %114 = vector.load %arg6[%c1_72, %c0_73, %c0_74] : memref<7x64x64xbf16, #tpu.memory_space<vmem>>, vector<1x64x64xbf16>
    %115 = vector.shape_cast %114 : vector<1x64x64xbf16> to vector<64x64xbf16>
    %c0_75 = arith.constant 0 : index
    %c1_76 = arith.constant 1 : index
    %116 = vector.load %arg12[%c0_75, %c1_76] : memref<64x144xbf16, #tpu.memory_space<vmem>>, vector<64x138xbf16>
    %cst_77 = arith.constant dense<0.000000e+00> : vector<64x138xf32>
    %117 = tpu.matmul %115, %116, %cst_77 {dimension_numbers = #tpu.dot_dimension_numbers<[1], [0], [0], [1], [0, 0, 1, 1], [], []>} : vector<64x64xbf16>, vector<64x138xbf16>, vector<64x138xf32> -> vector<64x138xf32>
    %118 = arith.addf %113, %117 : vector<64x138xf32>
    %c2_78 = arith.constant 2 : index
    %c0_79 = arith.constant 0 : index
    %c0_80 = arith.constant 0 : index
    %119 = vector.load %arg6[%c2_78, %c0_79, %c0_80] : memref<7x64x64xbf16, #tpu.memory_space<vmem>>, vector<1x64x64xbf16>
    %120 = vector.shape_cast %119 : vector<1x64x64xbf16> to vector<64x64xbf16>
    %c0_81 = arith.constant 0 : index
    %c2_82 = arith.constant 2 : index
    %121 = vector.load %arg12[%c0_81, %c2_82] : memref<64x144xbf16, #tpu.memory_space<vmem>>, vector<64x138xbf16>
    %cst_83 = arith.constant dense<0.000000e+00> : vector<64x138xf32>
    %122 = tpu.matmul %120, %121, %cst_83 {dimension_numbers = #tpu.dot_dimension_numbers<[1], [0], [0], [1], [0, 0, 1, 1], [], []>} : vector<64x64xbf16>, vector<64x138xbf16>, vector<64x138xf32> -> vector<64x138xf32>
    %123 = arith.addf %118, %122 : vector<64x138xf32>
    %c3_84 = arith.constant 3 : index
    %c0_85 = arith.constant 0 : index
    %c0_86 = arith.constant 0 : index
    %124 = vector.load %arg6[%c3_84, %c0_85, %c0_86] : memref<7x64x64xbf16, #tpu.memory_space<vmem>>, vector<1x64x64xbf16>
    %125 = vector.shape_cast %124 : vector<1x64x64xbf16> to vector<64x64xbf16>
    %c0_87 = arith.constant 0 : index
    %c3_88 = arith.constant 3 : index
    %126 = vector.load %arg12[%c0_87, %c3_88] : memref<64x144xbf16, #tpu.memory_space<vmem>>, vector<64x138xbf16>
    %cst_89 = arith.constant dense<0.000000e+00> : vector<64x138xf32>
    %127 = tpu.matmul %125, %126, %cst_89 {dimension_numbers = #tpu.dot_dimension_numbers<[1], [0], [0], [1], [0, 0, 1, 1], [], []>} : vector<64x64xbf16>, vector<64x138xbf16>, vector<64x138xf32> -> vector<64x138xf32>
    %128 = arith.addf %123, %127 : vector<64x138xf32>
    %c4_90 = arith.constant 4 : index
    %c0_91 = arith.constant 0 : index
    %c0_92 = arith.constant 0 : index
    %129 = vector.load %arg6[%c4_90, %c0_91, %c0_92] : memref<7x64x64xbf16, #tpu.memory_space<vmem>>, vector<1x64x64xbf16>
    %130 = vector.shape_cast %129 : vector<1x64x64xbf16> to vector<64x64xbf16>
    %c0_93 = arith.constant 0 : index
    %c4_94 = arith.constant 4 : index
    %131 = vector.load %arg12[%c0_93, %c4_94] : memref<64x144xbf16, #tpu.memory_space<vmem>>, vector<64x138xbf16>
    %cst_95 = arith.constant dense<0.000000e+00> : vector<64x138xf32>
    %132 = tpu.matmul %130, %131, %cst_95 {dimension_numbers = #tpu.dot_dimension_numbers<[1], [0], [0], [1], [0, 0, 1, 1], [], []>} : vector<64x64xbf16>, vector<64x138xbf16>, vector<64x138xf32> -> vector<64x138xf32>
    %133 = arith.addf %128, %132 : vector<64x138xf32>
    %c5_96 = arith.constant 5 : index
    %c0_97 = arith.constant 0 : index
    %c0_98 = arith.constant 0 : index
    %134 = vector.load %arg6[%c5_96, %c0_97, %c0_98] : memref<7x64x64xbf16, #tpu.memory_space<vmem>>, vector<1x64x64xbf16>
    %135 = vector.shape_cast %134 : vector<1x64x64xbf16> to vector<64x64xbf16>
    %c0_99 = arith.constant 0 : index
    %c5_100 = arith.constant 5 : index
    %136 = vector.load %arg12[%c0_99, %c5_100] : memref<64x144xbf16, #tpu.memory_space<vmem>>, vector<64x138xbf16>
    %cst_101 = arith.constant dense<0.000000e+00> : vector<64x138xf32>
    %137 = tpu.matmul %135, %136, %cst_101 {dimension_numbers = #tpu.dot_dimension_numbers<[1], [0], [0], [1], [0, 0, 1, 1], [], []>} : vector<64x64xbf16>, vector<64x138xbf16>, vector<64x138xf32> -> vector<64x138xf32>
    %138 = arith.addf %133, %137 : vector<64x138xf32>
    %c6_102 = arith.constant 6 : index
    %c0_103 = arith.constant 0 : index
    %c0_104 = arith.constant 0 : index
    %139 = vector.load %arg6[%c6_102, %c0_103, %c0_104] : memref<7x64x64xbf16, #tpu.memory_space<vmem>>, vector<1x64x64xbf16>
    %140 = vector.shape_cast %139 : vector<1x64x64xbf16> to vector<64x64xbf16>
    %c0_105 = arith.constant 0 : index
    %c6_106 = arith.constant 6 : index
    %141 = vector.load %arg12[%c0_105, %c6_106] : memref<64x144xbf16, #tpu.memory_space<vmem>>, vector<64x138xbf16>
    %cst_107 = arith.constant dense<0.000000e+00> : vector<64x138xf32>
    %142 = tpu.matmul %140, %141, %cst_107 {dimension_numbers = #tpu.dot_dimension_numbers<[1], [0], [0], [1], [0, 0, 1, 1], [], []>} : vector<64x64xbf16>, vector<64x138xbf16>, vector<64x138xf32> -> vector<64x138xf32>
    %143 = arith.addf %138, %142 : vector<64x138xf32>
    %c0_108 = arith.constant 0 : index
    %c0_109 = arith.constant 0 : index
    %144 = vector.load %arg7[%c0_108, %c0_109] : memref<64x1xf32, #tpu.memory_space<vmem>>, vector<64x1xf32>
    %145 = vector.broadcast %144 : vector<64x1xf32> to vector<64x138xf32>
    %146 = arith.addf %143, %145 : vector<64x138xf32>
    %cst_110 = arith.constant 0.000000e+00 : f32
    %147 = vector.broadcast %cst_110 : f32 to vector<64x138xf32>
    %148 = arith.maximumf %146, %147 : vector<64x138xf32>
    %149 = vector.extract_strided_slice %148 {offsets = [0, 0], sizes = [64, 30], strides = [1, 1]} : vector<64x138xf32> to vector<64x30xf32>
    %150 = arith.truncf %149 : vector<64x30xf32> to vector<64x30xbf16>
    %c0_111 = arith.constant 0 : index
    %c3_112 = arith.constant 3 : index
    %151 = vector.load %arg12[%c0_111, %c3_112] : memref<64x144xbf16, #tpu.memory_space<vmem>>, vector<64x30xbf16>
    tpu.vector_store %arg12[%c0_111, %c3_112], %150 {strides = array<i32>} : memref<64x144xbf16, #tpu.memory_space<vmem>>, vector<64x30xbf16>,
    %152 = vector.extract_strided_slice %148 {offsets = [0, 36], sizes = [64, 30], strides = [1, 1]} : vector<64x138xf32> to vector<64x30xf32>
    %153 = arith.truncf %152 : vector<64x30xf32> to vector<64x30xbf16>
    %c0_113 = arith.constant 0 : index
    %c39_114 = arith.constant 39 : index
    %154 = vector.load %arg12[%c0_113, %c39_114] : memref<64x144xbf16, #tpu.memory_space<vmem>>, vector<64x30xbf16>
    tpu.vector_store %arg12[%c0_113, %c39_114], %153 {strides = array<i32>} : memref<64x144xbf16, #tpu.memory_space<vmem>>, vector<64x30xbf16>,
    %155 = vector.extract_strided_slice %148 {offsets = [0, 72], sizes = [64, 30], strides = [1, 1]} : vector<64x138xf32> to vector<64x30xf32>
    %156 = arith.truncf %155 : vector<64x30xf32> to vector<64x30xbf16>
    %c0_115 = arith.constant 0 : index
    %c75_116 = arith.constant 75 : index
    %157 = vector.load %arg12[%c0_115, %c75_116] : memref<64x144xbf16, #tpu.memory_space<vmem>>, vector<64x30xbf16>
    tpu.vector_store %arg12[%c0_115, %c75_116], %156 {strides = array<i32>} : memref<64x144xbf16, #tpu.memory_space<vmem>>, vector<64x30xbf16>,
    %158 = vector.extract_strided_slice %148 {offsets = [0, 108], sizes = [64, 30], strides = [1, 1]} : vector<64x138xf32> to vector<64x30xf32>
    %159 = arith.truncf %158 : vector<64x30xf32> to vector<64x30xbf16>
    %c0_117 = arith.constant 0 : index
    %c111_118 = arith.constant 111 : index
    %160 = vector.load %arg12[%c0_117, %c111_118] : memref<64x144xbf16, #tpu.memory_space<vmem>>, vector<64x30xbf16>
    tpu.vector_store %arg12[%c0_117, %c111_118], %159 {strides = array<i32>} : memref<64x144xbf16, #tpu.memory_space<vmem>>, vector<64x30xbf16>,
    %cst_119 = arith.constant 0.000000e+00 : f32
    %161 = vector.broadcast %cst_119 : f32 to vector<64x138xf32>
    %c0_120 = arith.constant 0 : index
    %c0_121 = arith.constant 0 : index
    %c0_122 = arith.constant 0 : index
    %162 = vector.load %arg8[%c0_120, %c0_121, %c0_122] : memref<7x64x64xbf16, #tpu.memory_space<vmem>>, vector<1x64x64xbf16>
    %163 = vector.shape_cast %162 : vector<1x64x64xbf16> to vector<64x64xbf16>
    %c0_123 = arith.constant 0 : index
    %c0_124 = arith.constant 0 : index
    %164 = vector.load %arg12[%c0_123, %c0_124] : memref<64x144xbf16, #tpu.memory_space<vmem>>, vector<64x138xbf16>
    %cst_125 = arith.constant dense<0.000000e+00> : vector<64x138xf32>
    %165 = tpu.matmul %163, %164, %cst_125 {dimension_numbers = #tpu.dot_dimension_numbers<[1], [0], [0], [1], [0, 0, 1, 1], [], []>} : vector<64x64xbf16>, vector<64x138xbf16>, vector<64x138xf32> -> vector<64x138xf32>
    %166 = arith.addf %161, %165 : vector<64x138xf32>
    %c1_126 = arith.constant 1 : index
    %c0_127 = arith.constant 0 : index
    %c0_128 = arith.constant 0 : index
    %167 = vector.load %arg8[%c1_126, %c0_127, %c0_128] : memref<7x64x64xbf16, #tpu.memory_space<vmem>>, vector<1x64x64xbf16>
    %168 = vector.shape_cast %167 : vector<1x64x64xbf16> to vector<64x64xbf16>
    %c0_129 = arith.constant 0 : index
    %c1_130 = arith.constant 1 : index
    %169 = vector.load %arg12[%c0_129, %c1_130] : memref<64x144xbf16, #tpu.memory_space<vmem>>, vector<64x138xbf16>
    %cst_131 = arith.constant dense<0.000000e+00> : vector<64x138xf32>
    %170 = tpu.matmul %168, %169, %cst_131 {dimension_numbers = #tpu.dot_dimension_numbers<[1], [0], [0], [1], [0, 0, 1, 1], [], []>} : vector<64x64xbf16>, vector<64x138xbf16>, vector<64x138xf32> -> vector<64x138xf32>
    %171 = arith.addf %166, %170 : vector<64x138xf32>
    %c2_132 = arith.constant 2 : index
    %c0_133 = arith.constant 0 : index
    %c0_134 = arith.constant 0 : index
    %172 = vector.load %arg8[%c2_132, %c0_133, %c0_134] : memref<7x64x64xbf16, #tpu.memory_space<vmem>>, vector<1x64x64xbf16>
    %173 = vector.shape_cast %172 : vector<1x64x64xbf16> to vector<64x64xbf16>
    %c0_135 = arith.constant 0 : index
    %c2_136 = arith.constant 2 : index
    %174 = vector.load %arg12[%c0_135, %c2_136] : memref<64x144xbf16, #tpu.memory_space<vmem>>, vector<64x138xbf16>
    %cst_137 = arith.constant dense<0.000000e+00> : vector<64x138xf32>
    %175 = tpu.matmul %173, %174, %cst_137 {dimension_numbers = #tpu.dot_dimension_numbers<[1], [0], [0], [1], [0, 0, 1, 1], [], []>} : vector<64x64xbf16>, vector<64x138xbf16>, vector<64x138xf32> -> vector<64x138xf32>
    %176 = arith.addf %171, %175 : vector<64x138xf32>
    %c3_138 = arith.constant 3 : index
    %c0_139 = arith.constant 0 : index
    %c0_140 = arith.constant 0 : index
    %177 = vector.load %arg8[%c3_138, %c0_139, %c0_140] : memref<7x64x64xbf16, #tpu.memory_space<vmem>>, vector<1x64x64xbf16>
    %178 = vector.shape_cast %177 : vector<1x64x64xbf16> to vector<64x64xbf16>
    %c0_141 = arith.constant 0 : index
    %c3_142 = arith.constant 3 : index
    %179 = vector.load %arg12[%c0_141, %c3_142] : memref<64x144xbf16, #tpu.memory_space<vmem>>, vector<64x138xbf16>
    %cst_143 = arith.constant dense<0.000000e+00> : vector<64x138xf32>
    %180 = tpu.matmul %178, %179, %cst_143 {dimension_numbers = #tpu.dot_dimension_numbers<[1], [0], [0], [1], [0, 0, 1, 1], [], []>} : vector<64x64xbf16>, vector<64x138xbf16>, vector<64x138xf32> -> vector<64x138xf32>
    %181 = arith.addf %176, %180 : vector<64x138xf32>
    %c4_144 = arith.constant 4 : index
    %c0_145 = arith.constant 0 : index
    %c0_146 = arith.constant 0 : index
    %182 = vector.load %arg8[%c4_144, %c0_145, %c0_146] : memref<7x64x64xbf16, #tpu.memory_space<vmem>>, vector<1x64x64xbf16>
    %183 = vector.shape_cast %182 : vector<1x64x64xbf16> to vector<64x64xbf16>
    %c0_147 = arith.constant 0 : index
    %c4_148 = arith.constant 4 : index
    %184 = vector.load %arg12[%c0_147, %c4_148] : memref<64x144xbf16, #tpu.memory_space<vmem>>, vector<64x138xbf16>
    %cst_149 = arith.constant dense<0.000000e+00> : vector<64x138xf32>
    %185 = tpu.matmul %183, %184, %cst_149 {dimension_numbers = #tpu.dot_dimension_numbers<[1], [0], [0], [1], [0, 0, 1, 1], [], []>} : vector<64x64xbf16>, vector<64x138xbf16>, vector<64x138xf32> -> vector<64x138xf32>
    %186 = arith.addf %181, %185 : vector<64x138xf32>
    %c5_150 = arith.constant 5 : index
    %c0_151 = arith.constant 0 : index
    %c0_152 = arith.constant 0 : index
    %187 = vector.load %arg8[%c5_150, %c0_151, %c0_152] : memref<7x64x64xbf16, #tpu.memory_space<vmem>>, vector<1x64x64xbf16>
    %188 = vector.shape_cast %187 : vector<1x64x64xbf16> to vector<64x64xbf16>
    %c0_153 = arith.constant 0 : index
    %c5_154 = arith.constant 5 : index
    %189 = vector.load %arg12[%c0_153, %c5_154] : memref<64x144xbf16, #tpu.memory_space<vmem>>, vector<64x138xbf16>
    %cst_155 = arith.constant dense<0.000000e+00> : vector<64x138xf32>
    %190 = tpu.matmul %188, %189, %cst_155 {dimension_numbers = #tpu.dot_dimension_numbers<[1], [0], [0], [1], [0, 0, 1, 1], [], []>} : vector<64x64xbf16>, vector<64x138xbf16>, vector<64x138xf32> -> vector<64x138xf32>
    %191 = arith.addf %186, %190 : vector<64x138xf32>
    %c6_156 = arith.constant 6 : index
    %c0_157 = arith.constant 0 : index
    %c0_158 = arith.constant 0 : index
    %192 = vector.load %arg8[%c6_156, %c0_157, %c0_158] : memref<7x64x64xbf16, #tpu.memory_space<vmem>>, vector<1x64x64xbf16>
    %193 = vector.shape_cast %192 : vector<1x64x64xbf16> to vector<64x64xbf16>
    %c0_159 = arith.constant 0 : index
    %c6_160 = arith.constant 6 : index
    %194 = vector.load %arg12[%c0_159, %c6_160] : memref<64x144xbf16, #tpu.memory_space<vmem>>, vector<64x138xbf16>
    %cst_161 = arith.constant dense<0.000000e+00> : vector<64x138xf32>
    %195 = tpu.matmul %193, %194, %cst_161 {dimension_numbers = #tpu.dot_dimension_numbers<[1], [0], [0], [1], [0, 0, 1, 1], [], []>} : vector<64x64xbf16>, vector<64x138xbf16>, vector<64x138xf32> -> vector<64x138xf32>
    %196 = arith.addf %191, %195 : vector<64x138xf32>
    %c0_162 = arith.constant 0 : index
    %c0_163 = arith.constant 0 : index
    %197 = vector.load %arg9[%c0_162, %c0_163] : memref<64x1xf32, #tpu.memory_space<vmem>>, vector<64x1xf32>
    %198 = vector.broadcast %197 : vector<64x1xf32> to vector<64x138xf32>
    %199 = arith.addf %196, %198 : vector<64x138xf32>
    %cst_164 = arith.constant 0.000000e+00 : f32
    %200 = vector.broadcast %cst_164 : f32 to vector<64x138xf32>
    %201 = arith.maximumf %199, %200 : vector<64x138xf32>
    %202 = vector.extract_strided_slice %201 {offsets = [0, 0], sizes = [64, 8], strides = [1, 1]} : vector<64x138xf32> to vector<64x8xf32>
    %cst_165 = arith.constant dense<0xFF800000> : vector<64xf32>
    %203 = vector.multi_reduction <maximumf>, %202, %cst_165 [1] : vector<64x8xf32> to vector<64xf32>
    %204 = vector.shape_cast %203 : vector<64xf32> to vector<64x1xf32>
    %c0_166 = arith.constant 0 : index
    %c0_167 = arith.constant 0 : index
    %205 = vector.load %arg10[%c0_166, %c0_167] : memref<64x12xf32, #tpu.memory_space<vmem>>, vector<64x1xf32>
    tpu.vector_store %arg10[%c0_166, %c0_167], %204 {strides = array<i32>} : memref<64x12xf32, #tpu.memory_space<vmem>>, vector<64x1xf32>,
    %206 = vector.extract_strided_slice %201 {offsets = [0, 8], sizes = [64, 8], strides = [1, 1]} : vector<64x138xf32> to vector<64x8xf32>
    %cst_168 = arith.constant dense<0xFF800000> : vector<64xf32>
    %207 = vector.multi_reduction <maximumf>, %206, %cst_168 [1] : vector<64x8xf32> to vector<64xf32>
    %208 = vector.shape_cast %207 : vector<64xf32> to vector<64x1xf32>
    %c0_169 = arith.constant 0 : index
    %c1_170 = arith.constant 1 : index
    %209 = vector.load %arg10[%c0_169, %c1_170] : memref<64x12xf32, #tpu.memory_space<vmem>>, vector<64x1xf32>
    tpu.vector_store %arg10[%c0_169, %c1_170], %208 {strides = array<i32>} : memref<64x12xf32, #tpu.memory_space<vmem>>, vector<64x1xf32>,
    %210 = vector.extract_strided_slice %201 {offsets = [0, 16], sizes = [64, 8], strides = [1, 1]} : vector<64x138xf32> to vector<64x8xf32>
    %cst_171 = arith.constant dense<0xFF800000> : vector<64xf32>
    %211 = vector.multi_reduction <maximumf>, %210, %cst_171 [1] : vector<64x8xf32> to vector<64xf32>
    %212 = vector.shape_cast %211 : vector<64xf32> to vector<64x1xf32>
    %c0_172 = arith.constant 0 : index
    %c2_173 = arith.constant 2 : index
    %213 = vector.load %arg10[%c0_172, %c2_173] : memref<64x12xf32, #tpu.memory_space<vmem>>, vector<64x1xf32>
    tpu.vector_store %arg10[%c0_172, %c2_173], %212 {strides = array<i32>} : memref<64x12xf32, #tpu.memory_space<vmem>>, vector<64x1xf32>,
    %214 = vector.extract_strided_slice %201 {offsets = [0, 36], sizes = [64, 8], strides = [1, 1]} : vector<64x138xf32> to vector<64x8xf32>
    %cst_174 = arith.constant dense<0xFF800000> : vector<64xf32>
    %215 = vector.multi_reduction <maximumf>, %214, %cst_174 [1] : vector<64x8xf32> to vector<64xf32>
    %216 = vector.shape_cast %215 : vector<64xf32> to vector<64x1xf32>
    %c0_175 = arith.constant 0 : index
    %c3_176 = arith.constant 3 : index
    %217 = vector.load %arg10[%c0_175, %c3_176] : memref<64x12xf32, #tpu.memory_space<vmem>>, vector<64x1xf32>
    tpu.vector_store %arg10[%c0_175, %c3_176], %216 {strides = array<i32>} : memref<64x12xf32, #tpu.memory_space<vmem>>, vector<64x1xf32>,
    %218 = vector.extract_strided_slice %201 {offsets = [0, 44], sizes = [64, 8], strides = [1, 1]} : vector<64x138xf32> to vector<64x8xf32>
    %cst_177 = arith.constant dense<0xFF800000> : vector<64xf32>
    %219 = vector.multi_reduction <maximumf>, %218, %cst_177 [1] : vector<64x8xf32> to vector<64xf32>
    %220 = vector.shape_cast %219 : vector<64xf32> to vector<64x1xf32>
    %c0_178 = arith.constant 0 : index
    %c4_179 = arith.constant 4 : index
    %221 = vector.load %arg10[%c0_178, %c4_179] : memref<64x12xf32, #tpu.memory_space<vmem>>, vector<64x1xf32>
    tpu.vector_store %arg10[%c0_178, %c4_179], %220 {strides = array<i32>} : memref<64x12xf32, #tpu.memory_space<vmem>>, vector<64x1xf32>,
    %222 = vector.extract_strided_slice %201 {offsets = [0, 52], sizes = [64, 8], strides = [1, 1]} : vector<64x138xf32> to vector<64x8xf32>
    %cst_180 = arith.constant dense<0xFF800000> : vector<64xf32>
    %223 = vector.multi_reduction <maximumf>, %222, %cst_180 [1] : vector<64x8xf32> to vector<64xf32>
    %224 = vector.shape_cast %223 : vector<64xf32> to vector<64x1xf32>
    %c0_181 = arith.constant 0 : index
    %c5_182 = arith.constant 5 : index
    %225 = vector.load %arg10[%c0_181, %c5_182] : memref<64x12xf32, #tpu.memory_space<vmem>>, vector<64x1xf32>
    tpu.vector_store %arg10[%c0_181, %c5_182], %224 {strides = array<i32>} : memref<64x12xf32, #tpu.memory_space<vmem>>, vector<64x1xf32>,
    %226 = vector.extract_strided_slice %201 {offsets = [0, 72], sizes = [64, 8], strides = [1, 1]} : vector<64x138xf32> to vector<64x8xf32>
    %cst_183 = arith.constant dense<0xFF800000> : vector<64xf32>
    %227 = vector.multi_reduction <maximumf>, %226, %cst_183 [1] : vector<64x8xf32> to vector<64xf32>
    %228 = vector.shape_cast %227 : vector<64xf32> to vector<64x1xf32>
    %c0_184 = arith.constant 0 : index
    %c6_185 = arith.constant 6 : index
    %229 = vector.load %arg10[%c0_184, %c6_185] : memref<64x12xf32, #tpu.memory_space<vmem>>, vector<64x1xf32>
    tpu.vector_store %arg10[%c0_184, %c6_185], %228 {strides = array<i32>} : memref<64x12xf32, #tpu.memory_space<vmem>>, vector<64x1xf32>,
    %230 = vector.extract_strided_slice %201 {offsets = [0, 80], sizes = [64, 8], strides = [1, 1]} : vector<64x138xf32> to vector<64x8xf32>
    %cst_186 = arith.constant dense<0xFF800000> : vector<64xf32>
    %231 = vector.multi_reduction <maximumf>, %230, %cst_186 [1] : vector<64x8xf32> to vector<64xf32>
    %232 = vector.shape_cast %231 : vector<64xf32> to vector<64x1xf32>
    %c0_187 = arith.constant 0 : index
    %c7 = arith.constant 7 : index
    %233 = vector.load %arg10[%c0_187, %c7] : memref<64x12xf32, #tpu.memory_space<vmem>>, vector<64x1xf32>
    tpu.vector_store %arg10[%c0_187, %c7], %232 {strides = array<i32>} : memref<64x12xf32, #tpu.memory_space<vmem>>, vector<64x1xf32>,
    %234 = vector.extract_strided_slice %201 {offsets = [0, 88], sizes = [64, 8], strides = [1, 1]} : vector<64x138xf32> to vector<64x8xf32>
    %cst_188 = arith.constant dense<0xFF800000> : vector<64xf32>
    %235 = vector.multi_reduction <maximumf>, %234, %cst_188 [1] : vector<64x8xf32> to vector<64xf32>
    %236 = vector.shape_cast %235 : vector<64xf32> to vector<64x1xf32>
    %c0_189 = arith.constant 0 : index
    %c8 = arith.constant 8 : index
    %237 = vector.load %arg10[%c0_189, %c8] : memref<64x12xf32, #tpu.memory_space<vmem>>, vector<64x1xf32>
    tpu.vector_store %arg10[%c0_189, %c8], %236 {strides = array<i32>} : memref<64x12xf32, #tpu.memory_space<vmem>>, vector<64x1xf32>,
    %238 = vector.extract_strided_slice %201 {offsets = [0, 108], sizes = [64, 8], strides = [1, 1]} : vector<64x138xf32> to vector<64x8xf32>
    %cst_190 = arith.constant dense<0xFF800000> : vector<64xf32>
    %239 = vector.multi_reduction <maximumf>, %238, %cst_190 [1] : vector<64x8xf32> to vector<64xf32>
    %240 = vector.shape_cast %239 : vector<64xf32> to vector<64x1xf32>
    %c0_191 = arith.constant 0 : index
    %c9 = arith.constant 9 : index
    %241 = vector.load %arg10[%c0_191, %c9] : memref<64x12xf32, #tpu.memory_space<vmem>>, vector<64x1xf32>
    tpu.vector_store %arg10[%c0_191, %c9], %240 {strides = array<i32>} : memref<64x12xf32, #tpu.memory_space<vmem>>, vector<64x1xf32>,
    %242 = vector.extract_strided_slice %201 {offsets = [0, 116], sizes = [64, 8], strides = [1, 1]} : vector<64x138xf32> to vector<64x8xf32>
    %cst_192 = arith.constant dense<0xFF800000> : vector<64xf32>
    %243 = vector.multi_reduction <maximumf>, %242, %cst_192 [1] : vector<64x8xf32> to vector<64xf32>
    %244 = vector.shape_cast %243 : vector<64xf32> to vector<64x1xf32>
    %c0_193 = arith.constant 0 : index
    %c10 = arith.constant 10 : index
    %245 = vector.load %arg10[%c0_193, %c10] : memref<64x12xf32, #tpu.memory_space<vmem>>, vector<64x1xf32>
    tpu.vector_store %arg10[%c0_193, %c10], %244 {strides = array<i32>} : memref<64x12xf32, #tpu.memory_space<vmem>>, vector<64x1xf32>,
    %246 = vector.extract_strided_slice %201 {offsets = [0, 124], sizes = [64, 8], strides = [1, 1]} : vector<64x138xf32> to vector<64x8xf32>
    %cst_194 = arith.constant dense<0xFF800000> : vector<64xf32>
    %247 = vector.multi_reduction <maximumf>, %246, %cst_194 [1] : vector<64x8xf32> to vector<64xf32>
    %248 = vector.shape_cast %247 : vector<64xf32> to vector<64x1xf32>
    %c0_195 = arith.constant 0 : index
    %c11 = arith.constant 11 : index
    %249 = vector.load %arg10[%c0_195, %c11] : memref<64x12xf32, #tpu.memory_space<vmem>>, vector<64x1xf32>
    tpu.vector_store %arg10[%c0_195, %c11], %248 {strides = array<i32>} : memref<64x12xf32, #tpu.memory_space<vmem>>, vector<64x1xf32>,
    return
  }
  func.func @transform_0(%arg0: i32) -> (i32, i32) {
    %c0_i32 = arith.constant 0 : i32
    %c0_i32_0 = arith.constant 0 : i32
    %c0_i32_1 = arith.constant 0 : i32
    return %c0_i32, %c0_i32_0 : i32, i32
  }
  func.func @transform_1(%arg0: i32) -> (i32, i32) {
    %c0_i32 = arith.constant 0 : i32
    %c0_i32_0 = arith.constant 0 : i32
    %c0_i32_1 = arith.constant 0 : i32
    return %c0_i32, %c0_i32_0 : i32, i32
  }
  func.func @transform_2(%arg0: i32) -> (i32, i32) {
    %c0_i32 = arith.constant 0 : i32
    %c0_i32_0 = arith.constant 0 : i32
    %c0_i32_1 = arith.constant 0 : i32
    return %c0_i32, %c0_i32_0 : i32, i32
  }
  func.func @transform_3(%arg0: i32) -> (i32, i32, i32) {
    %c0_i32 = arith.constant 0 : i32
    %c0_i32_0 = arith.constant 0 : i32
    %c0_i32_1 = arith.constant 0 : i32
    %c0_i32_2 = arith.constant 0 : i32
    return %c0_i32, %c0_i32_0, %c0_i32_1 : i32, i32, i32
  }
  func.func @transform_4(%arg0: i32) -> (i32, i32) {
    %c0_i32 = arith.constant 0 : i32
    %c0_i32_0 = arith.constant 0 : i32
    %c0_i32_1 = arith.constant 0 : i32
    return %c0_i32, %c0_i32_0 : i32, i32
  }
  func.func @transform_5(%arg0: i32) -> (i32, i32, i32) {
    %c0_i32 = arith.constant 0 : i32
    %c0_i32_0 = arith.constant 0 : i32
    %c0_i32_1 = arith.constant 0 : i32
    %c0_i32_2 = arith.constant 0 : i32
    return %c0_i32, %c0_i32_0, %c0_i32_1 : i32, i32, i32
  }
  func.func @transform_6(%arg0: i32) -> (i32, i32) {
    %c0_i32 = arith.constant 0 : i32
    %c0_i32_0 = arith.constant 0 : i32
    %c0_i32_1 = arith.constant 0 : i32
    return %c0_i32, %c0_i32_0 : i32, i32
  }
  func.func @transform_7(%arg0: i32) -> (i32, i32, i32) {
    %c0_i32 = arith.constant 0 : i32
    %c0_i32_0 = arith.constant 0 : i32
    %c0_i32_1 = arith.constant 0 : i32
    %c0_i32_2 = arith.constant 0 : i32
    return %c0_i32, %c0_i32_0, %c0_i32_1 : i32, i32, i32
  }
  func.func @transform_8(%arg0: i32) -> (i32, i32) {
    %c0_i32 = arith.constant 0 : i32
    %c0_i32_0 = arith.constant 0 : i32
    %c0_i32_1 = arith.constant 0 : i32
    return %c0_i32, %c0_i32_0 : i32, i32
  }
  func.func @transform_9(%arg0: i32) -> (i32, i32) {
    %c0_i32 = arith.constant 0 : i32
    %c0_i32_0 = arith.constant 0 : i32
    %c0_i32_1 = arith.constant 0 : i32
    return %c0_i32, %c0_i32_0 : i32, i32
  }
}

</mosaic_0001>

<llo_original>
// kernel: feature_extractor.3
$region0: #{feature_extractor.3}
  #allocation0 [shape = 'u32[]', space=smem, size = 0x4, offset = 0x4, fixed_abs, tag = 'smem constant byte address 0x4 - core index']
  #allocation1 [shape = 'u32[144,128]{1,0:T(1,128)}', space=vmem, size = 0x12000, scoped, tag = 'internal scratch']
  #allocation2 [shape = 'bf16[64,40]{1,0:T(16,128)(2,1)}', space=vmem, size = 0x4000, scoped, tag = 'scratch operand']
  #allocation3 [shape = 'bf16[64,40]{1,0:T(16,128)(2,1)}', space=vmem, size = 0x4000, scoped, tag = 'scratch operand']
  %s0 = inlined_call_operand.vmem [shape: bf16[399,256], index: 0, kind: input, shape index: {}]
  %s1 = inlined_call_operand.vmem [shape: bf16[64,399], index: 1, kind: input, shape index: {}]
  %s2 = inlined_call_operand.vmem [shape: f32[64,1], index: 2, kind: input, shape index: {}]
  %s3 = inlined_call_operand.vmem [shape: bf16[5,64,64], index: 3, kind: input, shape index: {}]
  %s4 = inlined_call_operand.vmem [shape: f32[64,1], index: 4, kind: input, shape index: {}]
  %s5 = inlined_call_operand.vmem [shape: bf16[5,64,64], index: 5, kind: input, shape index: {}]
  %s6 = inlined_call_operand.vmem [shape: f32[64,1], index: 6, kind: input, shape index: {}]
  %s7 = inlined_call_operand.vmem [shape: bf16[5,64,64], index: 7, kind: input, shape index: {}]
  %s8 = inlined_call_operand.vmem [shape: f32[64,1], index: 8, kind: input, shape index: {}]
  %s9 = inlined_call_operand.vmem [shape: f32[64,4], index: 9, kind: output, shape index: {}]
  %s10 = sld [smem:[#allocation0]]
  $region46: #{feature_extractor.3} parent=0
    _
  %s12 = ssub.s32 1, %s10
  %s13 = scalar_select 0, %s12, %s10
  // Predicated region
  $region2: #{feature_extractor.3} parent=0 // pred_check
    _
  $region3: #{feature_extractor.3} parent=0 // pred_check_branch
    %15 = sbr.rel (0) target = $region5
  $region4: #{feature_extractor.3} parent=0 // pred_region
    _
  $region5: #{feature_extractor.3} parent=0 // pred_fallthru
    _
  // Predicated region
  $region6: #{feature_extractor.3} parent=0 // pred_check
    _
  $region7: #{feature_extractor.3} parent=0 // pred_check_branch
    %17 = sbr.rel (0) target = $region9
  $region8: #{feature_extractor.3} parent=0 // pred_region
    _
  $region9: #{feature_extractor.3} parent=0 // pred_fallthru
    _
  // Predicated region
  $region10: #{feature_extractor.3} parent=0 // pred_check
    _
  $region11: #{feature_extractor.3} parent=0 // pred_check_branch
    %19 = sbr.rel (0) target = $region13
  $region12: #{feature_extractor.3} parent=0 // pred_region
    _
  $region13: #{feature_extractor.3} parent=0 // pred_fallthru
    _
  // Predicated region
  $region14: #{feature_extractor.3} parent=0 // pred_check
    _
  $region15: #{feature_extractor.3} parent=0 // pred_check_branch
    %21 = sbr.rel (0) target = $region17
  $region16: #{feature_extractor.3} parent=0 // pred_region
    _
  $region17: #{feature_extractor.3} parent=0 // pred_fallthru
    _
  // Predicated region
  $region18: #{feature_extractor.3} parent=0 // pred_check
    _
  $region19: #{feature_extractor.3} parent=0 // pred_check_branch
    %23 = sbr.rel (0) target = $region21
  $region20: #{feature_extractor.3} parent=0 // pred_region
    _
  $region21: #{feature_extractor.3} parent=0 // pred_fallthru
    _
  // Predicated region
  $region22: #{feature_extractor.3} parent=0 // pred_check
    _
  $region23: #{feature_extractor.3} parent=0 // pred_check_branch
    %25 = sbr.rel (0) target = $region25
  $region24: #{feature_extractor.3} parent=0 // pred_region
    _
  $region25: #{feature_extractor.3} parent=0 // pred_fallthru
    _
  // Predicated region
  $region26: #{feature_extractor.3} parent=0 // pred_check
    _
  $region27: #{feature_extractor.3} parent=0 // pred_check_branch
    %27 = sbr.rel (0) target = $region29
  $region28: #{feature_extractor.3} parent=0 // pred_region
    _
  $region29: #{feature_extractor.3} parent=0 // pred_fallthru
    _
  // Predicated region
  $region30: #{feature_extractor.3} parent=0 // pred_check
    _
  $region31: #{feature_extractor.3} parent=0 // pred_check_branch
    %29 = sbr.rel (0) target = $region33
  $region32: #{feature_extractor.3} parent=0 // pred_region
    _
  $region33: #{feature_extractor.3} parent=0 // pred_fallthru
    _
  // Predicated region
  $region34: #{feature_extractor.3} parent=0 // pred_check
    _
  $region35: #{feature_extractor.3} parent=0 // pred_check_branch
    %31 = sbr.rel (0) target = $region37
  $region36: #{feature_extractor.3} parent=0 // pred_region
    _
  $region37: #{feature_extractor.3} parent=0 // pred_fallthru
    _
  %v33 = vld [vmem:[%s1] sm:$0xff]
  %v34 = vld [vmem:[%s1 + $0x8] sm:$0xff]
  %v35 = vld [vmem:[%s1 + $0x10] sm:$0xff]
  %v36 = vld [vmem:[%s1 + $0x18] sm:$0xff]
  %v37 = vld [vmem:[%s1 + $0x20] sm:$0xff]
  %v38 = vld [vmem:[%s1 + $0x28] sm:$0xff]
  %v39 = vld [vmem:[%s1 + $0x30] sm:$0xff]
  %v40 = vld [vmem:[%s1 + $0x38] sm:$0xff]
  %v41 = vld [vmem:[%s1 + $0x40] sm:$0xff]
  %v42 = vld [vmem:[%s1 + $0x48] sm:$0xff]
  %v43 = vld [vmem:[%s1 + $0x50] sm:$0xff]
  %v44 = vld [vmem:[%s1 + $0x58] sm:$0xff]
  %v45 = vld [vmem:[%s1 + $0x60] sm:$0xff]
  %v46 = vld [vmem:[%s1 + $0x68] sm:$0xff]
  %v47 = vld [vmem:[%s1 + $0x70] sm:$0xff]
  %v48 = vld [vmem:[%s1 + $0x78] sm:$0xff]
  %v49 = vld [vmem:[%s0] sm:$0xff]
  %v50 = vld [vmem:[%s0 + $0x8] sm:$0xff]
  %v51 = vld [vmem:[%s0 + $0x10] sm:$0xff]
  %v52 = vld [vmem:[%s0 + $0x18] sm:$0xff]
  %v53 = vld [vmem:[%s0 + $0x20] sm:$0xff]
  %v54 = vld [vmem:[%s0 + $0x28] sm:$0xff]
  %v55 = vld [vmem:[%s0 + $0x30] sm:$0xff]
  %v56 = vld [vmem:[%s0 + $0x38] sm:$0xff]
  %v57 = vld [vmem:[%s0 + $0x40] sm:$0xff]
  %v58 = vld [vmem:[%s0 + $0x48] sm:$0xff]
  %v59 = vld [vmem:[%s0 + $0x50] sm:$0xff]
  %v60 = vld [vmem:[%s0 + $0x58] sm:$0xff]
  %v61 = vld [vmem:[%s0 + $0x60] sm:$0xff]
  %v62 = vld [vmem:[%s0 + $0x68] sm:$0xff]
  %v63 = vld [vmem:[%s0 + $0x70] sm:$0xff]
  %v64 = vld [vmem:[%s0 + $0x78] sm:$0xff]
  %v65 = vld [vmem:[%s0 + $0x80] sm:$0xff]
  %v66 = vld [vmem:[%s0 + $0x88] sm:$0xff]
  %v67 = vld [vmem:[%s0 + $0x90] sm:$0xff]
  %v68 = vld [vmem:[%s0 + $0x98] sm:$0xff]
  %v69 = vld [vmem:[%s0 + $0xa0] sm:$0xff]
  %v70 = vld [vmem:[%s0 + $0xa8] sm:$0xff]
  %v71 = vld [vmem:[%s0 + $0xb0] sm:$0xff]
  %v72 = vld [vmem:[%s0 + $0xb8] sm:$0xff]
  %v73 = vld [vmem:[%s0 + $0xc0] sm:$0xff]
  %v74 = vld [vmem:[%s0 + $0xc8] sm:$0xff]
  %v75 = vld [vmem:[%s0 + $0xd0] sm:$0xff]
  %v76 = vld [vmem:[%s0 + $0xd8] sm:$0xff]
  %v77 = vld [vmem:[%s0 + $0xe0] sm:$0xff]
  %v78 = vld [vmem:[%s0 + $0xe8] sm:$0xff]
  %v79 = vld [vmem:[%s0 + $0xf0] sm:$0xff]
  %v80 = vld [vmem:[%s0 + $0xf8] sm:$0xff]
  %v81 = vld [vmem:[%s0 + $0x100] sm:$0xff]
  %v82 = vld [vmem:[%s0 + $0x108] sm:$0xff]
  %v83 = vld [vmem:[%s0 + $0x110] sm:$0xff]
  %v84 = vld [vmem:[%s0 + $0x118] sm:$0xff]
  %v85 = vld [vmem:[%s0 + $0x120] sm:$0xff]
  %v86 = vld [vmem:[%s0 + $0x128] sm:$0xff]
  %v87 = vld [vmem:[%s0 + $0x130] sm:$0xff]
  %v88 = vld [vmem:[%s0 + $0x138] sm:$0xff]
  %v89 = vld [vmem:[%s0 + $0x140] sm:$0xff]
  %v90 = vld [vmem:[%s0 + $0x148] sm:$0xff]
  %v91 = vld [vmem:[%s0 + $0x150] sm:$0xff]
  %v92 = vld [vmem:[%s0 + $0x158] sm:$0xff]
  %v93 = vld [vmem:[%s0 + $0x160] sm:$0xff]
  %v94 = vld [vmem:[%s0 + $0x168] sm:$0xff]
  %v95 = vld [vmem:[%s0 + $0x170] sm:$0xff]
  %v96 = vld [vmem:[%s0 + $0x178] sm:$0xff]
  %v97 = vld [vmem:[%s0 + $0x180] sm:$0xff]
  %v98 = vld [vmem:[%s0 + $0x188] sm:$0xff]
  %v115 = vunpack.c.l.b16 %v33
  %v116 = vunpack.c.h.b16 %v33
  %v117 = vunpack.c.l.b16 %v34
  %v118 = vunpack.c.h.b16 %v34
  %v119 = vunpack.c.l.b16 %v35
  %v120 = vunpack.c.h.b16 %v35
  %v121 = vunpack.c.l.b16 %v36
  %v122 = vunpack.c.h.b16 %v36
  %v123 = vunpack.c.l.b16 %v37
  %v124 = vunpack.c.h.b16 %v37
  %v125 = vunpack.c.l.b16 %v38
  %v126 = vunpack.c.h.b16 %v38
  %v127 = vunpack.c.l.b16 %v39
  %v128 = vunpack.c.h.b16 %v39
  %v129 = vunpack.c.l.b16 %v40
  %v130 = vunpack.c.h.b16 %v40
  %v131 = vunpack.c.l.b16 %v41
  %v132 = vunpack.c.h.b16 %v41
  %v133 = vunpack.c.l.b16 %v42
  %v134 = vunpack.c.h.b16 %v42
  %v135 = vunpack.c.l.b16 %v43
  %v136 = vunpack.c.h.b16 %v43
  %v137 = vunpack.c.l.b16 %v44
  %v138 = vunpack.c.h.b16 %v44
  %v139 = vunpack.c.l.b16 %v45
  %v140 = vunpack.c.h.b16 %v45
  %v141 = vunpack.c.l.b16 %v46
  %v142 = vunpack.c.h.b16 %v46
  %v143 = vunpack.c.l.b16 %v47
  %v144 = vunpack.c.h.b16 %v47
  %v145 = vunpack.c.l.b16 %v48
  %v146 = vunpack.c.h.b16 %v48
  %v147 = vpack.c.b16 %v119, %v115
  %v148 = vpack.c.b16 %v120, %v116
  %v149 = vpack.c.b16 %v121, %v117
  %v150 = vpack.c.b16 %v122, %v118
  %v151 = vpack.c.b16 %v127, %v123
  %v152 = vpack.c.b16 %v128, %v124
  %v153 = vpack.c.b16 %v129, %v125
  %v154 = vpack.c.b16 %v130, %v126
  %v155 = vpack.c.b16 %v135, %v131
  %v156 = vpack.c.b16 %v136, %v132
  %v157 = vpack.c.b16 %v137, %v133
  %v158 = vpack.c.b16 %v138, %v134
  %v159 = vpack.c.b16 %v143, %v139
  %v160 = vpack.c.b16 %v144, %v140
  %v161 = vpack.c.b16 %v145, %v141
  %v162 = vpack.c.b16 %v146, %v142
  %v225 = vunpack.c.l.b16 %v49
  %v226 = vunpack.c.h.b16 %v49
  %v227 = vunpack.c.l.b16 %v50
  %v228 = vunpack.c.h.b16 %v50
  %v229 = vunpack.c.l.b16 %v51
  %v230 = vunpack.c.h.b16 %v51
  %v231 = vunpack.c.l.b16 %v52
  %v232 = vunpack.c.h.b16 %v52
  %v233 = vunpack.c.l.b16 %v53
  %v234 = vunpack.c.h.b16 %v53
  %v235 = vunpack.c.l.b16 %v54
  %v236 = vunpack.c.h.b16 %v54
  %v237 = vunpack.c.l.b16 %v55
  %v238 = vunpack.c.h.b16 %v55
  %v239 = vunpack.c.l.b16 %v56
  %v240 = vunpack.c.h.b16 %v56
  %v241 = vunpack.c.l.b16 %v57
  %v242 = vunpack.c.h.b16 %v57
  %v243 = vunpack.c.l.b16 %v58
  %v244 = vunpack.c.h.b16 %v58
  %v245 = vunpack.c.l.b16 %v59
  %v246 = vunpack.c.h.b16 %v59
  %v247 = vunpack.c.l.b16 %v60
  %v248 = vunpack.c.h.b16 %v60
  %v249 = vunpack.c.l.b16 %v61
  %v250 = vunpack.c.h.b16 %v61
  %v251 = vunpack.c.l.b16 %v62
  %v252 = vunpack.c.h.b16 %v62
  %v253 = vunpack.c.l.b16 %v63
  %v254 = vunpack.c.h.b16 %v63
  %v255 = vunpack.c.l.b16 %v64
  %v256 = vunpack.c.h.b16 %v64
  %v257 = vunpack.c.l.b16 %v65
  %v258 = vunpack.c.h.b16 %v65
  %v259 = vunpack.c.l.b16 %v66
  %v260 = vunpack.c.h.b16 %v66
  %v261 = vunpack.c.l.b16 %v67
  %v262 = vunpack.c.h.b16 %v67
  %v263 = vunpack.c.l.b16 %v68
  %v264 = vunpack.c.h.b16 %v68
  %v265 = vunpack.c.l.b16 %v69
  %v266 = vunpack.c.h.b16 %v69
  %v267 = vunpack.c.l.b16 %v70
  %v268 = vunpack.c.h.b16 %v70
  %v269 = vunpack.c.l.b16 %v71
  %v270 = vunpack.c.h.b16 %v71
  %v271 = vunpack.c.l.b16 %v72
  %v272 = vunpack.c.h.b16 %v72
  %v273 = vunpack.c.l.b16 %v73
  %v274 = vunpack.c.h.b16 %v73
  %v275 = vunpack.c.l.b16 %v74
  %v276 = vunpack.c.h.b16 %v74
  %v277 = vunpack.c.l.b16 %v75
  %v278 = vunpack.c.h.b16 %v75
  %v279 = vunpack.c.l.b16 %v76
  %v280 = vunpack.c.h.b16 %v76
  %v281 = vunpack.c.l.b16 %v77
  %v282 = vunpack.c.h.b16 %v77
  %v283 = vunpack.c.l.b16 %v78
  %v284 = vunpack.c.h.b16 %v78
  %v285 = vunpack.c.l.b16 %v79
  %v286 = vunpack.c.h.b16 %v79
  %v287 = vunpack.c.l.b16 %v80
  %v288 = vunpack.c.h.b16 %v80
  %v289 = vunpack.c.l.b16 %v81
  %v290 = vunpack.c.h.b16 %v81
  %v291 = vunpack.c.l.b16 %v82
  %v292 = vunpack.c.h.b16 %v82
  %v293 = vunpack.c.l.b16 %v83
  %v294 = vunpack.c.h.b16 %v83
  %v295 = vunpack.c.l.b16 %v84
  %v296 = vunpack.c.h.b16 %v84
  %v297 = vunpack.c.l.b16 %v85
  %v298 = vunpack.c.h.b16 %v85
  %v299 = vunpack.c.l.b16 %v86
  %v300 = vunpack.c.h.b16 %v86
  %v301 = vunpack.c.l.b16 %v87
  %v302 = vunpack.c.h.b16 %v87
  %v303 = vunpack.c.l.b16 %v88
  %v304 = vunpack.c.h.b16 %v88
  %v305 = vunpack.c.l.b16 %v89
  %v306 = vunpack.c.h.b16 %v89
  %v307 = vunpack.c.l.b16 %v90
  %v308 = vunpack.c.h.b16 %v90
  %v309 = vunpack.c.l.b16 %v91
  %v310 = vunpack.c.h.b16 %v91
  %v311 = vunpack.c.l.b16 %v92
  %v312 = vunpack.c.h.b16 %v92
  %v313 = vunpack.c.l.b16 %v93
  %v314 = vunpack.c.h.b16 %v93
  %v315 = vunpack.c.l.b16 %v94
  %v316 = vunpack.c.h.b16 %v94
  %v317 = vunpack.c.l.b16 %v95
  %v318 = vunpack.c.h.b16 %v95
  %v319 = vunpack.c.l.b16 %v96
  %v320 = vunpack.c.h.b16 %v96
  %v321 = vunpack.c.l.b16 %v97
  %v322 = vunpack.c.h.b16 %v97
  %v323 = vunpack.c.l.b16 %v98
  %v324 = vunpack.c.h.b16 %v98
  %v325 = vpack.c.b16 %v227, %v225
  %v326 = vpack.c.b16 %v228, %v226
  %v327 = vpack.c.b16 %v231, %v229
  %v328 = vpack.c.b16 %v232, %v230
  %v329 = vpack.c.b16 %v235, %v233
  %v330 = vpack.c.b16 %v236, %v234
  %v331 = vpack.c.b16 %v239, %v237
  %v332 = vpack.c.b16 %v240, %v238
  %v333 = vpack.c.b16 %v243, %v241
  %v334 = vpack.c.b16 %v244, %v242
  %v335 = vpack.c.b16 %v247, %v245
  %v336 = vpack.c.b16 %v248, %v246
  %v337 = vpack.c.b16 %v251, %v249
  %v338 = vpack.c.b16 %v252, %v250
  %v339 = vpack.c.b16 %v255, %v253
  %v340 = vpack.c.b16 %v256, %v254
  %v341 = vpack.c.b16 %v259, %v257
  %v342 = vpack.c.b16 %v260, %v258
  %v343 = vpack.c.b16 %v263, %v261
  %v344 = vpack.c.b16 %v264, %v262
  %v345 = vpack.c.b16 %v267, %v265
  %v346 = vpack.c.b16 %v268, %v266
  %v347 = vpack.c.b16 %v271, %v269
  %v348 = vpack.c.b16 %v272, %v270
  %v349 = vpack.c.b16 %v275, %v273
  %v350 = vpack.c.b16 %v276, %v274
  %v351 = vpack.c.b16 %v279, %v277
  %v352 = vpack.c.b16 %v280, %v278
  %v353 = vpack.c.b16 %v283, %v281
  %v354 = vpack.c.b16 %v284, %v282
  %v355 = vpack.c.b16 %v287, %v285
  %v356 = vpack.c.b16 %v288, %v286
  %v357 = vpack.c.b16 %v291, %v289
  %v358 = vpack.c.b16 %v292, %v290
  %v359 = vpack.c.b16 %v295, %v293
  %v360 = vpack.c.b16 %v296, %v294
  %v361 = vpack.c.b16 %v299, %v297
  %v362 = vpack.c.b16 %v300, %v298
  %v363 = vpack.c.b16 %v303, %v301
  %v364 = vpack.c.b16 %v304, %v302
  %v365 = vpack.c.b16 %v307, %v305
  %v366 = vpack.c.b16 %v308, %v306
  %v367 = vpack.c.b16 %v311, %v309
  %v368 = vpack.c.b16 %v312, %v310
  %v369 = vpack.c.b16 %v315, %v313
  %v370 = vpack.c.b16 %v316, %v314
  %v371 = vpack.c.b16 %v319, %v317
  %v372 = vpack.c.b16 %v320, %v318
  %v373 = vpack.c.b16 %v323, %v321
  %v374 = vpack.c.b16 %v324, %v322
  %vm423 = vcmask 121856
  %v425 = vsel %vm423, %v150, 0
  %v428 = vsel %vm423, %v154, 0
  %v431 = vsel %vm423, %v158, 0
  %v434 = vsel %vm423, %v162, 0
  %vm436 = vcmask 1046528
  %vm437 = vcmask 1047552
  %v438 = vsel %vm436, 4294967295, 65535
  %v439 = vsel %vm437, %v438, 0
  %v441 = vand.u32 %v373, %v439
  %v444 = vand.u32 %v374, %v439
  %446 = vmatprep.subr.bf16.mxu0 %v326
  %447 = vmatpush1.bf16.msra.mxu0 %v325
  %448 = vmatprep.subr.bf16.mxu0 %v328
  %449 = vmatpush1.bf16.msra.mxu0 %v327
  %450 = vmatprep.subr.bf16.mxu0 %v330
  %451 = vmatpush1.bf16.msra.mxu0 %v329
  %452 = vmatprep.subr.bf16.mxu0 %v332
  %453 = vmatpush1.bf16.msra.mxu0 %v331
  %454 = vmatprep.subr.bf16.mxu0 %v334
  %455 = vmatpush1.bf16.msra.mxu0 %v333
  %456 = vmatprep.subr.bf16.mxu0 %v336
  %457 = vmatpush1.bf16.msra.mxu0 %v335
  %458 = vmatprep.subr.bf16.mxu0 %v338
  %459 = vmatpush1.bf16.msra.mxu0 %v337
  %460 = vmatprep.subr.bf16.mxu0 %v340
  %461 = vmatpush1.bf16.msra.mxu0 %v339
  %462 = vmatprep.subr.bf16.mxu0 %v342
  %463 = vmatpush1.bf16.msra.mxu0 %v341
  %464 = vmatprep.subr.bf16.mxu0 %v344
  %465 = vmatpush1.bf16.msra.mxu0 %v343
  %466 = vmatprep.subr.bf16.mxu0 %v346
  %467 = vmatpush1.bf16.msra.mxu0 %v345
  %468 = vmatprep.subr.bf16.mxu0 %v348
  %469 = vmatpush1.bf16.msra.mxu0 %v347
  %470 = vmatprep.subr.bf16.mxu0 %v350
  %471 = vmatpush1.bf16.msra.mxu0 %v349
  %472 = vmatprep.subr.bf16.mxu0 %v352
  %473 = vmatpush1.bf16.msra.mxu0 %v351
  %474 = vmatprep.subr.bf16.mxu0 %v354
  %475 = vmatpush1.bf16.msra.mxu0 %v353
  %476 = vmatprep.subr.bf16.mxu0 %v356
  %477 = vmatpush1.bf16.msra.mxu0 %v355
  %478 = vmatprep.mubr.bf16.mxu0 %v148
  %479 = vmatmul.mubr.bf16.gmra.mrb[0].mxu0 %v147
  %v480 = vpop.f32.mrb[0].mxu0
  %v481 = vadd.f32 0.0, %v480
  %v482 = vpop.f32.mrb[0].mxu0
  %v483 = vadd.f32 0.0, %v482
  %v484 = vpop.f32.mrb[0].mxu0
  %v485 = vadd.f32 0.0, %v484
  %v486 = vpop.f32.mrb[0].mxu0
  %v487 = vadd.f32 0.0, %v486
  %488 = vmatprep.mubr.bf16.mxu0 %v152
  %489 = vmatmul.mubr.bf16.gmra.mrb[0].mxu0 %v151
  %v490 = vpop.f32.mrb[0].mxu0
  %v491 = vadd.f32 0.0, %v490
  %v492 = vpop.f32.mrb[0].mxu0
  %v493 = vadd.f32 0.0, %v492
  %v494 = vpop.f32.mrb[0].mxu0
  %v495 = vadd.f32 0.0, %v494
  %v496 = vpop.f32.mrb[0].mxu0
  %v497 = vadd.f32 0.0, %v496
  %498 = vmatprep.mubr.bf16.mxu0 %v156
  %499 = vmatmul.mubr.bf16.gmra.mrb[0].mxu0 %v155
  %v500 = vpop.f32.mrb[0].mxu0
  %v501 = vadd.f32 0.0, %v500
  %v502 = vpop.f32.mrb[0].mxu0
  %v503 = vadd.f32 0.0, %v502
  %v504 = vpop.f32.mrb[0].mxu0
  %v505 = vadd.f32 0.0, %v504
  %v506 = vpop.f32.mrb[0].mxu0
  %v507 = vadd.f32 0.0, %v506
  %508 = vmatprep.mubr.bf16.mxu0 %v160
  %509 = vmatmul.mubr.bf16.gmra.mrb[0].mxu0 %v159
  %v510 = vpop.f32.mrb[0].mxu0
  %v511 = vadd.f32 0.0, %v510
  %v512 = vpop.f32.mrb[0].mxu0
  %v513 = vadd.f32 0.0, %v512
  %v514 = vpop.f32.mrb[0].mxu0
  %v515 = vadd.f32 0.0, %v514
  %v516 = vpop.f32.mrb[0].mxu0
  %v517 = vadd.f32 0.0, %v516
  %518 = vdwg.mxu0
  %519 = vmatprep.subr.bf16.mxu0 %v358
  %520 = vmatpush1.bf16.msra.mxu0 %v357
  %521 = vmatprep.subr.bf16.mxu0 %v360
  %522 = vmatpush1.bf16.msra.mxu0 %v359
  %523 = vmatprep.subr.bf16.mxu0 %v362
  %524 = vmatpush1.bf16.msra.mxu0 %v361
  %525 = vmatprep.subr.bf16.mxu0 %v364
  %526 = vmatpush1.bf16.msra.mxu0 %v363
  %527 = vmatprep.subr.bf16.mxu0 %v366
  %528 = vmatpush1.bf16.msra.mxu0 %v365
  %529 = vmatprep.subr.bf16.mxu0 %v368
  %530 = vmatpush1.bf16.msra.mxu0 %v367
  %531 = vmatprep.subr.bf16.mxu0 %v370
  %532 = vmatpush1.bf16.msra.mxu0 %v369
  %533 = vmatprep.subr.bf16.mxu0 %v372
  %534 = vmatpush1.bf16.msra.mxu0 %v371
  %535 = vmatprep.subr.bf16.mxu0 %v444
  %536 = vmatpush1.bf16.msra.mxu0 %v441
  %537 = vmatprep.subr.bf16.mxu0 0
  %538 = vmatpush1.bf16.msra.mxu0 0
  %539 = vmatprep.subr.bf16.mxu0 0
  %540 = vmatpush1.bf16.msra.mxu0 0
  %541 = vmatprep.subr.bf16.mxu0 0
  %542 = vmatpush1.bf16.msra.mxu0 0
  %543 = vmatprep.subr.bf16.mxu0 0
  %544 = vmatpush1.bf16.msra.mxu0 0
  %545 = vmatprep.subr.bf16.mxu0 0
  %546 = vmatpush1.bf16.msra.mxu0 0
  %547 = vmatprep.subr.bf16.mxu0 0
  %548 = vmatpush1.bf16.msra.mxu0 0
  %549 = vmatprep.subr.bf16.mxu0 0
  %550 = vmatpush1.bf16.msra.mxu0 0
  %551 = vmatprep.mubr.bf16.mxu0 %v425
  %552 = vmatmul.mubr.bf16.gmra.mrb[0].mxu0 %v149
  %v553 = vpop.f32.mrb[0].mxu0
  %v554 = vadd.f32 %v481, %v553
  %v555 = vpop.f32.mrb[0].mxu0
  %v556 = vadd.f32 %v483, %v555
  %v557 = vpop.f32.mrb[0].mxu0
  %v558 = vadd.f32 %v485, %v557
  %v559 = vpop.f32.mrb[0].mxu0
  %v560 = vadd.f32 %v487, %v559
  %561 = vmatprep.mubr.bf16.mxu0 %v428
  %562 = vmatmul.mubr.bf16.gmra.mrb[0].mxu0 %v153
  %v563 = vpop.f32.mrb[0].mxu0
  %v564 = vadd.f32 %v491, %v563
  %v565 = vpop.f32.mrb[0].mxu0
  %v566 = vadd.f32 %v493, %v565
  %v567 = vpop.f32.mrb[0].mxu0
  %v568 = vadd.f32 %v495, %v567
  %v569 = vpop.f32.mrb[0].mxu0
  %v570 = vadd.f32 %v497, %v569
  %571 = vmatprep.mubr.bf16.mxu0 %v431
  %572 = vmatmul.mubr.bf16.gmra.mrb[0].mxu0 %v157
  %v573 = vpop.f32.mrb[0].mxu0
  %v574 = vadd.f32 %v501, %v573
  %v575 = vpop.f32.mrb[0].mxu0
  %v576 = vadd.f32 %v503, %v575
  %v577 = vpop.f32.mrb[0].mxu0
  %v578 = vadd.f32 %v505, %v577
  %v579 = vpop.f32.mrb[0].mxu0
  %v580 = vadd.f32 %v507, %v579
  %581 = vmatprep.mubr.bf16.mxu0 %v434
  %582 = vmatmul.mubr.bf16.gmra.mrb[0].mxu0 %v161
  %v583 = vpop.f32.mrb[0].mxu0
  %v584 = vadd.f32 %v511, %v583
  %v585 = vpop.f32.mrb[0].mxu0
  %v586 = vadd.f32 %v513, %v585
  %v587 = vpop.f32.mrb[0].mxu0
  %v588 = vadd.f32 %v515, %v587
  %v589 = vpop.f32.mrb[0].mxu0
  %v590 = vadd.f32 %v517, %v589
  %591 = vdwg.mxu0
  %600 = vrot.lane.b32.xlu0 %v554, 104
  %v601 = vpop.permute.xlu0 %600
  %602 = vrot.lane.b32.xlu0 %v558, 104
  %v603 = vpop.permute.xlu0 %602
  %604 = vrot.lane.b32.xlu0 %v564, 104
  %v605 = vpop.permute.xlu0 %604
  %606 = vrot.lane.b32.xlu0 %v568, 104
  %v607 = vpop.permute.xlu0 %606
  %608 = vrot.lane.b32.xlu0 %v574, 104
  %v609 = vpop.permute.xlu0 %608
  %610 = vrot.lane.b32.xlu0 %v578, 104
  %v611 = vpop.permute.xlu0 %610
  %612 = vrot.lane.b32.xlu0 %v584, 104
  %v613 = vpop.permute.xlu0 %612
  %614 = vrot.lane.b32.xlu0 %v588, 104
  %v615 = vpop.permute.xlu0 %614
  %v624 = vmax.f32 %v554, %v601
  %v625 = vmax.f32 %v558, %v603
  %v626 = vmax.f32 %v564, %v605
  %v627 = vmax.f32 %v568, %v607
  %v628 = vmax.f32 %v574, %v609
  %v629 = vmax.f32 %v578, %v611
  %v630 = vmax.f32 %v584, %v613
  %v631 = vmax.f32 %v588, %v615
  %632 = vrot.lane.b32.xlu0 %v554, 80
  %v633 = vpop.permute.xlu0 %632
  %634 = vrot.lane.b32.xlu0 %v558, 80
  %v635 = vpop.permute.xlu0 %634
  %636 = vrot.lane.b32.xlu0 %v564, 80
  %v637 = vpop.permute.xlu0 %636
  %638 = vrot.lane.b32.xlu0 %v568, 80
  %v639 = vpop.permute.xlu0 %638
  %640 = vrot.lane.b32.xlu0 %v574, 80
  %v641 = vpop.permute.xlu0 %640
  %642 = vrot.lane.b32.xlu0 %v578, 80
  %v643 = vpop.permute.xlu0 %642
  %644 = vrot.lane.b32.xlu0 %v584, 80
  %v645 = vpop.permute.xlu0 %644
  %646 = vrot.lane.b32.xlu0 %v588, 80
  %v647 = vpop.permute.xlu0 %646
  %v656 = vmax.f32 %v624, %v633
  %v657 = vmax.f32 %v625, %v635
  %v658 = vmax.f32 %v626, %v637
  %v659 = vmax.f32 %v627, %v639
  %v660 = vmax.f32 %v628, %v641
  %v661 = vmax.f32 %v629, %v643
  %v662 = vmax.f32 %v630, %v645
  %v663 = vmax.f32 %v631, %v647
  %664 = vrot.lane.b32.xlu0 %v554, 56
  %v665 = vpop.permute.xlu0 %664
  %666 = vrot.lane.b32.xlu0 %v558, 56
  %v667 = vpop.permute.xlu0 %666
  %668 = vrot.lane.b32.xlu0 %v564, 56
  %v669 = vpop.permute.xlu0 %668
  %670 = vrot.lane.b32.xlu0 %v568, 56
  %v671 = vpop.permute.xlu0 %670
  %672 = vrot.lane.b32.xlu0 %v574, 56
  %v673 = vpop.permute.xlu0 %672
  %674 = vrot.lane.b32.xlu0 %v578, 56
  %v675 = vpop.permute.xlu0 %674
  %676 = vrot.lane.b32.xlu0 %v584, 56
  %v677 = vpop.permute.xlu0 %676
  %678 = vrot.lane.b32.xlu0 %v588, 56
  %v679 = vpop.permute.xlu0 %678
  %v688 = vmax.f32 %v656, %v665
  %v689 = vmax.f32 %v657, %v667
  %v690 = vmax.f32 %v658, %v669
  %v691 = vmax.f32 %v659, %v671
  %v692 = vmax.f32 %v660, %v673
  %v693 = vmax.f32 %v661, %v675
  %v694 = vmax.f32 %v662, %v677
  %v695 = vmax.f32 %v663, %v679
  %696 = vrot.lane.b32.xlu0 %v554, 32
  %v697 = vpop.permute.xlu0 %696
  %698 = vrot.lane.b32.xlu0 %v558, 32
  %v699 = vpop.permute.xlu0 %698
  %700 = vrot.lane.b32.xlu0 %v564, 32
  %v701 = vpop.permute.xlu0 %700
  %702 = vrot.lane.b32.xlu0 %v568, 32
  %v703 = vpop.permute.xlu0 %702
  %704 = vrot.lane.b32.xlu0 %v574, 32
  %v705 = vpop.permute.xlu0 %704
  %706 = vrot.lane.b32.xlu0 %v578, 32
  %v707 = vpop.permute.xlu0 %706
  %708 = vrot.lane.b32.xlu0 %v584, 32
  %v709 = vpop.permute.xlu0 %708
  %710 = vrot.lane.b32.xlu0 %v588, 32
  %v711 = vpop.permute.xlu0 %710
  %v720 = vmax.f32 %v688, %v697
  %v721 = vmax.f32 %v689, %v699
  %v722 = vmax.f32 %v690, %v701
  %v723 = vmax.f32 %v691, %v703
  %v724 = vmax.f32 %v692, %v705
  %v725 = vmax.f32 %v693, %v707
  %v726 = vmax.f32 %v694, %v709
  %v727 = vmax.f32 %v695, %v711
  %736 = vrot.lane.b32.xlu0 %v554, 8
  %v737 = vpop.permute.xlu0 %736
  %738 = vrot.lane.b32.xlu0 %v556, 8
  %v739 = vpop.permute.xlu0 %738
  %740 = vrot.lane.b32.xlu0 %v558, 8
  %v741 = vpop.permute.xlu0 %740
  %742 = vrot.lane.b32.xlu0 %v560, 8
  %v743 = vpop.permute.xlu0 %742
  %744 = vrot.lane.b32.xlu0 %v564, 8
  %v745 = vpop.permute.xlu0 %744
  %746 = vrot.lane.b32.xlu0 %v566, 8
  %v747 = vpop.permute.xlu0 %746
  %748 = vrot.lane.b32.xlu0 %v568, 8
  %v749 = vpop.permute.xlu0 %748
  %750 = vrot.lane.b32.xlu0 %v570, 8
  %v751 = vpop.permute.xlu0 %750
  %752 = vrot.lane.b32.xlu0 %v574, 8
  %v753 = vpop.permute.xlu0 %752
  %754 = vrot.lane.b32.xlu0 %v576, 8
  %v755 = vpop.permute.xlu0 %754
  %756 = vrot.lane.b32.xlu0 %v578, 8
  %v757 = vpop.permute.xlu0 %756
  %758 = vrot.lane.b32.xlu0 %v580, 8
  %v759 = vpop.permute.xlu0 %758
  %760 = vrot.lane.b32.xlu0 %v584, 8
  %v761 = vpop.permute.xlu0 %760
  %762 = vrot.lane.b32.xlu0 %v586, 8
  %v763 = vpop.permute.xlu0 %762
  %764 = vrot.lane.b32.xlu0 %v588, 8
  %v765 = vpop.permute.xlu0 %764
  %766 = vrot.lane.b32.xlu0 %v590, 8
  %v767 = vpop.permute.xlu0 %766
  %vm768 = vcmask 64512
  %v769 = vsel %vm768, %v737, %v739
  %v770 = vsel %vm768, %v741, %v743
  %v771 = vsel %vm768, %v745, %v747
  %v772 = vsel %vm768, %v749, %v751
  %v773 = vsel %vm768, %v753, %v755
  %v774 = vsel %vm768, %v757, %v759
  %v775 = vsel %vm768, %v761, %v763
  %v776 = vsel %vm768, %v765, %v767
  %v785 = vmax.f32 %v720, %v769
  %v786 = vmax.f32 %v721, %v770
  %v787 = vmax.f32 %v722, %v771
  %v788 = vmax.f32 %v723, %v772
  %v789 = vmax.f32 %v724, %v773
  %v790 = vmax.f32 %v725, %v774
  %v791 = vmax.f32 %v726, %v775
  %v792 = vmax.f32 %v727, %v776
  %793 = vrot.lane.b32.xlu0 %v556, 112
  %v794 = vpop.permute.xlu0 %793
  %795 = vrot.lane.b32.xlu0 %v560, 112
  %v796 = vpop.permute.xlu0 %795
  %797 = vrot.lane.b32.xlu0 %v566, 112
  %v798 = vpop.permute.xlu0 %797
  %799 = vrot.lane.b32.xlu0 %v570, 112
  %v800 = vpop.permute.xlu0 %799
  %801 = vrot.lane.b32.xlu0 %v576, 112
  %v802 = vpop.permute.xlu0 %801
  %803 = vrot.lane.b32.xlu0 %v580, 112
  %v804 = vpop.permute.xlu0 %803
  %805 = vrot.lane.b32.xlu0 %v586, 112
  %v806 = vpop.permute.xlu0 %805
  %807 = vrot.lane.b32.xlu0 %v590, 112
  %v808 = vpop.permute.xlu0 %807
  %v817 = vmax.f32 %v785, %v794
  %v818 = vmax.f32 %v786, %v796
  %v819 = vmax.f32 %v787, %v798
  %v820 = vmax.f32 %v788, %v800
  %v821 = vmax.f32 %v789, %v802
  %v822 = vmax.f32 %v790, %v804
  %v823 = vmax.f32 %v791, %v806
  %v824 = vmax.f32 %v792, %v808
  %825 = vrot.lane.b32.xlu0 %v556, 88
  %v826 = vpop.permute.xlu0 %825
  %827 = vrot.lane.b32.xlu0 %v560, 88
  %v828 = vpop.permute.xlu0 %827
  %829 = vrot.lane.b32.xlu0 %v566, 88
  %v830 = vpop.permute.xlu0 %829
  %831 = vrot.lane.b32.xlu0 %v570, 88
  %v832 = vpop.permute.xlu0 %831
  %833 = vrot.lane.b32.xlu0 %v576, 88
  %v834 = vpop.permute.xlu0 %833
  %835 = vrot.lane.b32.xlu0 %v580, 88
  %v836 = vpop.permute.xlu0 %835
  %837 = vrot.lane.b32.xlu0 %v586, 88
  %v838 = vpop.permute.xlu0 %837
  %839 = vrot.lane.b32.xlu0 %v590, 88
  %v840 = vpop.permute.xlu0 %839
  %v849 = vmax.f32 %v817, %v826
  %v850 = vmax.f32 %v818, %v828
  %v851 = vmax.f32 %v819, %v830
  %v852 = vmax.f32 %v820, %v832
  %v853 = vmax.f32 %v821, %v834
  %v854 = vmax.f32 %v822, %v836
  %v855 = vmax.f32 %v823, %v838
  %v856 = vmax.f32 %v824, %v840
  %v857 = vld [vmem:[%s2] sm:$0xff]
  %v858 = vld [vmem:[%s2 + $0x8] sm:$0xff]
  %v859 = vld [vmem:[%s2 + $0x10] sm:$0xff]
  %v860 = vld [vmem:[%s2 + $0x18] sm:$0xff]
  %v861 = vld [vmem:[%s2 + $0x20] sm:$0xff]
  %v862 = vld [vmem:[%s2 + $0x28] sm:$0xff]
  %v863 = vld [vmem:[%s2 + $0x30] sm:$0xff]
  %v864 = vld [vmem:[%s2 + $0x38] sm:$0xff]
  %866 = vset.pattern.permute.xlu0 0
  %867 = vperm.xlu0 %866, %v857
  %v868 = vpop.permute.xlu0 %867
  %871 = vset.pattern.permute.xlu0 0
  %872 = vperm.xlu0 %871, %v858
  %v873 = vpop.permute.xlu0 %872
  %876 = vset.pattern.permute.xlu0 0
  %877 = vperm.xlu0 %876, %v859
  %v878 = vpop.permute.xlu0 %877
  %881 = vset.pattern.permute.xlu0 0
  %882 = vperm.xlu0 %881, %v860
  %v883 = vpop.permute.xlu0 %882
  %886 = vset.pattern.permute.xlu0 0
  %887 = vperm.xlu0 %886, %v861
  %v888 = vpop.permute.xlu0 %887
  %891 = vset.pattern.permute.xlu0 0
  %892 = vperm.xlu0 %891, %v862
  %v893 = vpop.permute.xlu0 %892
  %896 = vset.pattern.permute.xlu0 0
  %897 = vperm.xlu0 %896, %v863
  %v898 = vpop.permute.xlu0 %897
  %901 = vset.pattern.permute.xlu0 0
  %902 = vperm.xlu0 %901, %v864
  %v903 = vpop.permute.xlu0 %902
  %v905 = vadd.f32 %v849, %v868
  %v906 = vadd.f32 %v850, %v873
  %v907 = vadd.f32 %v851, %v878
  %v908 = vadd.f32 %v852, %v883
  %v909 = vadd.f32 %v853, %v888
  %v910 = vadd.f32 %v854, %v893
  %v911 = vadd.f32 %v855, %v898
  %v912 = vadd.f32 %v856, %v903
  %v913 = vmax.f32 %v905, 0.0
  %v914 = vmax.f32 %v906, 0.0
  %v915 = vmax.f32 %v907, 0.0
  %v916 = vmax.f32 %v908, 0.0
  %v917 = vmax.f32 %v909, 0.0
  %v918 = vmax.f32 %v910, 0.0
  %v919 = vmax.f32 %v911, 0.0
  %v920 = vmax.f32 %v912, 0.0
  %vm921 = vcmask 326656
  %922 = vst.msk [vmem:[#allocation2] sm:$0xff] %vm921, 0
  %923 = vst.msk [vmem:[#allocation2 + $0x8] sm:$0xff] %vm921, 0
  %924 = vst.msk [vmem:[#allocation2 + $0x10] sm:$0xff] %vm921, 0
  %925 = vst.msk [vmem:[#allocation2 + $0x18] sm:$0xff] %vm921, 0
  %926 = vst.msk [vmem:[#allocation3] sm:$0xff] %vm921, 0
  %927 = vst.msk [vmem:[#allocation3 + $0x8] sm:$0xff] %vm921, 0
  %928 = vst.msk [vmem:[#allocation3 + $0x10] sm:$0xff] %vm921, 0
  %929 = vst.msk [vmem:[#allocation3 + $0x18] sm:$0xff] %vm921, 0
  %v930 = vpack.c.bf16 %v914, %v913
  %v931 = vpack.c.bf16 %v916, %v915
  %v932 = vpack.c.bf16 %v918, %v917
  %v933 = vpack.c.bf16 %v920, %v919
  %938 = vrot.lane.b32.xlu0 %v930, 2
  %v939 = vpop.permute.xlu0 %938
  %940 = vrot.lane.b32.xlu0 %v931, 2
  %v941 = vpop.permute.xlu0 %940
  %942 = vrot.lane.b32.xlu0 %v932, 2
  %v943 = vpop.permute.xlu0 %942
  %944 = vrot.lane.b32.xlu0 %v933, 2
  %v945 = vpop.permute.xlu0 %944
  %vm950 = vcmask 64528
  %951 = vst.msk [vmem:[#allocation2] sm:$0xff] %vm950, %v939
  %952 = vst.msk [vmem:[#allocation2 + $0x8] sm:$0xff] %vm950, %v941
  %953 = vst.msk [vmem:[#allocation2 + $0x10] sm:$0xff] %vm950, %v943
  %954 = vst.msk [vmem:[#allocation2 + $0x18] sm:$0xff] %vm950, %v945
  %955 = vrot.lane.b32.xlu0 %v930, 6
  %v956 = vpop.permute.xlu0 %955
  %957 = vrot.lane.b32.xlu0 %v931, 6
  %v958 = vpop.permute.xlu0 %957
  %959 = vrot.lane.b32.xlu0 %v932, 6
  %v960 = vpop.permute.xlu0 %959
  %961 = vrot.lane.b32.xlu0 %v933, 6
  %v962 = vpop.permute.xlu0 %961
  %vm967 = vcmask 146528
  %968 = vst.msk [vmem:[#allocation2] sm:$0xff] %vm967, %v956
  %969 = vst.msk [vmem:[#allocation2 + $0x8] sm:$0xff] %vm967, %v958
  %970 = vst.msk [vmem:[#allocation2 + $0x10] sm:$0xff] %vm967, %v960
  %971 = vst.msk [vmem:[#allocation2 + $0x18] sm:$0xff] %vm967, %v962
  %972 = vrot.lane.b32.xlu0 %v930, 10
  %v973 = vpop.permute.xlu0 %972
  %974 = vrot.lane.b32.xlu0 %v931, 10
  %v975 = vpop.permute.xlu0 %974
  %976 = vrot.lane.b32.xlu0 %v932, 10
  %v977 = vpop.permute.xlu0 %976
  %978 = vrot.lane.b32.xlu0 %v933, 10
  %v979 = vpop.permute.xlu0 %978
  %vm984 = vcmask 228528
  %985 = vst.msk [vmem:[#allocation2] sm:$0xff] %vm984, %v973
  %986 = vst.msk [vmem:[#allocation2 + $0x8] sm:$0xff] %vm984, %v975
  %987 = vst.msk [vmem:[#allocation2 + $0x10] sm:$0xff] %vm984, %v977
  %988 = vst.msk [vmem:[#allocation2 + $0x18] sm:$0xff] %vm984, %v979
  %989 = vrot.lane.b32.xlu0 %v930, 14
  %v990 = vpop.permute.xlu0 %989
  %991 = vrot.lane.b32.xlu0 %v931, 14
  %v992 = vpop.permute.xlu0 %991
  %993 = vrot.lane.b32.xlu0 %v932, 14
  %v994 = vpop.permute.xlu0 %993
  %995 = vrot.lane.b32.xlu0 %v933, 14
  %v996 = vpop.permute.xlu0 %995
  %vm1001 = vcmask 310528
  %1002 = vst.msk [vmem:[#allocation2] sm:$0xff] %vm1001, %v990
  %1003 = vst.msk [vmem:[#allocation2 + $0x8] sm:$0xff] %vm1001, %v992
  %1004 = vst.msk [vmem:[#allocation2 + $0x10] sm:$0xff] %vm1001, %v994
  %1005 = vst.msk [vmem:[#allocation2 + $0x18] sm:$0xff] %vm1001, %v996
  %v1006 = vld [vmem:[%s3] sm:$0xf]
  %v1007 = vld [vmem:[%s3 + $0x4] sm:$0xf]
  %v1008 = vld [vmem:[%s3 + $0x8] sm:$0xf]
  %v1009 = vld [vmem:[%s3 + $0xc] sm:$0xf]
  %v1010 = vld [vmem:[%s3 + $0x10] sm:$0xf]
  %v1011 = vld [vmem:[%s3 + $0x14] sm:$0xf]
  %v1012 = vld [vmem:[%s3 + $0x18] sm:$0xf]
  %v1013 = vld [vmem:[%s3 + $0x1c] sm:$0xf]
  %v1014 = vld [vmem:[#allocation2] sm:$0xff]
  %v1015 = vld [vmem:[#allocation2 + $0x8] sm:$0xff]
  %v1016 = vld [vmem:[#allocation2 + $0x10] sm:$0xff]
  %v1017 = vld [vmem:[#allocation2 + $0x18] sm:$0xff]
  %s1018 = scalar_lea.vmem %s3, 32
  %v1019 = vld [vmem:[%s1018] sm:$0xf]
  %v1020 = vld [vmem:[%s1018 + $0x4] sm:$0xf]
  %v1021 = vld [vmem:[%s1018 + $0x8] sm:$0xf]
  %v1022 = vld [vmem:[%s1018 + $0xc] sm:$0xf]
  %v1023 = vld [vmem:[%s1018 + $0x10] sm:$0xf]
  %v1024 = vld [vmem:[%s1018 + $0x14] sm:$0xf]
  %v1025 = vld [vmem:[%s1018 + $0x18] sm:$0xf]
  %v1026 = vld [vmem:[%s1018 + $0x1c] sm:$0xf]
  %v1035 = vunpack.c.l.b16 %v1019
  %v1036 = vunpack.c.l.b16 %v1020
  %v1037 = vunpack.c.l.b16 %v1021
  %v1038 = vunpack.c.l.b16 %v1022
  %v1039 = vunpack.c.l.b16 %v1023
  %v1040 = vunpack.c.l.b16 %v1024
  %v1041 = vunpack.c.l.b16 %v1025
  %v1042 = vunpack.c.l.b16 %v1026
  %v1043 = vpack.c.b16 %v1036, %v1035
  %v1044 = vpack.c.b16 %v1038, %v1037
  %v1045 = vpack.c.b16 %v1040, %v1039
  %v1046 = vpack.c.b16 %v1042, %v1041
  %1051 = vrot.lane.b32.xlu0 %v1014, 127
  %v1052 = vpop.permute.xlu0 %1051
  %1053 = vrot.lane.b32.xlu0 %v1015, 127
  %v1054 = vpop.permute.xlu0 %1053
  %1055 = vrot.lane.b32.xlu0 %v1016, 127
  %v1056 = vpop.permute.xlu0 %1055
  %1057 = vrot.lane.b32.xlu0 %v1017, 127
  %v1058 = vpop.permute.xlu0 %1057
  %vm1063 = vcmask 523264
  %v1065 = vsel %vm1063, %v1043, 0
  %v1068 = vsel %vm1063, %v1044, 0
  %v1071 = vsel %vm1063, %v1045, 0
  %v1074 = vsel %vm1063, %v1046, 0
  %1076 = vmatprep.subr.bf16.mxu0 0
  %1077 = vmatpush1.bf16.msra.mxu0 %v1052
  %1078 = vmatprep.subr.bf16.mxu0 0
  %1079 = vmatpush1.bf16.msra.mxu0 %v1054
  %1080 = vmatprep.subr.bf16.mxu0 0
  %1081 = vmatpush1.bf16.msra.mxu0 %v1056
  %1082 = vmatprep.subr.bf16.mxu0 0
  %1083 = vmatpush1.bf16.msra.mxu0 %v1058
  %1084 = vmatprep.subr.bf16.mxu0 0
  %1085 = vmatpush1.bf16.msra.mxu0 0
  %1086 = vmatprep.subr.bf16.mxu0 0
  %1087 = vmatpush1.bf16.msra.mxu0 0
  %1088 = vmatprep.subr.bf16.mxu0 0
  %1089 = vmatpush1.bf16.msra.mxu0 0
  %1090 = vmatprep.subr.bf16.mxu0 0
  %1091 = vmatpush1.bf16.msra.mxu0 0
  %1092 = vmatprep.subr.bf16.mxu0 0
  %1093 = vmatpush1.bf16.msra.mxu0 0
  %1094 = vmatprep.subr.bf16.mxu0 0
  %1095 = vmatpush1.bf16.msra.mxu0 0
  %1096 = vmatprep.subr.bf16.mxu0 0
  %1097 = vmatpush1.bf16.msra.mxu0 0
  %1098 = vmatprep.subr.bf16.mxu0 0
  %1099 = vmatpush1.bf16.msra.mxu0 0
  %1100 = vmatprep.subr.bf16.mxu0 0
  %1101 = vmatpush1.bf16.msra.mxu0 0
  %1102 = vmatprep.subr.bf16.mxu0 0
  %1103 = vmatpush1.bf16.msra.mxu0 0
  %1104 = vmatprep.subr.bf16.mxu0 0
  %1105 = vmatpush1.bf16.msra.mxu0 0
  %1106 = vmatprep.subr.bf16.mxu0 0
  %1107 = vmatpush1.bf16.msra.mxu0 0
  %1108 = vmatprep.mubr.bf16.mxu0 0
  %1109 = vmatmul.mubr.bf16.gmra.mrb[0].mxu0 %v1065
  %v1110 = vpop.f32.mrb[0].mxu0
  %v1111 = vadd.f32 0.0, %v1110
  %v1112 = vpop.f32.mrb[0].mxu0
  %v1113 = vpop.f32.mrb[0].mxu0
  %v1114 = vadd.f32 0.0, %v1113
  %v1115 = vpop.f32.mrb[0].mxu0
  %1116 = vmatprep.mubr.bf16.mxu0 0
  %1117 = vmatmul.mubr.bf16.gmra.mrb[0].mxu0 %v1068
  %v1118 = vpop.f32.mrb[0].mxu0
  %v1119 = vadd.f32 0.0, %v1118
  %v1120 = vpop.f32.mrb[0].mxu0
  %v1121 = vpop.f32.mrb[0].mxu0
  %v1122 = vadd.f32 0.0, %v1121
  %v1123 = vpop.f32.mrb[0].mxu0
  %1124 = vmatprep.mubr.bf16.mxu0 0
  %1125 = vmatmul.mubr.bf16.gmra.mrb[0].mxu0 %v1071
  %v1126 = vpop.f32.mrb[0].mxu0
  %v1127 = vadd.f32 0.0, %v1126
  %v1128 = vpop.f32.mrb[0].mxu0
  %v1129 = vpop.f32.mrb[0].mxu0
  %v1130 = vadd.f32 0.0, %v1129
  %v1131 = vpop.f32.mrb[0].mxu0
  %1132 = vmatprep.mubr.bf16.mxu0 0
  %1133 = vmatmul.mubr.bf16.gmra.mrb[0].mxu0 %v1074
  %v1134 = vpop.f32.mrb[0].mxu0
  %v1135 = vadd.f32 0.0, %v1134
  %v1136 = vpop.f32.mrb[0].mxu0
  %v1137 = vpop.f32.mrb[0].mxu0
  %v1138 = vadd.f32 0.0, %v1137
  %v1139 = vpop.f32.mrb[0].mxu0
  %1140 = vdwg.mxu0
  %v1149 = vunpack.c.l.b16 %v1006
  %v1150 = vunpack.c.l.b16 %v1007
  %v1151 = vunpack.c.l.b16 %v1008
  %v1152 = vunpack.c.l.b16 %v1009
  %v1153 = vunpack.c.l.b16 %v1010
  %v1154 = vunpack.c.l.b16 %v1011
  %v1155 = vunpack.c.l.b16 %v1012
  %v1156 = vunpack.c.l.b16 %v1013
  %v1157 = vpack.c.b16 %v1150, %v1149
  %v1158 = vpack.c.b16 %v1152, %v1151
  %v1159 = vpack.c.b16 %v1154, %v1153
  %v1160 = vpack.c.b16 %v1156, %v1155
  %v1162 = vsel %vm1063, %v1157, 0
  %v1165 = vsel %vm1063, %v1158, 0
  %v1168 = vsel %vm1063, %v1159, 0
  %v1171 = vsel %vm1063, %v1160, 0
  %1173 = vmatprep.subr.bf16.mxu0 0
  %1174 = vmatpush1.bf16.msra.mxu0 %v1014
  %1175 = vmatprep.subr.bf16.mxu0 0
  %1176 = vmatpush1.bf16.msra.mxu0 %v1015
  %1177 = vmatprep.subr.bf16.mxu0 0
  %1178 = vmatpush1.bf16.msra.mxu0 %v1016
  %1179 = vmatprep.subr.bf16.mxu0 0
  %1180 = vmatpush1.bf16.msra.mxu0 %v1017
  %1181 = vmatprep.subr.bf16.mxu0 0
  %1182 = vmatpush1.bf16.msra.mxu0 0
  %1183 = vmatprep.subr.bf16.mxu0 0
  %1184 = vmatpush1.bf16.msra.mxu0 0
  %1185 = vmatprep.subr.bf16.mxu0 0
  %1186 = vmatpush1.bf16.msra.mxu0 0
  %1187 = vmatprep.subr.bf16.mxu0 0
  %1188 = vmatpush1.bf16.msra.mxu0 0
  %1189 = vmatprep.subr.bf16.mxu0 0
  %1190 = vmatpush1.bf16.msra.mxu0 0
  %1191 = vmatprep.subr.bf16.mxu0 0
  %1192 = vmatpush1.bf16.msra.mxu0 0
  %1193 = vmatprep.subr.bf16.mxu0 0
  %1194 = vmatpush1.bf16.msra.mxu0 0
  %1195 = vmatprep.subr.bf16.mxu0 0
  %1196 = vmatpush1.bf16.msra.mxu0 0
  %1197 = vmatprep.subr.bf16.mxu0 0
  %1198 = vmatpush1.bf16.msra.mxu0 0
  %1199 = vmatprep.subr.bf16.mxu0 0
  %1200 = vmatpush1.bf16.msra.mxu0 0
  %1201 = vmatprep.subr.bf16.mxu0 0
  %1202 = vmatpush1.bf16.msra.mxu0 0
  %1203 = vmatprep.subr.bf16.mxu0 0
  %1204 = vmatpush1.bf16.msra.mxu0 0
  %1205 = vmatprep.mubr.bf16.mxu0 0
  %1206 = vmatmul.mubr.bf16.gmra.mrb[0].mxu0 %v1162
  %v1207 = vpop.f32.mrb[0].mxu0
  %v1208 = vadd.f32 %v1111, %v1207
  %v1209 = vpop.f32.mrb[0].mxu0
  %v1210 = vpop.f32.mrb[0].mxu0
  %v1211 = vadd.f32 %v1114, %v1210
  %v1212 = vpop.f32.mrb[0].mxu0
  %1213 = vmatprep.mubr.bf16.mxu0 0
  %1214 = vmatmul.mubr.bf16.gmra.mrb[0].mxu0 %v1165
  %v1215 = vpop.f32.mrb[0].mxu0
  %v1216 = vadd.f32 %v1119, %v1215
  %v1217 = vpop.f32.mrb[0].mxu0
  %v1218 = vpop.f32.mrb[0].mxu0
  %v1219 = vadd.f32 %v1122, %v1218
  %v1220 = vpop.f32.mrb[0].mxu0
  %1221 = vmatprep.mubr.bf16.mxu0 0
  %1222 = vmatmul.mubr.bf16.gmra.mrb[0].mxu0 %v1168
  %v1223 = vpop.f32.mrb[0].mxu0
  %v1224 = vadd.f32 %v1127, %v1223
  %v1225 = vpop.f32.mrb[0].mxu0
  %v1226 = vpop.f32.mrb[0].mxu0
  %v1227 = vadd.f32 %v1130, %v1226
  %v1228 = vpop.f32.mrb[0].mxu0
  %1229 = vmatprep.mubr.bf16.mxu0 0
  %1230 = vmatmul.mubr.bf16.gmra.mrb[0].mxu0 %v1171
  %v1231 = vpop.f32.mrb[0].mxu0
  %v1232 = vadd.f32 %v1135, %v1231
  %v1233 = vpop.f32.mrb[0].mxu0
  %v1234 = vpop.f32.mrb[0].mxu0
  %v1235 = vadd.f32 %v1138, %v1234
  %v1236 = vpop.f32.mrb[0].mxu0
  %1237 = vdwg.mxu0
  %s1238 = scalar_lea.vmem %s3, 64
  %v1239 = vld [vmem:[%s1238] sm:$0xf]
  %v1240 = vld [vmem:[%s1238 + $0x4] sm:$0xf]
  %v1241 = vld [vmem:[%s1238 + $0x8] sm:$0xf]
  %v1242 = vld [vmem:[%s1238 + $0xc] sm:$0xf]
  %v1243 = vld [vmem:[%s1238 + $0x10] sm:$0xf]
  %v1244 = vld [vmem:[%s1238 + $0x14] sm:$0xf]
  %v1245 = vld [vmem:[%s1238 + $0x18] sm:$0xf]
  %v1246 = vld [vmem:[%s1238 + $0x1c] sm:$0xf]
  %v1255 = vunpack.c.l.b16 %v1239
  %v1256 = vunpack.c.l.b16 %v1240
  %v1257 = vunpack.c.l.b16 %v1241
  %v1258 = vunpack.c.l.b16 %v1242
  %v1259 = vunpack.c.l.b16 %v1243
  %v1260 = vunpack.c.l.b16 %v1244
  %v1261 = vunpack.c.l.b16 %v1245
  %v1262 = vunpack.c.l.b16 %v1246
  %v1263 = vpack.c.b16 %v1256, %v1255
  %v1264 = vpack.c.b16 %v1258, %v1257
  %v1265 = vpack.c.b16 %v1260, %v1259
  %v1266 = vpack.c.b16 %v1262, %v1261
  %1267 = vrot.lane.b32.xlu0 %v1014, 126
  %v1268 = vpop.permute.xlu0 %1267
  %1269 = vrot.lane.b32.xlu0 %v1015, 126
  %v1270 = vpop.permute.xlu0 %1269
  %1271 = vrot.lane.b32.xlu0 %v1016, 126
  %v1272 = vpop.permute.xlu0 %1271
  %1273 = vrot.lane.b32.xlu0 %v1017, 126
  %v1274 = vpop.permute.xlu0 %1273
  %v1280 = vsel %vm1063, %v1263, 0
  %v1283 = vsel %vm1063, %v1264, 0
  %v1286 = vsel %vm1063, %v1265, 0
  %v1289 = vsel %vm1063, %v1266, 0
  %1291 = vmatprep.subr.bf16.mxu0 0
  %1292 = vmatpush1.bf16.msra.mxu0 %v1268
  %1293 = vmatprep.subr.bf16.mxu0 0
  %1294 = vmatpush1.bf16.msra.mxu0 %v1270
  %1295 = vmatprep.subr.bf16.mxu0 0
  %1296 = vmatpush1.bf16.msra.mxu0 %v1272
  %1297 = vmatprep.subr.bf16.mxu0 0
  %1298 = vmatpush1.bf16.msra.mxu0 %v1274
  %1299 = vmatprep.subr.bf16.mxu0 0
  %1300 = vmatpush1.bf16.msra.mxu0 0
  %1301 = vmatprep.subr.bf16.mxu0 0
  %1302 = vmatpush1.bf16.msra.mxu0 0
  %1303 = vmatprep.subr.bf16.mxu0 0
  %1304 = vmatpush1.bf16.msra.mxu0 0
  %1305 = vmatprep.subr.bf16.mxu0 0
  %1306 = vmatpush1.bf16.msra.mxu0 0
  %1307 = vmatprep.subr.bf16.mxu0 0
  %1308 = vmatpush1.bf16.msra.mxu0 0
  %1309 = vmatprep.subr.bf16.mxu0 0
  %1310 = vmatpush1.bf16.msra.mxu0 0
  %1311 = vmatprep.subr.bf16.mxu0 0
  %1312 = vmatpush1.bf16.msra.mxu0 0
  %1313 = vmatprep.subr.bf16.mxu0 0
  %1314 = vmatpush1.bf16.msra.mxu0 0
  %1315 = vmatprep.subr.bf16.mxu0 0
  %1316 = vmatpush1.bf16.msra.mxu0 0
  %1317 = vmatprep.subr.bf16.mxu0 0
  %1318 = vmatpush1.bf16.msra.mxu0 0
  %1319 = vmatprep.subr.bf16.mxu0 0
  %1320 = vmatpush1.bf16.msra.mxu0 0
  %1321 = vmatprep.subr.bf16.mxu0 0
  %1322 = vmatpush1.bf16.msra.mxu0 0
  %1323 = vmatprep.mubr.bf16.mxu0 0
  %1324 = vmatmul.mubr.bf16.gmra.mrb[0].mxu0 %v1280
  %v1325 = vpop.f32.mrb[0].mxu0
  %v1326 = vadd.f32 0.0, %v1325
  %v1327 = vpop.f32.mrb[0].mxu0
  %v1328 = vpop.f32.mrb[0].mxu0
  %v1329 = vadd.f32 0.0, %v1328
  %v1330 = vpop.f32.mrb[0].mxu0
  %1331 = vmatprep.mubr.bf16.mxu0 0
  %1332 = vmatmul.mubr.bf16.gmra.mrb[0].mxu0 %v1283
  %v1333 = vpop.f32.mrb[0].mxu0
  %v1334 = vadd.f32 0.0, %v1333
  %v1335 = vpop.f32.mrb[0].mxu0
  %v1336 = vpop.f32.mrb[0].mxu0
  %v1337 = vadd.f32 0.0, %v1336
  %v1338 = vpop.f32.mrb[0].mxu0
  %1339 = vmatprep.mubr.bf16.mxu0 0
  %1340 = vmatmul.mubr.bf16.gmra.mrb[0].mxu0 %v1286
  %v1341 = vpop.f32.mrb[0].mxu0
  %v1342 = vadd.f32 0.0, %v1341
  %v1343 = vpop.f32.mrb[0].mxu0
  %v1344 = vpop.f32.mrb[0].mxu0
  %v1345 = vadd.f32 0.0, %v1344
  %v1346 = vpop.f32.mrb[0].mxu0
  %1347 = vmatprep.mubr.bf16.mxu0 0
  %1348 = vmatmul.mubr.bf16.gmra.mrb[0].mxu0 %v1289
  %v1349 = vpop.f32.mrb[0].mxu0
  %v1350 = vadd.f32 0.0, %v1349
  %v1351 = vpop.f32.mrb[0].mxu0
  %v1352 = vpop.f32.mrb[0].mxu0
  %v1353 = vadd.f32 0.0, %v1352
  %v1354 = vpop.f32.mrb[0].mxu0
  %1355 = vdwg.mxu0
  %v1356 = vadd.f32 %v1208, %v1326
  %v1357 = vadd.f32 %v1211, %v1329
  %v1358 = vadd.f32 %v1216, %v1334
  %v1359 = vadd.f32 %v1219, %v1337
  %v1360 = vadd.f32 %v1224, %v1342
  %v1361 = vadd.f32 %v1227, %v1345
  %v1362 = vadd.f32 %v1232, %v1350
  %v1363 = vadd.f32 %v1235, %v1353
  %s1364 = scalar_lea.vmem %s3, 96
  %v1365 = vld [vmem:[%s1364] sm:$0xf]
  %v1366 = vld [vmem:[%s1364 + $0x4] sm:$0xf]
  %v1367 = vld [vmem:[%s1364 + $0x8] sm:$0xf]
  %v1368 = vld [vmem:[%s1364 + $0xc] sm:$0xf]
  %v1369 = vld [vmem:[%s1364 + $0x10] sm:$0xf]
  %v1370 = vld [vmem:[%s1364 + $0x14] sm:$0xf]
  %v1371 = vld [vmem:[%s1364 + $0x18] sm:$0xf]
  %v1372 = vld [vmem:[%s1364 + $0x1c] sm:$0xf]
  %v1381 = vunpack.c.l.b16 %v1365
  %v1382 = vunpack.c.l.b16 %v1366
  %v1383 = vunpack.c.l.b16 %v1367
  %v1384 = vunpack.c.l.b16 %v1368
  %v1385 = vunpack.c.l.b16 %v1369
  %v1386 = vunpack.c.l.b16 %v1370
  %v1387 = vunpack.c.l.b16 %v1371
  %v1388 = vunpack.c.l.b16 %v1372
  %v1389 = vpack.c.b16 %v1382, %v1381
  %v1390 = vpack.c.b16 %v1384, %v1383
  %v1391 = vpack.c.b16 %v1386, %v1385
  %v1392 = vpack.c.b16 %v1388, %v1387
  %1393 = vrot.lane.b32.xlu0 %v1014, 125
  %v1394 = vpop.permute.xlu0 %1393
  %1395 = vrot.lane.b32.xlu0 %v1015, 125
  %v1396 = vpop.permute.xlu0 %1395
  %1397 = vrot.lane.b32.xlu0 %v1016, 125
  %v1398 = vpop.permute.xlu0 %1397
  %1399 = vrot.lane.b32.xlu0 %v1017, 125
  %v1400 = vpop.permute.xlu0 %1399
  %v1406 = vsel %vm1063, %v1389, 0
  %v1409 = vsel %vm1063, %v1390, 0
  %v1412 = vsel %vm1063, %v1391, 0
  %v1415 = vsel %vm1063, %v1392, 0
  %1417 = vmatprep.subr.bf16.mxu0 0
  %1418 = vmatpush1.bf16.msra.mxu0 %v1394
  %1419 = vmatprep.subr.bf16.mxu0 0
  %1420 = vmatpush1.bf16.msra.mxu0 %v1396
  %1421 = vmatprep.subr.bf16.mxu0 0
  %1422 = vmatpush1.bf16.msra.mxu0 %v1398
  %1423 = vmatprep.subr.bf16.mxu0 0
  %1424 = vmatpush1.bf16.msra.mxu0 %v1400
  %1425 = vmatprep.subr.bf16.mxu0 0
  %1426 = vmatpush1.bf16.msra.mxu0 0
  %1427 = vmatprep.subr.bf16.mxu0 0
  %1428 = vmatpush1.bf16.msra.mxu0 0
  %1429 = vmatprep.subr.bf16.mxu0 0
  %1430 = vmatpush1.bf16.msra.mxu0 0
  %1431 = vmatprep.subr.bf16.mxu0 0
  %1432 = vmatpush1.bf16.msra.mxu0 0
  %1433 = vmatprep.subr.bf16.mxu0 0
  %1434 = vmatpush1.bf16.msra.mxu0 0
  %1435 = vmatprep.subr.bf16.mxu0 0
  %1436 = vmatpush1.bf16.msra.mxu0 0
  %1437 = vmatprep.subr.bf16.mxu0 0
  %1438 = vmatpush1.bf16.msra.mxu0 0
  %1439 = vmatprep.subr.bf16.mxu0 0
  %1440 = vmatpush1.bf16.msra.mxu0 0
  %1441 = vmatprep.subr.bf16.mxu0 0
  %1442 = vmatpush1.bf16.msra.mxu0 0
  %1443 = vmatprep.subr.bf16.mxu0 0
  %1444 = vmatpush1.bf16.msra.mxu0 0
  %1445 = vmatprep.subr.bf16.mxu0 0
  %1446 = vmatpush1.bf16.msra.mxu0 0
  %1447 = vmatprep.subr.bf16.mxu0 0
  %1448 = vmatpush1.bf16.msra.mxu0 0
  %1449 = vmatprep.mubr.bf16.mxu0 0
  %1450 = vmatmul.mubr.bf16.gmra.mrb[0].mxu0 %v1406
  %v1451 = vpop.f32.mrb[0].mxu0
  %v1452 = vadd.f32 0.0, %v1451
  %v1453 = vpop.f32.mrb[0].mxu0
  %v1454 = vpop.f32.mrb[0].mxu0
  %v1455 = vadd.f32 0.0, %v1454
  %v1456 = vpop.f32.mrb[0].mxu0
  %1457 = vmatprep.mubr.bf16.mxu0 0
  %1458 = vmatmul.mubr.bf16.gmra.mrb[0].mxu0 %v1409
  %v1459 = vpop.f32.mrb[0].mxu0
  %v1460 = vadd.f32 0.0, %v1459
  %v1461 = vpop.f32.mrb[0].mxu0
  %v1462 = vpop.f32.mrb[0].mxu0
  %v1463 = vadd.f32 0.0, %v1462
  %v1464 = vpop.f32.mrb[0].mxu0
  %1465 = vmatprep.mubr.bf16.mxu0 0
  %1466 = vmatmul.mubr.bf16.gmra.mrb[0].mxu0 %v1412
  %v1467 = vpop.f32.mrb[0].mxu0
  %v1468 = vadd.f32 0.0, %v1467
  %v1469 = vpop.f32.mrb[0].mxu0
  %v1470 = vpop.f32.mrb[0].mxu0
  %v1471 = vadd.f32 0.0, %v1470
  %v1472 = vpop.f32.mrb[0].mxu0
  %1473 = vmatprep.mubr.bf16.mxu0 0
  %1474 = vmatmul.mubr.bf16.gmra.mrb[0].mxu0 %v1415
  %v1475 = vpop.f32.mrb[0].mxu0
  %v1476 = vadd.f32 0.0, %v1475
  %v1477 = vpop.f32.mrb[0].mxu0
  %v1478 = vpop.f32.mrb[0].mxu0
  %v1479 = vadd.f32 0.0, %v1478
  %v1480 = vpop.f32.mrb[0].mxu0
  %1481 = vdwg.mxu0
  %v1482 = vadd.f32 %v1356, %v1452
  %v1483 = vadd.f32 %v1357, %v1455
  %v1484 = vadd.f32 %v1358, %v1460
  %v1485 = vadd.f32 %v1359, %v1463
  %v1486 = vadd.f32 %v1360, %v1468
  %v1487 = vadd.f32 %v1361, %v1471
  %v1488 = vadd.f32 %v1362, %v1476
  %v1489 = vadd.f32 %v1363, %v1479
  %s1490 = scalar_lea.vmem %s3, 128
  %v1491 = vld [vmem:[%s1490] sm:$0xf]
  %v1492 = vld [vmem:[%s1490 + $0x4] sm:$0xf]
  %v1493 = vld [vmem:[%s1490 + $0x8] sm:$0xf]
  %v1494 = vld [vmem:[%s1490 + $0xc] sm:$0xf]
  %v1495 = vld [vmem:[%s1490 + $0x10] sm:$0xf]
  %v1496 = vld [vmem:[%s1490 + $0x14] sm:$0xf]
  %v1497 = vld [vmem:[%s1490 + $0x18] sm:$0xf]
  %v1498 = vld [vmem:[%s1490 + $0x1c] sm:$0xf]
  %v1507 = vunpack.c.l.b16 %v1491
  %v1508 = vunpack.c.l.b16 %v1492
  %v1509 = vunpack.c.l.b16 %v1493
  %v1510 = vunpack.c.l.b16 %v1494
  %v1511 = vunpack.c.l.b16 %v1495
  %v1512 = vunpack.c.l.b16 %v1496
  %v1513 = vunpack.c.l.b16 %v1497
  %v1514 = vunpack.c.l.b16 %v1498
  %v1515 = vpack.c.b16 %v1508, %v1507
  %v1516 = vpack.c.b16 %v1510, %v1509
  %v1517 = vpack.c.b16 %v1512, %v1511
  %v1518 = vpack.c.b16 %v1514, %v1513
  %1519 = vrot.lane.b32.xlu0 %v1014, 124
  %v1520 = vpop.permute.xlu0 %1519
  %1521 = vrot.lane.b32.xlu0 %v1015, 124
  %v1522 = vpop.permute.xlu0 %1521
  %1523 = vrot.lane.b32.xlu0 %v1016, 124
  %v1524 = vpop.permute.xlu0 %1523
  %1525 = vrot.lane.b32.xlu0 %v1017, 124
  %v1526 = vpop.permute.xlu0 %1525
  %v1532 = vsel %vm1063, %v1515, 0
  %v1535 = vsel %vm1063, %v1516, 0
  %v1538 = vsel %vm1063, %v1517, 0
  %v1541 = vsel %vm1063, %v1518, 0
  %1543 = vmatprep.subr.bf16.mxu0 0
  %1544 = vmatpush1.bf16.msra.mxu0 %v1520
  %1545 = vmatprep.subr.bf16.mxu0 0
  %1546 = vmatpush1.bf16.msra.mxu0 %v1522
  %1547 = vmatprep.subr.bf16.mxu0 0
  %1548 = vmatpush1.bf16.msra.mxu0 %v1524
  %1549 = vmatprep.subr.bf16.mxu0 0
  %1550 = vmatpush1.bf16.msra.mxu0 %v1526
  %1551 = vmatprep.subr.bf16.mxu0 0
  %1552 = vmatpush1.bf16.msra.mxu0 0
  %1553 = vmatprep.subr.bf16.mxu0 0
  %1554 = vmatpush1.bf16.msra.mxu0 0
  %1555 = vmatprep.subr.bf16.mxu0 0
  %1556 = vmatpush1.bf16.msra.mxu0 0
  %1557 = vmatprep.subr.bf16.mxu0 0
  %1558 = vmatpush1.bf16.msra.mxu0 0
  %1559 = vmatprep.subr.bf16.mxu0 0
  %1560 = vmatpush1.bf16.msra.mxu0 0
  %1561 = vmatprep.subr.bf16.mxu0 0
  %1562 = vmatpush1.bf16.msra.mxu0 0
  %1563 = vmatprep.subr.bf16.mxu0 0
  %1564 = vmatpush1.bf16.msra.mxu0 0
  %1565 = vmatprep.subr.bf16.mxu0 0
  %1566 = vmatpush1.bf16.msra.mxu0 0
  %1567 = vmatprep.subr.bf16.mxu0 0
  %1568 = vmatpush1.bf16.msra.mxu0 0
  %1569 = vmatprep.subr.bf16.mxu0 0
  %1570 = vmatpush1.bf16.msra.mxu0 0
  %1571 = vmatprep.subr.bf16.mxu0 0
  %1572 = vmatpush1.bf16.msra.mxu0 0
  %1573 = vmatprep.subr.bf16.mxu0 0
  %1574 = vmatpush1.bf16.msra.mxu0 0
  %1575 = vmatprep.mubr.bf16.mxu0 0
  %1576 = vmatmul.mubr.bf16.gmra.mrb[0].mxu0 %v1532
  %v1577 = vpop.f32.mrb[0].mxu0
  %v1578 = vadd.f32 0.0, %v1577
  %v1579 = vpop.f32.mrb[0].mxu0
  %v1580 = vpop.f32.mrb[0].mxu0
  %v1581 = vadd.f32 0.0, %v1580
  %v1582 = vpop.f32.mrb[0].mxu0
  %1583 = vmatprep.mubr.bf16.mxu0 0
  %1584 = vmatmul.mubr.bf16.gmra.mrb[0].mxu0 %v1535
  %v1585 = vpop.f32.mrb[0].mxu0
  %v1586 = vadd.f32 0.0, %v1585
  %v1587 = vpop.f32.mrb[0].mxu0
  %v1588 = vpop.f32.mrb[0].mxu0
  %v1589 = vadd.f32 0.0, %v1588
  %v1590 = vpop.f32.mrb[0].mxu0
  %1591 = vmatprep.mubr.bf16.mxu0 0
  %1592 = vmatmul.mubr.bf16.gmra.mrb[0].mxu0 %v1538
  %v1593 = vpop.f32.mrb[0].mxu0
  %v1594 = vadd.f32 0.0, %v1593
  %v1595 = vpop.f32.mrb[0].mxu0
  %v1596 = vpop.f32.mrb[0].mxu0
  %v1597 = vadd.f32 0.0, %v1596
  %v1598 = vpop.f32.mrb[0].mxu0
  %1599 = vmatprep.mubr.bf16.mxu0 0
  %1600 = vmatmul.mubr.bf16.gmra.mrb[0].mxu0 %v1541
  %v1601 = vpop.f32.mrb[0].mxu0
  %v1602 = vadd.f32 0.0, %v1601
  %v1603 = vpop.f32.mrb[0].mxu0
  %v1604 = vpop.f32.mrb[0].mxu0
  %v1605 = vadd.f32 0.0, %v1604
  %v1606 = vpop.f32.mrb[0].mxu0
  %1607 = vdwg.mxu0
  %v1608 = vadd.f32 %v1482, %v1578
  %v1609 = vadd.f32 %v1483, %v1581
  %v1610 = vadd.f32 %v1484, %v1586
  %v1611 = vadd.f32 %v1485, %v1589
  %v1612 = vadd.f32 %v1486, %v1594
  %v1613 = vadd.f32 %v1487, %v1597
  %v1614 = vadd.f32 %v1488, %v1602
  %v1615 = vadd.f32 %v1489, %v1605
  %v1616 = vld [vmem:[%s4] sm:$0xff]
  %v1617 = vld [vmem:[%s4 + $0x8] sm:$0xff]
  %v1618 = vld [vmem:[%s4 + $0x10] sm:$0xff]
  %v1619 = vld [vmem:[%s4 + $0x18] sm:$0xff]
  %v1620 = vld [vmem:[%s4 + $0x20] sm:$0xff]
  %v1621 = vld [vmem:[%s4 + $0x28] sm:$0xff]
  %v1622 = vld [vmem:[%s4 + $0x30] sm:$0xff]
  %v1623 = vld [vmem:[%s4 + $0x38] sm:$0xff]
  %1625 = vset.pattern.permute.xlu0 0
  %1626 = vperm.xlu0 %1625, %v1616
  %v1627 = vpop.permute.xlu0 %1626
  %1630 = vset.pattern.permute.xlu0 0
  %1631 = vperm.xlu0 %1630, %v1617
  %v1632 = vpop.permute.xlu0 %1631
  %1635 = vset.pattern.permute.xlu0 0
  %1636 = vperm.xlu0 %1635, %v1618
  %v1637 = vpop.permute.xlu0 %1636
  %1640 = vset.pattern.permute.xlu0 0
  %1641 = vperm.xlu0 %1640, %v1619
  %v1642 = vpop.permute.xlu0 %1641
  %1645 = vset.pattern.permute.xlu0 0
  %1646 = vperm.xlu0 %1645, %v1620
  %v1647 = vpop.permute.xlu0 %1646
  %1650 = vset.pattern.permute.xlu0 0
  %1651 = vperm.xlu0 %1650, %v1621
  %v1652 = vpop.permute.xlu0 %1651
  %1655 = vset.pattern.permute.xlu0 0
  %1656 = vperm.xlu0 %1655, %v1622
  %v1657 = vpop.permute.xlu0 %1656
  %1660 = vset.pattern.permute.xlu0 0
  %1661 = vperm.xlu0 %1660, %v1623
  %v1662 = vpop.permute.xlu0 %1661
  %v1664 = vadd.f32 %v1608, %v1627
  %v1665 = vadd.f32 %v1609, %v1632
  %v1666 = vadd.f32 %v1610, %v1637
  %v1667 = vadd.f32 %v1611, %v1642
  %v1668 = vadd.f32 %v1612, %v1647
  %v1669 = vadd.f32 %v1613, %v1652
  %v1670 = vadd.f32 %v1614, %v1657
  %v1671 = vadd.f32 %v1615, %v1662
  %v1672 = vmax.f32 %v1664, 0.0
  %v1673 = vmax.f32 %v1665, 0.0
  %v1674 = vmax.f32 %v1666, 0.0
  %v1675 = vmax.f32 %v1667, 0.0
  %v1676 = vmax.f32 %v1668, 0.0
  %v1677 = vmax.f32 %v1669, 0.0
  %v1678 = vmax.f32 %v1670, 0.0
  %v1679 = vmax.f32 %v1671, 0.0
  %v1680 = vpack.c.bf16 %v1673, %v1672
  %v1681 = vpack.c.bf16 %v1675, %v1674
  %v1682 = vpack.c.bf16 %v1677, %v1676
  %v1683 = vpack.c.bf16 %v1679, %v1678
  %1688 = vrot.lane.b32.xlu0 %v1680, 2
  %v1689 = vpop.permute.xlu0 %1688
  %1690 = vrot.lane.b32.xlu0 %v1681, 2
  %v1691 = vpop.permute.xlu0 %1690
  %1692 = vrot.lane.b32.xlu0 %v1682, 2
  %v1693 = vpop.permute.xlu0 %1692
  %1694 = vrot.lane.b32.xlu0 %v1683, 2
  %v1695 = vpop.permute.xlu0 %1694
  %1700 = vst.msk [vmem:[#allocation3] sm:$0xff] %vm950, %v1689
  %1701 = vst.msk [vmem:[#allocation3 + $0x8] sm:$0xff] %vm950, %v1691
  %1702 = vst.msk [vmem:[#allocation3 + $0x10] sm:$0xff] %vm950, %v1693
  %1703 = vst.msk [vmem:[#allocation3 + $0x18] sm:$0xff] %vm950, %v1695
  %1704 = vst.msk [vmem:[#allocation3] sm:$0xff] %vm967, %v1689
  %1705 = vst.msk [vmem:[#allocation3 + $0x8] sm:$0xff] %vm967, %v1691
  %1706 = vst.msk [vmem:[#allocation3 + $0x10] sm:$0xff] %vm967, %v1693
  %1707 = vst.msk [vmem:[#allocation3 + $0x18] sm:$0xff] %vm967, %v1695
  %1708 = vst.msk [vmem:[#allocation3] sm:$0xff] %vm984, %v1689
  %1709 = vst.msk [vmem:[#allocation3 + $0x8] sm:$0xff] %vm984, %v1691
  %1710 = vst.msk [vmem:[#allocation3 + $0x10] sm:$0xff] %vm984, %v1693
  %1711 = vst.msk [vmem:[#allocation3 + $0x18] sm:$0xff] %vm984, %v1695
  %1712 = vst.msk [vmem:[#allocation3] sm:$0xff] %vm1001, %v1689
  %1713 = vst.msk [vmem:[#allocation3 + $0x8] sm:$0xff] %vm1001, %v1691
  %1714 = vst.msk [vmem:[#allocation3 + $0x10] sm:$0xff] %vm1001, %v1693
  %1715 = vst.msk [vmem:[#allocation3 + $0x18] sm:$0xff] %vm1001, %v1695
  %v1716 = vld [vmem:[%s5] sm:$0xf]
  %v1717 = vld [vmem:[%s5 + $0x4] sm:$0xf]
  %v1718 = vld [vmem:[%s5 + $0x8] sm:$0xf]
  %v1719 = vld [vmem:[%s5 + $0xc] sm:$0xf]
  %v1720 = vld [vmem:[%s5 + $0x10] sm:$0xf]
  %v1721 = vld [vmem:[%s5 + $0x14] sm:$0xf]
  %v1722 = vld [vmem:[%s5 + $0x18] sm:$0xf]
  %v1723 = vld [vmem:[%s5 + $0x1c] sm:$0xf]
  %v1724 = vld [vmem:[#allocation3] sm:$0xff]
  %v1725 = vld [vmem:[#allocation3 + $0x8] sm:$0xff]
  %v1726 = vld [vmem:[#allocation3 + $0x10] sm:$0xff]
  %v1727 = vld [vmem:[#allocation3 + $0x18] sm:$0xff]
  %s1728 = scalar_lea.vmem %s5, 32
  %v1729 = vld [vmem:[%s1728] sm:$0xf]
  %v1730 = vld [vmem:[%s1728 + $0x4] sm:$0xf]
  %v1731 = vld [vmem:[%s1728 + $0x8] sm:$0xf]
  %v1732 = vld [vmem:[%s1728 + $0xc] sm:$0xf]
  %v1733 = vld [vmem:[%s1728 + $0x10] sm:$0xf]
  %v1734 = vld [vmem:[%s1728 + $0x14] sm:$0xf]
  %v1735 = vld [vmem:[%s1728 + $0x18] sm:$0xf]
  %v1736 = vld [vmem:[%s1728 + $0x1c] sm:$0xf]
  %v1745 = vunpack.c.l.b16 %v1729
  %v1746 = vunpack.c.l.b16 %v1730
  %v1747 = vunpack.c.l.b16 %v1731
  %v1748 = vunpack.c.l.b16 %v1732
  %v1749 = vunpack.c.l.b16 %v1733
  %v1750 = vunpack.c.l.b16 %v1734
  %v1751 = vunpack.c.l.b16 %v1735
  %v1752 = vunpack.c.l.b16 %v1736
  %v1753 = vpack.c.b16 %v1746, %v1745
  %v1754 = vpack.c.b16 %v1748, %v1747
  %v1755 = vpack.c.b16 %v1750, %v1749
  %v1756 = vpack.c.b16 %v1752, %v1751
  %1761 = vrot.lane.b32.xlu0 %v1724, 127
  %v1762 = vpop.permute.xlu0 %1761
  %1763 = vrot.lane.b32.xlu0 %v1725, 127
  %v1764 = vpop.permute.xlu0 %1763
  %1765 = vrot.lane.b32.xlu0 %v1726, 127
  %v1766 = vpop.permute.xlu0 %1765
  %1767 = vrot.lane.b32.xlu0 %v1727, 127
  %v1768 = vpop.permute.xlu0 %1767
  %v1774 = vsel %vm1063, %v1753, 0
  %v1777 = vsel %vm1063, %v1754, 0
  %v1780 = vsel %vm1063, %v1755, 0
  %v1783 = vsel %vm1063, %v1756, 0
  %1785 = vmatprep.subr.bf16.mxu0 0
  %1786 = vmatpush1.bf16.msra.mxu0 %v1762
  %1787 = vmatprep.subr.bf16.mxu0 0
  %1788 = vmatpush1.bf16.msra.mxu0 %v1764
  %1789 = vmatprep.subr.bf16.mxu0 0
  %1790 = vmatpush1.bf16.msra.mxu0 %v1766
  %1791 = vmatprep.subr.bf16.mxu0 0
  %1792 = vmatpush1.bf16.msra.mxu0 %v1768
  %1793 = vmatprep.subr.bf16.mxu0 0
  %1794 = vmatpush1.bf16.msra.mxu0 0
  %1795 = vmatprep.subr.bf16.mxu0 0
  %1796 = vmatpush1.bf16.msra.mxu0 0
  %1797 = vmatprep.subr.bf16.mxu0 0
  %1798 = vmatpush1.bf16.msra.mxu0 0
  %1799 = vmatprep.subr.bf16.mxu0 0
  %1800 = vmatpush1.bf16.msra.mxu0 0
  %1801 = vmatprep.subr.bf16.mxu0 0
  %1802 = vmatpush1.bf16.msra.mxu0 0
  %1803 = vmatprep.subr.bf16.mxu0 0
  %1804 = vmatpush1.bf16.msra.mxu0 0
  %1805 = vmatprep.subr.bf16.mxu0 0
  %1806 = vmatpush1.bf16.msra.mxu0 0
  %1807 = vmatprep.subr.bf16.mxu0 0
  %1808 = vmatpush1.bf16.msra.mxu0 0
  %1809 = vmatprep.subr.bf16.mxu0 0
  %1810 = vmatpush1.bf16.msra.mxu0 0
  %1811 = vmatprep.subr.bf16.mxu0 0
  %1812 = vmatpush1.bf16.msra.mxu0 0
  %1813 = vmatprep.subr.bf16.mxu0 0
  %1814 = vmatpush1.bf16.msra.mxu0 0
  %1815 = vmatprep.subr.bf16.mxu0 0
  %1816 = vmatpush1.bf16.msra.mxu0 0
  %1817 = vmatprep.mubr.bf16.mxu0 0
  %1818 = vmatmul.mubr.bf16.gmra.mrb[0].mxu0 %v1774
  %v1819 = vpop.f32.mrb[0].mxu0
  %v1820 = vadd.f32 0.0, %v1819
  %v1821 = vpop.f32.mrb[0].mxu0
  %v1822 = vpop.f32.mrb[0].mxu0
  %v1823 = vadd.f32 0.0, %v1822
  %v1824 = vpop.f32.mrb[0].mxu0
  %1825 = vmatprep.mubr.bf16.mxu0 0
  %1826 = vmatmul.mubr.bf16.gmra.mrb[0].mxu0 %v1777
  %v1827 = vpop.f32.mrb[0].mxu0
  %v1828 = vadd.f32 0.0, %v1827
  %v1829 = vpop.f32.mrb[0].mxu0
  %v1830 = vpop.f32.mrb[0].mxu0
  %v1831 = vadd.f32 0.0, %v1830
  %v1832 = vpop.f32.mrb[0].mxu0
  %1833 = vmatprep.mubr.bf16.mxu0 0
  %1834 = vmatmul.mubr.bf16.gmra.mrb[0].mxu0 %v1780
  %v1835 = vpop.f32.mrb[0].mxu0
  %v1836 = vadd.f32 0.0, %v1835
  %v1837 = vpop.f32.mrb[0].mxu0
  %v1838 = vpop.f32.mrb[0].mxu0
  %v1839 = vadd.f32 0.0, %v1838
  %v1840 = vpop.f32.mrb[0].mxu0
  %1841 = vmatprep.mubr.bf16.mxu0 0
  %1842 = vmatmul.mubr.bf16.gmra.mrb[0].mxu0 %v1783
  %v1843 = vpop.f32.mrb[0].mxu0
  %v1844 = vadd.f32 0.0, %v1843
  %v1845 = vpop.f32.mrb[0].mxu0
  %v1846 = vpop.f32.mrb[0].mxu0
  %v1847 = vadd.f32 0.0, %v1846
  %v1848 = vpop.f32.mrb[0].mxu0
  %1849 = vdwg.mxu0
  %v1858 = vunpack.c.l.b16 %v1716
  %v1859 = vunpack.c.l.b16 %v1717
  %v1860 = vunpack.c.l.b16 %v1718
  %v1861 = vunpack.c.l.b16 %v1719
  %v1862 = vunpack.c.l.b16 %v1720
  %v1863 = vunpack.c.l.b16 %v1721
  %v1864 = vunpack.c.l.b16 %v1722
  %v1865 = vunpack.c.l.b16 %v1723
  %v1866 = vpack.c.b16 %v1859, %v1858
  %v1867 = vpack.c.b16 %v1861, %v1860
  %v1868 = vpack.c.b16 %v1863, %v1862
  %v1869 = vpack.c.b16 %v1865, %v1864
  %v1871 = vsel %vm1063, %v1866, 0
  %v1874 = vsel %vm1063, %v1867, 0
  %v1877 = vsel %vm1063, %v1868, 0
  %v1880 = vsel %vm1063, %v1869, 0
  %1882 = vmatprep.subr.bf16.mxu0 0
  %1883 = vmatpush1.bf16.msra.mxu0 %v1724
  %1884 = vmatprep.subr.bf16.mxu0 0
  %1885 = vmatpush1.bf16.msra.mxu0 %v1725
  %1886 = vmatprep.subr.bf16.mxu0 0
  %1887 = vmatpush1.bf16.msra.mxu0 %v1726
  %1888 = vmatprep.subr.bf16.mxu0 0
  %1889 = vmatpush1.bf16.msra.mxu0 %v1727
  %1890 = vmatprep.subr.bf16.mxu0 0
  %1891 = vmatpush1.bf16.msra.mxu0 0
  %1892 = vmatprep.subr.bf16.mxu0 0
  %1893 = vmatpush1.bf16.msra.mxu0 0
  %1894 = vmatprep.subr.bf16.mxu0 0
  %1895 = vmatpush1.bf16.msra.mxu0 0
  %1896 = vmatprep.subr.bf16.mxu0 0
  %1897 = vmatpush1.bf16.msra.mxu0 0
  %1898 = vmatprep.subr.bf16.mxu0 0
  %1899 = vmatpush1.bf16.msra.mxu0 0
  %1900 = vmatprep.subr.bf16.mxu0 0
  %1901 = vmatpush1.bf16.msra.mxu0 0
  %1902 = vmatprep.subr.bf16.mxu0 0
  %1903 = vmatpush1.bf16.msra.mxu0 0
  %1904 = vmatprep.subr.bf16.mxu0 0
  %1905 = vmatpush1.bf16.msra.mxu0 0
  %1906 = vmatprep.subr.bf16.mxu0 0
  %1907 = vmatpush1.bf16.msra.mxu0 0
  %1908 = vmatprep.subr.bf16.mxu0 0
  %1909 = vmatpush1.bf16.msra.mxu0 0
  %1910 = vmatprep.subr.bf16.mxu0 0
  %1911 = vmatpush1.bf16.msra.mxu0 0
  %1912 = vmatprep.subr.bf16.mxu0 0
  %1913 = vmatpush1.bf16.msra.mxu0 0
  %1914 = vmatprep.mubr.bf16.mxu0 0
  %1915 = vmatmul.mubr.bf16.gmra.mrb[0].mxu0 %v1871
  %v1916 = vpop.f32.mrb[0].mxu0
  %v1917 = vadd.f32 %v1820, %v1916
  %v1918 = vpop.f32.mrb[0].mxu0
  %v1919 = vpop.f32.mrb[0].mxu0
  %v1920 = vadd.f32 %v1823, %v1919
  %v1921 = vpop.f32.mrb[0].mxu0
  %1922 = vmatprep.mubr.bf16.mxu0 0
  %1923 = vmatmul.mubr.bf16.gmra.mrb[0].mxu0 %v1874
  %v1924 = vpop.f32.mrb[0].mxu0
  %v1925 = vadd.f32 %v1828, %v1924
  %v1926 = vpop.f32.mrb[0].mxu0
  %v1927 = vpop.f32.mrb[0].mxu0
  %v1928 = vadd.f32 %v1831, %v1927
  %v1929 = vpop.f32.mrb[0].mxu0
  %1930 = vmatprep.mubr.bf16.mxu0 0
  %1931 = vmatmul.mubr.bf16.gmra.mrb[0].mxu0 %v1877
  %v1932 = vpop.f32.mrb[0].mxu0
  %v1933 = vadd.f32 %v1836, %v1932
  %v1934 = vpop.f32.mrb[0].mxu0
  %v1935 = vpop.f32.mrb[0].mxu0
  %v1936 = vadd.f32 %v1839, %v1935
  %v1937 = vpop.f32.mrb[0].mxu0
  %1938 = vmatprep.mubr.bf16.mxu0 0
  %1939 = vmatmul.mubr.bf16.gmra.mrb[0].mxu0 %v1880
  %v1940 = vpop.f32.mrb[0].mxu0
  %v1941 = vadd.f32 %v1844, %v1940
  %v1942 = vpop.f32.mrb[0].mxu0
  %v1943 = vpop.f32.mrb[0].mxu0
  %v1944 = vadd.f32 %v1847, %v1943
  %v1945 = vpop.f32.mrb[0].mxu0
  %1946 = vdwg.mxu0
  %s1947 = scalar_lea.vmem %s5, 64
  %v1948 = vld [vmem:[%s1947] sm:$0xf]
  %v1949 = vld [vmem:[%s1947 + $0x4] sm:$0xf]
  %v1950 = vld [vmem:[%s1947 + $0x8] sm:$0xf]
  %v1951 = vld [vmem:[%s1947 + $0xc] sm:$0xf]
  %v1952 = vld [vmem:[%s1947 + $0x10] sm:$0xf]
  %v1953 = vld [vmem:[%s1947 + $0x14] sm:$0xf]
  %v1954 = vld [vmem:[%s1947 + $0x18] sm:$0xf]
  %v1955 = vld [vmem:[%s1947 + $0x1c] sm:$0xf]
  %v1964 = vunpack.c.l.b16 %v1948
  %v1965 = vunpack.c.l.b16 %v1949
  %v1966 = vunpack.c.l.b16 %v1950
  %v1967 = vunpack.c.l.b16 %v1951
  %v1968 = vunpack.c.l.b16 %v1952
  %v1969 = vunpack.c.l.b16 %v1953
  %v1970 = vunpack.c.l.b16 %v1954
  %v1971 = vunpack.c.l.b16 %v1955
  %v1972 = vpack.c.b16 %v1965, %v1964
  %v1973 = vpack.c.b16 %v1967, %v1966
  %v1974 = vpack.c.b16 %v1969, %v1968
  %v1975 = vpack.c.b16 %v1971, %v1970
  %1976 = vrot.lane.b32.xlu0 %v1724, 126
  %v1977 = vpop.permute.xlu0 %1976
  %1978 = vrot.lane.b32.xlu0 %v1725, 126
  %v1979 = vpop.permute.xlu0 %1978
  %1980 = vrot.lane.b32.xlu0 %v1726, 126
  %v1981 = vpop.permute.xlu0 %1980
  %1982 = vrot.lane.b32.xlu0 %v1727, 126
  %v1983 = vpop.permute.xlu0 %1982
  %v1989 = vsel %vm1063, %v1972, 0
  %v1992 = vsel %vm1063, %v1973, 0
  %v1995 = vsel %vm1063, %v1974, 0
  %v1998 = vsel %vm1063, %v1975, 0
  %2000 = vmatprep.subr.bf16.mxu0 0
  %2001 = vmatpush1.bf16.msra.mxu0 %v1977
  %2002 = vmatprep.subr.bf16.mxu0 0
  %2003 = vmatpush1.bf16.msra.mxu0 %v1979
  %2004 = vmatprep.subr.bf16.mxu0 0
  %2005 = vmatpush1.bf16.msra.mxu0 %v1981
  %2006 = vmatprep.subr.bf16.mxu0 0
  %2007 = vmatpush1.bf16.msra.mxu0 %v1983
  %2008 = vmatprep.subr.bf16.mxu0 0
  %2009 = vmatpush1.bf16.msra.mxu0 0
  %2010 = vmatprep.subr.bf16.mxu0 0
  %2011 = vmatpush1.bf16.msra.mxu0 0
  %2012 = vmatprep.subr.bf16.mxu0 0
  %2013 = vmatpush1.bf16.msra.mxu0 0
  %2014 = vmatprep.subr.bf16.mxu0 0
  %2015 = vmatpush1.bf16.msra.mxu0 0
  %2016 = vmatprep.subr.bf16.mxu0 0
  %2017 = vmatpush1.bf16.msra.mxu0 0
  %2018 = vmatprep.subr.bf16.mxu0 0
  %2019 = vmatpush1.bf16.msra.mxu0 0
  %2020 = vmatprep.subr.bf16.mxu0 0
  %2021 = vmatpush1.bf16.msra.mxu0 0
  %2022 = vmatprep.subr.bf16.mxu0 0
  %2023 = vmatpush1.bf16.msra.mxu0 0
  %2024 = vmatprep.subr.bf16.mxu0 0
  %2025 = vmatpush1.bf16.msra.mxu0 0
  %2026 = vmatprep.subr.bf16.mxu0 0
  %2027 = vmatpush1.bf16.msra.mxu0 0
  %2028 = vmatprep.subr.bf16.mxu0 0
  %2029 = vmatpush1.bf16.msra.mxu0 0
  %2030 = vmatprep.subr.bf16.mxu0 0
  %2031 = vmatpush1.bf16.msra.mxu0 0
  %2032 = vmatprep.mubr.bf16.mxu0 0
  %2033 = vmatmul.mubr.bf16.gmra.mrb[0].mxu0 %v1989
  %v2034 = vpop.f32.mrb[0].mxu0
  %v2035 = vadd.f32 0.0, %v2034
  %v2036 = vpop.f32.mrb[0].mxu0
  %v2037 = vpop.f32.mrb[0].mxu0
  %v2038 = vadd.f32 0.0, %v2037
  %v2039 = vpop.f32.mrb[0].mxu0
  %2040 = vmatprep.mubr.bf16.mxu0 0
  %2041 = vmatmul.mubr.bf16.gmra.mrb[0].mxu0 %v1992
  %v2042 = vpop.f32.mrb[0].mxu0
  %v2043 = vadd.f32 0.0, %v2042
  %v2044 = vpop.f32.mrb[0].mxu0
  %v2045 = vpop.f32.mrb[0].mxu0
  %v2046 = vadd.f32 0.0, %v2045
  %v2047 = vpop.f32.mrb[0].mxu0
  %2048 = vmatprep.mubr.bf16.mxu0 0
  %2049 = vmatmul.mubr.bf16.gmra.mrb[0].mxu0 %v1995
  %v2050 = vpop.f32.mrb[0].mxu0
  %v2051 = vadd.f32 0.0, %v2050
  %v2052 = vpop.f32.mrb[0].mxu0
  %v2053 = vpop.f32.mrb[0].mxu0
  %v2054 = vadd.f32 0.0, %v2053
  %v2055 = vpop.f32.mrb[0].mxu0
  %2056 = vmatprep.mubr.bf16.mxu0 0
  %2057 = vmatmul.mubr.bf16.gmra.mrb[0].mxu0 %v1998
  %v2058 = vpop.f32.mrb[0].mxu0
  %v2059 = vadd.f32 0.0, %v2058
  %v2060 = vpop.f32.mrb[0].mxu0
  %v2061 = vpop.f32.mrb[0].mxu0
  %v2062 = vadd.f32 0.0, %v2061
  %v2063 = vpop.f32.mrb[0].mxu0
  %2064 = vdwg.mxu0
  %v2065 = vadd.f32 %v1917, %v2035
  %v2066 = vadd.f32 %v1920, %v2038
  %v2067 = vadd.f32 %v1925, %v2043
  %v2068 = vadd.f32 %v1928, %v2046
  %v2069 = vadd.f32 %v1933, %v2051
  %v2070 = vadd.f32 %v1936, %v2054
  %v2071 = vadd.f32 %v1941, %v2059
  %v2072 = vadd.f32 %v1944, %v2062
  %s2073 = scalar_lea.vmem %s5, 96
  %v2074 = vld [vmem:[%s2073] sm:$0xf]
  %v2075 = vld [vmem:[%s2073 + $0x4] sm:$0xf]
  %v2076 = vld [vmem:[%s2073 + $0x8] sm:$0xf]
  %v2077 = vld [vmem:[%s2073 + $0xc] sm:$0xf]
  %v2078 = vld [vmem:[%s2073 + $0x10] sm:$0xf]
  %v2079 = vld [vmem:[%s2073 + $0x14] sm:$0xf]
  %v2080 = vld [vmem:[%s2073 + $0x18] sm:$0xf]
  %v2081 = vld [vmem:[%s2073 + $0x1c] sm:$0xf]
  %v2090 = vunpack.c.l.b16 %v2074
  %v2091 = vunpack.c.l.b16 %v2075
  %v2092 = vunpack.c.l.b16 %v2076
  %v2093 = vunpack.c.l.b16 %v2077
  %v2094 = vunpack.c.l.b16 %v2078
  %v2095 = vunpack.c.l.b16 %v2079
  %v2096 = vunpack.c.l.b16 %v2080
  %v2097 = vunpack.c.l.b16 %v2081
  %v2098 = vpack.c.b16 %v2091, %v2090
  %v2099 = vpack.c.b16 %v2093, %v2092
  %v2100 = vpack.c.b16 %v2095, %v2094
  %v2101 = vpack.c.b16 %v2097, %v2096
  %2102 = vrot.lane.b32.xlu0 %v1724, 125
  %v2103 = vpop.permute.xlu0 %2102
  %2104 = vrot.lane.b32.xlu0 %v1725, 125
  %v2105 = vpop.permute.xlu0 %2104
  %2106 = vrot.lane.b32.xlu0 %v1726, 125
  %v2107 = vpop.permute.xlu0 %2106
  %2108 = vrot.lane.b32.xlu0 %v1727, 125
  %v2109 = vpop.permute.xlu0 %2108
  %v2115 = vsel %vm1063, %v2098, 0
  %v2118 = vsel %vm1063, %v2099, 0
  %v2121 = vsel %vm1063, %v2100, 0
  %v2124 = vsel %vm1063, %v2101, 0
  %2126 = vmatprep.subr.bf16.mxu0 0
  %2127 = vmatpush1.bf16.msra.mxu0 %v2103
  %2128 = vmatprep.subr.bf16.mxu0 0
  %2129 = vmatpush1.bf16.msra.mxu0 %v2105
  %2130 = vmatprep.subr.bf16.mxu0 0
  %2131 = vmatpush1.bf16.msra.mxu0 %v2107
  %2132 = vmatprep.subr.bf16.mxu0 0
  %2133 = vmatpush1.bf16.msra.mxu0 %v2109
  %2134 = vmatprep.subr.bf16.mxu0 0
  %2135 = vmatpush1.bf16.msra.mxu0 0
  %2136 = vmatprep.subr.bf16.mxu0 0
  %2137 = vmatpush1.bf16.msra.mxu0 0
  %2138 = vmatprep.subr.bf16.mxu0 0
  %2139 = vmatpush1.bf16.msra.mxu0 0
  %2140 = vmatprep.subr.bf16.mxu0 0
  %2141 = vmatpush1.bf16.msra.mxu0 0
  %2142 = vmatprep.subr.bf16.mxu0 0
  %2143 = vmatpush1.bf16.msra.mxu0 0
  %2144 = vmatprep.subr.bf16.mxu0 0
  %2145 = vmatpush1.bf16.msra.mxu0 0
  %2146 = vmatprep.subr.bf16.mxu0 0
  %2147 = vmatpush1.bf16.msra.mxu0 0
  %2148 = vmatprep.subr.bf16.mxu0 0
  %2149 = vmatpush1.bf16.msra.mxu0 0
  %2150 = vmatprep.subr.bf16.mxu0 0
  %2151 = vmatpush1.bf16.msra.mxu0 0
  %2152 = vmatprep.subr.bf16.mxu0 0
  %2153 = vmatpush1.bf16.msra.mxu0 0
  %2154 = vmatprep.subr.bf16.mxu0 0
  %2155 = vmatpush1.bf16.msra.mxu0 0
  %2156 = vmatprep.subr.bf16.mxu0 0
  %2157 = vmatpush1.bf16.msra.mxu0 0
  %2158 = vmatprep.mubr.bf16.mxu0 0
  %2159 = vmatmul.mubr.bf16.gmra.mrb[0].mxu0 %v2115
  %v2160 = vpop.f32.mrb[0].mxu0
  %v2161 = vadd.f32 0.0, %v2160
  %v2162 = vpop.f32.mrb[0].mxu0
  %v2163 = vpop.f32.mrb[0].mxu0
  %v2164 = vadd.f32 0.0, %v2163
  %v2165 = vpop.f32.mrb[0].mxu0
  %2166 = vmatprep.mubr.bf16.mxu0 0
  %2167 = vmatmul.mubr.bf16.gmra.mrb[0].mxu0 %v2118
  %v2168 = vpop.f32.mrb[0].mxu0
  %v2169 = vadd.f32 0.0, %v2168
  %v2170 = vpop.f32.mrb[0].mxu0
  %v2171 = vpop.f32.mrb[0].mxu0
  %v2172 = vadd.f32 0.0, %v2171
  %v2173 = vpop.f32.mrb[0].mxu0
  %2174 = vmatprep.mubr.bf16.mxu0 0
  %2175 = vmatmul.mubr.bf16.gmra.mrb[0].mxu0 %v2121
  %v2176 = vpop.f32.mrb[0].mxu0
  %v2177 = vadd.f32 0.0, %v2176
  %v2178 = vpop.f32.mrb[0].mxu0
  %v2179 = vpop.f32.mrb[0].mxu0
  %v2180 = vadd.f32 0.0, %v2179
  %v2181 = vpop.f32.mrb[0].mxu0
  %2182 = vmatprep.mubr.bf16.mxu0 0
  %2183 = vmatmul.mubr.bf16.gmra.mrb[0].mxu0 %v2124
  %v2184 = vpop.f32.mrb[0].mxu0
  %v2185 = vadd.f32 0.0, %v2184
  %v2186 = vpop.f32.mrb[0].mxu0
  %v2187 = vpop.f32.mrb[0].mxu0
  %v2188 = vadd.f32 0.0, %v2187
  %v2189 = vpop.f32.mrb[0].mxu0
  %2190 = vdwg.mxu0
  %v2191 = vadd.f32 %v2065, %v2161
  %v2192 = vadd.f32 %v2066, %v2164
  %v2193 = vadd.f32 %v2067, %v2169
  %v2194 = vadd.f32 %v2068, %v2172
  %v2195 = vadd.f32 %v2069, %v2177
  %v2196 = vadd.f32 %v2070, %v2180
  %v2197 = vadd.f32 %v2071, %v2185
  %v2198 = vadd.f32 %v2072, %v2188
  %s2199 = scalar_lea.vmem %s5, 128
  %v2200 = vld [vmem:[%s2199] sm:$0xf]
  %v2201 = vld [vmem:[%s2199 + $0x4] sm:$0xf]
  %v2202 = vld [vmem:[%s2199 + $0x8] sm:$0xf]
  %v2203 = vld [vmem:[%s2199 + $0xc] sm:$0xf]
  %v2204 = vld [vmem:[%s2199 + $0x10] sm:$0xf]
  %v2205 = vld [vmem:[%s2199 + $0x14] sm:$0xf]
  %v2206 = vld [vmem:[%s2199 + $0x18] sm:$0xf]
  %v2207 = vld [vmem:[%s2199 + $0x1c] sm:$0xf]
  %v2216 = vunpack.c.l.b16 %v2200
  %v2217 = vunpack.c.l.b16 %v2201
  %v2218 = vunpack.c.l.b16 %v2202
  %v2219 = vunpack.c.l.b16 %v2203
  %v2220 = vunpack.c.l.b16 %v2204
  %v2221 = vunpack.c.l.b16 %v2205
  %v2222 = vunpack.c.l.b16 %v2206
  %v2223 = vunpack.c.l.b16 %v2207
  %v2224 = vpack.c.b16 %v2217, %v2216
  %v2225 = vpack.c.b16 %v2219, %v2218
  %v2226 = vpack.c.b16 %v2221, %v2220
  %v2227 = vpack.c.b16 %v2223, %v2222
  %2228 = vrot.lane.b32.xlu0 %v1724, 124
  %v2229 = vpop.permute.xlu0 %2228
  %2230 = vrot.lane.b32.xlu0 %v1725, 124
  %v2231 = vpop.permute.xlu0 %2230
  %2232 = vrot.lane.b32.xlu0 %v1726, 124
  %v2233 = vpop.permute.xlu0 %2232
  %2234 = vrot.lane.b32.xlu0 %v1727, 124
  %v2235 = vpop.permute.xlu0 %2234
  %v2241 = vsel %vm1063, %v2224, 0
  %v2244 = vsel %vm1063, %v2225, 0
  %v2247 = vsel %vm1063, %v2226, 0
  %v2250 = vsel %vm1063, %v2227, 0
  %2252 = vmatprep.subr.bf16.mxu0 0
  %2253 = vmatpush1.bf16.msra.mxu0 %v2229
  %2254 = vmatprep.subr.bf16.mxu0 0
  %2255 = vmatpush1.bf16.msra.mxu0 %v2231
  %2256 = vmatprep.subr.bf16.mxu0 0
  %2257 = vmatpush1.bf16.msra.mxu0 %v2233
  %2258 = vmatprep.subr.bf16.mxu0 0
  %2259 = vmatpush1.bf16.msra.mxu0 %v2235
  %2260 = vmatprep.subr.bf16.mxu0 0
  %2261 = vmatpush1.bf16.msra.mxu0 0
  %2262 = vmatprep.subr.bf16.mxu0 0
  %2263 = vmatpush1.bf16.msra.mxu0 0
  %2264 = vmatprep.subr.bf16.mxu0 0
  %2265 = vmatpush1.bf16.msra.mxu0 0
  %2266 = vmatprep.subr.bf16.mxu0 0
  %2267 = vmatpush1.bf16.msra.mxu0 0
  %2268 = vmatprep.subr.bf16.mxu0 0
  %2269 = vmatpush1.bf16.msra.mxu0 0
  %2270 = vmatprep.subr.bf16.mxu0 0
  %2271 = vmatpush1.bf16.msra.mxu0 0
  %2272 = vmatprep.subr.bf16.mxu0 0
  %2273 = vmatpush1.bf16.msra.mxu0 0
  %2274 = vmatprep.subr.bf16.mxu0 0
  %2275 = vmatpush1.bf16.msra.mxu0 0
  %2276 = vmatprep.subr.bf16.mxu0 0
  %2277 = vmatpush1.bf16.msra.mxu0 0
  %2278 = vmatprep.subr.bf16.mxu0 0
  %2279 = vmatpush1.bf16.msra.mxu0 0
  %2280 = vmatprep.subr.bf16.mxu0 0
  %2281 = vmatpush1.bf16.msra.mxu0 0
  %2282 = vmatprep.subr.bf16.mxu0 0
  %2283 = vmatpush1.bf16.msra.mxu0 0
  %2284 = vmatprep.mubr.bf16.mxu0 0
  %2285 = vmatmul.mubr.bf16.gmra.mrb[0].mxu0 %v2241
  %v2286 = vpop.f32.mrb[0].mxu0
  %v2287 = vadd.f32 0.0, %v2286
  %v2288 = vpop.f32.mrb[0].mxu0
  %v2289 = vpop.f32.mrb[0].mxu0
  %v2290 = vadd.f32 0.0, %v2289
  %v2291 = vpop.f32.mrb[0].mxu0
  %2292 = vmatprep.mubr.bf16.mxu0 0
  %2293 = vmatmul.mubr.bf16.gmra.mrb[0].mxu0 %v2244
  %v2294 = vpop.f32.mrb[0].mxu0
  %v2295 = vadd.f32 0.0, %v2294
  %v2296 = vpop.f32.mrb[0].mxu0
  %v2297 = vpop.f32.mrb[0].mxu0
  %v2298 = vadd.f32 0.0, %v2297
  %v2299 = vpop.f32.mrb[0].mxu0
  %2300 = vmatprep.mubr.bf16.mxu0 0
  %2301 = vmatmul.mubr.bf16.gmra.mrb[0].mxu0 %v2247
  %v2302 = vpop.f32.mrb[0].mxu0
  %v2303 = vadd.f32 0.0, %v2302
  %v2304 = vpop.f32.mrb[0].mxu0
  %v2305 = vpop.f32.mrb[0].mxu0
  %v2306 = vadd.f32 0.0, %v2305
  %v2307 = vpop.f32.mrb[0].mxu0
  %2308 = vmatprep.mubr.bf16.mxu0 0
  %2309 = vmatmul.mubr.bf16.gmra.mrb[0].mxu0 %v2250
  %v2310 = vpop.f32.mrb[0].mxu0
  %v2311 = vadd.f32 0.0, %v2310
  %v2312 = vpop.f32.mrb[0].mxu0
  %v2313 = vpop.f32.mrb[0].mxu0
  %v2314 = vadd.f32 0.0, %v2313
  %v2315 = vpop.f32.mrb[0].mxu0
  %2316 = vdwg.mxu0
  %v2317 = vadd.f32 %v2191, %v2287
  %v2318 = vadd.f32 %v2192, %v2290
  %v2319 = vadd.f32 %v2193, %v2295
  %v2320 = vadd.f32 %v2194, %v2298
  %v2321 = vadd.f32 %v2195, %v2303
  %v2322 = vadd.f32 %v2196, %v2306
  %v2323 = vadd.f32 %v2197, %v2311
  %v2324 = vadd.f32 %v2198, %v2314
  %v2325 = vld [vmem:[%s6] sm:$0xff]
  %v2326 = vld [vmem:[%s6 + $0x8] sm:$0xff]
  %v2327 = vld [vmem:[%s6 + $0x10] sm:$0xff]
  %v2328 = vld [vmem:[%s6 + $0x18] sm:$0xff]
  %v2329 = vld [vmem:[%s6 + $0x20] sm:$0xff]
  %v2330 = vld [vmem:[%s6 + $0x28] sm:$0xff]
  %v2331 = vld [vmem:[%s6 + $0x30] sm:$0xff]
  %v2332 = vld [vmem:[%s6 + $0x38] sm:$0xff]
  %2334 = vset.pattern.permute.xlu0 0
  %2335 = vperm.xlu0 %2334, %v2325
  %v2336 = vpop.permute.xlu0 %2335
  %2339 = vset.pattern.permute.xlu0 0
  %2340 = vperm.xlu0 %2339, %v2326
  %v2341 = vpop.permute.xlu0 %2340
  %2344 = vset.pattern.permute.xlu0 0
  %2345 = vperm.xlu0 %2344, %v2327
  %v2346 = vpop.permute.xlu0 %2345
  %2349 = vset.pattern.permute.xlu0 0
  %2350 = vperm.xlu0 %2349, %v2328
  %v2351 = vpop.permute.xlu0 %2350
  %2354 = vset.pattern.permute.xlu0 0
  %2355 = vperm.xlu0 %2354, %v2329
  %v2356 = vpop.permute.xlu0 %2355
  %2359 = vset.pattern.permute.xlu0 0
  %2360 = vperm.xlu0 %2359, %v2330
  %v2361 = vpop.permute.xlu0 %2360
  %2364 = vset.pattern.permute.xlu0 0
  %2365 = vperm.xlu0 %2364, %v2331
  %v2366 = vpop.permute.xlu0 %2365
  %2369 = vset.pattern.permute.xlu0 0
  %2370 = vperm.xlu0 %2369, %v2332
  %v2371 = vpop.permute.xlu0 %2370
  %v2373 = vadd.f32 %v2317, %v2336
  %v2374 = vadd.f32 %v2318, %v2341
  %v2375 = vadd.f32 %v2319, %v2346
  %v2376 = vadd.f32 %v2320, %v2351
  %v2377 = vadd.f32 %v2321, %v2356
  %v2378 = vadd.f32 %v2322, %v2361
  %v2379 = vadd.f32 %v2323, %v2366
  %v2380 = vadd.f32 %v2324, %v2371
  %v2381 = vmax.f32 %v2373, 0.0
  %v2382 = vmax.f32 %v2374, 0.0
  %v2383 = vmax.f32 %v2375, 0.0
  %v2384 = vmax.f32 %v2376, 0.0
  %v2385 = vmax.f32 %v2377, 0.0
  %v2386 = vmax.f32 %v2378, 0.0
  %v2387 = vmax.f32 %v2379, 0.0
  %v2388 = vmax.f32 %v2380, 0.0
  %v2389 = vpack.c.bf16 %v2382, %v2381
  %v2390 = vpack.c.bf16 %v2384, %v2383
  %v2391 = vpack.c.bf16 %v2386, %v2385
  %v2392 = vpack.c.bf16 %v2388, %v2387
  %2397 = vrot.lane.b32.xlu0 %v2389, 2
  %v2398 = vpop.permute.xlu0 %2397
  %2399 = vrot.lane.b32.xlu0 %v2390, 2
  %v2400 = vpop.permute.xlu0 %2399
  %2401 = vrot.lane.b32.xlu0 %v2391, 2
  %v2402 = vpop.permute.xlu0 %2401
  %2403 = vrot.lane.b32.xlu0 %v2392, 2
  %v2404 = vpop.permute.xlu0 %2403
  %2409 = vst.msk [vmem:[#allocation3] sm:$0xff] %vm950, %v2398
  %2410 = vst.msk [vmem:[#allocation3 + $0x8] sm:$0xff] %vm950, %v2400
  %2411 = vst.msk [vmem:[#allocation3 + $0x10] sm:$0xff] %vm950, %v2402
  %2412 = vst.msk [vmem:[#allocation3 + $0x18] sm:$0xff] %vm950, %v2404
  %2413 = vst.msk [vmem:[#allocation3] sm:$0xff] %vm967, %v2398
  %2414 = vst.msk [vmem:[#allocation3 + $0x8] sm:$0xff] %vm967, %v2400
  %2415 = vst.msk [vmem:[#allocation3 + $0x10] sm:$0xff] %vm967, %v2402
  %2416 = vst.msk [vmem:[#allocation3 + $0x18] sm:$0xff] %vm967, %v2404
  %2417 = vst.msk [vmem:[#allocation3] sm:$0xff] %vm984, %v2398
  %2418 = vst.msk [vmem:[#allocation3 + $0x8] sm:$0xff] %vm984, %v2400
  %2419 = vst.msk [vmem:[#allocation3 + $0x10] sm:$0xff] %vm984, %v2402
  %2420 = vst.msk [vmem:[#allocation3 + $0x18] sm:$0xff] %vm984, %v2404
  %2421 = vst.msk [vmem:[#allocation3] sm:$0xff] %vm1001, %v2398
  %2422 = vst.msk [vmem:[#allocation3 + $0x8] sm:$0xff] %vm1001, %v2400
  %2423 = vst.msk [vmem:[#allocation3 + $0x10] sm:$0xff] %vm1001, %v2402
  %2424 = vst.msk [vmem:[#allocation3 + $0x18] sm:$0xff] %vm1001, %v2404
  %v2425 = vld [vmem:[%s7] sm:$0xf]
  %v2426 = vld [vmem:[%s7 + $0x4] sm:$0xf]
  %v2427 = vld [vmem:[%s7 + $0x8] sm:$0xf]
  %v2428 = vld [vmem:[%s7 + $0xc] sm:$0xf]
  %v2429 = vld [vmem:[%s7 + $0x10] sm:$0xf]
  %v2430 = vld [vmem:[%s7 + $0x14] sm:$0xf]
  %v2431 = vld [vmem:[%s7 + $0x18] sm:$0xf]
  %v2432 = vld [vmem:[%s7 + $0x1c] sm:$0xf]
  %v2433 = vld [vmem:[#allocation3] sm:$0xff]
  %v2434 = vld [vmem:[#allocation3 + $0x8] sm:$0xff]
  %v2435 = vld [vmem:[#allocation3 + $0x10] sm:$0xff]
  %v2436 = vld [vmem:[#allocation3 + $0x18] sm:$0xff]
  %s2437 = scalar_lea.vmem %s7, 32
  %v2438 = vld [vmem:[%s2437] sm:$0xf]
  %v2439 = vld [vmem:[%s2437 + $0x4] sm:$0xf]
  %v2440 = vld [vmem:[%s2437 + $0x8] sm:$0xf]
  %v2441 = vld [vmem:[%s2437 + $0xc] sm:$0xf]
  %v2442 = vld [vmem:[%s2437 + $0x10] sm:$0xf]
  %v2443 = vld [vmem:[%s2437 + $0x14] sm:$0xf]
  %v2444 = vld [vmem:[%s2437 + $0x18] sm:$0xf]
  %v2445 = vld [vmem:[%s2437 + $0x1c] sm:$0xf]
  %v2454 = vunpack.c.l.b16 %v2438
  %v2455 = vunpack.c.l.b16 %v2439
  %v2456 = vunpack.c.l.b16 %v2440
  %v2457 = vunpack.c.l.b16 %v2441
  %v2458 = vunpack.c.l.b16 %v2442
  %v2459 = vunpack.c.l.b16 %v2443
  %v2460 = vunpack.c.l.b16 %v2444
  %v2461 = vunpack.c.l.b16 %v2445
  %v2462 = vpack.c.b16 %v2455, %v2454
  %v2463 = vpack.c.b16 %v2457, %v2456
  %v2464 = vpack.c.b16 %v2459, %v2458
  %v2465 = vpack.c.b16 %v2461, %v2460
  %2470 = vrot.lane.b32.xlu0 %v2433, 127
  %v2471 = vpop.permute.xlu0 %2470
  %2472 = vrot.lane.b32.xlu0 %v2434, 127
  %v2473 = vpop.permute.xlu0 %2472
  %2474 = vrot.lane.b32.xlu0 %v2435, 127
  %v2475 = vpop.permute.xlu0 %2474
  %2476 = vrot.lane.b32.xlu0 %v2436, 127
  %v2477 = vpop.permute.xlu0 %2476
  %v2483 = vsel %vm1063, %v2462, 0
  %v2486 = vsel %vm1063, %v2463, 0
  %v2489 = vsel %vm1063, %v2464, 0
  %v2492 = vsel %vm1063, %v2465, 0
  %2494 = vmatprep.subr.bf16.mxu0 0
  %2495 = vmatpush1.bf16.msra.mxu0 %v2471
  %2496 = vmatprep.subr.bf16.mxu0 0
  %2497 = vmatpush1.bf16.msra.mxu0 %v2473
  %2498 = vmatprep.subr.bf16.mxu0 0
  %2499 = vmatpush1.bf16.msra.mxu0 %v2475
  %2500 = vmatprep.subr.bf16.mxu0 0
  %2501 = vmatpush1.bf16.msra.mxu0 %v2477
  %2502 = vmatprep.subr.bf16.mxu0 0
  %2503 = vmatpush1.bf16.msra.mxu0 0
  %2504 = vmatprep.subr.bf16.mxu0 0
  %2505 = vmatpush1.bf16.msra.mxu0 0
  %2506 = vmatprep.subr.bf16.mxu0 0
  %2507 = vmatpush1.bf16.msra.mxu0 0
  %2508 = vmatprep.subr.bf16.mxu0 0
  %2509 = vmatpush1.bf16.msra.mxu0 0
  %2510 = vmatprep.subr.bf16.mxu0 0
  %2511 = vmatpush1.bf16.msra.mxu0 0
  %2512 = vmatprep.subr.bf16.mxu0 0
  %2513 = vmatpush1.bf16.msra.mxu0 0
  %2514 = vmatprep.subr.bf16.mxu0 0
  %2515 = vmatpush1.bf16.msra.mxu0 0
  %2516 = vmatprep.subr.bf16.mxu0 0
  %2517 = vmatpush1.bf16.msra.mxu0 0
  %2518 = vmatprep.subr.bf16.mxu0 0
  %2519 = vmatpush1.bf16.msra.mxu0 0
  %2520 = vmatprep.subr.bf16.mxu0 0
  %2521 = vmatpush1.bf16.msra.mxu0 0
  %2522 = vmatprep.subr.bf16.mxu0 0
  %2523 = vmatpush1.bf16.msra.mxu0 0
  %2524 = vmatprep.subr.bf16.mxu0 0
  %2525 = vmatpush1.bf16.msra.mxu0 0
  %2526 = vmatprep.mubr.bf16.mxu0 0
  %2527 = vmatmul.mubr.bf16.gmra.mrb[0].mxu0 %v2483
  %v2528 = vpop.f32.mrb[0].mxu0
  %v2529 = vadd.f32 0.0, %v2528
  %v2530 = vpop.f32.mrb[0].mxu0
  %v2531 = vpop.f32.mrb[0].mxu0
  %v2532 = vadd.f32 0.0, %v2531
  %v2533 = vpop.f32.mrb[0].mxu0
  %2534 = vmatprep.mubr.bf16.mxu0 0
  %2535 = vmatmul.mubr.bf16.gmra.mrb[0].mxu0 %v2486
  %v2536 = vpop.f32.mrb[0].mxu0
  %v2537 = vadd.f32 0.0, %v2536
  %v2538 = vpop.f32.mrb[0].mxu0
  %v2539 = vpop.f32.mrb[0].mxu0
  %v2540 = vadd.f32 0.0, %v2539
  %v2541 = vpop.f32.mrb[0].mxu0
  %2542 = vmatprep.mubr.bf16.mxu0 0
  %2543 = vmatmul.mubr.bf16.gmra.mrb[0].mxu0 %v2489
  %v2544 = vpop.f32.mrb[0].mxu0
  %v2545 = vadd.f32 0.0, %v2544
  %v2546 = vpop.f32.mrb[0].mxu0
  %v2547 = vpop.f32.mrb[0].mxu0
  %v2548 = vadd.f32 0.0, %v2547
  %v2549 = vpop.f32.mrb[0].mxu0
  %2550 = vmatprep.mubr.bf16.mxu0 0
  %2551 = vmatmul.mubr.bf16.gmra.mrb[0].mxu0 %v2492
  %v2552 = vpop.f32.mrb[0].mxu0
  %v2553 = vadd.f32 0.0, %v2552
  %v2554 = vpop.f32.mrb[0].mxu0
  %v2555 = vpop.f32.mrb[0].mxu0
  %v2556 = vadd.f32 0.0, %v2555
  %v2557 = vpop.f32.mrb[0].mxu0
  %2558 = vdwg.mxu0
  %v2567 = vunpack.c.l.b16 %v2425
  %v2568 = vunpack.c.l.b16 %v2426
  %v2569 = vunpack.c.l.b16 %v2427
  %v2570 = vunpack.c.l.b16 %v2428
  %v2571 = vunpack.c.l.b16 %v2429
  %v2572 = vunpack.c.l.b16 %v2430
  %v2573 = vunpack.c.l.b16 %v2431
  %v2574 = vunpack.c.l.b16 %v2432
  %v2575 = vpack.c.b16 %v2568, %v2567
  %v2576 = vpack.c.b16 %v2570, %v2569
  %v2577 = vpack.c.b16 %v2572, %v2571
  %v2578 = vpack.c.b16 %v2574, %v2573
  %v2580 = vsel %vm1063, %v2575, 0
  %v2583 = vsel %vm1063, %v2576, 0
  %v2586 = vsel %vm1063, %v2577, 0
  %v2589 = vsel %vm1063, %v2578, 0
  %2591 = vmatprep.subr.bf16.mxu0 0
  %2592 = vmatpush1.bf16.msra.mxu0 %v2433
  %2593 = vmatprep.subr.bf16.mxu0 0
  %2594 = vmatpush1.bf16.msra.mxu0 %v2434
  %2595 = vmatprep.subr.bf16.mxu0 0
  %2596 = vmatpush1.bf16.msra.mxu0 %v2435
  %2597 = vmatprep.subr.bf16.mxu0 0
  %2598 = vmatpush1.bf16.msra.mxu0 %v2436
  %2599 = vmatprep.subr.bf16.mxu0 0
  %2600 = vmatpush1.bf16.msra.mxu0 0
  %2601 = vmatprep.subr.bf16.mxu0 0
  %2602 = vmatpush1.bf16.msra.mxu0 0
  %2603 = vmatprep.subr.bf16.mxu0 0
  %2604 = vmatpush1.bf16.msra.mxu0 0
  %2605 = vmatprep.subr.bf16.mxu0 0
  %2606 = vmatpush1.bf16.msra.mxu0 0
  %2607 = vmatprep.subr.bf16.mxu0 0
  %2608 = vmatpush1.bf16.msra.mxu0 0
  %2609 = vmatprep.subr.bf16.mxu0 0
  %2610 = vmatpush1.bf16.msra.mxu0 0
  %2611 = vmatprep.subr.bf16.mxu0 0
  %2612 = vmatpush1.bf16.msra.mxu0 0
  %2613 = vmatprep.subr.bf16.mxu0 0
  %2614 = vmatpush1.bf16.msra.mxu0 0
  %2615 = vmatprep.subr.bf16.mxu0 0
  %2616 = vmatpush1.bf16.msra.mxu0 0
  %2617 = vmatprep.subr.bf16.mxu0 0
  %2618 = vmatpush1.bf16.msra.mxu0 0
  %2619 = vmatprep.subr.bf16.mxu0 0
  %2620 = vmatpush1.bf16.msra.mxu0 0
  %2621 = vmatprep.subr.bf16.mxu0 0
  %2622 = vmatpush1.bf16.msra.mxu0 0
  %2623 = vmatprep.mubr.bf16.mxu0 0
  %2624 = vmatmul.mubr.bf16.gmra.mrb[0].mxu0 %v2580
  %v2625 = vpop.f32.mrb[0].mxu0
  %v2626 = vadd.f32 %v2529, %v2625
  %v2627 = vpop.f32.mrb[0].mxu0
  %v2628 = vpop.f32.mrb[0].mxu0
  %v2629 = vadd.f32 %v2532, %v2628
  %v2630 = vpop.f32.mrb[0].mxu0
  %2631 = vmatprep.mubr.bf16.mxu0 0
  %2632 = vmatmul.mubr.bf16.gmra.mrb[0].mxu0 %v2583
  %v2633 = vpop.f32.mrb[0].mxu0
  %v2634 = vadd.f32 %v2537, %v2633
  %v2635 = vpop.f32.mrb[0].mxu0
  %v2636 = vpop.f32.mrb[0].mxu0
  %v2637 = vadd.f32 %v2540, %v2636
  %v2638 = vpop.f32.mrb[0].mxu0
  %2639 = vmatprep.mubr.bf16.mxu0 0
  %2640 = vmatmul.mubr.bf16.gmra.mrb[0].mxu0 %v2586
  %v2641 = vpop.f32.mrb[0].mxu0
  %v2642 = vadd.f32 %v2545, %v2641
  %v2643 = vpop.f32.mrb[0].mxu0
  %v2644 = vpop.f32.mrb[0].mxu0
  %v2645 = vadd.f32 %v2548, %v2644
  %v2646 = vpop.f32.mrb[0].mxu0
  %2647 = vmatprep.mubr.bf16.mxu0 0
  %2648 = vmatmul.mubr.bf16.gmra.mrb[0].mxu0 %v2589
  %v2649 = vpop.f32.mrb[0].mxu0
  %v2650 = vadd.f32 %v2553, %v2649
  %v2651 = vpop.f32.mrb[0].mxu0
  %v2652 = vpop.f32.mrb[0].mxu0
  %v2653 = vadd.f32 %v2556, %v2652
  %v2654 = vpop.f32.mrb[0].mxu0
  %2655 = vdwg.mxu0
  %s2656 = scalar_lea.vmem %s7, 64
  %v2657 = vld [vmem:[%s2656] sm:$0xf]
  %v2658 = vld [vmem:[%s2656 + $0x4] sm:$0xf]
  %v2659 = vld [vmem:[%s2656 + $0x8] sm:$0xf]
  %v2660 = vld [vmem:[%s2656 + $0xc] sm:$0xf]
  %v2661 = vld [vmem:[%s2656 + $0x10] sm:$0xf]
  %v2662 = vld [vmem:[%s2656 + $0x14] sm:$0xf]
  %v2663 = vld [vmem:[%s2656 + $0x18] sm:$0xf]
  %v2664 = vld [vmem:[%s2656 + $0x1c] sm:$0xf]
  %v2673 = vunpack.c.l.b16 %v2657
  %v2674 = vunpack.c.l.b16 %v2658
  %v2675 = vunpack.c.l.b16 %v2659
  %v2676 = vunpack.c.l.b16 %v2660
  %v2677 = vunpack.c.l.b16 %v2661
  %v2678 = vunpack.c.l.b16 %v2662
  %v2679 = vunpack.c.l.b16 %v2663
  %v2680 = vunpack.c.l.b16 %v2664
  %v2681 = vpack.c.b16 %v2674, %v2673
  %v2682 = vpack.c.b16 %v2676, %v2675
  %v2683 = vpack.c.b16 %v2678, %v2677
  %v2684 = vpack.c.b16 %v2680, %v2679
  %2685 = vrot.lane.b32.xlu0 %v2433, 126
  %v2686 = vpop.permute.xlu0 %2685
  %2687 = vrot.lane.b32.xlu0 %v2434, 126
  %v2688 = vpop.permute.xlu0 %2687
  %2689 = vrot.lane.b32.xlu0 %v2435, 126
  %v2690 = vpop.permute.xlu0 %2689
  %2691 = vrot.lane.b32.xlu0 %v2436, 126
  %v2692 = vpop.permute.xlu0 %2691
  %v2698 = vsel %vm1063, %v2681, 0
  %v2701 = vsel %vm1063, %v2682, 0
  %v2704 = vsel %vm1063, %v2683, 0
  %v2707 = vsel %vm1063, %v2684, 0
  %2709 = vmatprep.subr.bf16.mxu0 0
  %2710 = vmatpush1.bf16.msra.mxu0 %v2686
  %2711 = vmatprep.subr.bf16.mxu0 0
  %2712 = vmatpush1.bf16.msra.mxu0 %v2688
  %2713 = vmatprep.subr.bf16.mxu0 0
  %2714 = vmatpush1.bf16.msra.mxu0 %v2690
  %2715 = vmatprep.subr.bf16.mxu0 0
  %2716 = vmatpush1.bf16.msra.mxu0 %v2692
  %2717 = vmatprep.subr.bf16.mxu0 0
  %2718 = vmatpush1.bf16.msra.mxu0 0
  %2719 = vmatprep.subr.bf16.mxu0 0
  %2720 = vmatpush1.bf16.msra.mxu0 0
  %2721 = vmatprep.subr.bf16.mxu0 0
  %2722 = vmatpush1.bf16.msra.mxu0 0
  %2723 = vmatprep.subr.bf16.mxu0 0
  %2724 = vmatpush1.bf16.msra.mxu0 0
  %2725 = vmatprep.subr.bf16.mxu0 0
  %2726 = vmatpush1.bf16.msra.mxu0 0
  %2727 = vmatprep.subr.bf16.mxu0 0
  %2728 = vmatpush1.bf16.msra.mxu0 0
  %2729 = vmatprep.subr.bf16.mxu0 0
  %2730 = vmatpush1.bf16.msra.mxu0 0
  %2731 = vmatprep.subr.bf16.mxu0 0
  %2732 = vmatpush1.bf16.msra.mxu0 0
  %2733 = vmatprep.subr.bf16.mxu0 0
  %2734 = vmatpush1.bf16.msra.mxu0 0
  %2735 = vmatprep.subr.bf16.mxu0 0
  %2736 = vmatpush1.bf16.msra.mxu0 0
  %2737 = vmatprep.subr.bf16.mxu0 0
  %2738 = vmatpush1.bf16.msra.mxu0 0
  %2739 = vmatprep.subr.bf16.mxu0 0
  %2740 = vmatpush1.bf16.msra.mxu0 0
  %2741 = vmatprep.mubr.bf16.mxu0 0
  %2742 = vmatmul.mubr.bf16.gmra.mrb[0].mxu0 %v2698
  %v2743 = vpop.f32.mrb[0].mxu0
  %v2744 = vadd.f32 0.0, %v2743
  %v2745 = vpop.f32.mrb[0].mxu0
  %v2746 = vpop.f32.mrb[0].mxu0
  %v2747 = vadd.f32 0.0, %v2746
  %v2748 = vpop.f32.mrb[0].mxu0
  %2749 = vmatprep.mubr.bf16.mxu0 0
  %2750 = vmatmul.mubr.bf16.gmra.mrb[0].mxu0 %v2701
  %v2751 = vpop.f32.mrb[0].mxu0
  %v2752 = vadd.f32 0.0, %v2751
  %v2753 = vpop.f32.mrb[0].mxu0
  %v2754 = vpop.f32.mrb[0].mxu0
  %v2755 = vadd.f32 0.0, %v2754
  %v2756 = vpop.f32.mrb[0].mxu0
  %2757 = vmatprep.mubr.bf16.mxu0 0
  %2758 = vmatmul.mubr.bf16.gmra.mrb[0].mxu0 %v2704
  %v2759 = vpop.f32.mrb[0].mxu0
  %v2760 = vadd.f32 0.0, %v2759
  %v2761 = vpop.f32.mrb[0].mxu0
  %v2762 = vpop.f32.mrb[0].mxu0
  %v2763 = vadd.f32 0.0, %v2762
  %v2764 = vpop.f32.mrb[0].mxu0
  %2765 = vmatprep.mubr.bf16.mxu0 0
  %2766 = vmatmul.mubr.bf16.gmra.mrb[0].mxu0 %v2707
  %v2767 = vpop.f32.mrb[0].mxu0
  %v2768 = vadd.f32 0.0, %v2767
  %v2769 = vpop.f32.mrb[0].mxu0
  %v2770 = vpop.f32.mrb[0].mxu0
  %v2771 = vadd.f32 0.0, %v2770
  %v2772 = vpop.f32.mrb[0].mxu0
  %2773 = vdwg.mxu0
  %v2774 = vadd.f32 %v2626, %v2744
  %v2775 = vadd.f32 %v2629, %v2747
  %v2776 = vadd.f32 %v2634, %v2752
  %v2777 = vadd.f32 %v2637, %v2755
  %v2778 = vadd.f32 %v2642, %v2760
  %v2779 = vadd.f32 %v2645, %v2763
  %v2780 = vadd.f32 %v2650, %v2768
  %v2781 = vadd.f32 %v2653, %v2771
  %s2782 = scalar_lea.vmem %s7, 96
  %v2783 = vld [vmem:[%s2782] sm:$0xf]
  %v2784 = vld [vmem:[%s2782 + $0x4] sm:$0xf]
  %v2785 = vld [vmem:[%s2782 + $0x8] sm:$0xf]
  %v2786 = vld [vmem:[%s2782 + $0xc] sm:$0xf]
  %v2787 = vld [vmem:[%s2782 + $0x10] sm:$0xf]
  %v2788 = vld [vmem:[%s2782 + $0x14] sm:$0xf]
  %v2789 = vld [vmem:[%s2782 + $0x18] sm:$0xf]
  %v2790 = vld [vmem:[%s2782 + $0x1c] sm:$0xf]
  %v2799 = vunpack.c.l.b16 %v2783
  %v2800 = vunpack.c.l.b16 %v2784
  %v2801 = vunpack.c.l.b16 %v2785
  %v2802 = vunpack.c.l.b16 %v2786
  %v2803 = vunpack.c.l.b16 %v2787
  %v2804 = vunpack.c.l.b16 %v2788
  %v2805 = vunpack.c.l.b16 %v2789
  %v2806 = vunpack.c.l.b16 %v2790
  %v2807 = vpack.c.b16 %v2800, %v2799
  %v2808 = vpack.c.b16 %v2802, %v2801
  %v2809 = vpack.c.b16 %v2804, %v2803
  %v2810 = vpack.c.b16 %v2806, %v2805
  %2811 = vrot.lane.b32.xlu0 %v2433, 125
  %v2812 = vpop.permute.xlu0 %2811
  %2813 = vrot.lane.b32.xlu0 %v2434, 125
  %v2814 = vpop.permute.xlu0 %2813
  %2815 = vrot.lane.b32.xlu0 %v2435, 125
  %v2816 = vpop.permute.xlu0 %2815
  %2817 = vrot.lane.b32.xlu0 %v2436, 125
  %v2818 = vpop.permute.xlu0 %2817
  %v2824 = vsel %vm1063, %v2807, 0
  %v2827 = vsel %vm1063, %v2808, 0
  %v2830 = vsel %vm1063, %v2809, 0
  %v2833 = vsel %vm1063, %v2810, 0
  %2835 = vmatprep.subr.bf16.mxu0 0
  %2836 = vmatpush1.bf16.msra.mxu0 %v2812
  %2837 = vmatprep.subr.bf16.mxu0 0
  %2838 = vmatpush1.bf16.msra.mxu0 %v2814
  %2839 = vmatprep.subr.bf16.mxu0 0
  %2840 = vmatpush1.bf16.msra.mxu0 %v2816
  %2841 = vmatprep.subr.bf16.mxu0 0
  %2842 = vmatpush1.bf16.msra.mxu0 %v2818
  %2843 = vmatprep.subr.bf16.mxu0 0
  %2844 = vmatpush1.bf16.msra.mxu0 0
  %2845 = vmatprep.subr.bf16.mxu0 0
  %2846 = vmatpush1.bf16.msra.mxu0 0
  %2847 = vmatprep.subr.bf16.mxu0 0
  %2848 = vmatpush1.bf16.msra.mxu0 0
  %2849 = vmatprep.subr.bf16.mxu0 0
  %2850 = vmatpush1.bf16.msra.mxu0 0
  %2851 = vmatprep.subr.bf16.mxu0 0
  %2852 = vmatpush1.bf16.msra.mxu0 0
  %2853 = vmatprep.subr.bf16.mxu0 0
  %2854 = vmatpush1.bf16.msra.mxu0 0
  %2855 = vmatprep.subr.bf16.mxu0 0
  %2856 = vmatpush1.bf16.msra.mxu0 0
  %2857 = vmatprep.subr.bf16.mxu0 0
  %2858 = vmatpush1.bf16.msra.mxu0 0
  %2859 = vmatprep.subr.bf16.mxu0 0
  %2860 = vmatpush1.bf16.msra.mxu0 0
  %2861 = vmatprep.subr.bf16.mxu0 0
  %2862 = vmatpush1.bf16.msra.mxu0 0
  %2863 = vmatprep.subr.bf16.mxu0 0
  %2864 = vmatpush1.bf16.msra.mxu0 0
  %2865 = vmatprep.subr.bf16.mxu0 0
  %2866 = vmatpush1.bf16.msra.mxu0 0
  %2867 = vmatprep.mubr.bf16.mxu0 0
  %2868 = vmatmul.mubr.bf16.gmra.mrb[0].mxu0 %v2824
  %v2869 = vpop.f32.mrb[0].mxu0
  %v2870 = vadd.f32 0.0, %v2869
  %v2871 = vpop.f32.mrb[0].mxu0
  %v2872 = vpop.f32.mrb[0].mxu0
  %v2873 = vadd.f32 0.0, %v2872
  %v2874 = vpop.f32.mrb[0].mxu0
  %2875 = vmatprep.mubr.bf16.mxu0 0
  %2876 = vmatmul.mubr.bf16.gmra.mrb[0].mxu0 %v2827
  %v2877 = vpop.f32.mrb[0].mxu0
  %v2878 = vadd.f32 0.0, %v2877
  %v2879 = vpop.f32.mrb[0].mxu0
  %v2880 = vpop.f32.mrb[0].mxu0
  %v2881 = vadd.f32 0.0, %v2880
  %v2882 = vpop.f32.mrb[0].mxu0
  %2883 = vmatprep.mubr.bf16.mxu0 0
  %2884 = vmatmul.mubr.bf16.gmra.mrb[0].mxu0 %v2830
  %v2885 = vpop.f32.mrb[0].mxu0
  %v2886 = vadd.f32 0.0, %v2885
  %v2887 = vpop.f32.mrb[0].mxu0
  %v2888 = vpop.f32.mrb[0].mxu0
  %v2889 = vadd.f32 0.0, %v2888
  %v2890 = vpop.f32.mrb[0].mxu0
  %2891 = vmatprep.mubr.bf16.mxu0 0
  %2892 = vmatmul.mubr.bf16.gmra.mrb[0].mxu0 %v2833
  %v2893 = vpop.f32.mrb[0].mxu0
  %v2894 = vadd.f32 0.0, %v2893
  %v2895 = vpop.f32.mrb[0].mxu0
  %v2896 = vpop.f32.mrb[0].mxu0
  %v2897 = vadd.f32 0.0, %v2896
  %v2898 = vpop.f32.mrb[0].mxu0
  %2899 = vdwg.mxu0
  %v2900 = vadd.f32 %v2774, %v2870
  %v2901 = vadd.f32 %v2775, %v2873
  %v2902 = vadd.f32 %v2776, %v2878
  %v2903 = vadd.f32 %v2777, %v2881
  %v2904 = vadd.f32 %v2778, %v2886
  %v2905 = vadd.f32 %v2779, %v2889
  %v2906 = vadd.f32 %v2780, %v2894
  %v2907 = vadd.f32 %v2781, %v2897
  %s2908 = scalar_lea.vmem %s7, 128
  %v2909 = vld [vmem:[%s2908] sm:$0xf]
  %v2910 = vld [vmem:[%s2908 + $0x4] sm:$0xf]
  %v2911 = vld [vmem:[%s2908 + $0x8] sm:$0xf]
  %v2912 = vld [vmem:[%s2908 + $0xc] sm:$0xf]
  %v2913 = vld [vmem:[%s2908 + $0x10] sm:$0xf]
  %v2914 = vld [vmem:[%s2908 + $0x14] sm:$0xf]
  %v2915 = vld [vmem:[%s2908 + $0x18] sm:$0xf]
  %v2916 = vld [vmem:[%s2908 + $0x1c] sm:$0xf]
  %v2925 = vunpack.c.l.b16 %v2909
  %v2926 = vunpack.c.l.b16 %v2910
  %v2927 = vunpack.c.l.b16 %v2911
  %v2928 = vunpack.c.l.b16 %v2912
  %v2929 = vunpack.c.l.b16 %v2913
  %v2930 = vunpack.c.l.b16 %v2914
  %v2931 = vunpack.c.l.b16 %v2915
  %v2932 = vunpack.c.l.b16 %v2916
  %v2933 = vpack.c.b16 %v2926, %v2925
  %v2934 = vpack.c.b16 %v2928, %v2927
  %v2935 = vpack.c.b16 %v2930, %v2929
  %v2936 = vpack.c.b16 %v2932, %v2931
  %2937 = vrot.lane.b32.xlu0 %v2433, 124
  %v2938 = vpop.permute.xlu0 %2937
  %2939 = vrot.lane.b32.xlu0 %v2434, 124
  %v2940 = vpop.permute.xlu0 %2939
  %2941 = vrot.lane.b32.xlu0 %v2435, 124
  %v2942 = vpop.permute.xlu0 %2941
  %2943 = vrot.lane.b32.xlu0 %v2436, 124
  %v2944 = vpop.permute.xlu0 %2943
  %v2950 = vsel %vm1063, %v2933, 0
  %v2953 = vsel %vm1063, %v2934, 0
  %v2956 = vsel %vm1063, %v2935, 0
  %v2959 = vsel %vm1063, %v2936, 0
  %2961 = vmatprep.subr.bf16.mxu0 0
  %2962 = vmatpush1.bf16.msra.mxu0 %v2938
  %2963 = vmatprep.subr.bf16.mxu0 0
  %2964 = vmatpush1.bf16.msra.mxu0 %v2940
  %2965 = vmatprep.subr.bf16.mxu0 0
  %2966 = vmatpush1.bf16.msra.mxu0 %v2942
  %2967 = vmatprep.subr.bf16.mxu0 0
  %2968 = vmatpush1.bf16.msra.mxu0 %v2944
  %2969 = vmatprep.subr.bf16.mxu0 0
  %2970 = vmatpush1.bf16.msra.mxu0 0
  %2971 = vmatprep.subr.bf16.mxu0 0
  %2972 = vmatpush1.bf16.msra.mxu0 0
  %2973 = vmatprep.subr.bf16.mxu0 0
  %2974 = vmatpush1.bf16.msra.mxu0 0
  %2975 = vmatprep.subr.bf16.mxu0 0
  %2976 = vmatpush1.bf16.msra.mxu0 0
  %2977 = vmatprep.subr.bf16.mxu0 0
  %2978 = vmatpush1.bf16.msra.mxu0 0
  %2979 = vmatprep.subr.bf16.mxu0 0
  %2980 = vmatpush1.bf16.msra.mxu0 0
  %2981 = vmatprep.subr.bf16.mxu0 0
  %2982 = vmatpush1.bf16.msra.mxu0 0
  %2983 = vmatprep.subr.bf16.mxu0 0
  %2984 = vmatpush1.bf16.msra.mxu0 0
  %2985 = vmatprep.subr.bf16.mxu0 0
  %2986 = vmatpush1.bf16.msra.mxu0 0
  %2987 = vmatprep.subr.bf16.mxu0 0
  %2988 = vmatpush1.bf16.msra.mxu0 0
  %2989 = vmatprep.subr.bf16.mxu0 0
  %2990 = vmatpush1.bf16.msra.mxu0 0
  %2991 = vmatprep.subr.bf16.mxu0 0
  %2992 = vmatpush1.bf16.msra.mxu0 0
  %2993 = vmatprep.mubr.bf16.mxu0 0
  %2994 = vmatmul.mubr.bf16.gmra.mrb[0].mxu0 %v2950
  %v2995 = vpop.f32.mrb[0].mxu0
  %v2996 = vadd.f32 0.0, %v2995
  %v2997 = vpop.f32.mrb[0].mxu0
  %v2998 = vpop.f32.mrb[0].mxu0
  %v2999 = vadd.f32 0.0, %v2998
  %v3000 = vpop.f32.mrb[0].mxu0
  %3001 = vmatprep.mubr.bf16.mxu0 0
  %3002 = vmatmul.mubr.bf16.gmra.mrb[0].mxu0 %v2953
  %v3003 = vpop.f32.mrb[0].mxu0
  %v3004 = vadd.f32 0.0, %v3003
  %v3005 = vpop.f32.mrb[0].mxu0
  %v3006 = vpop.f32.mrb[0].mxu0
  %v3007 = vadd.f32 0.0, %v3006
  %v3008 = vpop.f32.mrb[0].mxu0
  %3009 = vmatprep.mubr.bf16.mxu0 0
  %3010 = vmatmul.mubr.bf16.gmra.mrb[0].mxu0 %v2956
  %v3011 = vpop.f32.mrb[0].mxu0
  %v3012 = vadd.f32 0.0, %v3011
  %v3013 = vpop.f32.mrb[0].mxu0
  %v3014 = vpop.f32.mrb[0].mxu0
  %v3015 = vadd.f32 0.0, %v3014
  %v3016 = vpop.f32.mrb[0].mxu0
  %3017 = vmatprep.mubr.bf16.mxu0 0
  %3018 = vmatmul.mubr.bf16.gmra.mrb[0].mxu0 %v2959
  %v3019 = vpop.f32.mrb[0].mxu0
  %v3020 = vadd.f32 0.0, %v3019
  %v3021 = vpop.f32.mrb[0].mxu0
  %v3022 = vpop.f32.mrb[0].mxu0
  %v3023 = vadd.f32 0.0, %v3022
  %v3024 = vpop.f32.mrb[0].mxu0
  %3025 = vdwg.mxu0
  %v3026 = vadd.f32 %v2900, %v2996
  %v3027 = vadd.f32 %v2901, %v2999
  %v3028 = vadd.f32 %v2902, %v3004
  %v3029 = vadd.f32 %v2903, %v3007
  %v3030 = vadd.f32 %v2904, %v3012
  %v3031 = vadd.f32 %v2905, %v3015
  %v3032 = vadd.f32 %v2906, %v3020
  %v3033 = vadd.f32 %v2907, %v3023
  %v3034 = vld [vmem:[%s8] sm:$0xff]
  %v3035 = vld [vmem:[%s8 + $0x8] sm:$0xff]
  %v3036 = vld [vmem:[%s8 + $0x10] sm:$0xff]
  %v3037 = vld [vmem:[%s8 + $0x18] sm:$0xff]
  %v3038 = vld [vmem:[%s8 + $0x20] sm:$0xff]
  %v3039 = vld [vmem:[%s8 + $0x28] sm:$0xff]
  %v3040 = vld [vmem:[%s8 + $0x30] sm:$0xff]
  %v3041 = vld [vmem:[%s8 + $0x38] sm:$0xff]
  %3043 = vset.pattern.permute.xlu0 0
  %3044 = vperm.xlu0 %3043, %v3034
  %v3045 = vpop.permute.xlu0 %3044
  %3048 = vset.pattern.permute.xlu0 0
  %3049 = vperm.xlu0 %3048, %v3035
  %v3050 = vpop.permute.xlu0 %3049
  %3053 = vset.pattern.permute.xlu0 0
  %3054 = vperm.xlu0 %3053, %v3036
  %v3055 = vpop.permute.xlu0 %3054
  %3058 = vset.pattern.permute.xlu0 0
  %3059 = vperm.xlu0 %3058, %v3037
  %v3060 = vpop.permute.xlu0 %3059
  %3063 = vset.pattern.permute.xlu0 0
  %3064 = vperm.xlu0 %3063, %v3038
  %v3065 = vpop.permute.xlu0 %3064
  %3068 = vset.pattern.permute.xlu0 0
  %3069 = vperm.xlu0 %3068, %v3039
  %v3070 = vpop.permute.xlu0 %3069
  %3073 = vset.pattern.permute.xlu0 0
  %3074 = vperm.xlu0 %3073, %v3040
  %v3075 = vpop.permute.xlu0 %3074
  %3078 = vset.pattern.permute.xlu0 0
  %3079 = vperm.xlu0 %3078, %v3041
  %v3080 = vpop.permute.xlu0 %3079
  %v3082 = vadd.f32 %v3026, %v3045
  %v3083 = vadd.f32 %v3027, %v3050
  %v3084 = vadd.f32 %v3028, %v3055
  %v3085 = vadd.f32 %v3029, %v3060
  %v3086 = vadd.f32 %v3030, %v3065
  %v3087 = vadd.f32 %v3031, %v3070
  %v3088 = vadd.f32 %v3032, %v3075
  %v3089 = vadd.f32 %v3033, %v3080
  %v3090 = vmax.f32 %v3082, 0.0
  %v3091 = vmax.f32 %v3083, 0.0
  %v3092 = vmax.f32 %v3084, 0.0
  %v3093 = vmax.f32 %v3085, 0.0
  %v3094 = vmax.f32 %v3086, 0.0
  %v3095 = vmax.f32 %v3087, 0.0
  %v3096 = vmax.f32 %v3088, 0.0
  %v3097 = vmax.f32 %v3089, 0.0
  %vm3098 = vcmask 31744
  %v3099 = vsel %vm3098, %v3090, -inf
  %3100 = vmax.xlane.f32.xlu0 %v3099
  %v3101 = vpop.xlane.xlu0 %3100
  %v3102 = vsel %vm3098, %v3091, -inf
  %3103 = vmax.xlane.f32.xlu0 %v3102
  %v3104 = vpop.xlane.xlu0 %3103
  %v3105 = vsel %vm3098, %v3092, -inf
  %3106 = vmax.xlane.f32.xlu0 %v3105
  %v3107 = vpop.xlane.xlu0 %3106
  %v3108 = vsel %vm3098, %v3093, -inf
  %3109 = vmax.xlane.f32.xlu0 %v3108
  %v3110 = vpop.xlane.xlu0 %3109
  %v3111 = vsel %vm3098, %v3094, -inf
  %3112 = vmax.xlane.f32.xlu0 %v3111
  %v3113 = vpop.xlane.xlu0 %3112
  %v3114 = vsel %vm3098, %v3095, -inf
  %3115 = vmax.xlane.f32.xlu0 %v3114
  %v3116 = vpop.xlane.xlu0 %3115
  %v3117 = vsel %vm3098, %v3096, -inf
  %3118 = vmax.xlane.f32.xlu0 %v3117
  %v3119 = vpop.xlane.xlu0 %3118
  %v3120 = vsel %vm3098, %v3097, -inf
  %3121 = vmax.xlane.f32.xlu0 %v3120
  %v3122 = vpop.xlane.xlu0 %3121
  %vm3123 = vcmask 7168
  %3124 = vst.msk [vmem:[%s9] sm:$0xff] %vm3123, %v3101
  %3125 = vst.msk [vmem:[%s9 + $0x8] sm:$0xff] %vm3123, %v3104
  %3126 = vst.msk [vmem:[%s9 + $0x10] sm:$0xff] %vm3123, %v3107
  %3127 = vst.msk [vmem:[%s9 + $0x18] sm:$0xff] %vm3123, %v3110
  %3128 = vst.msk [vmem:[%s9 + $0x20] sm:$0xff] %vm3123, %v3113
  %3129 = vst.msk [vmem:[%s9 + $0x28] sm:$0xff] %vm3123, %v3116
  %3130 = vst.msk [vmem:[%s9 + $0x30] sm:$0xff] %vm3123, %v3119
  %3131 = vst.msk [vmem:[%s9 + $0x38] sm:$0xff] %vm3123, %v3122
  %vm3132 = vcmask 113744
  %v3133 = vsel %vm3132, %v3090, -inf
  %3134 = vmax.xlane.f32.xlu0 %v3133
  %v3135 = vpop.xlane.xlu0 %3134
  %v3136 = vsel %vm3132, %v3091, -inf
  %3137 = vmax.xlane.f32.xlu0 %v3136
  %v3138 = vpop.xlane.xlu0 %3137
  %v3139 = vsel %vm3132, %v3092, -inf
  %3140 = vmax.xlane.f32.xlu0 %v3139
  %v3141 = vpop.xlane.xlu0 %3140
  %v3142 = vsel %vm3132, %v3093, -inf
  %3143 = vmax.xlane.f32.xlu0 %v3142
  %v3144 = vpop.xlane.xlu0 %3143
  %v3145 = vsel %vm3132, %v3094, -inf
  %3146 = vmax.xlane.f32.xlu0 %v3145
  %v3147 = vpop.xlane.xlu0 %3146
  %v3148 = vsel %vm3132, %v3095, -inf
  %3149 = vmax.xlane.f32.xlu0 %v3148
  %v3150 = vpop.xlane.xlu0 %3149
  %v3151 = vsel %vm3132, %v3096, -inf
  %3152 = vmax.xlane.f32.xlu0 %v3151
  %v3153 = vpop.xlane.xlu0 %3152
  %v3154 = vsel %vm3132, %v3097, -inf
  %3155 = vmax.xlane.f32.xlu0 %v3154
  %v3156 = vpop.xlane.xlu0 %3155
  %vm3157 = vcmask 15368
  %3158 = vst.msk [vmem:[%s9] sm:$0xff] %vm3157, %v3135
  %3159 = vst.msk [vmem:[%s9 + $0x8] sm:$0xff] %vm3157, %v3138
  %3160 = vst.msk [vmem:[%s9 + $0x10] sm:$0xff] %vm3157, %v3141
  %3161 = vst.msk [vmem:[%s9 + $0x18] sm:$0xff] %vm3157, %v3144
  %3162 = vst.msk [vmem:[%s9 + $0x20] sm:$0xff] %vm3157, %v3147
  %3163 = vst.msk [vmem:[%s9 + $0x28] sm:$0xff] %vm3157, %v3150
  %3164 = vst.msk [vmem:[%s9 + $0x30] sm:$0xff] %vm3157, %v3153
  %3165 = vst.msk [vmem:[%s9 + $0x38] sm:$0xff] %vm3157, %v3156
  %vm3166 = vcmask 195744
  %v3167 = vsel %vm3166, %v3090, -inf
  %3168 = vmax.xlane.f32.xlu0 %v3167
  %v3169 = vpop.xlane.xlu0 %3168
  %v3170 = vsel %vm3166, %v3091, -inf
  %3171 = vmax.xlane.f32.xlu0 %v3170
  %v3172 = vpop.xlane.xlu0 %3171
  %v3173 = vsel %vm3166, %v3092, -inf
  %3174 = vmax.xlane.f32.xlu0 %v3173
  %v3175 = vpop.xlane.xlu0 %3174
  %v3176 = vsel %vm3166, %v3093, -inf
  %3177 = vmax.xlane.f32.xlu0 %v3176
  %v3178 = vpop.xlane.xlu0 %3177
  %v3179 = vsel %vm3166, %v3094, -inf
  %3180 = vmax.xlane.f32.xlu0 %v3179
  %v3181 = vpop.xlane.xlu0 %3180
  %v3182 = vsel %vm3166, %v3095, -inf
  %3183 = vmax.xlane.f32.xlu0 %v3182
  %v3184 = vpop.xlane.xlu0 %3183
  %v3185 = vsel %vm3166, %v3096, -inf
  %3186 = vmax.xlane.f32.xlu0 %v3185
  %v3187 = vpop.xlane.xlu0 %3186
  %v3188 = vsel %vm3166, %v3097, -inf
  %3189 = vmax.xlane.f32.xlu0 %v3188
  %v3190 = vpop.xlane.xlu0 %3189
  %vm3191 = vcmask 23568
  %3192 = vst.msk [vmem:[%s9] sm:$0xff] %vm3191, %v3169
  %3193 = vst.msk [vmem:[%s9 + $0x8] sm:$0xff] %vm3191, %v3172
  %3194 = vst.msk [vmem:[%s9 + $0x10] sm:$0xff] %vm3191, %v3175
  %3195 = vst.msk [vmem:[%s9 + $0x18] sm:$0xff] %vm3191, %v3178
  %3196 = vst.msk [vmem:[%s9 + $0x20] sm:$0xff] %vm3191, %v3181
  %3197 = vst.msk [vmem:[%s9 + $0x28] sm:$0xff] %vm3191, %v3184
  %3198 = vst.msk [vmem:[%s9 + $0x30] sm:$0xff] %vm3191, %v3187
  %3199 = vst.msk [vmem:[%s9 + $0x38] sm:$0xff] %vm3191, %v3190
  %vm3200 = vcmask 277744
  %v3201 = vsel %vm3200, %v3090, -inf
  %3202 = vmax.xlane.f32.xlu0 %v3201
  %v3203 = vpop.xlane.xlu0 %3202
  %v3204 = vsel %vm3200, %v3091, -inf
  %3205 = vmax.xlane.f32.xlu0 %v3204
  %v3206 = vpop.xlane.xlu0 %3205
  %v3207 = vsel %vm3200, %v3092, -inf
  %3208 = vmax.xlane.f32.xlu0 %v3207
  %v3209 = vpop.xlane.xlu0 %3208
  %v3210 = vsel %vm3200, %v3093, -inf
  %3211 = vmax.xlane.f32.xlu0 %v3210
  %v3212 = vpop.xlane.xlu0 %3211
  %v3213 = vsel %vm3200, %v3094, -inf
  %3214 = vmax.xlane.f32.xlu0 %v3213
  %v3215 = vpop.xlane.xlu0 %3214
  %v3216 = vsel %vm3200, %v3095, -inf
  %3217 = vmax.xlane.f32.xlu0 %v3216
  %v3218 = vpop.xlane.xlu0 %3217
  %v3219 = vsel %vm3200, %v3096, -inf
  %3220 = vmax.xlane.f32.xlu0 %v3219
  %v3221 = vpop.xlane.xlu0 %3220
  %v3222 = vsel %vm3200, %v3097, -inf
  %3223 = vmax.xlane.f32.xlu0 %v3222
  %v3224 = vpop.xlane.xlu0 %3223
  %vm3225 = vcmask 31768
  %3226 = vst.msk [vmem:[%s9] sm:$0xff] %vm3225, %v3203
  %3227 = vst.msk [vmem:[%s9 + $0x8] sm:$0xff] %vm3225, %v3206
  %3228 = vst.msk [vmem:[%s9 + $0x10] sm:$0xff] %vm3225, %v3209
  %3229 = vst.msk [vmem:[%s9 + $0x18] sm:$0xff] %vm3225, %v3212
  %3230 = vst.msk [vmem:[%s9 + $0x20] sm:$0xff] %vm3225, %v3215
  %3231 = vst.msk [vmem:[%s9 + $0x28] sm:$0xff] %vm3225, %v3218
  %3232 = vst.msk [vmem:[%s9 + $0x30] sm:$0xff] %vm3225, %v3221
  %3233 = vst.msk [vmem:[%s9 + $0x38] sm:$0xff] %vm3225, %v3224
  // Predicated region
  $region38: #{feature_extractor.3} parent=0 // pred_check
    _
  $region39: #{feature_extractor.3} parent=0 // pred_check_branch
    %3235 = sbr.rel (0) target = $region41
  $region40: #{feature_extractor.3} parent=0 // pred_region
    _
  $region41: #{feature_extractor.3} parent=0 // pred_fallthru
    _
  // Predicated region
  $region42: #{feature_extractor.3} parent=0 // pred_check
    _
  $region43: #{feature_extractor.3} parent=0 // pred_check_branch
    %3237 = sbr.rel (0) target = $region45
  $region44: #{feature_extractor.3} parent=0 // pred_region
    _
  $region45: #{feature_extractor.3} parent=0 // pred_fallthru
    _

// kernel: feature_extractor.2
$region0: #{feature_extractor.2}
  #allocation0 [shape = 'u32[]', space=smem, size = 0x4, offset = 0x4, fixed_abs, tag = 'smem constant byte address 0x4 - core index']
  #allocation1 [shape = 'u32[144,128]{1,0:T(1,128)}', space=vmem, size = 0x12000, scoped, tag = 'internal scratch']
  #allocation2 [shape = 'bf16[32,144]{1,0:T(16,128)(2,1)}', space=vmem, size = 0x4000, scoped, tag = 'scratch operand']
  #allocation3 [shape = 'bf16[64,144]{1,0:T(16,128)(2,1)}', space=vmem, size = 0x8000, scoped, tag = 'scratch operand']
  %s0 = inlined_call_operand.vmem [shape: bf16[49,2048], index: 0, kind: input, shape index: {}]
  %s1 = inlined_call_operand.vmem [shape: bf16[32,49], index: 1, kind: input, shape index: {}]
  %s2 = inlined_call_operand.vmem [shape: f32[32,1], index: 2, kind: input, shape index: {}]
  %s3 = inlined_call_operand.vmem [shape: bf16[7,64,32], index: 3, kind: input, shape index: {}]
  %s4 = inlined_call_operand.vmem [shape: f32[64,1], index: 4, kind: input, shape index: {}]
  %s5 = inlined_call_operand.vmem [shape: bf16[7,64,64], index: 5, kind: input, shape index: {}]
  %s6 = inlined_call_operand.vmem [shape: f32[64,1], index: 6, kind: input, shape index: {}]
  %s7 = inlined_call_operand.vmem [shape: bf16[7,64,64], index: 7, kind: input, shape index: {}]
  %s8 = inlined_call_operand.vmem [shape: f32[64,1], index: 8, kind: input, shape index: {}]
  %s9 = inlined_call_operand.vmem [shape: f32[64,12], index: 9, kind: output, shape index: {}]
  %s10 = sld [smem:[#allocation0]]
  $region46: #{feature_extractor.2} parent=0
    _
  %s12 = ssub.s32 1, %s10
  %s13 = scalar_select 0, %s12, %s10
  // Predicated region
  $region2: #{feature_extractor.2} parent=0 // pred_check
    _
  $region3: #{feature_extractor.2} parent=0 // pred_check_branch
    %15 = sbr.rel (0) target = $region5
  $region4: #{feature_extractor.2} parent=0 // pred_region
    _
  $region5: #{feature_extractor.2} parent=0 // pred_fallthru
    _
  // Predicated region
  $region6: #{feature_extractor.2} parent=0 // pred_check
    _
  $region7: #{feature_extractor.2} parent=0 // pred_check_branch
    %17 = sbr.rel (0) target = $region9
  $region8: #{feature_extractor.2} parent=0 // pred_region
    _
  $region9: #{feature_extractor.2} parent=0 // pred_fallthru
    _
  // Predicated region
  $region10: #{feature_extractor.2} parent=0 // pred_check
    _
  $region11: #{feature_extractor.2} parent=0 // pred_check_branch
    %19 = sbr.rel (0) target = $region13
  $region12: #{feature_extractor.2} parent=0 // pred_region
    _
  $region13: #{feature_extractor.2} parent=0 // pred_fallthru
    _
  // Predicated region
  $region14: #{feature_extractor.2} parent=0 // pred_check
    _
  $region15: #{feature_extractor.2} parent=0 // pred_check_branch
    %21 = sbr.rel (0) target = $region17
  $region16: #{feature_extractor.2} parent=0 // pred_region
    _
  $region17: #{feature_extractor.2} parent=0 // pred_fallthru
    _
  // Predicated region
  $region18: #{feature_extractor.2} parent=0 // pred_check
    _
  $region19: #{feature_extractor.2} parent=0 // pred_check_branch
    %23 = sbr.rel (0) target = $region21
  $region20: #{feature_extractor.2} parent=0 // pred_region
    _
  $region21: #{feature_extractor.2} parent=0 // pred_fallthru
    _
  // Predicated region
  $region22: #{feature_extractor.2} parent=0 // pred_check
    _
  $region23: #{feature_extractor.2} parent=0 // pred_check_branch
    %25 = sbr.rel (0) target = $region25
  $region24: #{feature_extractor.2} parent=0 // pred_region
    _
  $region25: #{feature_extractor.2} parent=0 // pred_fallthru
    _
  // Predicated region
  $region26: #{feature_extractor.2} parent=0 // pred_check
    _
  $region27: #{feature_extractor.2} parent=0 // pred_check_branch
    %27 = sbr.rel (0) target = $region29
  $region28: #{feature_extractor.2} parent=0 // pred_region
    _
  $region29: #{feature_extractor.2} parent=0 // pred_fallthru
    _
  // Predicated region
  $region30: #{feature_extractor.2} parent=0 // pred_check
    _
  $region31: #{feature_extractor.2} parent=0 // pred_check_branch
    %29 = sbr.rel (0) target = $region33
  $region32: #{feature_extractor.2} parent=0 // pred_region
    _
  $region33: #{feature_extractor.2} parent=0 // pred_fallthru
    _
  // Predicated region
  $region34: #{feature_extractor.2} parent=0 // pred_check
    _
  $region35: #{feature_extractor.2} parent=0 // pred_check_branch
    %31 = sbr.rel (0) target = $region37
  $region36: #{feature_extractor.2} parent=0 // pred_region
    _
  $region37: #{feature_extractor.2} parent=0 // pred_fallthru
    _
  %v33 = vld [vmem:[%s1] sm:$0xf]
  %v34 = vld [vmem:[%s1 + $0x4] sm:$0xf]
  %v35 = vld [vmem:[%s1 + $0x8] sm:$0xf]
  %v36 = vld [vmem:[%s1 + $0xc] sm:$0xf]
  %v37 = vld [vmem:[%s0] sm:$0xff]
  %v38 = vld [vmem:[%s0 + $0x8] sm:$0xff]
  %v39 = vld [vmem:[%s0 + $0x10] sm:$0xff]
  %v40 = vld [vmem:[%s0 + $0x18] sm:$0xff]
  %v41 = vld [vmem:[%s0 + $0x20] sm:$0xff]
  %v42 = vld [vmem:[%s0 + $0x28] sm:$0xff]
  %v43 = vld [vmem:[%s0 + $0x30] sm:$0xff]
  %v44 = vld [vmem:[%s0 + $0x38] sm:$0xff]
  %v45 = vld [vmem:[%s0 + $0x40] sm:$0xff]
  %v46 = vld [vmem:[%s0 + $0x48] sm:$0xff]
  %v47 = vld [vmem:[%s0 + $0x50] sm:$0xff]
  %v48 = vld [vmem:[%s0 + $0x58] sm:$0xff]
  %v49 = vld [vmem:[%s0 + $0x60] sm:$0xff]
  %v50 = vld [vmem:[%s0 + $0x68] sm:$0xff]
  %v51 = vld [vmem:[%s0 + $0x70] sm:$0xff]
  %v52 = vld [vmem:[%s0 + $0x78] sm:$0xff]
  %v53 = vld [vmem:[%s0 + $0x80] sm:$0xff]
  %v54 = vld [vmem:[%s0 + $0x88] sm:$0xff]
  %v55 = vld [vmem:[%s0 + $0x90] sm:$0xff]
  %v56 = vld [vmem:[%s0 + $0x98] sm:$0xff]
  %v57 = vld [vmem:[%s0 + $0xa0] sm:$0xff]
  %v58 = vld [vmem:[%s0 + $0xa8] sm:$0xff]
  %v59 = vld [vmem:[%s0 + $0xb0] sm:$0xff]
  %v60 = vld [vmem:[%s0 + $0xb8] sm:$0xff]
  %v61 = vld [vmem:[%s0 + $0xc0] sm:$0xff]
  %v62 = vld [vmem:[%s0 + $0xc8] sm:$0xff]
  %v63 = vld [vmem:[%s0 + $0xd0] sm:$0xff]
  %v64 = vld [vmem:[%s0 + $0xd8] sm:$0xff]
  %v65 = vld [vmem:[%s0 + $0xe0] sm:$0xff]
  %v66 = vld [vmem:[%s0 + $0xe8] sm:$0xff]
  %v67 = vld [vmem:[%s0 + $0xf0] sm:$0xff]
  %v68 = vld [vmem:[%s0 + $0xf8] sm:$0xff]
  %v69 = vld [vmem:[%s0 + $0x100] sm:$0xff]
  %v70 = vld [vmem:[%s0 + $0x108] sm:$0xff]
  %v71 = vld [vmem:[%s0 + $0x110] sm:$0xff]
  %v72 = vld [vmem:[%s0 + $0x118] sm:$0xff]
  %v73 = vld [vmem:[%s0 + $0x120] sm:$0xff]
  %v74 = vld [vmem:[%s0 + $0x128] sm:$0xff]
  %v75 = vld [vmem:[%s0 + $0x130] sm:$0xff]
  %v76 = vld [vmem:[%s0 + $0x138] sm:$0xff]
  %v77 = vld [vmem:[%s0 + $0x140] sm:$0xff]
  %v78 = vld [vmem:[%s0 + $0x148] sm:$0xff]
  %v79 = vld [vmem:[%s0 + $0x150] sm:$0xff]
  %v80 = vld [vmem:[%s0 + $0x158] sm:$0xff]
  %v81 = vld [vmem:[%s0 + $0x160] sm:$0xff]
  %v82 = vld [vmem:[%s0 + $0x168] sm:$0xff]
  %v83 = vld [vmem:[%s0 + $0x170] sm:$0xff]
  %v84 = vld [vmem:[%s0 + $0x178] sm:$0xff]
  %v85 = vld [vmem:[%s0 + $0x180] sm:$0x11]
  %v86 = vld [vmem:[%s0 + $0x188] sm:$0x11]
  %v87 = vld [vmem:[%s0 + $0x190] sm:$0x11]
  %v88 = vld [vmem:[%s0 + $0x198] sm:$0x11]
  %v89 = vld [vmem:[%s0 + $0x1a0] sm:$0x11]
  %v90 = vld [vmem:[%s0 + $0x1a8] sm:$0x11]
  %v91 = vld [vmem:[%s0 + $0x1b0] sm:$0x11]
  %v92 = vld [vmem:[%s0 + $0x1b8] sm:$0x11]
  %v97 = vunpack.c.l.b16 %v33
  %v98 = vunpack.c.l.b16 %v34
  %v99 = vunpack.c.l.b16 %v35
  %v100 = vunpack.c.l.b16 %v36
  %v101 = vpack.c.b16 %v98, %v97
  %v102 = vpack.c.b16 %v100, %v99
  %v159 = vunpack.c.l.b16 %v37
  %v160 = vunpack.c.h.b16 %v37
  %v161 = vunpack.c.l.b16 %v38
  %v162 = vunpack.c.h.b16 %v38
  %v163 = vunpack.c.l.b16 %v39
  %v164 = vunpack.c.h.b16 %v39
  %v165 = vunpack.c.l.b16 %v40
  %v166 = vunpack.c.h.b16 %v40
  %v167 = vunpack.c.l.b16 %v41
  %v168 = vunpack.c.h.b16 %v41
  %v169 = vunpack.c.l.b16 %v42
  %v170 = vunpack.c.h.b16 %v42
  %v171 = vunpack.c.l.b16 %v43
  %v172 = vunpack.c.h.b16 %v43
  %v173 = vunpack.c.l.b16 %v44
  %v174 = vunpack.c.h.b16 %v44
  %v175 = vunpack.c.l.b16 %v45
  %v176 = vunpack.c.h.b16 %v45
  %v177 = vunpack.c.l.b16 %v46
  %v178 = vunpack.c.h.b16 %v46
  %v179 = vunpack.c.l.b16 %v47
  %v180 = vunpack.c.h.b16 %v47
  %v181 = vunpack.c.l.b16 %v48
  %v182 = vunpack.c.h.b16 %v48
  %v183 = vunpack.c.l.b16 %v49
  %v184 = vunpack.c.h.b16 %v49
  %v185 = vunpack.c.l.b16 %v50
  %v186 = vunpack.c.h.b16 %v50
  %v187 = vunpack.c.l.b16 %v51
  %v188 = vunpack.c.h.b16 %v51
  %v189 = vunpack.c.l.b16 %v52
  %v190 = vunpack.c.h.b16 %v52
  %v191 = vunpack.c.l.b16 %v53
  %v192 = vunpack.c.h.b16 %v53
  %v193 = vunpack.c.l.b16 %v54
  %v194 = vunpack.c.h.b16 %v54
  %v195 = vunpack.c.l.b16 %v55
  %v196 = vunpack.c.h.b16 %v55
  %v197 = vunpack.c.l.b16 %v56
  %v198 = vunpack.c.h.b16 %v56
  %v199 = vunpack.c.l.b16 %v57
  %v200 = vunpack.c.h.b16 %v57
  %v201 = vunpack.c.l.b16 %v58
  %v202 = vunpack.c.h.b16 %v58
  %v203 = vunpack.c.l.b16 %v59
  %v204 = vunpack.c.h.b16 %v59
  %v205 = vunpack.c.l.b16 %v60
  %v206 = vunpack.c.h.b16 %v60
  %v207 = vunpack.c.l.b16 %v61
  %v208 = vunpack.c.h.b16 %v61
  %v209 = vunpack.c.l.b16 %v62
  %v210 = vunpack.c.h.b16 %v62
  %v211 = vunpack.c.l.b16 %v63
  %v212 = vunpack.c.h.b16 %v63
  %v213 = vunpack.c.l.b16 %v64
  %v214 = vunpack.c.h.b16 %v64
  %v215 = vunpack.c.l.b16 %v65
  %v216 = vunpack.c.h.b16 %v65
  %v217 = vunpack.c.l.b16 %v66
  %v218 = vunpack.c.h.b16 %v66
  %v219 = vunpack.c.l.b16 %v67
  %v220 = vunpack.c.h.b16 %v67
  %v221 = vunpack.c.l.b16 %v68
  %v222 = vunpack.c.h.b16 %v68
  %v223 = vunpack.c.l.b16 %v69
  %v224 = vunpack.c.h.b16 %v69
  %v225 = vunpack.c.l.b16 %v70
  %v226 = vunpack.c.h.b16 %v70
  %v227 = vunpack.c.l.b16 %v71
  %v228 = vunpack.c.h.b16 %v71
  %v229 = vunpack.c.l.b16 %v72
  %v230 = vunpack.c.h.b16 %v72
  %v231 = vunpack.c.l.b16 %v73
  %v232 = vunpack.c.h.b16 %v73
  %v233 = vunpack.c.l.b16 %v74
  %v234 = vunpack.c.h.b16 %v74
  %v235 = vunpack.c.l.b16 %v75
  %v236 = vunpack.c.h.b16 %v75
  %v237 = vunpack.c.l.b16 %v76
  %v238 = vunpack.c.h.b16 %v76
  %v239 = vunpack.c.l.b16 %v77
  %v240 = vunpack.c.h.b16 %v77
  %v241 = vunpack.c.l.b16 %v78
  %v242 = vunpack.c.h.b16 %v78
  %v243 = vunpack.c.l.b16 %v79
  %v244 = vunpack.c.h.b16 %v79
  %v245 = vunpack.c.l.b16 %v80
  %v246 = vunpack.c.h.b16 %v80
  %v247 = vunpack.c.l.b16 %v81
  %v248 = vunpack.c.h.b16 %v81
  %v249 = vunpack.c.l.b16 %v82
  %v250 = vunpack.c.h.b16 %v82
  %v251 = vunpack.c.l.b16 %v83
  %v252 = vunpack.c.h.b16 %v83
  %v253 = vunpack.c.l.b16 %v84
  %v254 = vunpack.c.h.b16 %v84
  %v255 = vunpack.c.l.b16 %v85
  %v256 = vunpack.c.h.b16 %v85
  %v257 = vunpack.c.l.b16 %v86
  %v258 = vunpack.c.h.b16 %v86
  %v259 = vunpack.c.l.b16 %v87
  %v260 = vunpack.c.h.b16 %v87
  %v261 = vunpack.c.l.b16 %v88
  %v262 = vunpack.c.h.b16 %v88
  %v263 = vunpack.c.l.b16 %v89
  %v264 = vunpack.c.h.b16 %v89
  %v265 = vunpack.c.l.b16 %v90
  %v266 = vunpack.c.h.b16 %v90
  %v267 = vunpack.c.l.b16 %v91
  %v268 = vunpack.c.h.b16 %v91
  %v269 = vunpack.c.l.b16 %v92
  %v270 = vunpack.c.h.b16 %v92
  %v271 = vpack.c.b16 %v175, %v159
  %v272 = vpack.c.b16 %v176, %v160
  %v273 = vpack.c.b16 %v177, %v161
  %v274 = vpack.c.b16 %v178, %v162
  %v275 = vpack.c.b16 %v179, %v163
  %v276 = vpack.c.b16 %v180, %v164
  %v277 = vpack.c.b16 %v181, %v165
  %v278 = vpack.c.b16 %v182, %v166
  %v279 = vpack.c.b16 %v183, %v167
  %v280 = vpack.c.b16 %v184, %v168
  %v281 = vpack.c.b16 %v185, %v169
  %v282 = vpack.c.b16 %v186, %v170
  %v283 = vpack.c.b16 %v187, %v171
  %v284 = vpack.c.b16 %v188, %v172
  %v285 = vpack.c.b16 %v189, %v173
  %v286 = vpack.c.b16 %v190, %v174
  %v287 = vpack.c.b16 %v207, %v191
  %v288 = vpack.c.b16 %v208, %v192
  %v289 = vpack.c.b16 %v209, %v193
  %v290 = vpack.c.b16 %v210, %v194
  %v291 = vpack.c.b16 %v211, %v195
  %v292 = vpack.c.b16 %v212, %v196
  %v293 = vpack.c.b16 %v213, %v197
  %v294 = vpack.c.b16 %v214, %v198
  %v295 = vpack.c.b16 %v215, %v199
  %v296 = vpack.c.b16 %v216, %v200
  %v297 = vpack.c.b16 %v217, %v201
  %v298 = vpack.c.b16 %v218, %v202
  %v299 = vpack.c.b16 %v219, %v203
  %v300 = vpack.c.b16 %v220, %v204
  %v301 = vpack.c.b16 %v221, %v205
  %v302 = vpack.c.b16 %v222, %v206
  %v303 = vpack.c.b16 %v239, %v223
  %v304 = vpack.c.b16 %v240, %v224
  %v305 = vpack.c.b16 %v241, %v225
  %v306 = vpack.c.b16 %v242, %v226
  %v307 = vpack.c.b16 %v243, %v227
  %v308 = vpack.c.b16 %v244, %v228
  %v309 = vpack.c.b16 %v245, %v229
  %v310 = vpack.c.b16 %v246, %v230
  %v311 = vpack.c.b16 %v247, %v231
  %v312 = vpack.c.b16 %v248, %v232
  %v313 = vpack.c.b16 %v249, %v233
  %v314 = vpack.c.b16 %v250, %v234
  %v315 = vpack.c.b16 %v251, %v235
  %v316 = vpack.c.b16 %v252, %v236
  %v317 = vpack.c.b16 %v253, %v237
  %v318 = vpack.c.b16 %v254, %v238
  %v319 = vpack.c.b16 %v255, %v255
  %v320 = vpack.c.b16 %v256, %v256
  %v321 = vpack.c.b16 %v257, %v257
  %v322 = vpack.c.b16 %v258, %v258
  %v323 = vpack.c.b16 %v259, %v259
  %v324 = vpack.c.b16 %v260, %v260
  %v325 = vpack.c.b16 %v261, %v261
  %v326 = vpack.c.b16 %v262, %v262
  %v327 = vpack.c.b16 %v263, %v263
  %v328 = vpack.c.b16 %v264, %v264
  %v329 = vpack.c.b16 %v265, %v265
  %v330 = vpack.c.b16 %v266, %v266
  %v331 = vpack.c.b16 %v267, %v267
  %v332 = vpack.c.b16 %v268, %v268
  %v333 = vpack.c.b16 %v269, %v269
  %v334 = vpack.c.b16 %v270, %v270
  %vm383 = vcmask 400384
  %v385 = vsel %vm383, %v101, 0
  %v388 = vsel %vm383, %v102, 0
  %vm390 = vcmask 1040384
  %v391 = vsel 0, 4294967295, 65535
  %v392 = vsel %vm390, %v391, 0
  %v394 = vand.u32 %v319, %v392
  %v397 = vand.u32 %v320, %v392
  %v400 = vand.u32 %v321, %v392
  %v403 = vand.u32 %v322, %v392
  %v406 = vand.u32 %v323, %v392
  %v409 = vand.u32 %v324, %v392
  %v412 = vand.u32 %v325, %v392
  %v415 = vand.u32 %v326, %v392
  %v418 = vand.u32 %v327, %v392
  %v421 = vand.u32 %v328, %v392
  %v424 = vand.u32 %v329, %v392
  %v427 = vand.u32 %v330, %v392
  %v430 = vand.u32 %v331, %v392
  %v433 = vand.u32 %v332, %v392
  %v436 = vand.u32 %v333, %v392
  %v439 = vand.u32 %v334, %v392
  %441 = vmatprep.subr.bf16.mxu0 %v272
  %442 = vmatpush1.bf16.msra.mxu0 %v271
  %443 = vmatprep.subr.bf16.mxu0 %v288
  %444 = vmatpush1.bf16.msra.mxu0 %v287
  %445 = vmatprep.subr.bf16.mxu0 %v304
  %446 = vmatpush1.bf16.msra.mxu0 %v303
  %447 = vmatprep.subr.bf16.mxu0 %v397
  %448 = vmatpush1.bf16.msra.mxu0 %v394
  %449 = vmatprep.subr.bf16.mxu0 0
  %450 = vmatpush1.bf16.msra.mxu0 0
  %451 = vmatprep.subr.bf16.mxu0 0
  %452 = vmatpush1.bf16.msra.mxu0 0
  %453 = vmatprep.subr.bf16.mxu0 0
  %454 = vmatpush1.bf16.msra.mxu0 0
  %455 = vmatprep.subr.bf16.mxu0 0
  %456 = vmatpush1.bf16.msra.mxu0 0
  %457 = vmatprep.subr.bf16.mxu0 0
  %458 = vmatpush1.bf16.msra.mxu0 0
  %459 = vmatprep.subr.bf16.mxu0 0
  %460 = vmatpush1.bf16.msra.mxu0 0
  %461 = vmatprep.subr.bf16.mxu0 0
  %462 = vmatpush1.bf16.msra.mxu0 0
  %463 = vmatprep.subr.bf16.mxu0 0
  %464 = vmatpush1.bf16.msra.mxu0 0
  %465 = vmatprep.subr.bf16.mxu0 0
  %466 = vmatpush1.bf16.msra.mxu0 0
  %467 = vmatprep.subr.bf16.mxu0 0
  %468 = vmatpush1.bf16.msra.mxu0 0
  %469 = vmatprep.subr.bf16.mxu0 0
  %470 = vmatpush1.bf16.msra.mxu0 0
  %471 = vmatprep.subr.bf16.mxu0 0
  %472 = vmatpush1.bf16.msra.mxu0 0
  %473 = vmatprep.mubr.bf16.mxu0 0
  %474 = vmatmul.mubr.bf16.gmra.mrb[0].mxu0 %v385
  %v475 = vpop.f32.mrb[0].mxu0
  %v476 = vadd.f32 0.0, %v475
  %v477 = vpop.f32.mrb[0].mxu0
  %v478 = vadd.f32 0.0, %v477
  %v479 = vpop.f32.mrb[0].mxu0
  %v480 = vadd.f32 0.0, %v479
  %v481 = vpop.f32.mrb[0].mxu0
  %v482 = vadd.f32 0.0, %v481
  %483 = vmatprep.mubr.bf16.mxu0 0
  %484 = vmatmul.mubr.bf16.gmra.mrb[0].mxu0 %v388
  %v485 = vpop.f32.mrb[0].mxu0
  %v486 = vadd.f32 0.0, %v485
  %v487 = vpop.f32.mrb[0].mxu0
  %v488 = vadd.f32 0.0, %v487
  %v489 = vpop.f32.mrb[0].mxu0
  %v490 = vadd.f32 0.0, %v489
  %v491 = vpop.f32.mrb[0].mxu0
  %v492 = vadd.f32 0.0, %v491
  %493 = vdwg.mxu0
  %494 = vmatprep.subr.bf16.mxu0 %v274
  %495 = vmatpush1.bf16.msra.mxu0 %v273
  %496 = vmatprep.subr.bf16.mxu0 %v290
  %497 = vmatpush1.bf16.msra.mxu0 %v289
  %498 = vmatprep.subr.bf16.mxu0 %v306
  %499 = vmatpush1.bf16.msra.mxu0 %v305
  %500 = vmatprep.subr.bf16.mxu0 %v403
  %501 = vmatpush1.bf16.msra.mxu0 %v400
  %502 = vmatprep.subr.bf16.mxu0 0
  %503 = vmatpush1.bf16.msra.mxu0 0
  %504 = vmatprep.subr.bf16.mxu0 0
  %505 = vmatpush1.bf16.msra.mxu0 0
  %506 = vmatprep.subr.bf16.mxu0 0
  %507 = vmatpush1.bf16.msra.mxu0 0
  %508 = vmatprep.subr.bf16.mxu0 0
  %509 = vmatpush1.bf16.msra.mxu0 0
  %510 = vmatprep.subr.bf16.mxu0 0
  %511 = vmatpush1.bf16.msra.mxu0 0
  %512 = vmatprep.subr.bf16.mxu0 0
  %513 = vmatpush1.bf16.msra.mxu0 0
  %514 = vmatprep.subr.bf16.mxu0 0
  %515 = vmatpush1.bf16.msra.mxu0 0
  %516 = vmatprep.subr.bf16.mxu0 0
  %517 = vmatpush1.bf16.msra.mxu0 0
  %518 = vmatprep.subr.bf16.mxu0 0
  %519 = vmatpush1.bf16.msra.mxu0 0
  %520 = vmatprep.subr.bf16.mxu0 0
  %521 = vmatpush1.bf16.msra.mxu0 0
  %522 = vmatprep.subr.bf16.mxu0 0
  %523 = vmatpush1.bf16.msra.mxu0 0
  %524 = vmatprep.subr.bf16.mxu0 0
  %525 = vmatpush1.bf16.msra.mxu0 0
  %526 = vmatprep.mubr.bf16.mxu0 0
  %527 = vmatmul.mubr.bf16.gmra.mrb[0].mxu0 %v385
  %v528 = vpop.f32.mrb[0].mxu0
  %v529 = vadd.f32 0.0, %v528
  %v530 = vpop.f32.mrb[0].mxu0
  %v531 = vadd.f32 0.0, %v530
  %v532 = vpop.f32.mrb[0].mxu0
  %v533 = vadd.f32 0.0, %v532
  %v534 = vpop.f32.mrb[0].mxu0
  %v535 = vadd.f32 0.0, %v534
  %536 = vmatprep.mubr.bf16.mxu0 0
  %537 = vmatmul.mubr.bf16.gmra.mrb[0].mxu0 %v388
  %v538 = vpop.f32.mrb[0].mxu0
  %v539 = vadd.f32 0.0, %v538
  %v540 = vpop.f32.mrb[0].mxu0
  %v541 = vadd.f32 0.0, %v540
  %v542 = vpop.f32.mrb[0].mxu0
  %v543 = vadd.f32 0.0, %v542
  %v544 = vpop.f32.mrb[0].mxu0
  %v545 = vadd.f32 0.0, %v544
  %546 = vdwg.mxu0
  %547 = vmatprep.subr.bf16.mxu0 %v276
  %548 = vmatpush1.bf16.msra.mxu0 %v275
  %549 = vmatprep.subr.bf16.mxu0 %v292
  %550 = vmatpush1.bf16.msra.mxu0 %v291
  %551 = vmatprep.subr.bf16.mxu0 %v308
  %552 = vmatpush1.bf16.msra.mxu0 %v307
  %553 = vmatprep.subr.bf16.mxu0 %v409
  %554 = vmatpush1.bf16.msra.mxu0 %v406
  %555 = vmatprep.subr.bf16.mxu0 0
  %556 = vmatpush1.bf16.msra.mxu0 0
  %557 = vmatprep.subr.bf16.mxu0 0
  %558 = vmatpush1.bf16.msra.mxu0 0
  %559 = vmatprep.subr.bf16.mxu0 0
  %560 = vmatpush1.bf16.msra.mxu0 0
  %561 = vmatprep.subr.bf16.mxu0 0
  %562 = vmatpush1.bf16.msra.mxu0 0
  %563 = vmatprep.subr.bf16.mxu0 0
  %564 = vmatpush1.bf16.msra.mxu0 0
  %565 = vmatprep.subr.bf16.mxu0 0
  %566 = vmatpush1.bf16.msra.mxu0 0
  %567 = vmatprep.subr.bf16.mxu0 0
  %568 = vmatpush1.bf16.msra.mxu0 0
  %569 = vmatprep.subr.bf16.mxu0 0
  %570 = vmatpush1.bf16.msra.mxu0 0
  %571 = vmatprep.subr.bf16.mxu0 0
  %572 = vmatpush1.bf16.msra.mxu0 0
  %573 = vmatprep.subr.bf16.mxu0 0
  %574 = vmatpush1.bf16.msra.mxu0 0
  %575 = vmatprep.subr.bf16.mxu0 0
  %576 = vmatpush1.bf16.msra.mxu0 0
  %577 = vmatprep.subr.bf16.mxu0 0
  %578 = vmatpush1.bf16.msra.mxu0 0
  %579 = vmatprep.mubr.bf16.mxu0 0
  %580 = vmatmul.mubr.bf16.gmra.mrb[0].mxu0 %v385
  %v581 = vpop.f32.mrb[0].mxu0
  %v582 = vadd.f32 0.0, %v581
  %v583 = vpop.f32.mrb[0].mxu0
  %v584 = vadd.f32 0.0, %v583
  %v585 = vpop.f32.mrb[0].mxu0
  %v586 = vadd.f32 0.0, %v585
  %v587 = vpop.f32.mrb[0].mxu0
  %v588 = vadd.f32 0.0, %v587
  %589 = vmatprep.mubr.bf16.mxu0 0
  %590 = vmatmul.mubr.bf16.gmra.mrb[0].mxu0 %v388
  %v591 = vpop.f32.mrb[0].mxu0
  %v592 = vadd.f32 0.0, %v591
  %v593 = vpop.f32.mrb[0].mxu0
  %v594 = vadd.f32 0.0, %v593
  %v595 = vpop.f32.mrb[0].mxu0
  %v596 = vadd.f32 0.0, %v595
  %v597 = vpop.f32.mrb[0].mxu0
  %v598 = vadd.f32 0.0, %v597
  %599 = vdwg.mxu0
  %600 = vmatprep.subr.bf16.mxu0 %v278
  %601 = vmatpush1.bf16.msra.mxu0 %v277
  %602 = vmatprep.subr.bf16.mxu0 %v294
  %603 = vmatpush1.bf16.msra.mxu0 %v293
  %604 = vmatprep.subr.bf16.mxu0 %v310
  %605 = vmatpush1.bf16.msra.mxu0 %v309
  %606 = vmatprep.subr.bf16.mxu0 %v415
  %607 = vmatpush1.bf16.msra.mxu0 %v412
  %608 = vmatprep.subr.bf16.mxu0 0
  %609 = vmatpush1.bf16.msra.mxu0 0
  %610 = vmatprep.subr.bf16.mxu0 0
  %611 = vmatpush1.bf16.msra.mxu0 0
  %612 = vmatprep.subr.bf16.mxu0 0
  %613 = vmatpush1.bf16.msra.mxu0 0
  %614 = vmatprep.subr.bf16.mxu0 0
  %615 = vmatpush1.bf16.msra.mxu0 0
  %616 = vmatprep.subr.bf16.mxu0 0
  %617 = vmatpush1.bf16.msra.mxu0 0
  %618 = vmatprep.subr.bf16.mxu0 0
  %619 = vmatpush1.bf16.msra.mxu0 0
  %620 = vmatprep.subr.bf16.mxu0 0
  %621 = vmatpush1.bf16.msra.mxu0 0
  %622 = vmatprep.subr.bf16.mxu0 0
  %623 = vmatpush1.bf16.msra.mxu0 0
  %624 = vmatprep.subr.bf16.mxu0 0
  %625 = vmatpush1.bf16.msra.mxu0 0
  %626 = vmatprep.subr.bf16.mxu0 0
  %627 = vmatpush1.bf16.msra.mxu0 0
  %628 = vmatprep.subr.bf16.mxu0 0
  %629 = vmatpush1.bf16.msra.mxu0 0
  %630 = vmatprep.subr.bf16.mxu0 0
  %631 = vmatpush1.bf16.msra.mxu0 0
  %632 = vmatprep.mubr.bf16.mxu0 0
  %633 = vmatmul.mubr.bf16.gmra.mrb[0].mxu0 %v385
  %v634 = vpop.f32.mrb[0].mxu0
  %v635 = vadd.f32 0.0, %v634
  %v636 = vpop.f32.mrb[0].mxu0
  %v637 = vadd.f32 0.0, %v636
  %v638 = vpop.f32.mrb[0].mxu0
  %v639 = vadd.f32 0.0, %v638
  %v640 = vpop.f32.mrb[0].mxu0
  %v641 = vadd.f32 0.0, %v640
  %642 = vmatprep.mubr.bf16.mxu0 0
  %643 = vmatmul.mubr.bf16.gmra.mrb[0].mxu0 %v388
  %v644 = vpop.f32.mrb[0].mxu0
  %v645 = vadd.f32 0.0, %v644
  %v646 = vpop.f32.mrb[0].mxu0
  %v647 = vadd.f32 0.0, %v646
  %v648 = vpop.f32.mrb[0].mxu0
  %v649 = vadd.f32 0.0, %v648
  %v650 = vpop.f32.mrb[0].mxu0
  %v651 = vadd.f32 0.0, %v650
  %652 = vdwg.mxu0
  %653 = vmatprep.subr.bf16.mxu0 %v280
  %654 = vmatpush1.bf16.msra.mxu0 %v279
  %655 = vmatprep.subr.bf16.mxu0 %v296
  %656 = vmatpush1.bf16.msra.mxu0 %v295
  %657 = vmatprep.subr.bf16.mxu0 %v312
  %658 = vmatpush1.bf16.msra.mxu0 %v311
  %659 = vmatprep.subr.bf16.mxu0 %v421
  %660 = vmatpush1.bf16.msra.mxu0 %v418
  %661 = vmatprep.subr.bf16.mxu0 0
  %662 = vmatpush1.bf16.msra.mxu0 0
  %663 = vmatprep.subr.bf16.mxu0 0
  %664 = vmatpush1.bf16.msra.mxu0 0
  %665 = vmatprep.subr.bf16.mxu0 0
  %666 = vmatpush1.bf16.msra.mxu0 0
  %667 = vmatprep.subr.bf16.mxu0 0
  %668 = vmatpush1.bf16.msra.mxu0 0
  %669 = vmatprep.subr.bf16.mxu0 0
  %670 = vmatpush1.bf16.msra.mxu0 0
  %671 = vmatprep.subr.bf16.mxu0 0
  %672 = vmatpush1.bf16.msra.mxu0 0
  %673 = vmatprep.subr.bf16.mxu0 0
  %674 = vmatpush1.bf16.msra.mxu0 0
  %675 = vmatprep.subr.bf16.mxu0 0
  %676 = vmatpush1.bf16.msra.mxu0 0
  %677 = vmatprep.subr.bf16.mxu0 0
  %678 = vmatpush1.bf16.msra.mxu0 0
  %679 = vmatprep.subr.bf16.mxu0 0
  %680 = vmatpush1.bf16.msra.mxu0 0
  %681 = vmatprep.subr.bf16.mxu0 0
  %682 = vmatpush1.bf16.msra.mxu0 0
  %683 = vmatprep.subr.bf16.mxu0 0
  %684 = vmatpush1.bf16.msra.mxu0 0
  %685 = vmatprep.mubr.bf16.mxu0 0
  %686 = vmatmul.mubr.bf16.gmra.mrb[0].mxu0 %v385
  %v687 = vpop.f32.mrb[0].mxu0
  %v688 = vadd.f32 0.0, %v687
  %v689 = vpop.f32.mrb[0].mxu0
  %v690 = vadd.f32 0.0, %v689
  %v691 = vpop.f32.mrb[0].mxu0
  %v692 = vadd.f32 0.0, %v691
  %v693 = vpop.f32.mrb[0].mxu0
  %v694 = vadd.f32 0.0, %v693
  %695 = vmatprep.mubr.bf16.mxu0 0
  %696 = vmatmul.mubr.bf16.gmra.mrb[0].mxu0 %v388
  %v697 = vpop.f32.mrb[0].mxu0
  %v698 = vadd.f32 0.0, %v697
  %v699 = vpop.f32.mrb[0].mxu0
  %v700 = vadd.f32 0.0, %v699
  %v701 = vpop.f32.mrb[0].mxu0
  %v702 = vadd.f32 0.0, %v701
  %v703 = vpop.f32.mrb[0].mxu0
  %v704 = vadd.f32 0.0, %v703
  %705 = vdwg.mxu0
  %706 = vmatprep.subr.bf16.mxu0 %v282
  %707 = vmatpush1.bf16.msra.mxu0 %v281
  %708 = vmatprep.subr.bf16.mxu0 %v298
  %709 = vmatpush1.bf16.msra.mxu0 %v297
  %710 = vmatprep.subr.bf16.mxu0 %v314
  %711 = vmatpush1.bf16.msra.mxu0 %v313
  %712 = vmatprep.subr.bf16.mxu0 %v427
  %713 = vmatpush1.bf16.msra.mxu0 %v424
  %714 = vmatprep.subr.bf16.mxu0 0
  %715 = vmatpush1.bf16.msra.mxu0 0
  %716 = vmatprep.subr.bf16.mxu0 0
  %717 = vmatpush1.bf16.msra.mxu0 0
  %718 = vmatprep.subr.bf16.mxu0 0
  %719 = vmatpush1.bf16.msra.mxu0 0
  %720 = vmatprep.subr.bf16.mxu0 0
  %721 = vmatpush1.bf16.msra.mxu0 0
  %722 = vmatprep.subr.bf16.mxu0 0
  %723 = vmatpush1.bf16.msra.mxu0 0
  %724 = vmatprep.subr.bf16.mxu0 0
  %725 = vmatpush1.bf16.msra.mxu0 0
  %726 = vmatprep.subr.bf16.mxu0 0
  %727 = vmatpush1.bf16.msra.mxu0 0
  %728 = vmatprep.subr.bf16.mxu0 0
  %729 = vmatpush1.bf16.msra.mxu0 0
  %730 = vmatprep.subr.bf16.mxu0 0
  %731 = vmatpush1.bf16.msra.mxu0 0
  %732 = vmatprep.subr.bf16.mxu0 0
  %733 = vmatpush1.bf16.msra.mxu0 0
  %734 = vmatprep.subr.bf16.mxu0 0
  %735 = vmatpush1.bf16.msra.mxu0 0
  %736 = vmatprep.subr.bf16.mxu0 0
  %737 = vmatpush1.bf16.msra.mxu0 0
  %738 = vmatprep.mubr.bf16.mxu0 0
  %739 = vmatmul.mubr.bf16.gmra.mrb[0].mxu0 %v385
  %v740 = vpop.f32.mrb[0].mxu0
  %v741 = vadd.f32 0.0, %v740
  %v742 = vpop.f32.mrb[0].mxu0
  %v743 = vadd.f32 0.0, %v742
  %v744 = vpop.f32.mrb[0].mxu0
  %v745 = vadd.f32 0.0, %v744
  %v746 = vpop.f32.mrb[0].mxu0
  %v747 = vadd.f32 0.0, %v746
  %748 = vmatprep.mubr.bf16.mxu0 0
  %749 = vmatmul.mubr.bf16.gmra.mrb[0].mxu0 %v388
  %v750 = vpop.f32.mrb[0].mxu0
  %v751 = vadd.f32 0.0, %v750
  %v752 = vpop.f32.mrb[0].mxu0
  %v753 = vadd.f32 0.0, %v752
  %v754 = vpop.f32.mrb[0].mxu0
  %v755 = vadd.f32 0.0, %v754
  %v756 = vpop.f32.mrb[0].mxu0
  %v757 = vadd.f32 0.0, %v756
  %758 = vdwg.mxu0
  %759 = vmatprep.subr.bf16.mxu0 %v284
  %760 = vmatpush1.bf16.msra.mxu0 %v283
  %761 = vmatprep.subr.bf16.mxu0 %v300
  %762 = vmatpush1.bf16.msra.mxu0 %v299
  %763 = vmatprep.subr.bf16.mxu0 %v316
  %764 = vmatpush1.bf16.msra.mxu0 %v315
  %765 = vmatprep.subr.bf16.mxu0 %v433
  %766 = vmatpush1.bf16.msra.mxu0 %v430
  %767 = vmatprep.subr.bf16.mxu0 0
  %768 = vmatpush1.bf16.msra.mxu0 0
  %769 = vmatprep.subr.bf16.mxu0 0
  %770 = vmatpush1.bf16.msra.mxu0 0
  %771 = vmatprep.subr.bf16.mxu0 0
  %772 = vmatpush1.bf16.msra.mxu0 0
  %773 = vmatprep.subr.bf16.mxu0 0
  %774 = vmatpush1.bf16.msra.mxu0 0
  %775 = vmatprep.subr.bf16.mxu0 0
  %776 = vmatpush1.bf16.msra.mxu0 0
  %777 = vmatprep.subr.bf16.mxu0 0
  %778 = vmatpush1.bf16.msra.mxu0 0
  %779 = vmatprep.subr.bf16.mxu0 0
  %780 = vmatpush1.bf16.msra.mxu0 0
  %781 = vmatprep.subr.bf16.mxu0 0
  %782 = vmatpush1.bf16.msra.mxu0 0
  %783 = vmatprep.subr.bf16.mxu0 0
  %784 = vmatpush1.bf16.msra.mxu0 0
  %785 = vmatprep.subr.bf16.mxu0 0
  %786 = vmatpush1.bf16.msra.mxu0 0
  %787 = vmatprep.subr.bf16.mxu0 0
  %788 = vmatpush1.bf16.msra.mxu0 0
  %789 = vmatprep.subr.bf16.mxu0 0
  %790 = vmatpush1.bf16.msra.mxu0 0
  %791 = vmatprep.mubr.bf16.mxu0 0
  %792 = vmatmul.mubr.bf16.gmra.mrb[0].mxu0 %v385
  %v793 = vpop.f32.mrb[0].mxu0
  %v794 = vadd.f32 0.0, %v793
  %v795 = vpop.f32.mrb[0].mxu0
  %v796 = vadd.f32 0.0, %v795
  %v797 = vpop.f32.mrb[0].mxu0
  %v798 = vadd.f32 0.0, %v797
  %v799 = vpop.f32.mrb[0].mxu0
  %v800 = vadd.f32 0.0, %v799
  %801 = vmatprep.mubr.bf16.mxu0 0
  %802 = vmatmul.mubr.bf16.gmra.mrb[0].mxu0 %v388
  %v803 = vpop.f32.mrb[0].mxu0
  %v804 = vadd.f32 0.0, %v803
  %v805 = vpop.f32.mrb[0].mxu0
  %v806 = vadd.f32 0.0, %v805
  %v807 = vpop.f32.mrb[0].mxu0
  %v808 = vadd.f32 0.0, %v807
  %v809 = vpop.f32.mrb[0].mxu0
  %v810 = vadd.f32 0.0, %v809
  %811 = vdwg.mxu0
  %812 = vmatprep.subr.bf16.mxu0 %v286
  %813 = vmatpush1.bf16.msra.mxu0 %v285
  %814 = vmatprep.subr.bf16.mxu0 %v302
  %815 = vmatpush1.bf16.msra.mxu0 %v301
  %816 = vmatprep.subr.bf16.mxu0 %v318
  %817 = vmatpush1.bf16.msra.mxu0 %v317
  %818 = vmatprep.subr.bf16.mxu0 %v439
  %819 = vmatpush1.bf16.msra.mxu0 %v436
  %820 = vmatprep.subr.bf16.mxu0 0
  %821 = vmatpush1.bf16.msra.mxu0 0
  %822 = vmatprep.subr.bf16.mxu0 0
  %823 = vmatpush1.bf16.msra.mxu0 0
  %824 = vmatprep.subr.bf16.mxu0 0
  %825 = vmatpush1.bf16.msra.mxu0 0
  %826 = vmatprep.subr.bf16.mxu0 0
  %827 = vmatpush1.bf16.msra.mxu0 0
  %828 = vmatprep.subr.bf16.mxu0 0
  %829 = vmatpush1.bf16.msra.mxu0 0
  %830 = vmatprep.subr.bf16.mxu0 0
  %831 = vmatpush1.bf16.msra.mxu0 0
  %832 = vmatprep.subr.bf16.mxu0 0
  %833 = vmatpush1.bf16.msra.mxu0 0
  %834 = vmatprep.subr.bf16.mxu0 0
  %835 = vmatpush1.bf16.msra.mxu0 0
  %836 = vmatprep.subr.bf16.mxu0 0
  %837 = vmatpush1.bf16.msra.mxu0 0
  %838 = vmatprep.subr.bf16.mxu0 0
  %839 = vmatpush1.bf16.msra.mxu0 0
  %840 = vmatprep.subr.bf16.mxu0 0
  %841 = vmatpush1.bf16.msra.mxu0 0
  %842 = vmatprep.subr.bf16.mxu0 0
  %843 = vmatpush1.bf16.msra.mxu0 0
  %844 = vmatprep.mubr.bf16.mxu0 0
  %845 = vmatmul.mubr.bf16.gmra.mrb[0].mxu0 %v385
  %v846 = vpop.f32.mrb[0].mxu0
  %v847 = vadd.f32 0.0, %v846
  %v848 = vpop.f32.mrb[0].mxu0
  %v849 = vpop.f32.mrb[0].mxu0
  %v850 = vadd.f32 0.0, %v849
  %v851 = vpop.f32.mrb[0].mxu0
  %852 = vmatprep.mubr.bf16.mxu0 0
  %853 = vmatmul.mubr.bf16.gmra.mrb[0].mxu0 %v388
  %v854 = vpop.f32.mrb[0].mxu0
  %v855 = vadd.f32 0.0, %v854
  %v856 = vpop.f32.mrb[0].mxu0
  %v857 = vpop.f32.mrb[0].mxu0
  %v858 = vadd.f32 0.0, %v857
  %v859 = vpop.f32.mrb[0].mxu0
  %860 = vdwg.mxu0
  %869 = vrot.lane.b32.xlu0 %v476, 8
  %v870 = vpop.permute.xlu0 %869
  %871 = vrot.lane.b32.xlu0 %v478, 8
  %v872 = vpop.permute.xlu0 %871
  %873 = vrot.lane.b32.xlu0 %v480, 8
  %v874 = vpop.permute.xlu0 %873
  %875 = vrot.lane.b32.xlu0 %v482, 8
  %v876 = vpop.permute.xlu0 %875
  %877 = vrot.lane.b32.xlu0 %v486, 8
  %v878 = vpop.permute.xlu0 %877
  %879 = vrot.lane.b32.xlu0 %v488, 8
  %v880 = vpop.permute.xlu0 %879
  %881 = vrot.lane.b32.xlu0 %v490, 8
  %v882 = vpop.permute.xlu0 %881
  %883 = vrot.lane.b32.xlu0 %v492, 8
  %v884 = vpop.permute.xlu0 %883
  %vm885 = vcmask 64512
  %v886 = vsel %vm885, %v870, %v872
  %v887 = vsel %vm885, %v874, %v876
  %v888 = vsel %vm885, %v878, %v880
  %v889 = vsel %vm885, %v882, %v884
  %v894 = vmax.f32 %v476, %v886
  %v895 = vmax.f32 %v480, %v887
  %v896 = vmax.f32 %v486, %v888
  %v897 = vmax.f32 %v490, %v889
  %902 = vrot.lane.b32.xlu0 %v478, 16
  %v903 = vpop.permute.xlu0 %902
  %904 = vrot.lane.b32.xlu0 %v529, 16
  %v905 = vpop.permute.xlu0 %904
  %906 = vrot.lane.b32.xlu0 %v482, 16
  %v907 = vpop.permute.xlu0 %906
  %908 = vrot.lane.b32.xlu0 %v533, 16
  %v909 = vpop.permute.xlu0 %908
  %910 = vrot.lane.b32.xlu0 %v488, 16
  %v911 = vpop.permute.xlu0 %910
  %912 = vrot.lane.b32.xlu0 %v539, 16
  %v913 = vpop.permute.xlu0 %912
  %914 = vrot.lane.b32.xlu0 %v492, 16
  %v915 = vpop.permute.xlu0 %914
  %916 = vrot.lane.b32.xlu0 %v543, 16
  %v917 = vpop.permute.xlu0 %916
  %vm918 = vcmask 130048
  %v919 = vsel %vm918, %v903, %v905
  %v920 = vsel %vm918, %v907, %v909
  %v921 = vsel %vm918, %v911, %v913
  %v922 = vsel %vm918, %v915, %v917
  %v927 = vmax.f32 %v894, %v919
  %v928 = vmax.f32 %v895, %v920
  %v929 = vmax.f32 %v896, %v921
  %v930 = vmax.f32 %v897, %v922
  %935 = vrot.lane.b32.xlu0 %v529, 24
  %v936 = vpop.permute.xlu0 %935
  %937 = vrot.lane.b32.xlu0 %v531, 24
  %v938 = vpop.permute.xlu0 %937
  %939 = vrot.lane.b32.xlu0 %v533, 24
  %v940 = vpop.permute.xlu0 %939
  %941 = vrot.lane.b32.xlu0 %v535, 24
  %v942 = vpop.permute.xlu0 %941
  %943 = vrot.lane.b32.xlu0 %v539, 24
  %v944 = vpop.permute.xlu0 %943
  %945 = vrot.lane.b32.xlu0 %v541, 24
  %v946 = vpop.permute.xlu0 %945
  %947 = vrot.lane.b32.xlu0 %v543, 24
  %v948 = vpop.permute.xlu0 %947
  %949 = vrot.lane.b32.xlu0 %v545, 24
  %v950 = vpop.permute.xlu0 %949
  %vm951 = vcmask 195584
  %v952 = vsel %vm951, %v936, %v938
  %v953 = vsel %vm951, %v940, %v942
  %v954 = vsel %vm951, %v944, %v946
  %v955 = vsel %vm951, %v948, %v950
  %v960 = vmax.f32 %v927, %v952
  %v961 = vmax.f32 %v928, %v953
  %v962 = vmax.f32 %v929, %v954
  %v963 = vmax.f32 %v930, %v955
  %968 = vrot.lane.b32.xlu0 %v531, 32
  %v969 = vpop.permute.xlu0 %968
  %970 = vrot.lane.b32.xlu0 %v582, 32
  %v971 = vpop.permute.xlu0 %970
  %972 = vrot.lane.b32.xlu0 %v535, 32
  %v973 = vpop.permute.xlu0 %972
  %974 = vrot.lane.b32.xlu0 %v586, 32
  %v975 = vpop.permute.xlu0 %974
  %976 = vrot.lane.b32.xlu0 %v541, 32
  %v977 = vpop.permute.xlu0 %976
  %978 = vrot.lane.b32.xlu0 %v592, 32
  %v979 = vpop.permute.xlu0 %978
  %980 = vrot.lane.b32.xlu0 %v545, 32
  %v981 = vpop.permute.xlu0 %980
  %982 = vrot.lane.b32.xlu0 %v596, 32
  %v983 = vpop.permute.xlu0 %982
  %vm984 = vcmask 261120
  %v985 = vsel %vm984, %v969, %v971
  %v986 = vsel %vm984, %v973, %v975
  %v987 = vsel %vm984, %v977, %v979
  %v988 = vsel %vm984, %v981, %v983
  %v993 = vmax.f32 %v960, %v985
  %v994 = vmax.f32 %v961, %v986
  %v995 = vmax.f32 %v962, %v987
  %v996 = vmax.f32 %v963, %v988
  %1001 = vrot.lane.b32.xlu0 %v582, 40
  %v1002 = vpop.permute.xlu0 %1001
  %1003 = vrot.lane.b32.xlu0 %v584, 40
  %v1004 = vpop.permute.xlu0 %1003
  %1005 = vrot.lane.b32.xlu0 %v586, 40
  %v1006 = vpop.permute.xlu0 %1005
  %1007 = vrot.lane.b32.xlu0 %v588, 40
  %v1008 = vpop.permute.xlu0 %1007
  %1009 = vrot.lane.b32.xlu0 %v592, 40
  %v1010 = vpop.permute.xlu0 %1009
  %1011 = vrot.lane.b32.xlu0 %v594, 40
  %v1012 = vpop.permute.xlu0 %1011
  %1013 = vrot.lane.b32.xlu0 %v596, 40
  %v1014 = vpop.permute.xlu0 %1013
  %1015 = vrot.lane.b32.xlu0 %v598, 40
  %v1016 = vpop.permute.xlu0 %1015
  %vm1017 = vcmask 326656
  %v1018 = vsel %vm1017, %v1002, %v1004
  %v1019 = vsel %vm1017, %v1006, %v1008
  %v1020 = vsel %vm1017, %v1010, %v1012
  %v1021 = vsel %vm1017, %v1014, %v1016
  %v1026 = vmax.f32 %v993, %v1018
  %v1027 = vmax.f32 %v994, %v1019
  %v1028 = vmax.f32 %v995, %v1020
  %v1029 = vmax.f32 %v996, %v1021
  %1034 = vrot.lane.b32.xlu0 %v584, 48
  %v1035 = vpop.permute.xlu0 %1034
  %1036 = vrot.lane.b32.xlu0 %v635, 48
  %v1037 = vpop.permute.xlu0 %1036
  %1038 = vrot.lane.b32.xlu0 %v588, 48
  %v1039 = vpop.permute.xlu0 %1038
  %1040 = vrot.lane.b32.xlu0 %v639, 48
  %v1041 = vpop.permute.xlu0 %1040
  %1042 = vrot.lane.b32.xlu0 %v594, 48
  %v1043 = vpop.permute.xlu0 %1042
  %1044 = vrot.lane.b32.xlu0 %v645, 48
  %v1045 = vpop.permute.xlu0 %1044
  %1046 = vrot.lane.b32.xlu0 %v598, 48
  %v1047 = vpop.permute.xlu0 %1046
  %1048 = vrot.lane.b32.xlu0 %v649, 48
  %v1049 = vpop.permute.xlu0 %1048
  %vm1050 = vcmask 392192
  %v1051 = vsel %vm1050, %v1035, %v1037
  %v1052 = vsel %vm1050, %v1039, %v1041
  %v1053 = vsel %vm1050, %v1043, %v1045
  %v1054 = vsel %vm1050, %v1047, %v1049
  %v1059 = vmax.f32 %v1026, %v1051
  %v1060 = vmax.f32 %v1027, %v1052
  %v1061 = vmax.f32 %v1028, %v1053
  %v1062 = vmax.f32 %v1029, %v1054
  %1067 = vrot.lane.b32.xlu0 %v635, 56
  %v1068 = vpop.permute.xlu0 %1067
  %1069 = vrot.lane.b32.xlu0 %v637, 56
  %v1070 = vpop.permute.xlu0 %1069
  %1071 = vrot.lane.b32.xlu0 %v639, 56
  %v1072 = vpop.permute.xlu0 %1071
  %1073 = vrot.lane.b32.xlu0 %v641, 56
  %v1074 = vpop.permute.xlu0 %1073
  %1075 = vrot.lane.b32.xlu0 %v645, 56
  %v1076 = vpop.permute.xlu0 %1075
  %1077 = vrot.lane.b32.xlu0 %v647, 56
  %v1078 = vpop.permute.xlu0 %1077
  %1079 = vrot.lane.b32.xlu0 %v649, 56
  %v1080 = vpop.permute.xlu0 %1079
  %1081 = vrot.lane.b32.xlu0 %v651, 56
  %v1082 = vpop.permute.xlu0 %1081
  %vm1083 = vcmask 457728
  %v1084 = vsel %vm1083, %v1068, %v1070
  %v1085 = vsel %vm1083, %v1072, %v1074
  %v1086 = vsel %vm1083, %v1076, %v1078
  %v1087 = vsel %vm1083, %v1080, %v1082
  %v1092 = vmax.f32 %v1059, %v1084
  %v1093 = vmax.f32 %v1060, %v1085
  %v1094 = vmax.f32 %v1061, %v1086
  %v1095 = vmax.f32 %v1062, %v1087
  %1100 = vrot.lane.b32.xlu0 %v637, 64
  %v1101 = vpop.permute.xlu0 %1100
  %1102 = vrot.lane.b32.xlu0 %v688, 64
  %v1103 = vpop.permute.xlu0 %1102
  %1104 = vrot.lane.b32.xlu0 %v641, 64
  %v1105 = vpop.permute.xlu0 %1104
  %1106 = vrot.lane.b32.xlu0 %v692, 64
  %v1107 = vpop.permute.xlu0 %1106
  %1108 = vrot.lane.b32.xlu0 %v647, 64
  %v1109 = vpop.permute.xlu0 %1108
  %1110 = vrot.lane.b32.xlu0 %v698, 64
  %v1111 = vpop.permute.xlu0 %1110
  %1112 = vrot.lane.b32.xlu0 %v651, 64
  %v1113 = vpop.permute.xlu0 %1112
  %1114 = vrot.lane.b32.xlu0 %v702, 64
  %v1115 = vpop.permute.xlu0 %1114
  %vm1116 = vcmask 523264
  %v1117 = vsel %vm1116, %v1101, %v1103
  %v1118 = vsel %vm1116, %v1105, %v1107
  %v1119 = vsel %vm1116, %v1109, %v1111
  %v1120 = vsel %vm1116, %v1113, %v1115
  %v1125 = vmax.f32 %v1092, %v1117
  %v1126 = vmax.f32 %v1093, %v1118
  %v1127 = vmax.f32 %v1094, %v1119
  %v1128 = vmax.f32 %v1095, %v1120
  %1133 = vrot.lane.b32.xlu0 %v688, 72
  %v1134 = vpop.permute.xlu0 %1133
  %1135 = vrot.lane.b32.xlu0 %v690, 72
  %v1136 = vpop.permute.xlu0 %1135
  %1137 = vrot.lane.b32.xlu0 %v692, 72
  %v1138 = vpop.permute.xlu0 %1137
  %1139 = vrot.lane.b32.xlu0 %v694, 72
  %v1140 = vpop.permute.xlu0 %1139
  %1141 = vrot.lane.b32.xlu0 %v698, 72
  %v1142 = vpop.permute.xlu0 %1141
  %1143 = vrot.lane.b32.xlu0 %v700, 72
  %v1144 = vpop.permute.xlu0 %1143
  %1145 = vrot.lane.b32.xlu0 %v702, 72
  %v1146 = vpop.permute.xlu0 %1145
  %1147 = vrot.lane.b32.xlu0 %v704, 72
  %v1148 = vpop.permute.xlu0 %1147
  %vm1149 = vcmask 588800
  %v1150 = vsel %vm1149, %v1134, %v1136
  %v1151 = vsel %vm1149, %v1138, %v1140
  %v1152 = vsel %vm1149, %v1142, %v1144
  %v1153 = vsel %vm1149, %v1146, %v1148
  %v1158 = vmax.f32 %v1125, %v1150
  %v1159 = vmax.f32 %v1126, %v1151
  %v1160 = vmax.f32 %v1127, %v1152
  %v1161 = vmax.f32 %v1128, %v1153
  %1166 = vrot.lane.b32.xlu0 %v690, 80
  %v1167 = vpop.permute.xlu0 %1166
  %1168 = vrot.lane.b32.xlu0 %v741, 80
  %v1169 = vpop.permute.xlu0 %1168
  %1170 = vrot.lane.b32.xlu0 %v694, 80
  %v1171 = vpop.permute.xlu0 %1170
  %1172 = vrot.lane.b32.xlu0 %v745, 80
  %v1173 = vpop.permute.xlu0 %1172
  %1174 = vrot.lane.b32.xlu0 %v700, 80
  %v1175 = vpop.permute.xlu0 %1174
  %1176 = vrot.lane.b32.xlu0 %v751, 80
  %v1177 = vpop.permute.xlu0 %1176
  %1178 = vrot.lane.b32.xlu0 %v704, 80
  %v1179 = vpop.permute.xlu0 %1178
  %1180 = vrot.lane.b32.xlu0 %v755, 80
  %v1181 = vpop.permute.xlu0 %1180
  %vm1182 = vcmask 654336
  %v1183 = vsel %vm1182, %v1167, %v1169
  %v1184 = vsel %vm1182, %v1171, %v1173
  %v1185 = vsel %vm1182, %v1175, %v1177
  %v1186 = vsel %vm1182, %v1179, %v1181
  %v1191 = vmax.f32 %v1158, %v1183
  %v1192 = vmax.f32 %v1159, %v1184
  %v1193 = vmax.f32 %v1160, %v1185
  %v1194 = vmax.f32 %v1161, %v1186
  %1199 = vrot.lane.b32.xlu0 %v741, 88
  %v1200 = vpop.permute.xlu0 %1199
  %1201 = vrot.lane.b32.xlu0 %v743, 88
  %v1202 = vpop.permute.xlu0 %1201
  %1203 = vrot.lane.b32.xlu0 %v745, 88
  %v1204 = vpop.permute.xlu0 %1203
  %1205 = vrot.lane.b32.xlu0 %v747, 88
  %v1206 = vpop.permute.xlu0 %1205
  %1207 = vrot.lane.b32.xlu0 %v751, 88
  %v1208 = vpop.permute.xlu0 %1207
  %1209 = vrot.lane.b32.xlu0 %v753, 88
  %v1210 = vpop.permute.xlu0 %1209
  %1211 = vrot.lane.b32.xlu0 %v755, 88
  %v1212 = vpop.permute.xlu0 %1211
  %1213 = vrot.lane.b32.xlu0 %v757, 88
  %v1214 = vpop.permute.xlu0 %1213
  %vm1215 = vcmask 719872
  %v1216 = vsel %vm1215, %v1200, %v1202
  %v1217 = vsel %vm1215, %v1204, %v1206
  %v1218 = vsel %vm1215, %v1208, %v1210
  %v1219 = vsel %vm1215, %v1212, %v1214
  %v1224 = vmax.f32 %v1191, %v1216
  %v1225 = vmax.f32 %v1192, %v1217
  %v1226 = vmax.f32 %v1193, %v1218
  %v1227 = vmax.f32 %v1194, %v1219
  %1232 = vrot.lane.b32.xlu0 %v743, 96
  %v1233 = vpop.permute.xlu0 %1232
  %1234 = vrot.lane.b32.xlu0 %v794, 96
  %v1235 = vpop.permute.xlu0 %1234
  %1236 = vrot.lane.b32.xlu0 %v747, 96
  %v1237 = vpop.permute.xlu0 %1236
  %1238 = vrot.lane.b32.xlu0 %v798, 96
  %v1239 = vpop.permute.xlu0 %1238
  %1240 = vrot.lane.b32.xlu0 %v753, 96
  %v1241 = vpop.permute.xlu0 %1240
  %1242 = vrot.lane.b32.xlu0 %v804, 96
  %v1243 = vpop.permute.xlu0 %1242
  %1244 = vrot.lane.b32.xlu0 %v757, 96
  %v1245 = vpop.permute.xlu0 %1244
  %1246 = vrot.lane.b32.xlu0 %v808, 96
  %v1247 = vpop.permute.xlu0 %1246
  %vm1248 = vcmask 785408
  %v1249 = vsel %vm1248, %v1233, %v1235
  %v1250 = vsel %vm1248, %v1237, %v1239
  %v1251 = vsel %vm1248, %v1241, %v1243
  %v1252 = vsel %vm1248, %v1245, %v1247
  %v1257 = vmax.f32 %v1224, %v1249
  %v1258 = vmax.f32 %v1225, %v1250
  %v1259 = vmax.f32 %v1226, %v1251
  %v1260 = vmax.f32 %v1227, %v1252
  %1265 = vrot.lane.b32.xlu0 %v794, 104
  %v1266 = vpop.permute.xlu0 %1265
  %1267 = vrot.lane.b32.xlu0 %v796, 104
  %v1268 = vpop.permute.xlu0 %1267
  %1269 = vrot.lane.b32.xlu0 %v798, 104
  %v1270 = vpop.permute.xlu0 %1269
  %1271 = vrot.lane.b32.xlu0 %v800, 104
  %v1272 = vpop.permute.xlu0 %1271
  %1273 = vrot.lane.b32.xlu0 %v804, 104
  %v1274 = vpop.permute.xlu0 %1273
  %1275 = vrot.lane.b32.xlu0 %v806, 104
  %v1276 = vpop.permute.xlu0 %1275
  %1277 = vrot.lane.b32.xlu0 %v808, 104
  %v1278 = vpop.permute.xlu0 %1277
  %1279 = vrot.lane.b32.xlu0 %v810, 104
  %v1280 = vpop.permute.xlu0 %1279
  %vm1281 = vcmask 850944
  %v1282 = vsel %vm1281, %v1266, %v1268
  %v1283 = vsel %vm1281, %v1270, %v1272
  %v1284 = vsel %vm1281, %v1274, %v1276
  %v1285 = vsel %vm1281, %v1278, %v1280
  %v1290 = vmax.f32 %v1257, %v1282
  %v1291 = vmax.f32 %v1258, %v1283
  %v1292 = vmax.f32 %v1259, %v1284
  %v1293 = vmax.f32 %v1260, %v1285
  %1298 = vrot.lane.b32.xlu0 %v796, 112
  %v1299 = vpop.permute.xlu0 %1298
  %1300 = vrot.lane.b32.xlu0 %v847, 112
  %v1301 = vpop.permute.xlu0 %1300
  %1302 = vrot.lane.b32.xlu0 %v800, 112
  %v1303 = vpop.permute.xlu0 %1302
  %1304 = vrot.lane.b32.xlu0 %v850, 112
  %v1305 = vpop.permute.xlu0 %1304
  %1306 = vrot.lane.b32.xlu0 %v806, 112
  %v1307 = vpop.permute.xlu0 %1306
  %1308 = vrot.lane.b32.xlu0 %v855, 112
  %v1309 = vpop.permute.xlu0 %1308
  %1310 = vrot.lane.b32.xlu0 %v810, 112
  %v1311 = vpop.permute.xlu0 %1310
  %1312 = vrot.lane.b32.xlu0 %v858, 112
  %v1313 = vpop.permute.xlu0 %1312
  %vm1314 = vcmask 916480
  %v1315 = vsel %vm1314, %v1299, %v1301
  %v1316 = vsel %vm1314, %v1303, %v1305
  %v1317 = vsel %vm1314, %v1307, %v1309
  %v1318 = vsel %vm1314, %v1311, %v1313
  %v1323 = vmax.f32 %v1290, %v1315
  %v1324 = vmax.f32 %v1291, %v1316
  %v1325 = vmax.f32 %v1292, %v1317
  %v1326 = vmax.f32 %v1293, %v1318
  %1327 = vrot.lane.b32.xlu0 %v847, 120
  %v1328 = vpop.permute.xlu0 %1327
  %1329 = vrot.lane.b32.xlu0 %v850, 120
  %v1330 = vpop.permute.xlu0 %1329
  %1331 = vrot.lane.b32.xlu0 %v855, 120
  %v1332 = vpop.permute.xlu0 %1331
  %1333 = vrot.lane.b32.xlu0 %v858, 120
  %v1334 = vpop.permute.xlu0 %1333
  %v1339 = vmax.f32 %v1323, %v1328
  %v1340 = vmax.f32 %v1324, %v1330
  %v1341 = vmax.f32 %v1325, %v1332
  %v1342 = vmax.f32 %v1326, %v1334
  %v1343 = vld [vmem:[%s2] sm:$0xff]
  %v1344 = vld [vmem:[%s2 + $0x8] sm:$0xff]
  %v1345 = vld [vmem:[%s2 + $0x10] sm:$0xff]
  %v1346 = vld [vmem:[%s2 + $0x18] sm:$0xff]
  %1348 = vset.pattern.permute.xlu0 0
  %1349 = vperm.xlu0 %1348, %v1343
  %v1350 = vpop.permute.xlu0 %1349
  %1353 = vset.pattern.permute.xlu0 0
  %1354 = vperm.xlu0 %1353, %v1344
  %v1355 = vpop.permute.xlu0 %1354
  %1358 = vset.pattern.permute.xlu0 0
  %1359 = vperm.xlu0 %1358, %v1345
  %v1360 = vpop.permute.xlu0 %1359
  %1363 = vset.pattern.permute.xlu0 0
  %1364 = vperm.xlu0 %1363, %v1346
  %v1365 = vpop.permute.xlu0 %1364
  %v1367 = vadd.f32 %v1339, %v1350
  %v1368 = vadd.f32 %v1340, %v1355
  %v1369 = vadd.f32 %v1341, %v1360
  %v1370 = vadd.f32 %v1342, %v1365
  %v1371 = vmax.f32 %v1367, 0.0
  %v1372 = vmax.f32 %v1368, 0.0
  %v1373 = vmax.f32 %v1369, 0.0
  %v1374 = vmax.f32 %v1370, 0.0
  %1375 = vst [vmem:[#allocation2] sm:$0xff] 0
  %1376 = vst.msk [vmem:[#allocation2 + $0x8] sm:$0xff] %vm918, 0
  %1377 = vst [vmem:[#allocation2 + $0x10] sm:$0xff] 0
  %1378 = vst.msk [vmem:[#allocation2 + $0x18] sm:$0xff] %vm918, 0
  %1379 = vst [vmem:[#allocation3] sm:$0xff] 0
  %1380 = vst.msk [vmem:[#allocation3 + $0x8] sm:$0xff] %vm918, 0
  %1381 = vst [vmem:[#allocation3 + $0x10] sm:$0xff] 0
  %1382 = vst.msk [vmem:[#allocation3 + $0x18] sm:$0xff] %vm918, 0
  %1383 = vst [vmem:[#allocation3 + $0x20] sm:$0xff] 0
  %1384 = vst.msk [vmem:[#allocation3 + $0x28] sm:$0xff] %vm918, 0
  %1385 = vst [vmem:[#allocation3 + $0x30] sm:$0xff] 0
  %1386 = vst.msk [vmem:[#allocation3 + $0x38] sm:$0xff] %vm918, 0
  %v1387 = vpack.c.bf16 %v1372, %v1371
  %v1388 = vpack.c.bf16 %v1374, %v1373
  %1391 = vrot.lane.b32.xlu0 %v1387, 3
  %v1392 = vpop.permute.xlu0 %1391
  %1393 = vrot.lane.b32.xlu0 %v1388, 3
  %v1394 = vpop.permute.xlu0 %1393
  %vm1397 = vcmask 269336
  %1398 = vst.msk [vmem:[#allocation2] sm:$0xff] %vm1397, %v1392
  %1399 = vst.msk [vmem:[#allocation2 + $0x10] sm:$0xff] %vm1397, %v1394
  %1400 = vrot.lane.b32.xlu0 %v1387, 9
  %v1401 = vpop.permute.xlu0 %1400
  %1402 = vrot.lane.b32.xlu0 %v1388, 9
  %v1403 = vpop.permute.xlu0 %1402
  %vm1406 = vcmask 564536
  %1407 = vst.msk [vmem:[#allocation2] sm:$0xff] %vm1406, %v1401
  %1408 = vst.msk [vmem:[#allocation2 + $0x10] sm:$0xff] %vm1406, %v1403
  %1409 = vrot.lane.b32.xlu0 %v1387, 15
  %v1410 = vpop.permute.xlu0 %1409
  %1411 = vrot.lane.b32.xlu0 %v1388, 15
  %v1412 = vpop.permute.xlu0 %1411
  %vm1415 = vcmask 859736
  %1416 = vst.msk [vmem:[#allocation2] sm:$0xff] %vm1415, %v1410
  %1417 = vst.msk [vmem:[#allocation2 + $0x10] sm:$0xff] %vm1415, %v1412
  %1418 = vrot.lane.b32.xlu0 %v1387, 21
  %v1419 = vpop.permute.xlu0 %1418
  %1420 = vrot.lane.b32.xlu0 %v1388, 21
  %v1421 = vpop.permute.xlu0 %1420
  %vm1424 = vcmask 1048440
  %1425 = vst.msk [vmem:[#allocation2] sm:$0xff] %vm1424, %v1419
  %vm1426 = vcmask 105472
  %1427 = vst.msk [vmem:[#allocation2 + $0x8] sm:$0xff] %vm1426, %v1419
  %1428 = vst.msk [vmem:[#allocation2 + $0x10] sm:$0xff] %vm1424, %v1421
  %1429 = vst.msk [vmem:[#allocation2 + $0x18] sm:$0xff] %vm1426, %v1421
  %v1430 = vld [vmem:[%s3] sm:$0xf]
  %v1431 = vld [vmem:[%s3 + $0x4] sm:$0xf]
  %v1432 = vld [vmem:[%s3 + $0x8] sm:$0xf]
  %v1433 = vld [vmem:[%s3 + $0xc] sm:$0xf]
  %v1434 = vld [vmem:[%s3 + $0x10] sm:$0xf]
  %v1435 = vld [vmem:[%s3 + $0x14] sm:$0xf]
  %v1436 = vld [vmem:[%s3 + $0x18] sm:$0xf]
  %v1437 = vld [vmem:[%s3 + $0x1c] sm:$0xf]
  %v1438 = vld [vmem:[#allocation2] sm:$0xff]
  %v1439 = vld [vmem:[#allocation2 + $0x8] sm:$0xff]
  %v1440 = vld [vmem:[#allocation2 + $0x10] sm:$0xff]
  %v1441 = vld [vmem:[#allocation2 + $0x18] sm:$0xff]
  %s1442 = scalar_lea.vmem %s3, 32
  %v1443 = vld [vmem:[%s1442] sm:$0xf]
  %v1444 = vld [vmem:[%s1442 + $0x4] sm:$0xf]
  %v1445 = vld [vmem:[%s1442 + $0x8] sm:$0xf]
  %v1446 = vld [vmem:[%s1442 + $0xc] sm:$0xf]
  %v1447 = vld [vmem:[%s1442 + $0x10] sm:$0xf]
  %v1448 = vld [vmem:[%s1442 + $0x14] sm:$0xf]
  %v1449 = vld [vmem:[%s1442 + $0x18] sm:$0xf]
  %v1450 = vld [vmem:[%s1442 + $0x1c] sm:$0xf]
  %v1459 = vunpack.c.l.b16 %v1443
  %v1460 = vunpack.c.l.b16 %v1444
  %v1461 = vunpack.c.l.b16 %v1445
  %v1462 = vunpack.c.l.b16 %v1446
  %v1463 = vunpack.c.l.b16 %v1447
  %v1464 = vunpack.c.l.b16 %v1448
  %v1465 = vunpack.c.l.b16 %v1449
  %v1466 = vunpack.c.l.b16 %v1450
  %v1467 = vpack.c.b16 %v1460, %v1459
  %v1468 = vpack.c.b16 %v1462, %v1461
  %v1469 = vpack.c.b16 %v1464, %v1463
  %v1470 = vpack.c.b16 %v1466, %v1465
  %1475 = vrot.lane.b32.xlu0 %v1438, 127
  %v1476 = vpop.permute.xlu0 %1475
  %1477 = vrot.lane.b32.xlu0 %v1439, 127
  %v1478 = vpop.permute.xlu0 %1477
  %1479 = vrot.lane.b32.xlu0 %v1440, 127
  %v1480 = vpop.permute.xlu0 %1479
  %1481 = vrot.lane.b32.xlu0 %v1441, 127
  %v1482 = vpop.permute.xlu0 %1481
  %vm1483 = vcmask 1039360
  %v1484 = vsel %vm1483, %v1476, %v1478
  %v1485 = vsel %vm1483, %v1480, %v1482
  %v1491 = vsel %vm984, %v1467, 0
  %v1494 = vsel %vm984, %v1468, 0
  %v1497 = vsel %vm984, %v1469, 0
  %v1500 = vsel %vm984, %v1470, 0
  %1502 = vmatprep.subr.bf16.mxu0 %v1478
  %1503 = vmatpush1.bf16.msra.mxu0 %v1484
  %1504 = vmatprep.subr.bf16.mxu0 %v1482
  %1505 = vmatpush1.bf16.msra.mxu0 %v1485
  %1506 = vmatprep.subr.bf16.mxu0 0
  %1507 = vmatpush1.bf16.msra.mxu0 0
  %1508 = vmatprep.subr.bf16.mxu0 0
  %1509 = vmatpush1.bf16.msra.mxu0 0
  %1510 = vmatprep.subr.bf16.mxu0 0
  %1511 = vmatpush1.bf16.msra.mxu0 0
  %1512 = vmatprep.subr.bf16.mxu0 0
  %1513 = vmatpush1.bf16.msra.mxu0 0
  %1514 = vmatprep.subr.bf16.mxu0 0
  %1515 = vmatpush1.bf16.msra.mxu0 0
  %1516 = vmatprep.subr.bf16.mxu0 0
  %1517 = vmatpush1.bf16.msra.mxu0 0
  %1518 = vmatprep.subr.bf16.mxu0 0
  %1519 = vmatpush1.bf16.msra.mxu0 0
  %1520 = vmatprep.subr.bf16.mxu0 0
  %1521 = vmatpush1.bf16.msra.mxu0 0
  %1522 = vmatprep.subr.bf16.mxu0 0
  %1523 = vmatpush1.bf16.msra.mxu0 0
  %1524 = vmatprep.subr.bf16.mxu0 0
  %1525 = vmatpush1.bf16.msra.mxu0 0
  %1526 = vmatprep.subr.bf16.mxu0 0
  %1527 = vmatpush1.bf16.msra.mxu0 0
  %1528 = vmatprep.subr.bf16.mxu0 0
  %1529 = vmatpush1.bf16.msra.mxu0 0
  %1530 = vmatprep.subr.bf16.mxu0 0
  %1531 = vmatpush1.bf16.msra.mxu0 0
  %1532 = vmatprep.subr.bf16.mxu0 0
  %1533 = vmatpush1.bf16.msra.mxu0 0
  %1534 = vmatprep.mubr.bf16.mxu0 0
  %1535 = vmatmul.mubr.bf16.gmra.mrb[0].mxu0 %v1491
  %v1536 = vpop.f32.mrb[0].mxu0
  %v1537 = vadd.f32 0.0, %v1536
  %v1538 = vpop.f32.mrb[0].mxu0
  %v1539 = vadd.f32 0.0, %v1538
  %v1540 = vpop.f32.mrb[0].mxu0
  %v1541 = vadd.f32 0.0, %v1540
  %v1542 = vpop.f32.mrb[0].mxu0
  %v1543 = vadd.f32 0.0, %v1542
  %1544 = vmatprep.mubr.bf16.mxu0 0
  %1545 = vmatmul.mubr.bf16.gmra.mrb[0].mxu0 %v1494
  %v1546 = vpop.f32.mrb[0].mxu0
  %v1547 = vadd.f32 0.0, %v1546
  %v1548 = vpop.f32.mrb[0].mxu0
  %v1549 = vadd.f32 0.0, %v1548
  %v1550 = vpop.f32.mrb[0].mxu0
  %v1551 = vadd.f32 0.0, %v1550
  %v1552 = vpop.f32.mrb[0].mxu0
  %v1553 = vadd.f32 0.0, %v1552
  %1554 = vmatprep.mubr.bf16.mxu0 0
  %1555 = vmatmul.mubr.bf16.gmra.mrb[0].mxu0 %v1497
  %v1556 = vpop.f32.mrb[0].mxu0
  %v1557 = vadd.f32 0.0, %v1556
  %v1558 = vpop.f32.mrb[0].mxu0
  %v1559 = vadd.f32 0.0, %v1558
  %v1560 = vpop.f32.mrb[0].mxu0
  %v1561 = vadd.f32 0.0, %v1560
  %v1562 = vpop.f32.mrb[0].mxu0
  %v1563 = vadd.f32 0.0, %v1562
  %1564 = vmatprep.mubr.bf16.mxu0 0
  %1565 = vmatmul.mubr.bf16.gmra.mrb[0].mxu0 %v1500
  %v1566 = vpop.f32.mrb[0].mxu0
  %v1567 = vadd.f32 0.0, %v1566
  %v1568 = vpop.f32.mrb[0].mxu0
  %v1569 = vadd.f32 0.0, %v1568
  %v1570 = vpop.f32.mrb[0].mxu0
  %v1571 = vadd.f32 0.0, %v1570
  %v1572 = vpop.f32.mrb[0].mxu0
  %v1573 = vadd.f32 0.0, %v1572
  %1574 = vdwg.mxu0
  %v1583 = vunpack.c.l.b16 %v1430
  %v1584 = vunpack.c.l.b16 %v1431
  %v1585 = vunpack.c.l.b16 %v1432
  %v1586 = vunpack.c.l.b16 %v1433
  %v1587 = vunpack.c.l.b16 %v1434
  %v1588 = vunpack.c.l.b16 %v1435
  %v1589 = vunpack.c.l.b16 %v1436
  %v1590 = vunpack.c.l.b16 %v1437
  %v1591 = vpack.c.b16 %v1584, %v1583
  %v1592 = vpack.c.b16 %v1586, %v1585
  %v1593 = vpack.c.b16 %v1588, %v1587
  %v1594 = vpack.c.b16 %v1590, %v1589
  %v1596 = vsel %vm984, %v1591, 0
  %v1599 = vsel %vm984, %v1592, 0
  %v1602 = vsel %vm984, %v1593, 0
  %v1605 = vsel %vm984, %v1594, 0
  %1607 = vmatprep.subr.bf16.mxu0 %v1439
  %1608 = vmatpush1.bf16.msra.mxu0 %v1438
  %1609 = vmatprep.subr.bf16.mxu0 %v1441
  %1610 = vmatpush1.bf16.msra.mxu0 %v1440
  %1611 = vmatprep.subr.bf16.mxu0 0
  %1612 = vmatpush1.bf16.msra.mxu0 0
  %1613 = vmatprep.subr.bf16.mxu0 0
  %1614 = vmatpush1.bf16.msra.mxu0 0
  %1615 = vmatprep.subr.bf16.mxu0 0
  %1616 = vmatpush1.bf16.msra.mxu0 0
  %1617 = vmatprep.subr.bf16.mxu0 0
  %1618 = vmatpush1.bf16.msra.mxu0 0
  %1619 = vmatprep.subr.bf16.mxu0 0
  %1620 = vmatpush1.bf16.msra.mxu0 0
  %1621 = vmatprep.subr.bf16.mxu0 0
  %1622 = vmatpush1.bf16.msra.mxu0 0
  %1623 = vmatprep.subr.bf16.mxu0 0
  %1624 = vmatpush1.bf16.msra.mxu0 0
  %1625 = vmatprep.subr.bf16.mxu0 0
  %1626 = vmatpush1.bf16.msra.mxu0 0
  %1627 = vmatprep.subr.bf16.mxu0 0
  %1628 = vmatpush1.bf16.msra.mxu0 0
  %1629 = vmatprep.subr.bf16.mxu0 0
  %1630 = vmatpush1.bf16.msra.mxu0 0
  %1631 = vmatprep.subr.bf16.mxu0 0
  %1632 = vmatpush1.bf16.msra.mxu0 0
  %1633 = vmatprep.subr.bf16.mxu0 0
  %1634 = vmatpush1.bf16.msra.mxu0 0
  %1635 = vmatprep.subr.bf16.mxu0 0
  %1636 = vmatpush1.bf16.msra.mxu0 0
  %1637 = vmatprep.subr.bf16.mxu0 0
  %1638 = vmatpush1.bf16.msra.mxu0 0
  %1639 = vmatprep.mubr.bf16.mxu0 0
  %1640 = vmatmul.mubr.bf16.gmra.mrb[0].mxu0 %v1596
  %v1641 = vpop.f32.mrb[0].mxu0
  %v1642 = vadd.f32 %v1537, %v1641
  %v1643 = vpop.f32.mrb[0].mxu0
  %v1644 = vadd.f32 %v1539, %v1643
  %v1645 = vpop.f32.mrb[0].mxu0
  %v1646 = vadd.f32 %v1541, %v1645
  %v1647 = vpop.f32.mrb[0].mxu0
  %v1648 = vadd.f32 %v1543, %v1647
  %1649 = vmatprep.mubr.bf16.mxu0 0
  %1650 = vmatmul.mubr.bf16.gmra.mrb[0].mxu0 %v1599
  %v1651 = vpop.f32.mrb[0].mxu0
  %v1652 = vadd.f32 %v1547, %v1651
  %v1653 = vpop.f32.mrb[0].mxu0
  %v1654 = vadd.f32 %v1549, %v1653
  %v1655 = vpop.f32.mrb[0].mxu0
  %v1656 = vadd.f32 %v1551, %v1655
  %v1657 = vpop.f32.mrb[0].mxu0
  %v1658 = vadd.f32 %v1553, %v1657
  %1659 = vmatprep.mubr.bf16.mxu0 0
  %1660 = vmatmul.mubr.bf16.gmra.mrb[0].mxu0 %v1602
  %v1661 = vpop.f32.mrb[0].mxu0
  %v1662 = vadd.f32 %v1557, %v1661
  %v1663 = vpop.f32.mrb[0].mxu0
  %v1664 = vadd.f32 %v1559, %v1663
  %v1665 = vpop.f32.mrb[0].mxu0
  %v1666 = vadd.f32 %v1561, %v1665
  %v1667 = vpop.f32.mrb[0].mxu0
  %v1668 = vadd.f32 %v1563, %v1667
  %1669 = vmatprep.mubr.bf16.mxu0 0
  %1670 = vmatmul.mubr.bf16.gmra.mrb[0].mxu0 %v1605
  %v1671 = vpop.f32.mrb[0].mxu0
  %v1672 = vadd.f32 %v1567, %v1671
  %v1673 = vpop.f32.mrb[0].mxu0
  %v1674 = vadd.f32 %v1569, %v1673
  %v1675 = vpop.f32.mrb[0].mxu0
  %v1676 = vadd.f32 %v1571, %v1675
  %v1677 = vpop.f32.mrb[0].mxu0
  %v1678 = vadd.f32 %v1573, %v1677
  %1679 = vdwg.mxu0
  %s1680 = scalar_lea.vmem %s3, 64
  %v1681 = vld [vmem:[%s1680] sm:$0xf]
  %v1682 = vld [vmem:[%s1680 + $0x4] sm:$0xf]
  %v1683 = vld [vmem:[%s1680 + $0x8] sm:$0xf]
  %v1684 = vld [vmem:[%s1680 + $0xc] sm:$0xf]
  %v1685 = vld [vmem:[%s1680 + $0x10] sm:$0xf]
  %v1686 = vld [vmem:[%s1680 + $0x14] sm:$0xf]
  %v1687 = vld [vmem:[%s1680 + $0x18] sm:$0xf]
  %v1688 = vld [vmem:[%s1680 + $0x1c] sm:$0xf]
  %v1697 = vunpack.c.l.b16 %v1681
  %v1698 = vunpack.c.l.b16 %v1682
  %v1699 = vunpack.c.l.b16 %v1683
  %v1700 = vunpack.c.l.b16 %v1684
  %v1701 = vunpack.c.l.b16 %v1685
  %v1702 = vunpack.c.l.b16 %v1686
  %v1703 = vunpack.c.l.b16 %v1687
  %v1704 = vunpack.c.l.b16 %v1688
  %v1705 = vpack.c.b16 %v1698, %v1697
  %v1706 = vpack.c.b16 %v1700, %v1699
  %v1707 = vpack.c.b16 %v1702, %v1701
  %v1708 = vpack.c.b16 %v1704, %v1703
  %1709 = vrot.lane.b32.xlu0 %v1438, 126
  %v1710 = vpop.permute.xlu0 %1709
  %1711 = vrot.lane.b32.xlu0 %v1439, 126
  %v1712 = vpop.permute.xlu0 %1711
  %1713 = vrot.lane.b32.xlu0 %v1440, 126
  %v1714 = vpop.permute.xlu0 %1713
  %1715 = vrot.lane.b32.xlu0 %v1441, 126
  %v1716 = vpop.permute.xlu0 %1715
  %vm1717 = vcmask 1031168
  %v1718 = vsel %vm1717, %v1710, %v1712
  %v1719 = vsel %vm1717, %v1714, %v1716
  %v1725 = vsel %vm984, %v1705, 0
  %v1728 = vsel %vm984, %v1706, 0
  %v1731 = vsel %vm984, %v1707, 0
  %v1734 = vsel %vm984, %v1708, 0
  %1736 = vmatprep.subr.bf16.mxu0 %v1712
  %1737 = vmatpush1.bf16.msra.mxu0 %v1718
  %1738 = vmatprep.subr.bf16.mxu0 %v1716
  %1739 = vmatpush1.bf16.msra.mxu0 %v1719
  %1740 = vmatprep.subr.bf16.mxu0 0
  %1741 = vmatpush1.bf16.msra.mxu0 0
  %1742 = vmatprep.subr.bf16.mxu0 0
  %1743 = vmatpush1.bf16.msra.mxu0 0
  %1744 = vmatprep.subr.bf16.mxu0 0
  %1745 = vmatpush1.bf16.msra.mxu0 0
  %1746 = vmatprep.subr.bf16.mxu0 0
  %1747 = vmatpush1.bf16.msra.mxu0 0
  %1748 = vmatprep.subr.bf16.mxu0 0
  %1749 = vmatpush1.bf16.msra.mxu0 0
  %1750 = vmatprep.subr.bf16.mxu0 0
  %1751 = vmatpush1.bf16.msra.mxu0 0
  %1752 = vmatprep.subr.bf16.mxu0 0
  %1753 = vmatpush1.bf16.msra.mxu0 0
  %1754 = vmatprep.subr.bf16.mxu0 0
  %1755 = vmatpush1.bf16.msra.mxu0 0
  %1756 = vmatprep.subr.bf16.mxu0 0
  %1757 = vmatpush1.bf16.msra.mxu0 0
  %1758 = vmatprep.subr.bf16.mxu0 0
  %1759 = vmatpush1.bf16.msra.mxu0 0
  %1760 = vmatprep.subr.bf16.mxu0 0
  %1761 = vmatpush1.bf16.msra.mxu0 0
  %1762 = vmatprep.subr.bf16.mxu0 0
  %1763 = vmatpush1.bf16.msra.mxu0 0
  %1764 = vmatprep.subr.bf16.mxu0 0
  %1765 = vmatpush1.bf16.msra.mxu0 0
  %1766 = vmatprep.subr.bf16.mxu0 0
  %1767 = vmatpush1.bf16.msra.mxu0 0
  %1768 = vmatprep.mubr.bf16.mxu0 0
  %1769 = vmatmul.mubr.bf16.gmra.mrb[0].mxu0 %v1725
  %v1770 = vpop.f32.mrb[0].mxu0
  %v1771 = vadd.f32 0.0, %v1770
  %v1772 = vpop.f32.mrb[0].mxu0
  %v1773 = vadd.f32 0.0, %v1772
  %v1774 = vpop.f32.mrb[0].mxu0
  %v1775 = vadd.f32 0.0, %v1774
  %v1776 = vpop.f32.mrb[0].mxu0
  %v1777 = vadd.f32 0.0, %v1776
  %1778 = vmatprep.mubr.bf16.mxu0 0
  %1779 = vmatmul.mubr.bf16.gmra.mrb[0].mxu0 %v1728
  %v1780 = vpop.f32.mrb[0].mxu0
  %v1781 = vadd.f32 0.0, %v1780
  %v1782 = vpop.f32.mrb[0].mxu0
  %v1783 = vadd.f32 0.0, %v1782
  %v1784 = vpop.f32.mrb[0].mxu0
  %v1785 = vadd.f32 0.0, %v1784
  %v1786 = vpop.f32.mrb[0].mxu0
  %v1787 = vadd.f32 0.0, %v1786
  %1788 = vmatprep.mubr.bf16.mxu0 0
  %1789 = vmatmul.mubr.bf16.gmra.mrb[0].mxu0 %v1731
  %v1790 = vpop.f32.mrb[0].mxu0
  %v1791 = vadd.f32 0.0, %v1790
  %v1792 = vpop.f32.mrb[0].mxu0
  %v1793 = vadd.f32 0.0, %v1792
  %v1794 = vpop.f32.mrb[0].mxu0
  %v1795 = vadd.f32 0.0, %v1794
  %v1796 = vpop.f32.mrb[0].mxu0
  %v1797 = vadd.f32 0.0, %v1796
  %1798 = vmatprep.mubr.bf16.mxu0 0
  %1799 = vmatmul.mubr.bf16.gmra.mrb[0].mxu0 %v1734
  %v1800 = vpop.f32.mrb[0].mxu0
  %v1801 = vadd.f32 0.0, %v1800
  %v1802 = vpop.f32.mrb[0].mxu0
  %v1803 = vadd.f32 0.0, %v1802
  %v1804 = vpop.f32.mrb[0].mxu0
  %v1805 = vadd.f32 0.0, %v1804
  %v1806 = vpop.f32.mrb[0].mxu0
  %v1807 = vadd.f32 0.0, %v1806
  %1808 = vdwg.mxu0
  %v1809 = vadd.f32 %v1642, %v1771
  %v1810 = vadd.f32 %v1644, %v1773
  %v1811 = vadd.f32 %v1646, %v1775
  %v1812 = vadd.f32 %v1648, %v1777
  %v1813 = vadd.f32 %v1652, %v1781
  %v1814 = vadd.f32 %v1654, %v1783
  %v1815 = vadd.f32 %v1656, %v1785
  %v1816 = vadd.f32 %v1658, %v1787
  %v1817 = vadd.f32 %v1662, %v1791
  %v1818 = vadd.f32 %v1664, %v1793
  %v1819 = vadd.f32 %v1666, %v1795
  %v1820 = vadd.f32 %v1668, %v1797
  %v1821 = vadd.f32 %v1672, %v1801
  %v1822 = vadd.f32 %v1674, %v1803
  %v1823 = vadd.f32 %v1676, %v1805
  %v1824 = vadd.f32 %v1678, %v1807
  %s1825 = scalar_lea.vmem %s3, 96
  %v1826 = vld [vmem:[%s1825] sm:$0xf]
  %v1827 = vld [vmem:[%s1825 + $0x4] sm:$0xf]
  %v1828 = vld [vmem:[%s1825 + $0x8] sm:$0xf]
  %v1829 = vld [vmem:[%s1825 + $0xc] sm:$0xf]
  %v1830 = vld [vmem:[%s1825 + $0x10] sm:$0xf]
  %v1831 = vld [vmem:[%s1825 + $0x14] sm:$0xf]
  %v1832 = vld [vmem:[%s1825 + $0x18] sm:$0xf]
  %v1833 = vld [vmem:[%s1825 + $0x1c] sm:$0xf]
  %v1842 = vunpack.c.l.b16 %v1826
  %v1843 = vunpack.c.l.b16 %v1827
  %v1844 = vunpack.c.l.b16 %v1828
  %v1845 = vunpack.c.l.b16 %v1829
  %v1846 = vunpack.c.l.b16 %v1830
  %v1847 = vunpack.c.l.b16 %v1831
  %v1848 = vunpack.c.l.b16 %v1832
  %v1849 = vunpack.c.l.b16 %v1833
  %v1850 = vpack.c.b16 %v1843, %v1842
  %v1851 = vpack.c.b16 %v1845, %v1844
  %v1852 = vpack.c.b16 %v1847, %v1846
  %v1853 = vpack.c.b16 %v1849, %v1848
  %1854 = vrot.lane.b32.xlu0 %v1438, 125
  %v1855 = vpop.permute.xlu0 %1854
  %1856 = vrot.lane.b32.xlu0 %v1439, 125
  %v1857 = vpop.permute.xlu0 %1856
  %1858 = vrot.lane.b32.xlu0 %v1440, 125
  %v1859 = vpop.permute.xlu0 %1858
  %1860 = vrot.lane.b32.xlu0 %v1441, 125
  %v1861 = vpop.permute.xlu0 %1860
  %vm1862 = vcmask 1022976
  %v1863 = vsel %vm1862, %v1855, %v1857
  %v1864 = vsel %vm1862, %v1859, %v1861
  %v1870 = vsel %vm984, %v1850, 0
  %v1873 = vsel %vm984, %v1851, 0
  %v1876 = vsel %vm984, %v1852, 0
  %v1879 = vsel %vm984, %v1853, 0
  %1881 = vmatprep.subr.bf16.mxu0 %v1857
  %1882 = vmatpush1.bf16.msra.mxu0 %v1863
  %1883 = vmatprep.subr.bf16.mxu0 %v1861
  %1884 = vmatpush1.bf16.msra.mxu0 %v1864
  %1885 = vmatprep.subr.bf16.mxu0 0
  %1886 = vmatpush1.bf16.msra.mxu0 0
  %1887 = vmatprep.subr.bf16.mxu0 0
  %1888 = vmatpush1.bf16.msra.mxu0 0
  %1889 = vmatprep.subr.bf16.mxu0 0
  %1890 = vmatpush1.bf16.msra.mxu0 0
  %1891 = vmatprep.subr.bf16.mxu0 0
  %1892 = vmatpush1.bf16.msra.mxu0 0
  %1893 = vmatprep.subr.bf16.mxu0 0
  %1894 = vmatpush1.bf16.msra.mxu0 0
  %1895 = vmatprep.subr.bf16.mxu0 0
  %1896 = vmatpush1.bf16.msra.mxu0 0
  %1897 = vmatprep.subr.bf16.mxu0 0
  %1898 = vmatpush1.bf16.msra.mxu0 0
  %1899 = vmatprep.subr.bf16.mxu0 0
  %1900 = vmatpush1.bf16.msra.mxu0 0
  %1901 = vmatprep.subr.bf16.mxu0 0
  %1902 = vmatpush1.bf16.msra.mxu0 0
  %1903 = vmatprep.subr.bf16.mxu0 0
  %1904 = vmatpush1.bf16.msra.mxu0 0
  %1905 = vmatprep.subr.bf16.mxu0 0
  %1906 = vmatpush1.bf16.msra.mxu0 0
  %1907 = vmatprep.subr.bf16.mxu0 0
  %1908 = vmatpush1.bf16.msra.mxu0 0
  %1909 = vmatprep.subr.bf16.mxu0 0
  %1910 = vmatpush1.bf16.msra.mxu0 0
  %1911 = vmatprep.subr.bf16.mxu0 0
  %1912 = vmatpush1.bf16.msra.mxu0 0
  %1913 = vmatprep.mubr.bf16.mxu0 0
  %1914 = vmatmul.mubr.bf16.gmra.mrb[0].mxu0 %v1870
  %v1915 = vpop.f32.mrb[0].mxu0
  %v1916 = vadd.f32 0.0, %v1915
  %v1917 = vpop.f32.mrb[0].mxu0
  %v1918 = vadd.f32 0.0, %v1917
  %v1919 = vpop.f32.mrb[0].mxu0
  %v1920 = vadd.f32 0.0, %v1919
  %v1921 = vpop.f32.mrb[0].mxu0
  %v1922 = vadd.f32 0.0, %v1921
  %1923 = vmatprep.mubr.bf16.mxu0 0
  %1924 = vmatmul.mubr.bf16.gmra.mrb[0].mxu0 %v1873
  %v1925 = vpop.f32.mrb[0].mxu0
  %v1926 = vadd.f32 0.0, %v1925
  %v1927 = vpop.f32.mrb[0].mxu0
  %v1928 = vadd.f32 0.0, %v1927
  %v1929 = vpop.f32.mrb[0].mxu0
  %v1930 = vadd.f32 0.0, %v1929
  %v1931 = vpop.f32.mrb[0].mxu0
  %v1932 = vadd.f32 0.0, %v1931
  %1933 = vmatprep.mubr.bf16.mxu0 0
  %1934 = vmatmul.mubr.bf16.gmra.mrb[0].mxu0 %v1876
  %v1935 = vpop.f32.mrb[0].mxu0
  %v1936 = vadd.f32 0.0, %v1935
  %v1937 = vpop.f32.mrb[0].mxu0
  %v1938 = vadd.f32 0.0, %v1937
  %v1939 = vpop.f32.mrb[0].mxu0
  %v1940 = vadd.f32 0.0, %v1939
  %v1941 = vpop.f32.mrb[0].mxu0
  %v1942 = vadd.f32 0.0, %v1941
  %1943 = vmatprep.mubr.bf16.mxu0 0
  %1944 = vmatmul.mubr.bf16.gmra.mrb[0].mxu0 %v1879
  %v1945 = vpop.f32.mrb[0].mxu0
  %v1946 = vadd.f32 0.0, %v1945
  %v1947 = vpop.f32.mrb[0].mxu0
  %v1948 = vadd.f32 0.0, %v1947
  %v1949 = vpop.f32.mrb[0].mxu0
  %v1950 = vadd.f32 0.0, %v1949
  %v1951 = vpop.f32.mrb[0].mxu0
  %v1952 = vadd.f32 0.0, %v1951
  %1953 = vdwg.mxu0
  %v1954 = vadd.f32 %v1809, %v1916
  %v1955 = vadd.f32 %v1810, %v1918
  %v1956 = vadd.f32 %v1811, %v1920
  %v1957 = vadd.f32 %v1812, %v1922
  %v1958 = vadd.f32 %v1813, %v1926
  %v1959 = vadd.f32 %v1814, %v1928
  %v1960 = vadd.f32 %v1815, %v1930
  %v1961 = vadd.f32 %v1816, %v1932
  %v1962 = vadd.f32 %v1817, %v1936
  %v1963 = vadd.f32 %v1818, %v1938
  %v1964 = vadd.f32 %v1819, %v1940
  %v1965 = vadd.f32 %v1820, %v1942
  %v1966 = vadd.f32 %v1821, %v1946
  %v1967 = vadd.f32 %v1822, %v1948
  %v1968 = vadd.f32 %v1823, %v1950
  %v1969 = vadd.f32 %v1824, %v1952
  %s1970 = scalar_lea.vmem %s3, 128
  %v1971 = vld [vmem:[%s1970] sm:$0xf]
  %v1972 = vld [vmem:[%s1970 + $0x4] sm:$0xf]
  %v1973 = vld [vmem:[%s1970 + $0x8] sm:$0xf]
  %v1974 = vld [vmem:[%s1970 + $0xc] sm:$0xf]
  %v1975 = vld [vmem:[%s1970 + $0x10] sm:$0xf]
  %v1976 = vld [vmem:[%s1970 + $0x14] sm:$0xf]
  %v1977 = vld [vmem:[%s1970 + $0x18] sm:$0xf]
  %v1978 = vld [vmem:[%s1970 + $0x1c] sm:$0xf]
  %v1987 = vunpack.c.l.b16 %v1971
  %v1988 = vunpack.c.l.b16 %v1972
  %v1989 = vunpack.c.l.b16 %v1973
  %v1990 = vunpack.c.l.b16 %v1974
  %v1991 = vunpack.c.l.b16 %v1975
  %v1992 = vunpack.c.l.b16 %v1976
  %v1993 = vunpack.c.l.b16 %v1977
  %v1994 = vunpack.c.l.b16 %v1978
  %v1995 = vpack.c.b16 %v1988, %v1987
  %v1996 = vpack.c.b16 %v1990, %v1989
  %v1997 = vpack.c.b16 %v1992, %v1991
  %v1998 = vpack.c.b16 %v1994, %v1993
  %1999 = vrot.lane.b32.xlu0 %v1438, 124
  %v2000 = vpop.permute.xlu0 %1999
  %2001 = vrot.lane.b32.xlu0 %v1439, 124
  %v2002 = vpop.permute.xlu0 %2001
  %2003 = vrot.lane.b32.xlu0 %v1440, 124
  %v2004 = vpop.permute.xlu0 %2003
  %2005 = vrot.lane.b32.xlu0 %v1441, 124
  %v2006 = vpop.permute.xlu0 %2005
  %vm2007 = vcmask 1014784
  %v2008 = vsel %vm2007, %v2000, %v2002
  %v2009 = vsel %vm2007, %v2004, %v2006
  %v2015 = vsel %vm984, %v1995, 0
  %v2018 = vsel %vm984, %v1996, 0
  %v2021 = vsel %vm984, %v1997, 0
  %v2024 = vsel %vm984, %v1998, 0
  %2026 = vmatprep.subr.bf16.mxu0 %v2002
  %2027 = vmatpush1.bf16.msra.mxu0 %v2008
  %2028 = vmatprep.subr.bf16.mxu0 %v2006
  %2029 = vmatpush1.bf16.msra.mxu0 %v2009
  %2030 = vmatprep.subr.bf16.mxu0 0
  %2031 = vmatpush1.bf16.msra.mxu0 0
  %2032 = vmatprep.subr.bf16.mxu0 0
  %2033 = vmatpush1.bf16.msra.mxu0 0
  %2034 = vmatprep.subr.bf16.mxu0 0
  %2035 = vmatpush1.bf16.msra.mxu0 0
  %2036 = vmatprep.subr.bf16.mxu0 0
  %2037 = vmatpush1.bf16.msra.mxu0 0
  %2038 = vmatprep.subr.bf16.mxu0 0
  %2039 = vmatpush1.bf16.msra.mxu0 0
  %2040 = vmatprep.subr.bf16.mxu0 0
  %2041 = vmatpush1.bf16.msra.mxu0 0
  %2042 = vmatprep.subr.bf16.mxu0 0
  %2043 = vmatpush1.bf16.msra.mxu0 0
  %2044 = vmatprep.subr.bf16.mxu0 0
  %2045 = vmatpush1.bf16.msra.mxu0 0
  %2046 = vmatprep.subr.bf16.mxu0 0
  %2047 = vmatpush1.bf16.msra.mxu0 0
  %2048 = vmatprep.subr.bf16.mxu0 0
  %2049 = vmatpush1.bf16.msra.mxu0 0
  %2050 = vmatprep.subr.bf16.mxu0 0
  %2051 = vmatpush1.bf16.msra.mxu0 0
  %2052 = vmatprep.subr.bf16.mxu0 0
  %2053 = vmatpush1.bf16.msra.mxu0 0
  %2054 = vmatprep.subr.bf16.mxu0 0
  %2055 = vmatpush1.bf16.msra.mxu0 0
  %2056 = vmatprep.subr.bf16.mxu0 0
  %2057 = vmatpush1.bf16.msra.mxu0 0
  %2058 = vmatprep.mubr.bf16.mxu0 0
  %2059 = vmatmul.mubr.bf16.gmra.mrb[0].mxu0 %v2015
  %v2060 = vpop.f32.mrb[0].mxu0
  %v2061 = vadd.f32 0.0, %v2060
  %v2062 = vpop.f32.mrb[0].mxu0
  %v2063 = vadd.f32 0.0, %v2062
  %v2064 = vpop.f32.mrb[0].mxu0
  %v2065 = vadd.f32 0.0, %v2064
  %v2066 = vpop.f32.mrb[0].mxu0
  %v2067 = vadd.f32 0.0, %v2066
  %2068 = vmatprep.mubr.bf16.mxu0 0
  %2069 = vmatmul.mubr.bf16.gmra.mrb[0].mxu0 %v2018
  %v2070 = vpop.f32.mrb[0].mxu0
  %v2071 = vadd.f32 0.0, %v2070
  %v2072 = vpop.f32.mrb[0].mxu0
  %v2073 = vadd.f32 0.0, %v2072
  %v2074 = vpop.f32.mrb[0].mxu0
  %v2075 = vadd.f32 0.0, %v2074
  %v2076 = vpop.f32.mrb[0].mxu0
  %v2077 = vadd.f32 0.0, %v2076
  %2078 = vmatprep.mubr.bf16.mxu0 0
  %2079 = vmatmul.mubr.bf16.gmra.mrb[0].mxu0 %v2021
  %v2080 = vpop.f32.mrb[0].mxu0
  %v2081 = vadd.f32 0.0, %v2080
  %v2082 = vpop.f32.mrb[0].mxu0
  %v2083 = vadd.f32 0.0, %v2082
  %v2084 = vpop.f32.mrb[0].mxu0
  %v2085 = vadd.f32 0.0, %v2084
  %v2086 = vpop.f32.mrb[0].mxu0
  %v2087 = vadd.f32 0.0, %v2086
  %2088 = vmatprep.mubr.bf16.mxu0 0
  %2089 = vmatmul.mubr.bf16.gmra.mrb[0].mxu0 %v2024
  %v2090 = vpop.f32.mrb[0].mxu0
  %v2091 = vadd.f32 0.0, %v2090
  %v2092 = vpop.f32.mrb[0].mxu0
  %v2093 = vadd.f32 0.0, %v2092
  %v2094 = vpop.f32.mrb[0].mxu0
  %v2095 = vadd.f32 0.0, %v2094
  %v2096 = vpop.f32.mrb[0].mxu0
  %v2097 = vadd.f32 0.0, %v2096
  %2098 = vdwg.mxu0
  %v2099 = vadd.f32 %v1954, %v2061
  %v2100 = vadd.f32 %v1955, %v2063
  %v2101 = vadd.f32 %v1956, %v2065
  %v2102 = vadd.f32 %v1957, %v2067
  %v2103 = vadd.f32 %v1958, %v2071
  %v2104 = vadd.f32 %v1959, %v2073
  %v2105 = vadd.f32 %v1960, %v2075
  %v2106 = vadd.f32 %v1961, %v2077
  %v2107 = vadd.f32 %v1962, %v2081
  %v2108 = vadd.f32 %v1963, %v2083
  %v2109 = vadd.f32 %v1964, %v2085
  %v2110 = vadd.f32 %v1965, %v2087
  %v2111 = vadd.f32 %v1966, %v2091
  %v2112 = vadd.f32 %v1967, %v2093
  %v2113 = vadd.f32 %v1968, %v2095
  %v2114 = vadd.f32 %v1969, %v2097
  %s2115 = scalar_lea.vmem %s3, 160
  %v2116 = vld [vmem:[%s2115] sm:$0xf]
  %v2117 = vld [vmem:[%s2115 + $0x4] sm:$0xf]
  %v2118 = vld [vmem:[%s2115 + $0x8] sm:$0xf]
  %v2119 = vld [vmem:[%s2115 + $0xc] sm:$0xf]
  %v2120 = vld [vmem:[%s2115 + $0x10] sm:$0xf]
  %v2121 = vld [vmem:[%s2115 + $0x14] sm:$0xf]
  %v2122 = vld [vmem:[%s2115 + $0x18] sm:$0xf]
  %v2123 = vld [vmem:[%s2115 + $0x1c] sm:$0xf]
  %v2132 = vunpack.c.l.b16 %v2116
  %v2133 = vunpack.c.l.b16 %v2117
  %v2134 = vunpack.c.l.b16 %v2118
  %v2135 = vunpack.c.l.b16 %v2119
  %v2136 = vunpack.c.l.b16 %v2120
  %v2137 = vunpack.c.l.b16 %v2121
  %v2138 = vunpack.c.l.b16 %v2122
  %v2139 = vunpack.c.l.b16 %v2123
  %v2140 = vpack.c.b16 %v2133, %v2132
  %v2141 = vpack.c.b16 %v2135, %v2134
  %v2142 = vpack.c.b16 %v2137, %v2136
  %v2143 = vpack.c.b16 %v2139, %v2138
  %2144 = vrot.lane.b32.xlu0 %v1438, 123
  %v2145 = vpop.permute.xlu0 %2144
  %2146 = vrot.lane.b32.xlu0 %v1439, 123
  %v2147 = vpop.permute.xlu0 %2146
  %2148 = vrot.lane.b32.xlu0 %v1440, 123
  %v2149 = vpop.permute.xlu0 %2148
  %2150 = vrot.lane.b32.xlu0 %v1441, 123
  %v2151 = vpop.permute.xlu0 %2150
  %vm2152 = vcmask 1006592
  %v2153 = vsel %vm2152, %v2145, %v2147
  %v2154 = vsel %vm2152, %v2149, %v2151
  %v2160 = vsel %vm984, %v2140, 0
  %v2163 = vsel %vm984, %v2141, 0
  %v2166 = vsel %vm984, %v2142, 0
  %v2169 = vsel %vm984, %v2143, 0
  %2171 = vmatprep.subr.bf16.mxu0 %v2147
  %2172 = vmatpush1.bf16.msra.mxu0 %v2153
  %2173 = vmatprep.subr.bf16.mxu0 %v2151
  %2174 = vmatpush1.bf16.msra.mxu0 %v2154
  %2175 = vmatprep.subr.bf16.mxu0 0
  %2176 = vmatpush1.bf16.msra.mxu0 0
  %2177 = vmatprep.subr.bf16.mxu0 0
  %2178 = vmatpush1.bf16.msra.mxu0 0
  %2179 = vmatprep.subr.bf16.mxu0 0
  %2180 = vmatpush1.bf16.msra.mxu0 0
  %2181 = vmatprep.subr.bf16.mxu0 0
  %2182 = vmatpush1.bf16.msra.mxu0 0
  %2183 = vmatprep.subr.bf16.mxu0 0
  %2184 = vmatpush1.bf16.msra.mxu0 0
  %2185 = vmatprep.subr.bf16.mxu0 0
  %2186 = vmatpush1.bf16.msra.mxu0 0
  %2187 = vmatprep.subr.bf16.mxu0 0
  %2188 = vmatpush1.bf16.msra.mxu0 0
  %2189 = vmatprep.subr.bf16.mxu0 0
  %2190 = vmatpush1.bf16.msra.mxu0 0
  %2191 = vmatprep.subr.bf16.mxu0 0
  %2192 = vmatpush1.bf16.msra.mxu0 0
  %2193 = vmatprep.subr.bf16.mxu0 0
  %2194 = vmatpush1.bf16.msra.mxu0 0
  %2195 = vmatprep.subr.bf16.mxu0 0
  %2196 = vmatpush1.bf16.msra.mxu0 0
  %2197 = vmatprep.subr.bf16.mxu0 0
  %2198 = vmatpush1.bf16.msra.mxu0 0
  %2199 = vmatprep.subr.bf16.mxu0 0
  %2200 = vmatpush1.bf16.msra.mxu0 0
  %2201 = vmatprep.subr.bf16.mxu0 0
  %2202 = vmatpush1.bf16.msra.mxu0 0
  %2203 = vmatprep.mubr.bf16.mxu0 0
  %2204 = vmatmul.mubr.bf16.gmra.mrb[0].mxu0 %v2160
  %v2205 = vpop.f32.mrb[0].mxu0
  %v2206 = vadd.f32 0.0, %v2205
  %v2207 = vpop.f32.mrb[0].mxu0
  %v2208 = vadd.f32 0.0, %v2207
  %v2209 = vpop.f32.mrb[0].mxu0
  %v2210 = vadd.f32 0.0, %v2209
  %v2211 = vpop.f32.mrb[0].mxu0
  %v2212 = vadd.f32 0.0, %v2211
  %2213 = vmatprep.mubr.bf16.mxu0 0
  %2214 = vmatmul.mubr.bf16.gmra.mrb[0].mxu0 %v2163
  %v2215 = vpop.f32.mrb[0].mxu0
  %v2216 = vadd.f32 0.0, %v2215
  %v2217 = vpop.f32.mrb[0].mxu0
  %v2218 = vadd.f32 0.0, %v2217
  %v2219 = vpop.f32.mrb[0].mxu0
  %v2220 = vadd.f32 0.0, %v2219
  %v2221 = vpop.f32.mrb[0].mxu0
  %v2222 = vadd.f32 0.0, %v2221
  %2223 = vmatprep.mubr.bf16.mxu0 0
  %2224 = vmatmul.mubr.bf16.gmra.mrb[0].mxu0 %v2166
  %v2225 = vpop.f32.mrb[0].mxu0
  %v2226 = vadd.f32 0.0, %v2225
  %v2227 = vpop.f32.mrb[0].mxu0
  %v2228 = vadd.f32 0.0, %v2227
  %v2229 = vpop.f32.mrb[0].mxu0
  %v2230 = vadd.f32 0.0, %v2229
  %v2231 = vpop.f32.mrb[0].mxu0
  %v2232 = vadd.f32 0.0, %v2231
  %2233 = vmatprep.mubr.bf16.mxu0 0
  %2234 = vmatmul.mubr.bf16.gmra.mrb[0].mxu0 %v2169
  %v2235 = vpop.f32.mrb[0].mxu0
  %v2236 = vadd.f32 0.0, %v2235
  %v2237 = vpop.f32.mrb[0].mxu0
  %v2238 = vadd.f32 0.0, %v2237
  %v2239 = vpop.f32.mrb[0].mxu0
  %v2240 = vadd.f32 0.0, %v2239
  %v2241 = vpop.f32.mrb[0].mxu0
  %v2242 = vadd.f32 0.0, %v2241
  %2243 = vdwg.mxu0
  %v2244 = vadd.f32 %v2099, %v2206
  %v2245 = vadd.f32 %v2100, %v2208
  %v2246 = vadd.f32 %v2101, %v2210
  %v2247 = vadd.f32 %v2102, %v2212
  %v2248 = vadd.f32 %v2103, %v2216
  %v2249 = vadd.f32 %v2104, %v2218
  %v2250 = vadd.f32 %v2105, %v2220
  %v2251 = vadd.f32 %v2106, %v2222
  %v2252 = vadd.f32 %v2107, %v2226
  %v2253 = vadd.f32 %v2108, %v2228
  %v2254 = vadd.f32 %v2109, %v2230
  %v2255 = vadd.f32 %v2110, %v2232
  %v2256 = vadd.f32 %v2111, %v2236
  %v2257 = vadd.f32 %v2112, %v2238
  %v2258 = vadd.f32 %v2113, %v2240
  %v2259 = vadd.f32 %v2114, %v2242
  %s2260 = scalar_lea.vmem %s3, 192
  %v2261 = vld [vmem:[%s2260] sm:$0xf]
  %v2262 = vld [vmem:[%s2260 + $0x4] sm:$0xf]
  %v2263 = vld [vmem:[%s2260 + $0x8] sm:$0xf]
  %v2264 = vld [vmem:[%s2260 + $0xc] sm:$0xf]
  %v2265 = vld [vmem:[%s2260 + $0x10] sm:$0xf]
  %v2266 = vld [vmem:[%s2260 + $0x14] sm:$0xf]
  %v2267 = vld [vmem:[%s2260 + $0x18] sm:$0xf]
  %v2268 = vld [vmem:[%s2260 + $0x1c] sm:$0xf]
  %v2277 = vunpack.c.l.b16 %v2261
  %v2278 = vunpack.c.l.b16 %v2262
  %v2279 = vunpack.c.l.b16 %v2263
  %v2280 = vunpack.c.l.b16 %v2264
  %v2281 = vunpack.c.l.b16 %v2265
  %v2282 = vunpack.c.l.b16 %v2266
  %v2283 = vunpack.c.l.b16 %v2267
  %v2284 = vunpack.c.l.b16 %v2268
  %v2285 = vpack.c.b16 %v2278, %v2277
  %v2286 = vpack.c.b16 %v2280, %v2279
  %v2287 = vpack.c.b16 %v2282, %v2281
  %v2288 = vpack.c.b16 %v2284, %v2283
  %2289 = vrot.lane.b32.xlu0 %v1438, 122
  %v2290 = vpop.permute.xlu0 %2289
  %2291 = vrot.lane.b32.xlu0 %v1439, 122
  %v2292 = vpop.permute.xlu0 %2291
  %2293 = vrot.lane.b32.xlu0 %v1440, 122
  %v2294 = vpop.permute.xlu0 %2293
  %2295 = vrot.lane.b32.xlu0 %v1441, 122
  %v2296 = vpop.permute.xlu0 %2295
  %vm2297 = vcmask 998400
  %v2298 = vsel %vm2297, %v2290, %v2292
  %v2299 = vsel %vm2297, %v2294, %v2296
  %v2305 = vsel %vm984, %v2285, 0
  %v2308 = vsel %vm984, %v2286, 0
  %v2311 = vsel %vm984, %v2287, 0
  %v2314 = vsel %vm984, %v2288, 0
  %2316 = vmatprep.subr.bf16.mxu0 %v2292
  %2317 = vmatpush1.bf16.msra.mxu0 %v2298
  %2318 = vmatprep.subr.bf16.mxu0 %v2296
  %2319 = vmatpush1.bf16.msra.mxu0 %v2299
  %2320 = vmatprep.subr.bf16.mxu0 0
  %2321 = vmatpush1.bf16.msra.mxu0 0
  %2322 = vmatprep.subr.bf16.mxu0 0
  %2323 = vmatpush1.bf16.msra.mxu0 0
  %2324 = vmatprep.subr.bf16.mxu0 0
  %2325 = vmatpush1.bf16.msra.mxu0 0
  %2326 = vmatprep.subr.bf16.mxu0 0
  %2327 = vmatpush1.bf16.msra.mxu0 0
  %2328 = vmatprep.subr.bf16.mxu0 0
  %2329 = vmatpush1.bf16.msra.mxu0 0
  %2330 = vmatprep.subr.bf16.mxu0 0
  %2331 = vmatpush1.bf16.msra.mxu0 0
  %2332 = vmatprep.subr.bf16.mxu0 0
  %2333 = vmatpush1.bf16.msra.mxu0 0
  %2334 = vmatprep.subr.bf16.mxu0 0
  %2335 = vmatpush1.bf16.msra.mxu0 0
  %2336 = vmatprep.subr.bf16.mxu0 0
  %2337 = vmatpush1.bf16.msra.mxu0 0
  %2338 = vmatprep.subr.bf16.mxu0 0
  %2339 = vmatpush1.bf16.msra.mxu0 0
  %2340 = vmatprep.subr.bf16.mxu0 0
  %2341 = vmatpush1.bf16.msra.mxu0 0
  %2342 = vmatprep.subr.bf16.mxu0 0
  %2343 = vmatpush1.bf16.msra.mxu0 0
  %2344 = vmatprep.subr.bf16.mxu0 0
  %2345 = vmatpush1.bf16.msra.mxu0 0
  %2346 = vmatprep.subr.bf16.mxu0 0
  %2347 = vmatpush1.bf16.msra.mxu0 0
  %2348 = vmatprep.mubr.bf16.mxu0 0
  %2349 = vmatmul.mubr.bf16.gmra.mrb[0].mxu0 %v2305
  %v2350 = vpop.f32.mrb[0].mxu0
  %v2351 = vadd.f32 0.0, %v2350
  %v2352 = vpop.f32.mrb[0].mxu0
  %v2353 = vadd.f32 0.0, %v2352
  %v2354 = vpop.f32.mrb[0].mxu0
  %v2355 = vadd.f32 0.0, %v2354
  %v2356 = vpop.f32.mrb[0].mxu0
  %v2357 = vadd.f32 0.0, %v2356
  %2358 = vmatprep.mubr.bf16.mxu0 0
  %2359 = vmatmul.mubr.bf16.gmra.mrb[0].mxu0 %v2308
  %v2360 = vpop.f32.mrb[0].mxu0
  %v2361 = vadd.f32 0.0, %v2360
  %v2362 = vpop.f32.mrb[0].mxu0
  %v2363 = vadd.f32 0.0, %v2362
  %v2364 = vpop.f32.mrb[0].mxu0
  %v2365 = vadd.f32 0.0, %v2364
  %v2366 = vpop.f32.mrb[0].mxu0
  %v2367 = vadd.f32 0.0, %v2366
  %2368 = vmatprep.mubr.bf16.mxu0 0
  %2369 = vmatmul.mubr.bf16.gmra.mrb[0].mxu0 %v2311
  %v2370 = vpop.f32.mrb[0].mxu0
  %v2371 = vadd.f32 0.0, %v2370
  %v2372 = vpop.f32.mrb[0].mxu0
  %v2373 = vadd.f32 0.0, %v2372
  %v2374 = vpop.f32.mrb[0].mxu0
  %v2375 = vadd.f32 0.0, %v2374
  %v2376 = vpop.f32.mrb[0].mxu0
  %v2377 = vadd.f32 0.0, %v2376
  %2378 = vmatprep.mubr.bf16.mxu0 0
  %2379 = vmatmul.mubr.bf16.gmra.mrb[0].mxu0 %v2314
  %v2380 = vpop.f32.mrb[0].mxu0
  %v2381 = vadd.f32 0.0, %v2380
  %v2382 = vpop.f32.mrb[0].mxu0
  %v2383 = vadd.f32 0.0, %v2382
  %v2384 = vpop.f32.mrb[0].mxu0
  %v2385 = vadd.f32 0.0, %v2384
  %v2386 = vpop.f32.mrb[0].mxu0
  %v2387 = vadd.f32 0.0, %v2386
  %2388 = vdwg.mxu0
  %v2389 = vadd.f32 %v2244, %v2351
  %v2390 = vadd.f32 %v2245, %v2353
  %v2391 = vadd.f32 %v2246, %v2355
  %v2392 = vadd.f32 %v2247, %v2357
  %v2393 = vadd.f32 %v2248, %v2361
  %v2394 = vadd.f32 %v2249, %v2363
  %v2395 = vadd.f32 %v2250, %v2365
  %v2396 = vadd.f32 %v2251, %v2367
  %v2397 = vadd.f32 %v2252, %v2371
  %v2398 = vadd.f32 %v2253, %v2373
  %v2399 = vadd.f32 %v2254, %v2375
  %v2400 = vadd.f32 %v2255, %v2377
  %v2401 = vadd.f32 %v2256, %v2381
  %v2402 = vadd.f32 %v2257, %v2383
  %v2403 = vadd.f32 %v2258, %v2385
  %v2404 = vadd.f32 %v2259, %v2387
  %v2405 = vld [vmem:[%s4] sm:$0xff]
  %v2406 = vld [vmem:[%s4 + $0x8] sm:$0xff]
  %v2407 = vld [vmem:[%s4 + $0x10] sm:$0xff]
  %v2408 = vld [vmem:[%s4 + $0x18] sm:$0xff]
  %v2409 = vld [vmem:[%s4 + $0x20] sm:$0xff]
  %v2410 = vld [vmem:[%s4 + $0x28] sm:$0xff]
  %v2411 = vld [vmem:[%s4 + $0x30] sm:$0xff]
  %v2412 = vld [vmem:[%s4 + $0x38] sm:$0xff]
  %2414 = vset.pattern.permute.xlu0 0
  %2415 = vperm.xlu0 %2414, %v2405
  %v2416 = vpop.permute.xlu0 %2415
  %2419 = vset.pattern.permute.xlu0 0
  %2420 = vperm.xlu0 %2419, %v2406
  %v2421 = vpop.permute.xlu0 %2420
  %2424 = vset.pattern.permute.xlu0 0
  %2425 = vperm.xlu0 %2424, %v2407
  %v2426 = vpop.permute.xlu0 %2425
  %2429 = vset.pattern.permute.xlu0 0
  %2430 = vperm.xlu0 %2429, %v2408
  %v2431 = vpop.permute.xlu0 %2430
  %2434 = vset.pattern.permute.xlu0 0
  %2435 = vperm.xlu0 %2434, %v2409
  %v2436 = vpop.permute.xlu0 %2435
  %2439 = vset.pattern.permute.xlu0 0
  %2440 = vperm.xlu0 %2439, %v2410
  %v2441 = vpop.permute.xlu0 %2440
  %2444 = vset.pattern.permute.xlu0 0
  %2445 = vperm.xlu0 %2444, %v2411
  %v2446 = vpop.permute.xlu0 %2445
  %2449 = vset.pattern.permute.xlu0 0
  %2450 = vperm.xlu0 %2449, %v2412
  %v2451 = vpop.permute.xlu0 %2450
  %v2453 = vadd.f32 %v2389, %v2416
  %v2454 = vadd.f32 %v2390, %v2416
  %v2455 = vadd.f32 %v2391, %v2421
  %v2456 = vadd.f32 %v2392, %v2421
  %v2457 = vadd.f32 %v2393, %v2426
  %v2458 = vadd.f32 %v2394, %v2426
  %v2459 = vadd.f32 %v2395, %v2431
  %v2460 = vadd.f32 %v2396, %v2431
  %v2461 = vadd.f32 %v2397, %v2436
  %v2462 = vadd.f32 %v2398, %v2436
  %v2463 = vadd.f32 %v2399, %v2441
  %v2464 = vadd.f32 %v2400, %v2441
  %v2465 = vadd.f32 %v2401, %v2446
  %v2466 = vadd.f32 %v2402, %v2446
  %v2467 = vadd.f32 %v2403, %v2451
  %v2468 = vadd.f32 %v2404, %v2451
  %v2469 = vmax.f32 %v2453, 0.0
  %v2470 = vmax.f32 %v2454, 0.0
  %v2471 = vmax.f32 %v2455, 0.0
  %v2472 = vmax.f32 %v2456, 0.0
  %v2473 = vmax.f32 %v2457, 0.0
  %v2474 = vmax.f32 %v2458, 0.0
  %v2475 = vmax.f32 %v2459, 0.0
  %v2476 = vmax.f32 %v2460, 0.0
  %v2477 = vmax.f32 %v2461, 0.0
  %v2478 = vmax.f32 %v2462, 0.0
  %v2479 = vmax.f32 %v2463, 0.0
  %v2480 = vmax.f32 %v2464, 0.0
  %v2481 = vmax.f32 %v2465, 0.0
  %v2482 = vmax.f32 %v2466, 0.0
  %v2483 = vmax.f32 %v2467, 0.0
  %v2484 = vmax.f32 %v2468, 0.0
  %v2485 = vpack.c.bf16 %v2471, %v2469
  %v2486 = vpack.c.bf16 %v2475, %v2473
  %v2487 = vpack.c.bf16 %v2479, %v2477
  %v2488 = vpack.c.bf16 %v2483, %v2481
  %2493 = vrot.lane.b32.xlu0 %v2485, 3
  %v2494 = vpop.permute.xlu0 %2493
  %2495 = vrot.lane.b32.xlu0 %v2486, 3
  %v2496 = vpop.permute.xlu0 %2495
  %2497 = vrot.lane.b32.xlu0 %v2487, 3
  %v2498 = vpop.permute.xlu0 %2497
  %2499 = vrot.lane.b32.xlu0 %v2488, 3
  %v2500 = vpop.permute.xlu0 %2499
  %2505 = vst.msk [vmem:[#allocation3] sm:$0xff] %vm1397, %v2494
  %2506 = vst.msk [vmem:[#allocation3 + $0x10] sm:$0xff] %vm1397, %v2496
  %2507 = vst.msk [vmem:[#allocation3 + $0x20] sm:$0xff] %vm1397, %v2498
  %2508 = vst.msk [vmem:[#allocation3 + $0x30] sm:$0xff] %vm1397, %v2500
  %2509 = vst.msk [vmem:[#allocation3] sm:$0xff] %vm1406, %v2494
  %2510 = vst.msk [vmem:[#allocation3 + $0x10] sm:$0xff] %vm1406, %v2496
  %2511 = vst.msk [vmem:[#allocation3 + $0x20] sm:$0xff] %vm1406, %v2498
  %2512 = vst.msk [vmem:[#allocation3 + $0x30] sm:$0xff] %vm1406, %v2500
  %2513 = vst.msk [vmem:[#allocation3] sm:$0xff] %vm1415, %v2494
  %2514 = vst.msk [vmem:[#allocation3 + $0x10] sm:$0xff] %vm1415, %v2496
  %2515 = vst.msk [vmem:[#allocation3 + $0x20] sm:$0xff] %vm1415, %v2498
  %2516 = vst.msk [vmem:[#allocation3 + $0x30] sm:$0xff] %vm1415, %v2500
  %v2517 = vpack.c.bf16 %v2472, %v2470
  %v2518 = vpack.c.bf16 %v2476, %v2474
  %v2519 = vpack.c.bf16 %v2480, %v2478
  %v2520 = vpack.c.bf16 %v2484, %v2482
  %2525 = vrot.lane.b32.xlu0 %v2517, 3
  %v2526 = vpop.permute.xlu0 %2525
  %2527 = vrot.lane.b32.xlu0 %v2518, 3
  %v2528 = vpop.permute.xlu0 %2527
  %2529 = vrot.lane.b32.xlu0 %v2519, 3
  %v2530 = vpop.permute.xlu0 %2529
  %2531 = vrot.lane.b32.xlu0 %v2520, 3
  %v2532 = vpop.permute.xlu0 %2531
  %vm2533 = vcmask 23552
  %v2534 = vsel %vm2533, %v2494, %v2526
  %v2535 = vsel %vm2533, %v2496, %v2528
  %v2536 = vsel %vm2533, %v2498, %v2530
  %v2537 = vsel %vm2533, %v2500, %v2532
  %2542 = vst.msk [vmem:[#allocation3] sm:$0xff] %vm1424, %v2494
  %2543 = vst.msk [vmem:[#allocation3 + $0x8] sm:$0xff] %vm1426, %v2534
  %2544 = vst.msk [vmem:[#allocation3 + $0x10] sm:$0xff] %vm1424, %v2496
  %2545 = vst.msk [vmem:[#allocation3 + $0x18] sm:$0xff] %vm1426, %v2535
  %2546 = vst.msk [vmem:[#allocation3 + $0x20] sm:$0xff] %vm1424, %v2498
  %2547 = vst.msk [vmem:[#allocation3 + $0x28] sm:$0xff] %vm1426, %v2536
  %2548 = vst.msk [vmem:[#allocation3 + $0x30] sm:$0xff] %vm1424, %v2500
  %2549 = vst.msk [vmem:[#allocation3 + $0x38] sm:$0xff] %vm1426, %v2537
  %v2550 = vld [vmem:[%s5] sm:$0xf]
  %v2551 = vld [vmem:[%s5 + $0x4] sm:$0xf]
  %v2552 = vld [vmem:[%s5 + $0x8] sm:$0xf]
  %v2553 = vld [vmem:[%s5 + $0xc] sm:$0xf]
  %v2554 = vld [vmem:[%s5 + $0x10] sm:$0xf]
  %v2555 = vld [vmem:[%s5 + $0x14] sm:$0xf]
  %v2556 = vld [vmem:[%s5 + $0x18] sm:$0xf]
  %v2557 = vld [vmem:[%s5 + $0x1c] sm:$0xf]
  %v2558 = vld [vmem:[#allocation3] sm:$0xff]
  %v2559 = vld [vmem:[#allocation3 + $0x8] sm:$0xff]
  %v2560 = vld [vmem:[#allocation3 + $0x10] sm:$0xff]
  %v2561 = vld [vmem:[#allocation3 + $0x18] sm:$0xff]
  %v2562 = vld [vmem:[#allocation3 + $0x20] sm:$0xff]
  %v2563 = vld [vmem:[#allocation3 + $0x28] sm:$0xff]
  %v2564 = vld [vmem:[#allocation3 + $0x30] sm:$0xff]
  %v2565 = vld [vmem:[#allocation3 + $0x38] sm:$0xff]
  %s2566 = scalar_lea.vmem %s5, 32
  %v2567 = vld [vmem:[%s2566] sm:$0xf]
  %v2568 = vld [vmem:[%s2566 + $0x4] sm:$0xf]
  %v2569 = vld [vmem:[%s2566 + $0x8] sm:$0xf]
  %v2570 = vld [vmem:[%s2566 + $0xc] sm:$0xf]
  %v2571 = vld [vmem:[%s2566 + $0x10] sm:$0xf]
  %v2572 = vld [vmem:[%s2566 + $0x14] sm:$0xf]
  %v2573 = vld [vmem:[%s2566 + $0x18] sm:$0xf]
  %v2574 = vld [vmem:[%s2566 + $0x1c] sm:$0xf]
  %v2583 = vunpack.c.l.b16 %v2567
  %v2584 = vunpack.c.l.b16 %v2568
  %v2585 = vunpack.c.l.b16 %v2569
  %v2586 = vunpack.c.l.b16 %v2570
  %v2587 = vunpack.c.l.b16 %v2571
  %v2588 = vunpack.c.l.b16 %v2572
  %v2589 = vunpack.c.l.b16 %v2573
  %v2590 = vunpack.c.l.b16 %v2574
  %v2591 = vpack.c.b16 %v2584, %v2583
  %v2592 = vpack.c.b16 %v2586, %v2585
  %v2593 = vpack.c.b16 %v2588, %v2587
  %v2594 = vpack.c.b16 %v2590, %v2589
  %2603 = vrot.lane.b32.xlu0 %v2558, 127
  %v2604 = vpop.permute.xlu0 %2603
  %2605 = vrot.lane.b32.xlu0 %v2559, 127
  %v2606 = vpop.permute.xlu0 %2605
  %2607 = vrot.lane.b32.xlu0 %v2560, 127
  %v2608 = vpop.permute.xlu0 %2607
  %2609 = vrot.lane.b32.xlu0 %v2561, 127
  %v2610 = vpop.permute.xlu0 %2609
  %2611 = vrot.lane.b32.xlu0 %v2562, 127
  %v2612 = vpop.permute.xlu0 %2611
  %2613 = vrot.lane.b32.xlu0 %v2563, 127
  %v2614 = vpop.permute.xlu0 %2613
  %2615 = vrot.lane.b32.xlu0 %v2564, 127
  %v2616 = vpop.permute.xlu0 %2615
  %2617 = vrot.lane.b32.xlu0 %v2565, 127
  %v2618 = vpop.permute.xlu0 %2617
  %v2619 = vsel %vm1483, %v2604, %v2606
  %v2620 = vsel %vm1483, %v2608, %v2610
  %v2621 = vsel %vm1483, %v2612, %v2614
  %v2622 = vsel %vm1483, %v2616, %v2618
  %v2632 = vsel %vm1116, %v2591, 0
  %v2635 = vsel %vm1116, %v2592, 0
  %v2638 = vsel %vm1116, %v2593, 0
  %v2641 = vsel %vm1116, %v2594, 0
  %2643 = vmatprep.subr.bf16.mxu0 %v2606
  %2644 = vmatpush1.bf16.msra.mxu0 %v2619
  %2645 = vmatprep.subr.bf16.mxu0 %v2610
  %2646 = vmatpush1.bf16.msra.mxu0 %v2620
  %2647 = vmatprep.subr.bf16.mxu0 %v2614
  %2648 = vmatpush1.bf16.msra.mxu0 %v2621
  %2649 = vmatprep.subr.bf16.mxu0 %v2618
  %2650 = vmatpush1.bf16.msra.mxu0 %v2622
  %2651 = vmatprep.subr.bf16.mxu0 0
  %2652 = vmatpush1.bf16.msra.mxu0 0
  %2653 = vmatprep.subr.bf16.mxu0 0
  %2654 = vmatpush1.bf16.msra.mxu0 0
  %2655 = vmatprep.subr.bf16.mxu0 0
  %2656 = vmatpush1.bf16.msra.mxu0 0
  %2657 = vmatprep.subr.bf16.mxu0 0
  %2658 = vmatpush1.bf16.msra.mxu0 0
  %2659 = vmatprep.subr.bf16.mxu0 0
  %2660 = vmatpush1.bf16.msra.mxu0 0
  %2661 = vmatprep.subr.bf16.mxu0 0
  %2662 = vmatpush1.bf16.msra.mxu0 0
  %2663 = vmatprep.subr.bf16.mxu0 0
  %2664 = vmatpush1.bf16.msra.mxu0 0
  %2665 = vmatprep.subr.bf16.mxu0 0
  %2666 = vmatpush1.bf16.msra.mxu0 0
  %2667 = vmatprep.subr.bf16.mxu0 0
  %2668 = vmatpush1.bf16.msra.mxu0 0
  %2669 = vmatprep.subr.bf16.mxu0 0
  %2670 = vmatpush1.bf16.msra.mxu0 0
  %2671 = vmatprep.subr.bf16.mxu0 0
  %2672 = vmatpush1.bf16.msra.mxu0 0
  %2673 = vmatprep.subr.bf16.mxu0 0
  %2674 = vmatpush1.bf16.msra.mxu0 0
  %2675 = vmatprep.mubr.bf16.mxu0 0
  %2676 = vmatmul.mubr.bf16.gmra.mrb[0].mxu0 %v2632
  %v2677 = vpop.f32.mrb[0].mxu0
  %v2678 = vadd.f32 0.0, %v2677
  %v2679 = vpop.f32.mrb[0].mxu0
  %v2680 = vadd.f32 0.0, %v2679
  %v2681 = vpop.f32.mrb[0].mxu0
  %v2682 = vadd.f32 0.0, %v2681
  %v2683 = vpop.f32.mrb[0].mxu0
  %v2684 = vadd.f32 0.0, %v2683
  %2685 = vmatprep.mubr.bf16.mxu0 0
  %2686 = vmatmul.mubr.bf16.gmra.mrb[0].mxu0 %v2635
  %v2687 = vpop.f32.mrb[0].mxu0
  %v2688 = vadd.f32 0.0, %v2687
  %v2689 = vpop.f32.mrb[0].mxu0
  %v2690 = vadd.f32 0.0, %v2689
  %v2691 = vpop.f32.mrb[0].mxu0
  %v2692 = vadd.f32 0.0, %v2691
  %v2693 = vpop.f32.mrb[0].mxu0
  %v2694 = vadd.f32 0.0, %v2693
  %2695 = vmatprep.mubr.bf16.mxu0 0
  %2696 = vmatmul.mubr.bf16.gmra.mrb[0].mxu0 %v2638
  %v2697 = vpop.f32.mrb[0].mxu0
  %v2698 = vadd.f32 0.0, %v2697
  %v2699 = vpop.f32.mrb[0].mxu0
  %v2700 = vadd.f32 0.0, %v2699
  %v2701 = vpop.f32.mrb[0].mxu0
  %v2702 = vadd.f32 0.0, %v2701
  %v2703 = vpop.f32.mrb[0].mxu0
  %v2704 = vadd.f32 0.0, %v2703
  %2705 = vmatprep.mubr.bf16.mxu0 0
  %2706 = vmatmul.mubr.bf16.gmra.mrb[0].mxu0 %v2641
  %v2707 = vpop.f32.mrb[0].mxu0
  %v2708 = vadd.f32 0.0, %v2707
  %v2709 = vpop.f32.mrb[0].mxu0
  %v2710 = vadd.f32 0.0, %v2709
  %v2711 = vpop.f32.mrb[0].mxu0
  %v2712 = vadd.f32 0.0, %v2711
  %v2713 = vpop.f32.mrb[0].mxu0
  %v2714 = vadd.f32 0.0, %v2713
  %2715 = vdwg.mxu0
  %v2724 = vunpack.c.l.b16 %v2550
  %v2725 = vunpack.c.l.b16 %v2551
  %v2726 = vunpack.c.l.b16 %v2552
  %v2727 = vunpack.c.l.b16 %v2553
  %v2728 = vunpack.c.l.b16 %v2554
  %v2729 = vunpack.c.l.b16 %v2555
  %v2730 = vunpack.c.l.b16 %v2556
  %v2731 = vunpack.c.l.b16 %v2557
  %v2732 = vpack.c.b16 %v2725, %v2724
  %v2733 = vpack.c.b16 %v2727, %v2726
  %v2734 = vpack.c.b16 %v2729, %v2728
  %v2735 = vpack.c.b16 %v2731, %v2730
  %v2737 = vsel %vm1116, %v2732, 0
  %v2740 = vsel %vm1116, %v2733, 0
  %v2743 = vsel %vm1116, %v2734, 0
  %v2746 = vsel %vm1116, %v2735, 0
  %2748 = vmatprep.subr.bf16.mxu0 %v2559
  %2749 = vmatpush1.bf16.msra.mxu0 %v2558
  %2750 = vmatprep.subr.bf16.mxu0 %v2561
  %2751 = vmatpush1.bf16.msra.mxu0 %v2560
  %2752 = vmatprep.subr.bf16.mxu0 %v2563
  %2753 = vmatpush1.bf16.msra.mxu0 %v2562
  %2754 = vmatprep.subr.bf16.mxu0 %v2565
  %2755 = vmatpush1.bf16.msra.mxu0 %v2564
  %2756 = vmatprep.subr.bf16.mxu0 0
  %2757 = vmatpush1.bf16.msra.mxu0 0
  %2758 = vmatprep.subr.bf16.mxu0 0
  %2759 = vmatpush1.bf16.msra.mxu0 0
  %2760 = vmatprep.subr.bf16.mxu0 0
  %2761 = vmatpush1.bf16.msra.mxu0 0
  %2762 = vmatprep.subr.bf16.mxu0 0
  %2763 = vmatpush1.bf16.msra.mxu0 0
  %2764 = vmatprep.subr.bf16.mxu0 0
  %2765 = vmatpush1.bf16.msra.mxu0 0
  %2766 = vmatprep.subr.bf16.mxu0 0
  %2767 = vmatpush1.bf16.msra.mxu0 0
  %2768 = vmatprep.subr.bf16.mxu0 0
  %2769 = vmatpush1.bf16.msra.mxu0 0
  %2770 = vmatprep.subr.bf16.mxu0 0
  %2771 = vmatpush1.bf16.msra.mxu0 0
  %2772 = vmatprep.subr.bf16.mxu0 0
  %2773 = vmatpush1.bf16.msra.mxu0 0
  %2774 = vmatprep.subr.bf16.mxu0 0
  %2775 = vmatpush1.bf16.msra.mxu0 0
  %2776 = vmatprep.subr.bf16.mxu0 0
  %2777 = vmatpush1.bf16.msra.mxu0 0
  %2778 = vmatprep.subr.bf16.mxu0 0
  %2779 = vmatpush1.bf16.msra.mxu0 0
  %2780 = vmatprep.mubr.bf16.mxu0 0
  %2781 = vmatmul.mubr.bf16.gmra.mrb[0].mxu0 %v2737
  %v2782 = vpop.f32.mrb[0].mxu0
  %v2783 = vadd.f32 %v2678, %v2782
  %v2784 = vpop.f32.mrb[0].mxu0
  %v2785 = vadd.f32 %v2680, %v2784
  %v2786 = vpop.f32.mrb[0].mxu0
  %v2787 = vadd.f32 %v2682, %v2786
  %v2788 = vpop.f32.mrb[0].mxu0
  %v2789 = vadd.f32 %v2684, %v2788
  %2790 = vmatprep.mubr.bf16.mxu0 0
  %2791 = vmatmul.mubr.bf16.gmra.mrb[0].mxu0 %v2740
  %v2792 = vpop.f32.mrb[0].mxu0
  %v2793 = vadd.f32 %v2688, %v2792
  %v2794 = vpop.f32.mrb[0].mxu0
  %v2795 = vadd.f32 %v2690, %v2794
  %v2796 = vpop.f32.mrb[0].mxu0
  %v2797 = vadd.f32 %v2692, %v2796
  %v2798 = vpop.f32.mrb[0].mxu0
  %v2799 = vadd.f32 %v2694, %v2798
  %2800 = vmatprep.mubr.bf16.mxu0 0
  %2801 = vmatmul.mubr.bf16.gmra.mrb[0].mxu0 %v2743
  %v2802 = vpop.f32.mrb[0].mxu0
  %v2803 = vadd.f32 %v2698, %v2802
  %v2804 = vpop.f32.mrb[0].mxu0
  %v2805 = vadd.f32 %v2700, %v2804
  %v2806 = vpop.f32.mrb[0].mxu0
  %v2807 = vadd.f32 %v2702, %v2806
  %v2808 = vpop.f32.mrb[0].mxu0
  %v2809 = vadd.f32 %v2704, %v2808
  %2810 = vmatprep.mubr.bf16.mxu0 0
  %2811 = vmatmul.mubr.bf16.gmra.mrb[0].mxu0 %v2746
  %v2812 = vpop.f32.mrb[0].mxu0
  %v2813 = vadd.f32 %v2708, %v2812
  %v2814 = vpop.f32.mrb[0].mxu0
  %v2815 = vadd.f32 %v2710, %v2814
  %v2816 = vpop.f32.mrb[0].mxu0
  %v2817 = vadd.f32 %v2712, %v2816
  %v2818 = vpop.f32.mrb[0].mxu0
  %v2819 = vadd.f32 %v2714, %v2818
  %2820 = vdwg.mxu0
  %s2821 = scalar_lea.vmem %s5, 64
  %v2822 = vld [vmem:[%s2821] sm:$0xf]
  %v2823 = vld [vmem:[%s2821 + $0x4] sm:$0xf]
  %v2824 = vld [vmem:[%s2821 + $0x8] sm:$0xf]
  %v2825 = vld [vmem:[%s2821 + $0xc] sm:$0xf]
  %v2826 = vld [vmem:[%s2821 + $0x10] sm:$0xf]
  %v2827 = vld [vmem:[%s2821 + $0x14] sm:$0xf]
  %v2828 = vld [vmem:[%s2821 + $0x18] sm:$0xf]
  %v2829 = vld [vmem:[%s2821 + $0x1c] sm:$0xf]
  %v2838 = vunpack.c.l.b16 %v2822
  %v2839 = vunpack.c.l.b16 %v2823
  %v2840 = vunpack.c.l.b16 %v2824
  %v2841 = vunpack.c.l.b16 %v2825
  %v2842 = vunpack.c.l.b16 %v2826
  %v2843 = vunpack.c.l.b16 %v2827
  %v2844 = vunpack.c.l.b16 %v2828
  %v2845 = vunpack.c.l.b16 %v2829
  %v2846 = vpack.c.b16 %v2839, %v2838
  %v2847 = vpack.c.b16 %v2841, %v2840
  %v2848 = vpack.c.b16 %v2843, %v2842
  %v2849 = vpack.c.b16 %v2845, %v2844
  %2850 = vrot.lane.b32.xlu0 %v2558, 126
  %v2851 = vpop.permute.xlu0 %2850
  %2852 = vrot.lane.b32.xlu0 %v2559, 126
  %v2853 = vpop.permute.xlu0 %2852
  %2854 = vrot.lane.b32.xlu0 %v2560, 126
  %v2855 = vpop.permute.xlu0 %2854
  %2856 = vrot.lane.b32.xlu0 %v2561, 126
  %v2857 = vpop.permute.xlu0 %2856
  %2858 = vrot.lane.b32.xlu0 %v2562, 126
  %v2859 = vpop.permute.xlu0 %2858
  %2860 = vrot.lane.b32.xlu0 %v2563, 126
  %v2861 = vpop.permute.xlu0 %2860
  %2862 = vrot.lane.b32.xlu0 %v2564, 126
  %v2863 = vpop.permute.xlu0 %2862
  %2864 = vrot.lane.b32.xlu0 %v2565, 126
  %v2865 = vpop.permute.xlu0 %2864
  %v2866 = vsel %vm1717, %v2851, %v2853
  %v2867 = vsel %vm1717, %v2855, %v2857
  %v2868 = vsel %vm1717, %v2859, %v2861
  %v2869 = vsel %vm1717, %v2863, %v2865
  %v2879 = vsel %vm1116, %v2846, 0
  %v2882 = vsel %vm1116, %v2847, 0
  %v2885 = vsel %vm1116, %v2848, 0
  %v2888 = vsel %vm1116, %v2849, 0
  %2890 = vmatprep.subr.bf16.mxu0 %v2853
  %2891 = vmatpush1.bf16.msra.mxu0 %v2866
  %2892 = vmatprep.subr.bf16.mxu0 %v2857
  %2893 = vmatpush1.bf16.msra.mxu0 %v2867
  %2894 = vmatprep.subr.bf16.mxu0 %v2861
  %2895 = vmatpush1.bf16.msra.mxu0 %v2868
  %2896 = vmatprep.subr.bf16.mxu0 %v2865
  %2897 = vmatpush1.bf16.msra.mxu0 %v2869
  %2898 = vmatprep.subr.bf16.mxu0 0
  %2899 = vmatpush1.bf16.msra.mxu0 0
  %2900 = vmatprep.subr.bf16.mxu0 0
  %2901 = vmatpush1.bf16.msra.mxu0 0
  %2902 = vmatprep.subr.bf16.mxu0 0
  %2903 = vmatpush1.bf16.msra.mxu0 0
  %2904 = vmatprep.subr.bf16.mxu0 0
  %2905 = vmatpush1.bf16.msra.mxu0 0
  %2906 = vmatprep.subr.bf16.mxu0 0
  %2907 = vmatpush1.bf16.msra.mxu0 0
  %2908 = vmatprep.subr.bf16.mxu0 0
  %2909 = vmatpush1.bf16.msra.mxu0 0
  %2910 = vmatprep.subr.bf16.mxu0 0
  %2911 = vmatpush1.bf16.msra.mxu0 0
  %2912 = vmatprep.subr.bf16.mxu0 0
  %2913 = vmatpush1.bf16.msra.mxu0 0
  %2914 = vmatprep.subr.bf16.mxu0 0
  %2915 = vmatpush1.bf16.msra.mxu0 0
  %2916 = vmatprep.subr.bf16.mxu0 0
  %2917 = vmatpush1.bf16.msra.mxu0 0
  %2918 = vmatprep.subr.bf16.mxu0 0
  %2919 = vmatpush1.bf16.msra.mxu0 0
  %2920 = vmatprep.subr.bf16.mxu0 0
  %2921 = vmatpush1.bf16.msra.mxu0 0
  %2922 = vmatprep.mubr.bf16.mxu0 0
  %2923 = vmatmul.mubr.bf16.gmra.mrb[0].mxu0 %v2879
  %v2924 = vpop.f32.mrb[0].mxu0
  %v2925 = vadd.f32 0.0, %v2924
  %v2926 = vpop.f32.mrb[0].mxu0
  %v2927 = vadd.f32 0.0, %v2926
  %v2928 = vpop.f32.mrb[0].mxu0
  %v2929 = vadd.f32 0.0, %v2928
  %v2930 = vpop.f32.mrb[0].mxu0
  %v2931 = vadd.f32 0.0, %v2930
  %2932 = vmatprep.mubr.bf16.mxu0 0
  %2933 = vmatmul.mubr.bf16.gmra.mrb[0].mxu0 %v2882
  %v2934 = vpop.f32.mrb[0].mxu0
  %v2935 = vadd.f32 0.0, %v2934
  %v2936 = vpop.f32.mrb[0].mxu0
  %v2937 = vadd.f32 0.0, %v2936
  %v2938 = vpop.f32.mrb[0].mxu0
  %v2939 = vadd.f32 0.0, %v2938
  %v2940 = vpop.f32.mrb[0].mxu0
  %v2941 = vadd.f32 0.0, %v2940
  %2942 = vmatprep.mubr.bf16.mxu0 0
  %2943 = vmatmul.mubr.bf16.gmra.mrb[0].mxu0 %v2885
  %v2944 = vpop.f32.mrb[0].mxu0
  %v2945 = vadd.f32 0.0, %v2944
  %v2946 = vpop.f32.mrb[0].mxu0
  %v2947 = vadd.f32 0.0, %v2946
  %v2948 = vpop.f32.mrb[0].mxu0
  %v2949 = vadd.f32 0.0, %v2948
  %v2950 = vpop.f32.mrb[0].mxu0
  %v2951 = vadd.f32 0.0, %v2950
  %2952 = vmatprep.mubr.bf16.mxu0 0
  %2953 = vmatmul.mubr.bf16.gmra.mrb[0].mxu0 %v2888
  %v2954 = vpop.f32.mrb[0].mxu0
  %v2955 = vadd.f32 0.0, %v2954
  %v2956 = vpop.f32.mrb[0].mxu0
  %v2957 = vadd.f32 0.0, %v2956
  %v2958 = vpop.f32.mrb[0].mxu0
  %v2959 = vadd.f32 0.0, %v2958
  %v2960 = vpop.f32.mrb[0].mxu0
  %v2961 = vadd.f32 0.0, %v2960
  %2962 = vdwg.mxu0
  %v2963 = vadd.f32 %v2783, %v2925
  %v2964 = vadd.f32 %v2785, %v2927
  %v2965 = vadd.f32 %v2787, %v2929
  %v2966 = vadd.f32 %v2789, %v2931
  %v2967 = vadd.f32 %v2793, %v2935
  %v2968 = vadd.f32 %v2795, %v2937
  %v2969 = vadd.f32 %v2797, %v2939
  %v2970 = vadd.f32 %v2799, %v2941
  %v2971 = vadd.f32 %v2803, %v2945
  %v2972 = vadd.f32 %v2805, %v2947
  %v2973 = vadd.f32 %v2807, %v2949
  %v2974 = vadd.f32 %v2809, %v2951
  %v2975 = vadd.f32 %v2813, %v2955
  %v2976 = vadd.f32 %v2815, %v2957
  %v2977 = vadd.f32 %v2817, %v2959
  %v2978 = vadd.f32 %v2819, %v2961
  %s2979 = scalar_lea.vmem %s5, 96
  %v2980 = vld [vmem:[%s2979] sm:$0xf]
  %v2981 = vld [vmem:[%s2979 + $0x4] sm:$0xf]
  %v2982 = vld [vmem:[%s2979 + $0x8] sm:$0xf]
  %v2983 = vld [vmem:[%s2979 + $0xc] sm:$0xf]
  %v2984 = vld [vmem:[%s2979 + $0x10] sm:$0xf]
  %v2985 = vld [vmem:[%s2979 + $0x14] sm:$0xf]
  %v2986 = vld [vmem:[%s2979 + $0x18] sm:$0xf]
  %v2987 = vld [vmem:[%s2979 + $0x1c] sm:$0xf]
  %v2996 = vunpack.c.l.b16 %v2980
  %v2997 = vunpack.c.l.b16 %v2981
  %v2998 = vunpack.c.l.b16 %v2982
  %v2999 = vunpack.c.l.b16 %v2983
  %v3000 = vunpack.c.l.b16 %v2984
  %v3001 = vunpack.c.l.b16 %v2985
  %v3002 = vunpack.c.l.b16 %v2986
  %v3003 = vunpack.c.l.b16 %v2987
  %v3004 = vpack.c.b16 %v2997, %v2996
  %v3005 = vpack.c.b16 %v2999, %v2998
  %v3006 = vpack.c.b16 %v3001, %v3000
  %v3007 = vpack.c.b16 %v3003, %v3002
  %3008 = vrot.lane.b32.xlu0 %v2558, 125
  %v3009 = vpop.permute.xlu0 %3008
  %3010 = vrot.lane.b32.xlu0 %v2559, 125
  %v3011 = vpop.permute.xlu0 %3010
  %3012 = vrot.lane.b32.xlu0 %v2560, 125
  %v3013 = vpop.permute.xlu0 %3012
  %3014 = vrot.lane.b32.xlu0 %v2561, 125
  %v3015 = vpop.permute.xlu0 %3014
  %3016 = vrot.lane.b32.xlu0 %v2562, 125
  %v3017 = vpop.permute.xlu0 %3016
  %3018 = vrot.lane.b32.xlu0 %v2563, 125
  %v3019 = vpop.permute.xlu0 %3018
  %3020 = vrot.lane.b32.xlu0 %v2564, 125
  %v3021 = vpop.permute.xlu0 %3020
  %3022 = vrot.lane.b32.xlu0 %v2565, 125
  %v3023 = vpop.permute.xlu0 %3022
  %v3024 = vsel %vm1862, %v3009, %v3011
  %v3025 = vsel %vm1862, %v3013, %v3015
  %v3026 = vsel %vm1862, %v3017, %v3019
  %v3027 = vsel %vm1862, %v3021, %v3023
  %v3037 = vsel %vm1116, %v3004, 0
  %v3040 = vsel %vm1116, %v3005, 0
  %v3043 = vsel %vm1116, %v3006, 0
  %v3046 = vsel %vm1116, %v3007, 0
  %3048 = vmatprep.subr.bf16.mxu0 %v3011
  %3049 = vmatpush1.bf16.msra.mxu0 %v3024
  %3050 = vmatprep.subr.bf16.mxu0 %v3015
  %3051 = vmatpush1.bf16.msra.mxu0 %v3025
  %3052 = vmatprep.subr.bf16.mxu0 %v3019
  %3053 = vmatpush1.bf16.msra.mxu0 %v3026
  %3054 = vmatprep.subr.bf16.mxu0 %v3023
  %3055 = vmatpush1.bf16.msra.mxu0 %v3027
  %3056 = vmatprep.subr.bf16.mxu0 0
  %3057 = vmatpush1.bf16.msra.mxu0 0
  %3058 = vmatprep.subr.bf16.mxu0 0
  %3059 = vmatpush1.bf16.msra.mxu0 0
  %3060 = vmatprep.subr.bf16.mxu0 0
  %3061 = vmatpush1.bf16.msra.mxu0 0
  %3062 = vmatprep.subr.bf16.mxu0 0
  %3063 = vmatpush1.bf16.msra.mxu0 0
  %3064 = vmatprep.subr.bf16.mxu0 0
  %3065 = vmatpush1.bf16.msra.mxu0 0
  %3066 = vmatprep.subr.bf16.mxu0 0
  %3067 = vmatpush1.bf16.msra.mxu0 0
  %3068 = vmatprep.subr.bf16.mxu0 0
  %3069 = vmatpush1.bf16.msra.mxu0 0
  %3070 = vmatprep.subr.bf16.mxu0 0
  %3071 = vmatpush1.bf16.msra.mxu0 0
  %3072 = vmatprep.subr.bf16.mxu0 0
  %3073 = vmatpush1.bf16.msra.mxu0 0
  %3074 = vmatprep.subr.bf16.mxu0 0
  %3075 = vmatpush1.bf16.msra.mxu0 0
  %3076 = vmatprep.subr.bf16.mxu0 0
  %3077 = vmatpush1.bf16.msra.mxu0 0
  %3078 = vmatprep.subr.bf16.mxu0 0
  %3079 = vmatpush1.bf16.msra.mxu0 0
  %3080 = vmatprep.mubr.bf16.mxu0 0
  %3081 = vmatmul.mubr.bf16.gmra.mrb[0].mxu0 %v3037
  %v3082 = vpop.f32.mrb[0].mxu0
  %v3083 = vadd.f32 0.0, %v3082
  %v3084 = vpop.f32.mrb[0].mxu0
  %v3085 = vadd.f32 0.0, %v3084
  %v3086 = vpop.f32.mrb[0].mxu0
  %v3087 = vadd.f32 0.0, %v3086
  %v3088 = vpop.f32.mrb[0].mxu0
  %v3089 = vadd.f32 0.0, %v3088
  %3090 = vmatprep.mubr.bf16.mxu0 0
  %3091 = vmatmul.mubr.bf16.gmra.mrb[0].mxu0 %v3040
  %v3092 = vpop.f32.mrb[0].mxu0
  %v3093 = vadd.f32 0.0, %v3092
  %v3094 = vpop.f32.mrb[0].mxu0
  %v3095 = vadd.f32 0.0, %v3094
  %v3096 = vpop.f32.mrb[0].mxu0
  %v3097 = vadd.f32 0.0, %v3096
  %v3098 = vpop.f32.mrb[0].mxu0
  %v3099 = vadd.f32 0.0, %v3098
  %3100 = vmatprep.mubr.bf16.mxu0 0
  %3101 = vmatmul.mubr.bf16.gmra.mrb[0].mxu0 %v3043
  %v3102 = vpop.f32.mrb[0].mxu0
  %v3103 = vadd.f32 0.0, %v3102
  %v3104 = vpop.f32.mrb[0].mxu0
  %v3105 = vadd.f32 0.0, %v3104
  %v3106 = vpop.f32.mrb[0].mxu0
  %v3107 = vadd.f32 0.0, %v3106
  %v3108 = vpop.f32.mrb[0].mxu0
  %v3109 = vadd.f32 0.0, %v3108
  %3110 = vmatprep.mubr.bf16.mxu0 0
  %3111 = vmatmul.mubr.bf16.gmra.mrb[0].mxu0 %v3046
  %v3112 = vpop.f32.mrb[0].mxu0
  %v3113 = vadd.f32 0.0, %v3112
  %v3114 = vpop.f32.mrb[0].mxu0
  %v3115 = vadd.f32 0.0, %v3114
  %v3116 = vpop.f32.mrb[0].mxu0
  %v3117 = vadd.f32 0.0, %v3116
  %v3118 = vpop.f32.mrb[0].mxu0
  %v3119 = vadd.f32 0.0, %v3118
  %3120 = vdwg.mxu0
  %v3121 = vadd.f32 %v2963, %v3083
  %v3122 = vadd.f32 %v2964, %v3085
  %v3123 = vadd.f32 %v2965, %v3087
  %v3124 = vadd.f32 %v2966, %v3089
  %v3125 = vadd.f32 %v2967, %v3093
  %v3126 = vadd.f32 %v2968, %v3095
  %v3127 = vadd.f32 %v2969, %v3097
  %v3128 = vadd.f32 %v2970, %v3099
  %v3129 = vadd.f32 %v2971, %v3103
  %v3130 = vadd.f32 %v2972, %v3105
  %v3131 = vadd.f32 %v2973, %v3107
  %v3132 = vadd.f32 %v2974, %v3109
  %v3133 = vadd.f32 %v2975, %v3113
  %v3134 = vadd.f32 %v2976, %v3115
  %v3135 = vadd.f32 %v2977, %v3117
  %v3136 = vadd.f32 %v2978, %v3119
  %s3137 = scalar_lea.vmem %s5, 128
  %v3138 = vld [vmem:[%s3137] sm:$0xf]
  %v3139 = vld [vmem:[%s3137 + $0x4] sm:$0xf]
  %v3140 = vld [vmem:[%s3137 + $0x8] sm:$0xf]
  %v3141 = vld [vmem:[%s3137 + $0xc] sm:$0xf]
  %v3142 = vld [vmem:[%s3137 + $0x10] sm:$0xf]
  %v3143 = vld [vmem:[%s3137 + $0x14] sm:$0xf]
  %v3144 = vld [vmem:[%s3137 + $0x18] sm:$0xf]
  %v3145 = vld [vmem:[%s3137 + $0x1c] sm:$0xf]
  %v3154 = vunpack.c.l.b16 %v3138
  %v3155 = vunpack.c.l.b16 %v3139
  %v3156 = vunpack.c.l.b16 %v3140
  %v3157 = vunpack.c.l.b16 %v3141
  %v3158 = vunpack.c.l.b16 %v3142
  %v3159 = vunpack.c.l.b16 %v3143
  %v3160 = vunpack.c.l.b16 %v3144
  %v3161 = vunpack.c.l.b16 %v3145
  %v3162 = vpack.c.b16 %v3155, %v3154
  %v3163 = vpack.c.b16 %v3157, %v3156
  %v3164 = vpack.c.b16 %v3159, %v3158
  %v3165 = vpack.c.b16 %v3161, %v3160
  %3166 = vrot.lane.b32.xlu0 %v2558, 124
  %v3167 = vpop.permute.xlu0 %3166
  %3168 = vrot.lane.b32.xlu0 %v2559, 124
  %v3169 = vpop.permute.xlu0 %3168
  %3170 = vrot.lane.b32.xlu0 %v2560, 124
  %v3171 = vpop.permute.xlu0 %3170
  %3172 = vrot.lane.b32.xlu0 %v2561, 124
  %v3173 = vpop.permute.xlu0 %3172
  %3174 = vrot.lane.b32.xlu0 %v2562, 124
  %v3175 = vpop.permute.xlu0 %3174
  %3176 = vrot.lane.b32.xlu0 %v2563, 124
  %v3177 = vpop.permute.xlu0 %3176
  %3178 = vrot.lane.b32.xlu0 %v2564, 124
  %v3179 = vpop.permute.xlu0 %3178
  %3180 = vrot.lane.b32.xlu0 %v2565, 124
  %v3181 = vpop.permute.xlu0 %3180
  %v3182 = vsel %vm2007, %v3167, %v3169
  %v3183 = vsel %vm2007, %v3171, %v3173
  %v3184 = vsel %vm2007, %v3175, %v3177
  %v3185 = vsel %vm2007, %v3179, %v3181
  %v3195 = vsel %vm1116, %v3162, 0
  %v3198 = vsel %vm1116, %v3163, 0
  %v3201 = vsel %vm1116, %v3164, 0
  %v3204 = vsel %vm1116, %v3165, 0
  %3206 = vmatprep.subr.bf16.mxu0 %v3169
  %3207 = vmatpush1.bf16.msra.mxu0 %v3182
  %3208 = vmatprep.subr.bf16.mxu0 %v3173
  %3209 = vmatpush1.bf16.msra.mxu0 %v3183
  %3210 = vmatprep.subr.bf16.mxu0 %v3177
  %3211 = vmatpush1.bf16.msra.mxu0 %v3184
  %3212 = vmatprep.subr.bf16.mxu0 %v3181
  %3213 = vmatpush1.bf16.msra.mxu0 %v3185
  %3214 = vmatprep.subr.bf16.mxu0 0
  %3215 = vmatpush1.bf16.msra.mxu0 0
  %3216 = vmatprep.subr.bf16.mxu0 0
  %3217 = vmatpush1.bf16.msra.mxu0 0
  %3218 = vmatprep.subr.bf16.mxu0 0
  %3219 = vmatpush1.bf16.msra.mxu0 0
  %3220 = vmatprep.subr.bf16.mxu0 0
  %3221 = vmatpush1.bf16.msra.mxu0 0
  %3222 = vmatprep.subr.bf16.mxu0 0
  %3223 = vmatpush1.bf16.msra.mxu0 0
  %3224 = vmatprep.subr.bf16.mxu0 0
  %3225 = vmatpush1.bf16.msra.mxu0 0
  %3226 = vmatprep.subr.bf16.mxu0 0
  %3227 = vmatpush1.bf16.msra.mxu0 0
  %3228 = vmatprep.subr.bf16.mxu0 0
  %3229 = vmatpush1.bf16.msra.mxu0 0
  %3230 = vmatprep.subr.bf16.mxu0 0
  %3231 = vmatpush1.bf16.msra.mxu0 0
  %3232 = vmatprep.subr.bf16.mxu0 0
  %3233 = vmatpush1.bf16.msra.mxu0 0
  %3234 = vmatprep.subr.bf16.mxu0 0
  %3235 = vmatpush1.bf16.msra.mxu0 0
  %3236 = vmatprep.subr.bf16.mxu0 0
  %3237 = vmatpush1.bf16.msra.mxu0 0
  %3238 = vmatprep.mubr.bf16.mxu0 0
  %3239 = vmatmul.mubr.bf16.gmra.mrb[0].mxu0 %v3195
  %v3240 = vpop.f32.mrb[0].mxu0
  %v3241 = vadd.f32 0.0, %v3240
  %v3242 = vpop.f32.mrb[0].mxu0
  %v3243 = vadd.f32 0.0, %v3242
  %v3244 = vpop.f32.mrb[0].mxu0
  %v3245 = vadd.f32 0.0, %v3244
  %v3246 = vpop.f32.mrb[0].mxu0
  %v3247 = vadd.f32 0.0, %v3246
  %3248 = vmatprep.mubr.bf16.mxu0 0
  %3249 = vmatmul.mubr.bf16.gmra.mrb[0].mxu0 %v3198
  %v3250 = vpop.f32.mrb[0].mxu0
  %v3251 = vadd.f32 0.0, %v3250
  %v3252 = vpop.f32.mrb[0].mxu0
  %v3253 = vadd.f32 0.0, %v3252
  %v3254 = vpop.f32.mrb[0].mxu0
  %v3255 = vadd.f32 0.0, %v3254
  %v3256 = vpop.f32.mrb[0].mxu0
  %v3257 = vadd.f32 0.0, %v3256
  %3258 = vmatprep.mubr.bf16.mxu0 0
  %3259 = vmatmul.mubr.bf16.gmra.mrb[0].mxu0 %v3201
  %v3260 = vpop.f32.mrb[0].mxu0
  %v3261 = vadd.f32 0.0, %v3260
  %v3262 = vpop.f32.mrb[0].mxu0
  %v3263 = vadd.f32 0.0, %v3262
  %v3264 = vpop.f32.mrb[0].mxu0
  %v3265 = vadd.f32 0.0, %v3264
  %v3266 = vpop.f32.mrb[0].mxu0
  %v3267 = vadd.f32 0.0, %v3266
  %3268 = vmatprep.mubr.bf16.mxu0 0
  %3269 = vmatmul.mubr.bf16.gmra.mrb[0].mxu0 %v3204
  %v3270 = vpop.f32.mrb[0].mxu0
  %v3271 = vadd.f32 0.0, %v3270
  %v3272 = vpop.f32.mrb[0].mxu0
  %v3273 = vadd.f32 0.0, %v3272
  %v3274 = vpop.f32.mrb[0].mxu0
  %v3275 = vadd.f32 0.0, %v3274
  %v3276 = vpop.f32.mrb[0].mxu0
  %v3277 = vadd.f32 0.0, %v3276
  %3278 = vdwg.mxu0
  %v3279 = vadd.f32 %v3121, %v3241
  %v3280 = vadd.f32 %v3122, %v3243
  %v3281 = vadd.f32 %v3123, %v3245
  %v3282 = vadd.f32 %v3124, %v3247
  %v3283 = vadd.f32 %v3125, %v3251
  %v3284 = vadd.f32 %v3126, %v3253
  %v3285 = vadd.f32 %v3127, %v3255
  %v3286 = vadd.f32 %v3128, %v3257
  %v3287 = vadd.f32 %v3129, %v3261
  %v3288 = vadd.f32 %v3130, %v3263
  %v3289 = vadd.f32 %v3131, %v3265
  %v3290 = vadd.f32 %v3132, %v3267
  %v3291 = vadd.f32 %v3133, %v3271
  %v3292 = vadd.f32 %v3134, %v3273
  %v3293 = vadd.f32 %v3135, %v3275
  %v3294 = vadd.f32 %v3136, %v3277
  %s3295 = scalar_lea.vmem %s5, 160
  %v3296 = vld [vmem:[%s3295] sm:$0xf]
  %v3297 = vld [vmem:[%s3295 + $0x4] sm:$0xf]
  %v3298 = vld [vmem:[%s3295 + $0x8] sm:$0xf]
  %v3299 = vld [vmem:[%s3295 + $0xc] sm:$0xf]
  %v3300 = vld [vmem:[%s3295 + $0x10] sm:$0xf]
  %v3301 = vld [vmem:[%s3295 + $0x14] sm:$0xf]
  %v3302 = vld [vmem:[%s3295 + $0x18] sm:$0xf]
  %v3303 = vld [vmem:[%s3295 + $0x1c] sm:$0xf]
  %v3312 = vunpack.c.l.b16 %v3296
  %v3313 = vunpack.c.l.b16 %v3297
  %v3314 = vunpack.c.l.b16 %v3298
  %v3315 = vunpack.c.l.b16 %v3299
  %v3316 = vunpack.c.l.b16 %v3300
  %v3317 = vunpack.c.l.b16 %v3301
  %v3318 = vunpack.c.l.b16 %v3302
  %v3319 = vunpack.c.l.b16 %v3303
  %v3320 = vpack.c.b16 %v3313, %v3312
  %v3321 = vpack.c.b16 %v3315, %v3314
  %v3322 = vpack.c.b16 %v3317, %v3316
  %v3323 = vpack.c.b16 %v3319, %v3318
  %3324 = vrot.lane.b32.xlu0 %v2558, 123
  %v3325 = vpop.permute.xlu0 %3324
  %3326 = vrot.lane.b32.xlu0 %v2559, 123
  %v3327 = vpop.permute.xlu0 %3326
  %3328 = vrot.lane.b32.xlu0 %v2560, 123
  %v3329 = vpop.permute.xlu0 %3328
  %3330 = vrot.lane.b32.xlu0 %v2561, 123
  %v3331 = vpop.permute.xlu0 %3330
  %3332 = vrot.lane.b32.xlu0 %v2562, 123
  %v3333 = vpop.permute.xlu0 %3332
  %3334 = vrot.lane.b32.xlu0 %v2563, 123
  %v3335 = vpop.permute.xlu0 %3334
  %3336 = vrot.lane.b32.xlu0 %v2564, 123
  %v3337 = vpop.permute.xlu0 %3336
  %3338 = vrot.lane.b32.xlu0 %v2565, 123
  %v3339 = vpop.permute.xlu0 %3338
  %v3340 = vsel %vm2152, %v3325, %v3327
  %v3341 = vsel %vm2152, %v3329, %v3331
  %v3342 = vsel %vm2152, %v3333, %v3335
  %v3343 = vsel %vm2152, %v3337, %v3339
  %v3353 = vsel %vm1116, %v3320, 0
  %v3356 = vsel %vm1116, %v3321, 0
  %v3359 = vsel %vm1116, %v3322, 0
  %v3362 = vsel %vm1116, %v3323, 0
  %3364 = vmatprep.subr.bf16.mxu0 %v3327
  %3365 = vmatpush1.bf16.msra.mxu0 %v3340
  %3366 = vmatprep.subr.bf16.mxu0 %v3331
  %3367 = vmatpush1.bf16.msra.mxu0 %v3341
  %3368 = vmatprep.subr.bf16.mxu0 %v3335
  %3369 = vmatpush1.bf16.msra.mxu0 %v3342
  %3370 = vmatprep.subr.bf16.mxu0 %v3339
  %3371 = vmatpush1.bf16.msra.mxu0 %v3343
  %3372 = vmatprep.subr.bf16.mxu0 0
  %3373 = vmatpush1.bf16.msra.mxu0 0
  %3374 = vmatprep.subr.bf16.mxu0 0
  %3375 = vmatpush1.bf16.msra.mxu0 0
  %3376 = vmatprep.subr.bf16.mxu0 0
  %3377 = vmatpush1.bf16.msra.mxu0 0
  %3378 = vmatprep.subr.bf16.mxu0 0
  %3379 = vmatpush1.bf16.msra.mxu0 0
  %3380 = vmatprep.subr.bf16.mxu0 0
  %3381 = vmatpush1.bf16.msra.mxu0 0
  %3382 = vmatprep.subr.bf16.mxu0 0
  %3383 = vmatpush1.bf16.msra.mxu0 0
  %3384 = vmatprep.subr.bf16.mxu0 0
  %3385 = vmatpush1.bf16.msra.mxu0 0
  %3386 = vmatprep.subr.bf16.mxu0 0
  %3387 = vmatpush1.bf16.msra.mxu0 0
  %3388 = vmatprep.subr.bf16.mxu0 0
  %3389 = vmatpush1.bf16.msra.mxu0 0
  %3390 = vmatprep.subr.bf16.mxu0 0
  %3391 = vmatpush1.bf16.msra.mxu0 0
  %3392 = vmatprep.subr.bf16.mxu0 0
  %3393 = vmatpush1.bf16.msra.mxu0 0
  %3394 = vmatprep.subr.bf16.mxu0 0
  %3395 = vmatpush1.bf16.msra.mxu0 0
  %3396 = vmatprep.mubr.bf16.mxu0 0
  %3397 = vmatmul.mubr.bf16.gmra.mrb[0].mxu0 %v3353
  %v3398 = vpop.f32.mrb[0].mxu0
  %v3399 = vadd.f32 0.0, %v3398
  %v3400 = vpop.f32.mrb[0].mxu0
  %v3401 = vadd.f32 0.0, %v3400
  %v3402 = vpop.f32.mrb[0].mxu0
  %v3403 = vadd.f32 0.0, %v3402
  %v3404 = vpop.f32.mrb[0].mxu0
  %v3405 = vadd.f32 0.0, %v3404
  %3406 = vmatprep.mubr.bf16.mxu0 0
  %3407 = vmatmul.mubr.bf16.gmra.mrb[0].mxu0 %v3356
  %v3408 = vpop.f32.mrb[0].mxu0
  %v3409 = vadd.f32 0.0, %v3408
  %v3410 = vpop.f32.mrb[0].mxu0
  %v3411 = vadd.f32 0.0, %v3410
  %v3412 = vpop.f32.mrb[0].mxu0
  %v3413 = vadd.f32 0.0, %v3412
  %v3414 = vpop.f32.mrb[0].mxu0
  %v3415 = vadd.f32 0.0, %v3414
  %3416 = vmatprep.mubr.bf16.mxu0 0
  %3417 = vmatmul.mubr.bf16.gmra.mrb[0].mxu0 %v3359
  %v3418 = vpop.f32.mrb[0].mxu0
  %v3419 = vadd.f32 0.0, %v3418
  %v3420 = vpop.f32.mrb[0].mxu0
  %v3421 = vadd.f32 0.0, %v3420
  %v3422 = vpop.f32.mrb[0].mxu0
  %v3423 = vadd.f32 0.0, %v3422
  %v3424 = vpop.f32.mrb[0].mxu0
  %v3425 = vadd.f32 0.0, %v3424
  %3426 = vmatprep.mubr.bf16.mxu0 0
  %3427 = vmatmul.mubr.bf16.gmra.mrb[0].mxu0 %v3362
  %v3428 = vpop.f32.mrb[0].mxu0
  %v3429 = vadd.f32 0.0, %v3428
  %v3430 = vpop.f32.mrb[0].mxu0
  %v3431 = vadd.f32 0.0, %v3430
  %v3432 = vpop.f32.mrb[0].mxu0
  %v3433 = vadd.f32 0.0, %v3432
  %v3434 = vpop.f32.mrb[0].mxu0
  %v3435 = vadd.f32 0.0, %v3434
  %3436 = vdwg.mxu0
  %v3437 = vadd.f32 %v3279, %v3399
  %v3438 = vadd.f32 %v3280, %v3401
  %v3439 = vadd.f32 %v3281, %v3403
  %v3440 = vadd.f32 %v3282, %v3405
  %v3441 = vadd.f32 %v3283, %v3409
  %v3442 = vadd.f32 %v3284, %v3411
  %v3443 = vadd.f32 %v3285, %v3413
  %v3444 = vadd.f32 %v3286, %v3415
  %v3445 = vadd.f32 %v3287, %v3419
  %v3446 = vadd.f32 %v3288, %v3421
  %v3447 = vadd.f32 %v3289, %v3423
  %v3448 = vadd.f32 %v3290, %v3425
  %v3449 = vadd.f32 %v3291, %v3429
  %v3450 = vadd.f32 %v3292, %v3431
  %v3451 = vadd.f32 %v3293, %v3433
  %v3452 = vadd.f32 %v3294, %v3435
  %s3453 = scalar_lea.vmem %s5, 192
  %v3454 = vld [vmem:[%s3453] sm:$0xf]
  %v3455 = vld [vmem:[%s3453 + $0x4] sm:$0xf]
  %v3456 = vld [vmem:[%s3453 + $0x8] sm:$0xf]
  %v3457 = vld [vmem:[%s3453 + $0xc] sm:$0xf]
  %v3458 = vld [vmem:[%s3453 + $0x10] sm:$0xf]
  %v3459 = vld [vmem:[%s3453 + $0x14] sm:$0xf]
  %v3460 = vld [vmem:[%s3453 + $0x18] sm:$0xf]
  %v3461 = vld [vmem:[%s3453 + $0x1c] sm:$0xf]
  %v3470 = vunpack.c.l.b16 %v3454
  %v3471 = vunpack.c.l.b16 %v3455
  %v3472 = vunpack.c.l.b16 %v3456
  %v3473 = vunpack.c.l.b16 %v3457
  %v3474 = vunpack.c.l.b16 %v3458
  %v3475 = vunpack.c.l.b16 %v3459
  %v3476 = vunpack.c.l.b16 %v3460
  %v3477 = vunpack.c.l.b16 %v3461
  %v3478 = vpack.c.b16 %v3471, %v3470
  %v3479 = vpack.c.b16 %v3473, %v3472
  %v3480 = vpack.c.b16 %v3475, %v3474
  %v3481 = vpack.c.b16 %v3477, %v3476
  %3482 = vrot.lane.b32.xlu0 %v2558, 122
  %v3483 = vpop.permute.xlu0 %3482
  %3484 = vrot.lane.b32.xlu0 %v2559, 122
  %v3485 = vpop.permute.xlu0 %3484
  %3486 = vrot.lane.b32.xlu0 %v2560, 122
  %v3487 = vpop.permute.xlu0 %3486
  %3488 = vrot.lane.b32.xlu0 %v2561, 122
  %v3489 = vpop.permute.xlu0 %3488
  %3490 = vrot.lane.b32.xlu0 %v2562, 122
  %v3491 = vpop.permute.xlu0 %3490
  %3492 = vrot.lane.b32.xlu0 %v2563, 122
  %v3493 = vpop.permute.xlu0 %3492
  %3494 = vrot.lane.b32.xlu0 %v2564, 122
  %v3495 = vpop.permute.xlu0 %3494
  %3496 = vrot.lane.b32.xlu0 %v2565, 122
  %v3497 = vpop.permute.xlu0 %3496
  %v3498 = vsel %vm2297, %v3483, %v3485
  %v3499 = vsel %vm2297, %v3487, %v3489
  %v3500 = vsel %vm2297, %v3491, %v3493
  %v3501 = vsel %vm2297, %v3495, %v3497
  %v3511 = vsel %vm1116, %v3478, 0
  %v3514 = vsel %vm1116, %v3479, 0
  %v3517 = vsel %vm1116, %v3480, 0
  %v3520 = vsel %vm1116, %v3481, 0
  %3522 = vmatprep.subr.bf16.mxu0 %v3485
  %3523 = vmatpush1.bf16.msra.mxu0 %v3498
  %3524 = vmatprep.subr.bf16.mxu0 %v3489
  %3525 = vmatpush1.bf16.msra.mxu0 %v3499
  %3526 = vmatprep.subr.bf16.mxu0 %v3493
  %3527 = vmatpush1.bf16.msra.mxu0 %v3500
  %3528 = vmatprep.subr.bf16.mxu0 %v3497
  %3529 = vmatpush1.bf16.msra.mxu0 %v3501
  %3530 = vmatprep.subr.bf16.mxu0 0
  %3531 = vmatpush1.bf16.msra.mxu0 0
  %3532 = vmatprep.subr.bf16.mxu0 0
  %3533 = vmatpush1.bf16.msra.mxu0 0
  %3534 = vmatprep.subr.bf16.mxu0 0
  %3535 = vmatpush1.bf16.msra.mxu0 0
  %3536 = vmatprep.subr.bf16.mxu0 0
  %3537 = vmatpush1.bf16.msra.mxu0 0
  %3538 = vmatprep.subr.bf16.mxu0 0
  %3539 = vmatpush1.bf16.msra.mxu0 0
  %3540 = vmatprep.subr.bf16.mxu0 0
  %3541 = vmatpush1.bf16.msra.mxu0 0
  %3542 = vmatprep.subr.bf16.mxu0 0
  %3543 = vmatpush1.bf16.msra.mxu0 0
  %3544 = vmatprep.subr.bf16.mxu0 0
  %3545 = vmatpush1.bf16.msra.mxu0 0
  %3546 = vmatprep.subr.bf16.mxu0 0
  %3547 = vmatpush1.bf16.msra.mxu0 0
  %3548 = vmatprep.subr.bf16.mxu0 0
  %3549 = vmatpush1.bf16.msra.mxu0 0
  %3550 = vmatprep.subr.bf16.mxu0 0
  %3551 = vmatpush1.bf16.msra.mxu0 0
  %3552 = vmatprep.subr.bf16.mxu0 0
  %3553 = vmatpush1.bf16.msra.mxu0 0
  %3554 = vmatprep.mubr.bf16.mxu0 0
  %3555 = vmatmul.mubr.bf16.gmra.mrb[0].mxu0 %v3511
  %v3556 = vpop.f32.mrb[0].mxu0
  %v3557 = vadd.f32 0.0, %v3556
  %v3558 = vpop.f32.mrb[0].mxu0
  %v3559 = vadd.f32 0.0, %v3558
  %v3560 = vpop.f32.mrb[0].mxu0
  %v3561 = vadd.f32 0.0, %v3560
  %v3562 = vpop.f32.mrb[0].mxu0
  %v3563 = vadd.f32 0.0, %v3562
  %3564 = vmatprep.mubr.bf16.mxu0 0
  %3565 = vmatmul.mubr.bf16.gmra.mrb[0].mxu0 %v3514
  %v3566 = vpop.f32.mrb[0].mxu0
  %v3567 = vadd.f32 0.0, %v3566
  %v3568 = vpop.f32.mrb[0].mxu0
  %v3569 = vadd.f32 0.0, %v3568
  %v3570 = vpop.f32.mrb[0].mxu0
  %v3571 = vadd.f32 0.0, %v3570
  %v3572 = vpop.f32.mrb[0].mxu0
  %v3573 = vadd.f32 0.0, %v3572
  %3574 = vmatprep.mubr.bf16.mxu0 0
  %3575 = vmatmul.mubr.bf16.gmra.mrb[0].mxu0 %v3517
  %v3576 = vpop.f32.mrb[0].mxu0
  %v3577 = vadd.f32 0.0, %v3576
  %v3578 = vpop.f32.mrb[0].mxu0
  %v3579 = vadd.f32 0.0, %v3578
  %v3580 = vpop.f32.mrb[0].mxu0
  %v3581 = vadd.f32 0.0, %v3580
  %v3582 = vpop.f32.mrb[0].mxu0
  %v3583 = vadd.f32 0.0, %v3582
  %3584 = vmatprep.mubr.bf16.mxu0 0
  %3585 = vmatmul.mubr.bf16.gmra.mrb[0].mxu0 %v3520
  %v3586 = vpop.f32.mrb[0].mxu0
  %v3587 = vadd.f32 0.0, %v3586
  %v3588 = vpop.f32.mrb[0].mxu0
  %v3589 = vadd.f32 0.0, %v3588
  %v3590 = vpop.f32.mrb[0].mxu0
  %v3591 = vadd.f32 0.0, %v3590
  %v3592 = vpop.f32.mrb[0].mxu0
  %v3593 = vadd.f32 0.0, %v3592
  %3594 = vdwg.mxu0
  %v3595 = vadd.f32 %v3437, %v3557
  %v3596 = vadd.f32 %v3438, %v3559
  %v3597 = vadd.f32 %v3439, %v3561
  %v3598 = vadd.f32 %v3440, %v3563
  %v3599 = vadd.f32 %v3441, %v3567
  %v3600 = vadd.f32 %v3442, %v3569
  %v3601 = vadd.f32 %v3443, %v3571
  %v3602 = vadd.f32 %v3444, %v3573
  %v3603 = vadd.f32 %v3445, %v3577
  %v3604 = vadd.f32 %v3446, %v3579
  %v3605 = vadd.f32 %v3447, %v3581
  %v3606 = vadd.f32 %v3448, %v3583
  %v3607 = vadd.f32 %v3449, %v3587
  %v3608 = vadd.f32 %v3450, %v3589
  %v3609 = vadd.f32 %v3451, %v3591
  %v3610 = vadd.f32 %v3452, %v3593
  %v3611 = vld [vmem:[%s6] sm:$0xff]
  %v3612 = vld [vmem:[%s6 + $0x8] sm:$0xff]
  %v3613 = vld [vmem:[%s6 + $0x10] sm:$0xff]
  %v3614 = vld [vmem:[%s6 + $0x18] sm:$0xff]
  %v3615 = vld [vmem:[%s6 + $0x20] sm:$0xff]
  %v3616 = vld [vmem:[%s6 + $0x28] sm:$0xff]
  %v3617 = vld [vmem:[%s6 + $0x30] sm:$0xff]
  %v3618 = vld [vmem:[%s6 + $0x38] sm:$0xff]
  %3620 = vset.pattern.permute.xlu0 0
  %3621 = vperm.xlu0 %3620, %v3611
  %v3622 = vpop.permute.xlu0 %3621
  %3625 = vset.pattern.permute.xlu0 0
  %3626 = vperm.xlu0 %3625, %v3612
  %v3627 = vpop.permute.xlu0 %3626
  %3630 = vset.pattern.permute.xlu0 0
  %3631 = vperm.xlu0 %3630, %v3613
  %v3632 = vpop.permute.xlu0 %3631
  %3635 = vset.pattern.permute.xlu0 0
  %3636 = vperm.xlu0 %3635, %v3614
  %v3637 = vpop.permute.xlu0 %3636
  %3640 = vset.pattern.permute.xlu0 0
  %3641 = vperm.xlu0 %3640, %v3615
  %v3642 = vpop.permute.xlu0 %3641
  %3645 = vset.pattern.permute.xlu0 0
  %3646 = vperm.xlu0 %3645, %v3616
  %v3647 = vpop.permute.xlu0 %3646
  %3650 = vset.pattern.permute.xlu0 0
  %3651 = vperm.xlu0 %3650, %v3617
  %v3652 = vpop.permute.xlu0 %3651
  %3655 = vset.pattern.permute.xlu0 0
  %3656 = vperm.xlu0 %3655, %v3618
  %v3657 = vpop.permute.xlu0 %3656
  %v3659 = vadd.f32 %v3595, %v3622
  %v3660 = vadd.f32 %v3596, %v3622
  %v3661 = vadd.f32 %v3597, %v3627
  %v3662 = vadd.f32 %v3598, %v3627
  %v3663 = vadd.f32 %v3599, %v3632
  %v3664 = vadd.f32 %v3600, %v3632
  %v3665 = vadd.f32 %v3601, %v3637
  %v3666 = vadd.f32 %v3602, %v3637
  %v3667 = vadd.f32 %v3603, %v3642
  %v3668 = vadd.f32 %v3604, %v3642
  %v3669 = vadd.f32 %v3605, %v3647
  %v3670 = vadd.f32 %v3606, %v3647
  %v3671 = vadd.f32 %v3607, %v3652
  %v3672 = vadd.f32 %v3608, %v3652
  %v3673 = vadd.f32 %v3609, %v3657
  %v3674 = vadd.f32 %v3610, %v3657
  %v3675 = vmax.f32 %v3659, 0.0
  %v3676 = vmax.f32 %v3660, 0.0
  %v3677 = vmax.f32 %v3661, 0.0
  %v3678 = vmax.f32 %v3662, 0.0
  %v3679 = vmax.f32 %v3663, 0.0
  %v3680 = vmax.f32 %v3664, 0.0
  %v3681 = vmax.f32 %v3665, 0.0
  %v3682 = vmax.f32 %v3666, 0.0
  %v3683 = vmax.f32 %v3667, 0.0
  %v3684 = vmax.f32 %v3668, 0.0
  %v3685 = vmax.f32 %v3669, 0.0
  %v3686 = vmax.f32 %v3670, 0.0
  %v3687 = vmax.f32 %v3671, 0.0
  %v3688 = vmax.f32 %v3672, 0.0
  %v3689 = vmax.f32 %v3673, 0.0
  %v3690 = vmax.f32 %v3674, 0.0
  %v3691 = vpack.c.bf16 %v3677, %v3675
  %v3692 = vpack.c.bf16 %v3681, %v3679
  %v3693 = vpack.c.bf16 %v3685, %v3683
  %v3694 = vpack.c.bf16 %v3689, %v3687
  %3699 = vrot.lane.b32.xlu0 %v3691, 3
  %v3700 = vpop.permute.xlu0 %3699
  %3701 = vrot.lane.b32.xlu0 %v3692, 3
  %v3702 = vpop.permute.xlu0 %3701
  %3703 = vrot.lane.b32.xlu0 %v3693, 3
  %v3704 = vpop.permute.xlu0 %3703
  %3705 = vrot.lane.b32.xlu0 %v3694, 3
  %v3706 = vpop.permute.xlu0 %3705
  %3711 = vst.msk [vmem:[#allocation3] sm:$0xff] %vm1397, %v3700
  %3712 = vst.msk [vmem:[#allocation3 + $0x10] sm:$0xff] %vm1397, %v3702
  %3713 = vst.msk [vmem:[#allocation3 + $0x20] sm:$0xff] %vm1397, %v3704
  %3714 = vst.msk [vmem:[#allocation3 + $0x30] sm:$0xff] %vm1397, %v3706
  %3715 = vst.msk [vmem:[#allocation3] sm:$0xff] %vm1406, %v3700
  %3716 = vst.msk [vmem:[#allocation3 + $0x10] sm:$0xff] %vm1406, %v3702
  %3717 = vst.msk [vmem:[#allocation3 + $0x20] sm:$0xff] %vm1406, %v3704
  %3718 = vst.msk [vmem:[#allocation3 + $0x30] sm:$0xff] %vm1406, %v3706
  %3719 = vst.msk [vmem:[#allocation3] sm:$0xff] %vm1415, %v3700
  %3720 = vst.msk [vmem:[#allocation3 + $0x10] sm:$0xff] %vm1415, %v3702
  %3721 = vst.msk [vmem:[#allocation3 + $0x20] sm:$0xff] %vm1415, %v3704
  %3722 = vst.msk [vmem:[#allocation3 + $0x30] sm:$0xff] %vm1415, %v3706
  %v3723 = vpack.c.bf16 %v3678, %v3676
  %v3724 = vpack.c.bf16 %v3682, %v3680
  %v3725 = vpack.c.bf16 %v3686, %v3684
  %v3726 = vpack.c.bf16 %v3690, %v3688
  %3731 = vrot.lane.b32.xlu0 %v3723, 3
  %v3732 = vpop.permute.xlu0 %3731
  %3733 = vrot.lane.b32.xlu0 %v3724, 3
  %v3734 = vpop.permute.xlu0 %3733
  %3735 = vrot.lane.b32.xlu0 %v3725, 3
  %v3736 = vpop.permute.xlu0 %3735
  %3737 = vrot.lane.b32.xlu0 %v3726, 3
  %v3738 = vpop.permute.xlu0 %3737
  %v3739 = vsel %vm2533, %v3700, %v3732
  %v3740 = vsel %vm2533, %v3702, %v3734
  %v3741 = vsel %vm2533, %v3704, %v3736
  %v3742 = vsel %vm2533, %v3706, %v3738
  %3747 = vst.msk [vmem:[#allocation3] sm:$0xff] %vm1424, %v3700
  %3748 = vst.msk [vmem:[#allocation3 + $0x8] sm:$0xff] %vm1426, %v3739
  %3749 = vst.msk [vmem:[#allocation3 + $0x10] sm:$0xff] %vm1424, %v3702
  %3750 = vst.msk [vmem:[#allocation3 + $0x18] sm:$0xff] %vm1426, %v3740
  %3751 = vst.msk [vmem:[#allocation3 + $0x20] sm:$0xff] %vm1424, %v3704
  %3752 = vst.msk [vmem:[#allocation3 + $0x28] sm:$0xff] %vm1426, %v3741
  %3753 = vst.msk [vmem:[#allocation3 + $0x30] sm:$0xff] %vm1424, %v3706
  %3754 = vst.msk [vmem:[#allocation3 + $0x38] sm:$0xff] %vm1426, %v3742
  %v3755 = vld [vmem:[%s7] sm:$0xf]
  %v3756 = vld [vmem:[%s7 + $0x4] sm:$0xf]
  %v3757 = vld [vmem:[%s7 + $0x8] sm:$0xf]
  %v3758 = vld [vmem:[%s7 + $0xc] sm:$0xf]
  %v3759 = vld [vmem:[%s7 + $0x10] sm:$0xf]
  %v3760 = vld [vmem:[%s7 + $0x14] sm:$0xf]
  %v3761 = vld [vmem:[%s7 + $0x18] sm:$0xf]
  %v3762 = vld [vmem:[%s7 + $0x1c] sm:$0xf]
  %v3763 = vld [vmem:[#allocation3] sm:$0xff]
  %v3764 = vld [vmem:[#allocation3 + $0x8] sm:$0xff]
  %v3765 = vld [vmem:[#allocation3 + $0x10] sm:$0xff]
  %v3766 = vld [vmem:[#allocation3 + $0x18] sm:$0xff]
  %v3767 = vld [vmem:[#allocation3 + $0x20] sm:$0xff]
  %v3768 = vld [vmem:[#allocation3 + $0x28] sm:$0xff]
  %v3769 = vld [vmem:[#allocation3 + $0x30] sm:$0xff]
  %v3770 = vld [vmem:[#allocation3 + $0x38] sm:$0xff]
  %s3771 = scalar_lea.vmem %s7, 32
  %v3772 = vld [vmem:[%s3771] sm:$0xf]
  %v3773 = vld [vmem:[%s3771 + $0x4] sm:$0xf]
  %v3774 = vld [vmem:[%s3771 + $0x8] sm:$0xf]
  %v3775 = vld [vmem:[%s3771 + $0xc] sm:$0xf]
  %v3776 = vld [vmem:[%s3771 + $0x10] sm:$0xf]
  %v3777 = vld [vmem:[%s3771 + $0x14] sm:$0xf]
  %v3778 = vld [vmem:[%s3771 + $0x18] sm:$0xf]
  %v3779 = vld [vmem:[%s3771 + $0x1c] sm:$0xf]
  %v3788 = vunpack.c.l.b16 %v3772
  %v3789 = vunpack.c.l.b16 %v3773
  %v3790 = vunpack.c.l.b16 %v3774
  %v3791 = vunpack.c.l.b16 %v3775
  %v3792 = vunpack.c.l.b16 %v3776
  %v3793 = vunpack.c.l.b16 %v3777
  %v3794 = vunpack.c.l.b16 %v3778
  %v3795 = vunpack.c.l.b16 %v3779
  %v3796 = vpack.c.b16 %v3789, %v3788
  %v3797 = vpack.c.b16 %v3791, %v3790
  %v3798 = vpack.c.b16 %v3793, %v3792
  %v3799 = vpack.c.b16 %v3795, %v3794
  %3808 = vrot.lane.b32.xlu0 %v3763, 127
  %v3809 = vpop.permute.xlu0 %3808
  %3810 = vrot.lane.b32.xlu0 %v3764, 127
  %v3811 = vpop.permute.xlu0 %3810
  %3812 = vrot.lane.b32.xlu0 %v3765, 127
  %v3813 = vpop.permute.xlu0 %3812
  %3814 = vrot.lane.b32.xlu0 %v3766, 127
  %v3815 = vpop.permute.xlu0 %3814
  %3816 = vrot.lane.b32.xlu0 %v3767, 127
  %v3817 = vpop.permute.xlu0 %3816
  %3818 = vrot.lane.b32.xlu0 %v3768, 127
  %v3819 = vpop.permute.xlu0 %3818
  %3820 = vrot.lane.b32.xlu0 %v3769, 127
  %v3821 = vpop.permute.xlu0 %3820
  %3822 = vrot.lane.b32.xlu0 %v3770, 127
  %v3823 = vpop.permute.xlu0 %3822
  %v3824 = vsel %vm1483, %v3809, %v3811
  %v3825 = vsel %vm1483, %v3813, %v3815
  %v3826 = vsel %vm1483, %v3817, %v3819
  %v3827 = vsel %vm1483, %v3821, %v3823
  %v3837 = vsel %vm1116, %v3796, 0
  %v3840 = vsel %vm1116, %v3797, 0
  %v3843 = vsel %vm1116, %v3798, 0
  %v3846 = vsel %vm1116, %v3799, 0
  %3848 = vmatprep.subr.bf16.mxu0 %v3811
  %3849 = vmatpush1.bf16.msra.mxu0 %v3824
  %3850 = vmatprep.subr.bf16.mxu0 %v3815
  %3851 = vmatpush1.bf16.msra.mxu0 %v3825
  %3852 = vmatprep.subr.bf16.mxu0 %v3819
  %3853 = vmatpush1.bf16.msra.mxu0 %v3826
  %3854 = vmatprep.subr.bf16.mxu0 %v3823
  %3855 = vmatpush1.bf16.msra.mxu0 %v3827
  %3856 = vmatprep.subr.bf16.mxu0 0
  %3857 = vmatpush1.bf16.msra.mxu0 0
  %3858 = vmatprep.subr.bf16.mxu0 0
  %3859 = vmatpush1.bf16.msra.mxu0 0
  %3860 = vmatprep.subr.bf16.mxu0 0
  %3861 = vmatpush1.bf16.msra.mxu0 0
  %3862 = vmatprep.subr.bf16.mxu0 0
  %3863 = vmatpush1.bf16.msra.mxu0 0
  %3864 = vmatprep.subr.bf16.mxu0 0
  %3865 = vmatpush1.bf16.msra.mxu0 0
  %3866 = vmatprep.subr.bf16.mxu0 0
  %3867 = vmatpush1.bf16.msra.mxu0 0
  %3868 = vmatprep.subr.bf16.mxu0 0
  %3869 = vmatpush1.bf16.msra.mxu0 0
  %3870 = vmatprep.subr.bf16.mxu0 0
  %3871 = vmatpush1.bf16.msra.mxu0 0
  %3872 = vmatprep.subr.bf16.mxu0 0
  %3873 = vmatpush1.bf16.msra.mxu0 0
  %3874 = vmatprep.subr.bf16.mxu0 0
  %3875 = vmatpush1.bf16.msra.mxu0 0
  %3876 = vmatprep.subr.bf16.mxu0 0
  %3877 = vmatpush1.bf16.msra.mxu0 0
  %3878 = vmatprep.subr.bf16.mxu0 0
  %3879 = vmatpush1.bf16.msra.mxu0 0
  %3880 = vmatprep.mubr.bf16.mxu0 0
  %3881 = vmatmul.mubr.bf16.gmra.mrb[0].mxu0 %v3837
  %v3882 = vpop.f32.mrb[0].mxu0
  %v3883 = vadd.f32 0.0, %v3882
  %v3884 = vpop.f32.mrb[0].mxu0
  %v3885 = vadd.f32 0.0, %v3884
  %v3886 = vpop.f32.mrb[0].mxu0
  %v3887 = vadd.f32 0.0, %v3886
  %v3888 = vpop.f32.mrb[0].mxu0
  %v3889 = vadd.f32 0.0, %v3888
  %3890 = vmatprep.mubr.bf16.mxu0 0
  %3891 = vmatmul.mubr.bf16.gmra.mrb[0].mxu0 %v3840
  %v3892 = vpop.f32.mrb[0].mxu0
  %v3893 = vadd.f32 0.0, %v3892
  %v3894 = vpop.f32.mrb[0].mxu0
  %v3895 = vadd.f32 0.0, %v3894
  %v3896 = vpop.f32.mrb[0].mxu0
  %v3897 = vadd.f32 0.0, %v3896
  %v3898 = vpop.f32.mrb[0].mxu0
  %v3899 = vadd.f32 0.0, %v3898
  %3900 = vmatprep.mubr.bf16.mxu0 0
  %3901 = vmatmul.mubr.bf16.gmra.mrb[0].mxu0 %v3843
  %v3902 = vpop.f32.mrb[0].mxu0
  %v3903 = vadd.f32 0.0, %v3902
  %v3904 = vpop.f32.mrb[0].mxu0
  %v3905 = vadd.f32 0.0, %v3904
  %v3906 = vpop.f32.mrb[0].mxu0
  %v3907 = vadd.f32 0.0, %v3906
  %v3908 = vpop.f32.mrb[0].mxu0
  %v3909 = vadd.f32 0.0, %v3908
  %3910 = vmatprep.mubr.bf16.mxu0 0
  %3911 = vmatmul.mubr.bf16.gmra.mrb[0].mxu0 %v3846
  %v3912 = vpop.f32.mrb[0].mxu0
  %v3913 = vadd.f32 0.0, %v3912
  %v3914 = vpop.f32.mrb[0].mxu0
  %v3915 = vadd.f32 0.0, %v3914
  %v3916 = vpop.f32.mrb[0].mxu0
  %v3917 = vadd.f32 0.0, %v3916
  %v3918 = vpop.f32.mrb[0].mxu0
  %v3919 = vadd.f32 0.0, %v3918
  %3920 = vdwg.mxu0
  %v3929 = vunpack.c.l.b16 %v3755
  %v3930 = vunpack.c.l.b16 %v3756
  %v3931 = vunpack.c.l.b16 %v3757
  %v3932 = vunpack.c.l.b16 %v3758
  %v3933 = vunpack.c.l.b16 %v3759
  %v3934 = vunpack.c.l.b16 %v3760
  %v3935 = vunpack.c.l.b16 %v3761
  %v3936 = vunpack.c.l.b16 %v3762
  %v3937 = vpack.c.b16 %v3930, %v3929
  %v3938 = vpack.c.b16 %v3932, %v3931
  %v3939 = vpack.c.b16 %v3934, %v3933
  %v3940 = vpack.c.b16 %v3936, %v3935
  %v3942 = vsel %vm1116, %v3937, 0
  %v3945 = vsel %vm1116, %v3938, 0
  %v3948 = vsel %vm1116, %v3939, 0
  %v3951 = vsel %vm1116, %v3940, 0
  %3953 = vmatprep.subr.bf16.mxu0 %v3764
  %3954 = vmatpush1.bf16.msra.mxu0 %v3763
  %3955 = vmatprep.subr.bf16.mxu0 %v3766
  %3956 = vmatpush1.bf16.msra.mxu0 %v3765
  %3957 = vmatprep.subr.bf16.mxu0 %v3768
  %3958 = vmatpush1.bf16.msra.mxu0 %v3767
  %3959 = vmatprep.subr.bf16.mxu0 %v3770
  %3960 = vmatpush1.bf16.msra.mxu0 %v3769
  %3961 = vmatprep.subr.bf16.mxu0 0
  %3962 = vmatpush1.bf16.msra.mxu0 0
  %3963 = vmatprep.subr.bf16.mxu0 0
  %3964 = vmatpush1.bf16.msra.mxu0 0
  %3965 = vmatprep.subr.bf16.mxu0 0
  %3966 = vmatpush1.bf16.msra.mxu0 0
  %3967 = vmatprep.subr.bf16.mxu0 0
  %3968 = vmatpush1.bf16.msra.mxu0 0
  %3969 = vmatprep.subr.bf16.mxu0 0
  %3970 = vmatpush1.bf16.msra.mxu0 0
  %3971 = vmatprep.subr.bf16.mxu0 0
  %3972 = vmatpush1.bf16.msra.mxu0 0
  %3973 = vmatprep.subr.bf16.mxu0 0
  %3974 = vmatpush1.bf16.msra.mxu0 0
  %3975 = vmatprep.subr.bf16.mxu0 0
  %3976 = vmatpush1.bf16.msra.mxu0 0
  %3977 = vmatprep.subr.bf16.mxu0 0
  %3978 = vmatpush1.bf16.msra.mxu0 0
  %3979 = vmatprep.subr.bf16.mxu0 0
  %3980 = vmatpush1.bf16.msra.mxu0 0
  %3981 = vmatprep.subr.bf16.mxu0 0
  %3982 = vmatpush1.bf16.msra.mxu0 0
  %3983 = vmatprep.subr.bf16.mxu0 0
  %3984 = vmatpush1.bf16.msra.mxu0 0
  %3985 = vmatprep.mubr.bf16.mxu0 0
  %3986 = vmatmul.mubr.bf16.gmra.mrb[0].mxu0 %v3942
  %v3987 = vpop.f32.mrb[0].mxu0
  %v3988 = vadd.f32 %v3883, %v3987
  %v3989 = vpop.f32.mrb[0].mxu0
  %v3990 = vadd.f32 %v3885, %v3989
  %v3991 = vpop.f32.mrb[0].mxu0
  %v3992 = vadd.f32 %v3887, %v3991
  %v3993 = vpop.f32.mrb[0].mxu0
  %v3994 = vadd.f32 %v3889, %v3993
  %3995 = vmatprep.mubr.bf16.mxu0 0
  %3996 = vmatmul.mubr.bf16.gmra.mrb[0].mxu0 %v3945
  %v3997 = vpop.f32.mrb[0].mxu0
  %v3998 = vadd.f32 %v3893, %v3997
  %v3999 = vpop.f32.mrb[0].mxu0
  %v4000 = vadd.f32 %v3895, %v3999
  %v4001 = vpop.f32.mrb[0].mxu0
  %v4002 = vadd.f32 %v3897, %v4001
  %v4003 = vpop.f32.mrb[0].mxu0
  %v4004 = vadd.f32 %v3899, %v4003
  %4005 = vmatprep.mubr.bf16.mxu0 0
  %4006 = vmatmul.mubr.bf16.gmra.mrb[0].mxu0 %v3948
  %v4007 = vpop.f32.mrb[0].mxu0
  %v4008 = vadd.f32 %v3903, %v4007
  %v4009 = vpop.f32.mrb[0].mxu0
  %v4010 = vadd.f32 %v3905, %v4009
  %v4011 = vpop.f32.mrb[0].mxu0
  %v4012 = vadd.f32 %v3907, %v4011
  %v4013 = vpop.f32.mrb[0].mxu0
  %v4014 = vadd.f32 %v3909, %v4013
  %4015 = vmatprep.mubr.bf16.mxu0 0
  %4016 = vmatmul.mubr.bf16.gmra.mrb[0].mxu0 %v3951
  %v4017 = vpop.f32.mrb[0].mxu0
  %v4018 = vadd.f32 %v3913, %v4017
  %v4019 = vpop.f32.mrb[0].mxu0
  %v4020 = vadd.f32 %v3915, %v4019
  %v4021 = vpop.f32.mrb[0].mxu0
  %v4022 = vadd.f32 %v3917, %v4021
  %v4023 = vpop.f32.mrb[0].mxu0
  %v4024 = vadd.f32 %v3919, %v4023
  %4025 = vdwg.mxu0
  %s4026 = scalar_lea.vmem %s7, 64
  %v4027 = vld [vmem:[%s4026] sm:$0xf]
  %v4028 = vld [vmem:[%s4026 + $0x4] sm:$0xf]
  %v4029 = vld [vmem:[%s4026 + $0x8] sm:$0xf]
  %v4030 = vld [vmem:[%s4026 + $0xc] sm:$0xf]
  %v4031 = vld [vmem:[%s4026 + $0x10] sm:$0xf]
  %v4032 = vld [vmem:[%s4026 + $0x14] sm:$0xf]
  %v4033 = vld [vmem:[%s4026 + $0x18] sm:$0xf]
  %v4034 = vld [vmem:[%s4026 + $0x1c] sm:$0xf]
  %v4043 = vunpack.c.l.b16 %v4027
  %v4044 = vunpack.c.l.b16 %v4028
  %v4045 = vunpack.c.l.b16 %v4029
  %v4046 = vunpack.c.l.b16 %v4030
  %v4047 = vunpack.c.l.b16 %v4031
  %v4048 = vunpack.c.l.b16 %v4032
  %v4049 = vunpack.c.l.b16 %v4033
  %v4050 = vunpack.c.l.b16 %v4034
  %v4051 = vpack.c.b16 %v4044, %v4043
  %v4052 = vpack.c.b16 %v4046, %v4045
  %v4053 = vpack.c.b16 %v4048, %v4047
  %v4054 = vpack.c.b16 %v4050, %v4049
  %4055 = vrot.lane.b32.xlu0 %v3763, 126
  %v4056 = vpop.permute.xlu0 %4055
  %4057 = vrot.lane.b32.xlu0 %v3764, 126
  %v4058 = vpop.permute.xlu0 %4057
  %4059 = vrot.lane.b32.xlu0 %v3765, 126
  %v4060 = vpop.permute.xlu0 %4059
  %4061 = vrot.lane.b32.xlu0 %v3766, 126
  %v4062 = vpop.permute.xlu0 %4061
  %4063 = vrot.lane.b32.xlu0 %v3767, 126
  %v4064 = vpop.permute.xlu0 %4063
  %4065 = vrot.lane.b32.xlu0 %v3768, 126
  %v4066 = vpop.permute.xlu0 %4065
  %4067 = vrot.lane.b32.xlu0 %v3769, 126
  %v4068 = vpop.permute.xlu0 %4067
  %4069 = vrot.lane.b32.xlu0 %v3770, 126
  %v4070 = vpop.permute.xlu0 %4069
  %v4071 = vsel %vm1717, %v4056, %v4058
  %v4072 = vsel %vm1717, %v4060, %v4062
  %v4073 = vsel %vm1717, %v4064, %v4066
  %v4074 = vsel %vm1717, %v4068, %v4070
  %v4084 = vsel %vm1116, %v4051, 0
  %v4087 = vsel %vm1116, %v4052, 0
  %v4090 = vsel %vm1116, %v4053, 0
  %v4093 = vsel %vm1116, %v4054, 0
  %4095 = vmatprep.subr.bf16.mxu0 %v4058
  %4096 = vmatpush1.bf16.msra.mxu0 %v4071
  %4097 = vmatprep.subr.bf16.mxu0 %v4062
  %4098 = vmatpush1.bf16.msra.mxu0 %v4072
  %4099 = vmatprep.subr.bf16.mxu0 %v4066
  %4100 = vmatpush1.bf16.msra.mxu0 %v4073
  %4101 = vmatprep.subr.bf16.mxu0 %v4070
  %4102 = vmatpush1.bf16.msra.mxu0 %v4074
  %4103 = vmatprep.subr.bf16.mxu0 0
  %4104 = vmatpush1.bf16.msra.mxu0 0
  %4105 = vmatprep.subr.bf16.mxu0 0
  %4106 = vmatpush1.bf16.msra.mxu0 0
  %4107 = vmatprep.subr.bf16.mxu0 0
  %4108 = vmatpush1.bf16.msra.mxu0 0
  %4109 = vmatprep.subr.bf16.mxu0 0
  %4110 = vmatpush1.bf16.msra.mxu0 0
  %4111 = vmatprep.subr.bf16.mxu0 0
  %4112 = vmatpush1.bf16.msra.mxu0 0
  %4113 = vmatprep.subr.bf16.mxu0 0
  %4114 = vmatpush1.bf16.msra.mxu0 0
  %4115 = vmatprep.subr.bf16.mxu0 0
  %4116 = vmatpush1.bf16.msra.mxu0 0
  %4117 = vmatprep.subr.bf16.mxu0 0
  %4118 = vmatpush1.bf16.msra.mxu0 0
  %4119 = vmatprep.subr.bf16.mxu0 0
  %4120 = vmatpush1.bf16.msra.mxu0 0
  %4121 = vmatprep.subr.bf16.mxu0 0
  %4122 = vmatpush1.bf16.msra.mxu0 0
  %4123 = vmatprep.subr.bf16.mxu0 0
  %4124 = vmatpush1.bf16.msra.mxu0 0
  %4125 = vmatprep.subr.bf16.mxu0 0
  %4126 = vmatpush1.bf16.msra.mxu0 0
  %4127 = vmatprep.mubr.bf16.mxu0 0
  %4128 = vmatmul.mubr.bf16.gmra.mrb[0].mxu0 %v4084
  %v4129 = vpop.f32.mrb[0].mxu0
  %v4130 = vadd.f32 0.0, %v4129
  %v4131 = vpop.f32.mrb[0].mxu0
  %v4132 = vadd.f32 0.0, %v4131
  %v4133 = vpop.f32.mrb[0].mxu0
  %v4134 = vadd.f32 0.0, %v4133
  %v4135 = vpop.f32.mrb[0].mxu0
  %v4136 = vadd.f32 0.0, %v4135
  %4137 = vmatprep.mubr.bf16.mxu0 0
  %4138 = vmatmul.mubr.bf16.gmra.mrb[0].mxu0 %v4087
  %v4139 = vpop.f32.mrb[0].mxu0
  %v4140 = vadd.f32 0.0, %v4139
  %v4141 = vpop.f32.mrb[0].mxu0
  %v4142 = vadd.f32 0.0, %v4141
  %v4143 = vpop.f32.mrb[0].mxu0
  %v4144 = vadd.f32 0.0, %v4143
  %v4145 = vpop.f32.mrb[0].mxu0
  %v4146 = vadd.f32 0.0, %v4145
  %4147 = vmatprep.mubr.bf16.mxu0 0
  %4148 = vmatmul.mubr.bf16.gmra.mrb[0].mxu0 %v4090
  %v4149 = vpop.f32.mrb[0].mxu0
  %v4150 = vadd.f32 0.0, %v4149
  %v4151 = vpop.f32.mrb[0].mxu0
  %v4152 = vadd.f32 0.0, %v4151
  %v4153 = vpop.f32.mrb[0].mxu0
  %v4154 = vadd.f32 0.0, %v4153
  %v4155 = vpop.f32.mrb[0].mxu0
  %v4156 = vadd.f32 0.0, %v4155
  %4157 = vmatprep.mubr.bf16.mxu0 0
  %4158 = vmatmul.mubr.bf16.gmra.mrb[0].mxu0 %v4093
  %v4159 = vpop.f32.mrb[0].mxu0
  %v4160 = vadd.f32 0.0, %v4159
  %v4161 = vpop.f32.mrb[0].mxu0
  %v4162 = vadd.f32 0.0, %v4161
  %v4163 = vpop.f32.mrb[0].mxu0
  %v4164 = vadd.f32 0.0, %v4163
  %v4165 = vpop.f32.mrb[0].mxu0
  %v4166 = vadd.f32 0.0, %v4165
  %4167 = vdwg.mxu0
  %v4168 = vadd.f32 %v3988, %v4130
  %v4169 = vadd.f32 %v3990, %v4132
  %v4170 = vadd.f32 %v3992, %v4134
  %v4171 = vadd.f32 %v3994, %v4136
  %v4172 = vadd.f32 %v3998, %v4140
  %v4173 = vadd.f32 %v4000, %v4142
  %v4174 = vadd.f32 %v4002, %v4144
  %v4175 = vadd.f32 %v4004, %v4146
  %v4176 = vadd.f32 %v4008, %v4150
  %v4177 = vadd.f32 %v4010, %v4152
  %v4178 = vadd.f32 %v4012, %v4154
  %v4179 = vadd.f32 %v4014, %v4156
  %v4180 = vadd.f32 %v4018, %v4160
  %v4181 = vadd.f32 %v4020, %v4162
  %v4182 = vadd.f32 %v4022, %v4164
  %v4183 = vadd.f32 %v4024, %v4166
  %s4184 = scalar_lea.vmem %s7, 96
  %v4185 = vld [vmem:[%s4184] sm:$0xf]
  %v4186 = vld [vmem:[%s4184 + $0x4] sm:$0xf]
  %v4187 = vld [vmem:[%s4184 + $0x8] sm:$0xf]
  %v4188 = vld [vmem:[%s4184 + $0xc] sm:$0xf]
  %v4189 = vld [vmem:[%s4184 + $0x10] sm:$0xf]
  %v4190 = vld [vmem:[%s4184 + $0x14] sm:$0xf]
  %v4191 = vld [vmem:[%s4184 + $0x18] sm:$0xf]
  %v4192 = vld [vmem:[%s4184 + $0x1c] sm:$0xf]
  %v4201 = vunpack.c.l.b16 %v4185
  %v4202 = vunpack.c.l.b16 %v4186
  %v4203 = vunpack.c.l.b16 %v4187
  %v4204 = vunpack.c.l.b16 %v4188
  %v4205 = vunpack.c.l.b16 %v4189
  %v4206 = vunpack.c.l.b16 %v4190
  %v4207 = vunpack.c.l.b16 %v4191
  %v4208 = vunpack.c.l.b16 %v4192
  %v4209 = vpack.c.b16 %v4202, %v4201
  %v4210 = vpack.c.b16 %v4204, %v4203
  %v4211 = vpack.c.b16 %v4206, %v4205
  %v4212 = vpack.c.b16 %v4208, %v4207
  %4213 = vrot.lane.b32.xlu0 %v3763, 125
  %v4214 = vpop.permute.xlu0 %4213
  %4215 = vrot.lane.b32.xlu0 %v3764, 125
  %v4216 = vpop.permute.xlu0 %4215
  %4217 = vrot.lane.b32.xlu0 %v3765, 125
  %v4218 = vpop.permute.xlu0 %4217
  %4219 = vrot.lane.b32.xlu0 %v3766, 125
  %v4220 = vpop.permute.xlu0 %4219
  %4221 = vrot.lane.b32.xlu0 %v3767, 125
  %v4222 = vpop.permute.xlu0 %4221
  %4223 = vrot.lane.b32.xlu0 %v3768, 125
  %v4224 = vpop.permute.xlu0 %4223
  %4225 = vrot.lane.b32.xlu0 %v3769, 125
  %v4226 = vpop.permute.xlu0 %4225
  %4227 = vrot.lane.b32.xlu0 %v3770, 125
  %v4228 = vpop.permute.xlu0 %4227
  %v4229 = vsel %vm1862, %v4214, %v4216
  %v4230 = vsel %vm1862, %v4218, %v4220
  %v4231 = vsel %vm1862, %v4222, %v4224
  %v4232 = vsel %vm1862, %v4226, %v4228
  %v4242 = vsel %vm1116, %v4209, 0
  %v4245 = vsel %vm1116, %v4210, 0
  %v4248 = vsel %vm1116, %v4211, 0
  %v4251 = vsel %vm1116, %v4212, 0
  %4253 = vmatprep.subr.bf16.mxu0 %v4216
  %4254 = vmatpush1.bf16.msra.mxu0 %v4229
  %4255 = vmatprep.subr.bf16.mxu0 %v4220
  %4256 = vmatpush1.bf16.msra.mxu0 %v4230
  %4257 = vmatprep.subr.bf16.mxu0 %v4224
  %4258 = vmatpush1.bf16.msra.mxu0 %v4231
  %4259 = vmatprep.subr.bf16.mxu0 %v4228
  %4260 = vmatpush1.bf16.msra.mxu0 %v4232
  %4261 = vmatprep.subr.bf16.mxu0 0
  %4262 = vmatpush1.bf16.msra.mxu0 0
  %4263 = vmatprep.subr.bf16.mxu0 0
  %4264 = vmatpush1.bf16.msra.mxu0 0
  %4265 = vmatprep.subr.bf16.mxu0 0
  %4266 = vmatpush1.bf16.msra.mxu0 0
  %4267 = vmatprep.subr.bf16.mxu0 0
  %4268 = vmatpush1.bf16.msra.mxu0 0
  %4269 = vmatprep.subr.bf16.mxu0 0
  %4270 = vmatpush1.bf16.msra.mxu0 0
  %4271 = vmatprep.subr.bf16.mxu0 0
  %4272 = vmatpush1.bf16.msra.mxu0 0
  %4273 = vmatprep.subr.bf16.mxu0 0
  %4274 = vmatpush1.bf16.msra.mxu0 0
  %4275 = vmatprep.subr.bf16.mxu0 0
  %4276 = vmatpush1.bf16.msra.mxu0 0
  %4277 = vmatprep.subr.bf16.mxu0 0
  %4278 = vmatpush1.bf16.msra.mxu0 0
  %4279 = vmatprep.subr.bf16.mxu0 0
  %4280 = vmatpush1.bf16.msra.mxu0 0
  %4281 = vmatprep.subr.bf16.mxu0 0
  %4282 = vmatpush1.bf16.msra.mxu0 0
  %4283 = vmatprep.subr.bf16.mxu0 0
  %4284 = vmatpush1.bf16.msra.mxu0 0
  %4285 = vmatprep.mubr.bf16.mxu0 0
  %4286 = vmatmul.mubr.bf16.gmra.mrb[0].mxu0 %v4242
  %v4287 = vpop.f32.mrb[0].mxu0
  %v4288 = vadd.f32 0.0, %v4287
  %v4289 = vpop.f32.mrb[0].mxu0
  %v4290 = vadd.f32 0.0, %v4289
  %v4291 = vpop.f32.mrb[0].mxu0
  %v4292 = vadd.f32 0.0, %v4291
  %v4293 = vpop.f32.mrb[0].mxu0
  %v4294 = vadd.f32 0.0, %v4293
  %4295 = vmatprep.mubr.bf16.mxu0 0
  %4296 = vmatmul.mubr.bf16.gmra.mrb[0].mxu0 %v4245
  %v4297 = vpop.f32.mrb[0].mxu0
  %v4298 = vadd.f32 0.0, %v4297
  %v4299 = vpop.f32.mrb[0].mxu0
  %v4300 = vadd.f32 0.0, %v4299
  %v4301 = vpop.f32.mrb[0].mxu0
  %v4302 = vadd.f32 0.0, %v4301
  %v4303 = vpop.f32.mrb[0].mxu0
  %v4304 = vadd.f32 0.0, %v4303
  %4305 = vmatprep.mubr.bf16.mxu0 0
  %4306 = vmatmul.mubr.bf16.gmra.mrb[0].mxu0 %v4248
  %v4307 = vpop.f32.mrb[0].mxu0
  %v4308 = vadd.f32 0.0, %v4307
  %v4309 = vpop.f32.mrb[0].mxu0
  %v4310 = vadd.f32 0.0, %v4309
  %v4311 = vpop.f32.mrb[0].mxu0
  %v4312 = vadd.f32 0.0, %v4311
  %v4313 = vpop.f32.mrb[0].mxu0
  %v4314 = vadd.f32 0.0, %v4313
  %4315 = vmatprep.mubr.bf16.mxu0 0
  %4316 = vmatmul.mubr.bf16.gmra.mrb[0].mxu0 %v4251
  %v4317 = vpop.f32.mrb[0].mxu0
  %v4318 = vadd.f32 0.0, %v4317
  %v4319 = vpop.f32.mrb[0].mxu0
  %v4320 = vadd.f32 0.0, %v4319
  %v4321 = vpop.f32.mrb[0].mxu0
  %v4322 = vadd.f32 0.0, %v4321
  %v4323 = vpop.f32.mrb[0].mxu0
  %v4324 = vadd.f32 0.0, %v4323
  %4325 = vdwg.mxu0
  %v4326 = vadd.f32 %v4168, %v4288
  %v4327 = vadd.f32 %v4169, %v4290
  %v4328 = vadd.f32 %v4170, %v4292
  %v4329 = vadd.f32 %v4171, %v4294
  %v4330 = vadd.f32 %v4172, %v4298
  %v4331 = vadd.f32 %v4173, %v4300
  %v4332 = vadd.f32 %v4174, %v4302
  %v4333 = vadd.f32 %v4175, %v4304
  %v4334 = vadd.f32 %v4176, %v4308
  %v4335 = vadd.f32 %v4177, %v4310
  %v4336 = vadd.f32 %v4178, %v4312
  %v4337 = vadd.f32 %v4179, %v4314
  %v4338 = vadd.f32 %v4180, %v4318
  %v4339 = vadd.f32 %v4181, %v4320
  %v4340 = vadd.f32 %v4182, %v4322
  %v4341 = vadd.f32 %v4183, %v4324
  %s4342 = scalar_lea.vmem %s7, 128
  %v4343 = vld [vmem:[%s4342] sm:$0xf]
  %v4344 = vld [vmem:[%s4342 + $0x4] sm:$0xf]
  %v4345 = vld [vmem:[%s4342 + $0x8] sm:$0xf]
  %v4346 = vld [vmem:[%s4342 + $0xc] sm:$0xf]
  %v4347 = vld [vmem:[%s4342 + $0x10] sm:$0xf]
  %v4348 = vld [vmem:[%s4342 + $0x14] sm:$0xf]
  %v4349 = vld [vmem:[%s4342 + $0x18] sm:$0xf]
  %v4350 = vld [vmem:[%s4342 + $0x1c] sm:$0xf]
  %v4359 = vunpack.c.l.b16 %v4343
  %v4360 = vunpack.c.l.b16 %v4344
  %v4361 = vunpack.c.l.b16 %v4345
  %v4362 = vunpack.c.l.b16 %v4346
  %v4363 = vunpack.c.l.b16 %v4347
  %v4364 = vunpack.c.l.b16 %v4348
  %v4365 = vunpack.c.l.b16 %v4349
  %v4366 = vunpack.c.l.b16 %v4350
  %v4367 = vpack.c.b16 %v4360, %v4359
  %v4368 = vpack.c.b16 %v4362, %v4361
  %v4369 = vpack.c.b16 %v4364, %v4363
  %v4370 = vpack.c.b16 %v4366, %v4365
  %4371 = vrot.lane.b32.xlu0 %v3763, 124
  %v4372 = vpop.permute.xlu0 %4371
  %4373 = vrot.lane.b32.xlu0 %v3764, 124
  %v4374 = vpop.permute.xlu0 %4373
  %4375 = vrot.lane.b32.xlu0 %v3765, 124
  %v4376 = vpop.permute.xlu0 %4375
  %4377 = vrot.lane.b32.xlu0 %v3766, 124
  %v4378 = vpop.permute.xlu0 %4377
  %4379 = vrot.lane.b32.xlu0 %v3767, 124
  %v4380 = vpop.permute.xlu0 %4379
  %4381 = vrot.lane.b32.xlu0 %v3768, 124
  %v4382 = vpop.permute.xlu0 %4381
  %4383 = vrot.lane.b32.xlu0 %v3769, 124
  %v4384 = vpop.permute.xlu0 %4383
  %4385 = vrot.lane.b32.xlu0 %v3770, 124
  %v4386 = vpop.permute.xlu0 %4385
  %v4387 = vsel %vm2007, %v4372, %v4374
  %v4388 = vsel %vm2007, %v4376, %v4378
  %v4389 = vsel %vm2007, %v4380, %v4382
  %v4390 = vsel %vm2007, %v4384, %v4386
  %v4400 = vsel %vm1116, %v4367, 0
  %v4403 = vsel %vm1116, %v4368, 0
  %v4406 = vsel %vm1116, %v4369, 0
  %v4409 = vsel %vm1116, %v4370, 0
  %4411 = vmatprep.subr.bf16.mxu0 %v4374
  %4412 = vmatpush1.bf16.msra.mxu0 %v4387
  %4413 = vmatprep.subr.bf16.mxu0 %v4378
  %4414 = vmatpush1.bf16.msra.mxu0 %v4388
  %4415 = vmatprep.subr.bf16.mxu0 %v4382
  %4416 = vmatpush1.bf16.msra.mxu0 %v4389
  %4417 = vmatprep.subr.bf16.mxu0 %v4386
  %4418 = vmatpush1.bf16.msra.mxu0 %v4390
  %4419 = vmatprep.subr.bf16.mxu0 0
  %4420 = vmatpush1.bf16.msra.mxu0 0
  %4421 = vmatprep.subr.bf16.mxu0 0
  %4422 = vmatpush1.bf16.msra.mxu0 0
  %4423 = vmatprep.subr.bf16.mxu0 0
  %4424 = vmatpush1.bf16.msra.mxu0 0
  %4425 = vmatprep.subr.bf16.mxu0 0
  %4426 = vmatpush1.bf16.msra.mxu0 0
  %4427 = vmatprep.subr.bf16.mxu0 0
  %4428 = vmatpush1.bf16.msra.mxu0 0
  %4429 = vmatprep.subr.bf16.mxu0 0
  %4430 = vmatpush1.bf16.msra.mxu0 0
  %4431 = vmatprep.subr.bf16.mxu0 0
  %4432 = vmatpush1.bf16.msra.mxu0 0
  %4433 = vmatprep.subr.bf16.mxu0 0
  %4434 = vmatpush1.bf16.msra.mxu0 0
  %4435 = vmatprep.subr.bf16.mxu0 0
  %4436 = vmatpush1.bf16.msra.mxu0 0
  %4437 = vmatprep.subr.bf16.mxu0 0
  %4438 = vmatpush1.bf16.msra.mxu0 0
  %4439 = vmatprep.subr.bf16.mxu0 0
  %4440 = vmatpush1.bf16.msra.mxu0 0
  %4441 = vmatprep.subr.bf16.mxu0 0
  %4442 = vmatpush1.bf16.msra.mxu0 0
  %4443 = vmatprep.mubr.bf16.mxu0 0
  %4444 = vmatmul.mubr.bf16.gmra.mrb[0].mxu0 %v4400
  %v4445 = vpop.f32.mrb[0].mxu0
  %v4446 = vadd.f32 0.0, %v4445
  %v4447 = vpop.f32.mrb[0].mxu0
  %v4448 = vadd.f32 0.0, %v4447
  %v4449 = vpop.f32.mrb[0].mxu0
  %v4450 = vadd.f32 0.0, %v4449
  %v4451 = vpop.f32.mrb[0].mxu0
  %v4452 = vadd.f32 0.0, %v4451
  %4453 = vmatprep.mubr.bf16.mxu0 0
  %4454 = vmatmul.mubr.bf16.gmra.mrb[0].mxu0 %v4403
  %v4455 = vpop.f32.mrb[0].mxu0
  %v4456 = vadd.f32 0.0, %v4455
  %v4457 = vpop.f32.mrb[0].mxu0
  %v4458 = vadd.f32 0.0, %v4457
  %v4459 = vpop.f32.mrb[0].mxu0
  %v4460 = vadd.f32 0.0, %v4459
  %v4461 = vpop.f32.mrb[0].mxu0
  %v4462 = vadd.f32 0.0, %v4461
  %4463 = vmatprep.mubr.bf16.mxu0 0
  %4464 = vmatmul.mubr.bf16.gmra.mrb[0].mxu0 %v4406
  %v4465 = vpop.f32.mrb[0].mxu0
  %v4466 = vadd.f32 0.0, %v4465
  %v4467 = vpop.f32.mrb[0].mxu0
  %v4468 = vadd.f32 0.0, %v4467
  %v4469 = vpop.f32.mrb[0].mxu0
  %v4470 = vadd.f32 0.0, %v4469
  %v4471 = vpop.f32.mrb[0].mxu0
  %v4472 = vadd.f32 0.0, %v4471
  %4473 = vmatprep.mubr.bf16.mxu0 0
  %4474 = vmatmul.mubr.bf16.gmra.mrb[0].mxu0 %v4409
  %v4475 = vpop.f32.mrb[0].mxu0
  %v4476 = vadd.f32 0.0, %v4475
  %v4477 = vpop.f32.mrb[0].mxu0
  %v4478 = vadd.f32 0.0, %v4477
  %v4479 = vpop.f32.mrb[0].mxu0
  %v4480 = vadd.f32 0.0, %v4479
  %v4481 = vpop.f32.mrb[0].mxu0
  %v4482 = vadd.f32 0.0, %v4481
  %4483 = vdwg.mxu0
  %v4484 = vadd.f32 %v4326, %v4446
  %v4485 = vadd.f32 %v4327, %v4448
  %v4486 = vadd.f32 %v4328, %v4450
  %v4487 = vadd.f32 %v4329, %v4452
  %v4488 = vadd.f32 %v4330, %v4456
  %v4489 = vadd.f32 %v4331, %v4458
  %v4490 = vadd.f32 %v4332, %v4460
  %v4491 = vadd.f32 %v4333, %v4462
  %v4492 = vadd.f32 %v4334, %v4466
  %v4493 = vadd.f32 %v4335, %v4468
  %v4494 = vadd.f32 %v4336, %v4470
  %v4495 = vadd.f32 %v4337, %v4472
  %v4496 = vadd.f32 %v4338, %v4476
  %v4497 = vadd.f32 %v4339, %v4478
  %v4498 = vadd.f32 %v4340, %v4480
  %v4499 = vadd.f32 %v4341, %v4482
  %s4500 = scalar_lea.vmem %s7, 160
  %v4501 = vld [vmem:[%s4500] sm:$0xf]
  %v4502 = vld [vmem:[%s4500 + $0x4] sm:$0xf]
  %v4503 = vld [vmem:[%s4500 + $0x8] sm:$0xf]
  %v4504 = vld [vmem:[%s4500 + $0xc] sm:$0xf]
  %v4505 = vld [vmem:[%s4500 + $0x10] sm:$0xf]
  %v4506 = vld [vmem:[%s4500 + $0x14] sm:$0xf]
  %v4507 = vld [vmem:[%s4500 + $0x18] sm:$0xf]
  %v4508 = vld [vmem:[%s4500 + $0x1c] sm:$0xf]
  %v4517 = vunpack.c.l.b16 %v4501
  %v4518 = vunpack.c.l.b16 %v4502
  %v4519 = vunpack.c.l.b16 %v4503
  %v4520 = vunpack.c.l.b16 %v4504
  %v4521 = vunpack.c.l.b16 %v4505
  %v4522 = vunpack.c.l.b16 %v4506
  %v4523 = vunpack.c.l.b16 %v4507
  %v4524 = vunpack.c.l.b16 %v4508
  %v4525 = vpack.c.b16 %v4518, %v4517
  %v4526 = vpack.c.b16 %v4520, %v4519
  %v4527 = vpack.c.b16 %v4522, %v4521
  %v4528 = vpack.c.b16 %v4524, %v4523
  %4529 = vrot.lane.b32.xlu0 %v3763, 123
  %v4530 = vpop.permute.xlu0 %4529
  %4531 = vrot.lane.b32.xlu0 %v3764, 123
  %v4532 = vpop.permute.xlu0 %4531
  %4533 = vrot.lane.b32.xlu0 %v3765, 123
  %v4534 = vpop.permute.xlu0 %4533
  %4535 = vrot.lane.b32.xlu0 %v3766, 123
  %v4536 = vpop.permute.xlu0 %4535
  %4537 = vrot.lane.b32.xlu0 %v3767, 123
  %v4538 = vpop.permute.xlu0 %4537
  %4539 = vrot.lane.b32.xlu0 %v3768, 123
  %v4540 = vpop.permute.xlu0 %4539
  %4541 = vrot.lane.b32.xlu0 %v3769, 123
  %v4542 = vpop.permute.xlu0 %4541
  %4543 = vrot.lane.b32.xlu0 %v3770, 123
  %v4544 = vpop.permute.xlu0 %4543
  %v4545 = vsel %vm2152, %v4530, %v4532
  %v4546 = vsel %vm2152, %v4534, %v4536
  %v4547 = vsel %vm2152, %v4538, %v4540
  %v4548 = vsel %vm2152, %v4542, %v4544
  %v4558 = vsel %vm1116, %v4525, 0
  %v4561 = vsel %vm1116, %v4526, 0
  %v4564 = vsel %vm1116, %v4527, 0
  %v4567 = vsel %vm1116, %v4528, 0
  %4569 = vmatprep.subr.bf16.mxu0 %v4532
  %4570 = vmatpush1.bf16.msra.mxu0 %v4545
  %4571 = vmatprep.subr.bf16.mxu0 %v4536
  %4572 = vmatpush1.bf16.msra.mxu0 %v4546
  %4573 = vmatprep.subr.bf16.mxu0 %v4540
  %4574 = vmatpush1.bf16.msra.mxu0 %v4547
  %4575 = vmatprep.subr.bf16.mxu0 %v4544
  %4576 = vmatpush1.bf16.msra.mxu0 %v4548
  %4577 = vmatprep.subr.bf16.mxu0 0
  %4578 = vmatpush1.bf16.msra.mxu0 0
  %4579 = vmatprep.subr.bf16.mxu0 0
  %4580 = vmatpush1.bf16.msra.mxu0 0
  %4581 = vmatprep.subr.bf16.mxu0 0
  %4582 = vmatpush1.bf16.msra.mxu0 0
  %4583 = vmatprep.subr.bf16.mxu0 0
  %4584 = vmatpush1.bf16.msra.mxu0 0
  %4585 = vmatprep.subr.bf16.mxu0 0
  %4586 = vmatpush1.bf16.msra.mxu0 0
  %4587 = vmatprep.subr.bf16.mxu0 0
  %4588 = vmatpush1.bf16.msra.mxu0 0
  %4589 = vmatprep.subr.bf16.mxu0 0
  %4590 = vmatpush1.bf16.msra.mxu0 0
  %4591 = vmatprep.subr.bf16.mxu0 0
  %4592 = vmatpush1.bf16.msra.mxu0 0
  %4593 = vmatprep.subr.bf16.mxu0 0
  %4594 = vmatpush1.bf16.msra.mxu0 0
  %4595 = vmatprep.subr.bf16.mxu0 0
  %4596 = vmatpush1.bf16.msra.mxu0 0
  %4597 = vmatprep.subr.bf16.mxu0 0
  %4598 = vmatpush1.bf16.msra.mxu0 0
  %4599 = vmatprep.subr.bf16.mxu0 0
  %4600 = vmatpush1.bf16.msra.mxu0 0
  %4601 = vmatprep.mubr.bf16.mxu0 0
  %4602 = vmatmul.mubr.bf16.gmra.mrb[0].mxu0 %v4558
  %v4603 = vpop.f32.mrb[0].mxu0
  %v4604 = vadd.f32 0.0, %v4603
  %v4605 = vpop.f32.mrb[0].mxu0
  %v4606 = vadd.f32 0.0, %v4605
  %v4607 = vpop.f32.mrb[0].mxu0
  %v4608 = vadd.f32 0.0, %v4607
  %v4609 = vpop.f32.mrb[0].mxu0
  %v4610 = vadd.f32 0.0, %v4609
  %4611 = vmatprep.mubr.bf16.mxu0 0
  %4612 = vmatmul.mubr.bf16.gmra.mrb[0].mxu0 %v4561
  %v4613 = vpop.f32.mrb[0].mxu0
  %v4614 = vadd.f32 0.0, %v4613
  %v4615 = vpop.f32.mrb[0].mxu0
  %v4616 = vadd.f32 0.0, %v4615
  %v4617 = vpop.f32.mrb[0].mxu0
  %v4618 = vadd.f32 0.0, %v4617
  %v4619 = vpop.f32.mrb[0].mxu0
  %v4620 = vadd.f32 0.0, %v4619
  %4621 = vmatprep.mubr.bf16.mxu0 0
  %4622 = vmatmul.mubr.bf16.gmra.mrb[0].mxu0 %v4564
  %v4623 = vpop.f32.mrb[0].mxu0
  %v4624 = vadd.f32 0.0, %v4623
  %v4625 = vpop.f32.mrb[0].mxu0
  %v4626 = vadd.f32 0.0, %v4625
  %v4627 = vpop.f32.mrb[0].mxu0
  %v4628 = vadd.f32 0.0, %v4627
  %v4629 = vpop.f32.mrb[0].mxu0
  %v4630 = vadd.f32 0.0, %v4629
  %4631 = vmatprep.mubr.bf16.mxu0 0
  %4632 = vmatmul.mubr.bf16.gmra.mrb[0].mxu0 %v4567
  %v4633 = vpop.f32.mrb[0].mxu0
  %v4634 = vadd.f32 0.0, %v4633
  %v4635 = vpop.f32.mrb[0].mxu0
  %v4636 = vadd.f32 0.0, %v4635
  %v4637 = vpop.f32.mrb[0].mxu0
  %v4638 = vadd.f32 0.0, %v4637
  %v4639 = vpop.f32.mrb[0].mxu0
  %v4640 = vadd.f32 0.0, %v4639
  %4641 = vdwg.mxu0
  %v4642 = vadd.f32 %v4484, %v4604
  %v4643 = vadd.f32 %v4485, %v4606
  %v4644 = vadd.f32 %v4486, %v4608
  %v4645 = vadd.f32 %v4487, %v4610
  %v4646 = vadd.f32 %v4488, %v4614
  %v4647 = vadd.f32 %v4489, %v4616
  %v4648 = vadd.f32 %v4490, %v4618
  %v4649 = vadd.f32 %v4491, %v4620
  %v4650 = vadd.f32 %v4492, %v4624
  %v4651 = vadd.f32 %v4493, %v4626
  %v4652 = vadd.f32 %v4494, %v4628
  %v4653 = vadd.f32 %v4495, %v4630
  %v4654 = vadd.f32 %v4496, %v4634
  %v4655 = vadd.f32 %v4497, %v4636
  %v4656 = vadd.f32 %v4498, %v4638
  %v4657 = vadd.f32 %v4499, %v4640
  %s4658 = scalar_lea.vmem %s7, 192
  %v4659 = vld [vmem:[%s4658] sm:$0xf]
  %v4660 = vld [vmem:[%s4658 + $0x4] sm:$0xf]
  %v4661 = vld [vmem:[%s4658 + $0x8] sm:$0xf]
  %v4662 = vld [vmem:[%s4658 + $0xc] sm:$0xf]
  %v4663 = vld [vmem:[%s4658 + $0x10] sm:$0xf]
  %v4664 = vld [vmem:[%s4658 + $0x14] sm:$0xf]
  %v4665 = vld [vmem:[%s4658 + $0x18] sm:$0xf]
  %v4666 = vld [vmem:[%s4658 + $0x1c] sm:$0xf]
  %v4675 = vunpack.c.l.b16 %v4659
  %v4676 = vunpack.c.l.b16 %v4660
  %v4677 = vunpack.c.l.b16 %v4661
  %v4678 = vunpack.c.l.b16 %v4662
  %v4679 = vunpack.c.l.b16 %v4663
  %v4680 = vunpack.c.l.b16 %v4664
  %v4681 = vunpack.c.l.b16 %v4665
  %v4682 = vunpack.c.l.b16 %v4666
  %v4683 = vpack.c.b16 %v4676, %v4675
  %v4684 = vpack.c.b16 %v4678, %v4677
  %v4685 = vpack.c.b16 %v4680, %v4679
  %v4686 = vpack.c.b16 %v4682, %v4681
  %4687 = vrot.lane.b32.xlu0 %v3763, 122
  %v4688 = vpop.permute.xlu0 %4687
  %4689 = vrot.lane.b32.xlu0 %v3764, 122
  %v4690 = vpop.permute.xlu0 %4689
  %4691 = vrot.lane.b32.xlu0 %v3765, 122
  %v4692 = vpop.permute.xlu0 %4691
  %4693 = vrot.lane.b32.xlu0 %v3766, 122
  %v4694 = vpop.permute.xlu0 %4693
  %4695 = vrot.lane.b32.xlu0 %v3767, 122
  %v4696 = vpop.permute.xlu0 %4695
  %4697 = vrot.lane.b32.xlu0 %v3768, 122
  %v4698 = vpop.permute.xlu0 %4697
  %4699 = vrot.lane.b32.xlu0 %v3769, 122
  %v4700 = vpop.permute.xlu0 %4699
  %4701 = vrot.lane.b32.xlu0 %v3770, 122
  %v4702 = vpop.permute.xlu0 %4701
  %v4703 = vsel %vm2297, %v4688, %v4690
  %v4704 = vsel %vm2297, %v4692, %v4694
  %v4705 = vsel %vm2297, %v4696, %v4698
  %v4706 = vsel %vm2297, %v4700, %v4702
  %v4716 = vsel %vm1116, %v4683, 0
  %v4719 = vsel %vm1116, %v4684, 0
  %v4722 = vsel %vm1116, %v4685, 0
  %v4725 = vsel %vm1116, %v4686, 0
  %4727 = vmatprep.subr.bf16.mxu0 %v4690
  %4728 = vmatpush1.bf16.msra.mxu0 %v4703
  %4729 = vmatprep.subr.bf16.mxu0 %v4694
  %4730 = vmatpush1.bf16.msra.mxu0 %v4704
  %4731 = vmatprep.subr.bf16.mxu0 %v4698
  %4732 = vmatpush1.bf16.msra.mxu0 %v4705
  %4733 = vmatprep.subr.bf16.mxu0 %v4702
  %4734 = vmatpush1.bf16.msra.mxu0 %v4706
  %4735 = vmatprep.subr.bf16.mxu0 0
  %4736 = vmatpush1.bf16.msra.mxu0 0
  %4737 = vmatprep.subr.bf16.mxu0 0
  %4738 = vmatpush1.bf16.msra.mxu0 0
  %4739 = vmatprep.subr.bf16.mxu0 0
  %4740 = vmatpush1.bf16.msra.mxu0 0
  %4741 = vmatprep.subr.bf16.mxu0 0
  %4742 = vmatpush1.bf16.msra.mxu0 0
  %4743 = vmatprep.subr.bf16.mxu0 0
  %4744 = vmatpush1.bf16.msra.mxu0 0
  %4745 = vmatprep.subr.bf16.mxu0 0
  %4746 = vmatpush1.bf16.msra.mxu0 0
  %4747 = vmatprep.subr.bf16.mxu0 0
  %4748 = vmatpush1.bf16.msra.mxu0 0
  %4749 = vmatprep.subr.bf16.mxu0 0
  %4750 = vmatpush1.bf16.msra.mxu0 0
  %4751 = vmatprep.subr.bf16.mxu0 0
  %4752 = vmatpush1.bf16.msra.mxu0 0
  %4753 = vmatprep.subr.bf16.mxu0 0
  %4754 = vmatpush1.bf16.msra.mxu0 0
  %4755 = vmatprep.subr.bf16.mxu0 0
  %4756 = vmatpush1.bf16.msra.mxu0 0
  %4757 = vmatprep.subr.bf16.mxu0 0
  %4758 = vmatpush1.bf16.msra.mxu0 0
  %4759 = vmatprep.mubr.bf16.mxu0 0
  %4760 = vmatmul.mubr.bf16.gmra.mrb[0].mxu0 %v4716
  %v4761 = vpop.f32.mrb[0].mxu0
  %v4762 = vadd.f32 0.0, %v4761
  %v4763 = vpop.f32.mrb[0].mxu0
  %v4764 = vadd.f32 0.0, %v4763
  %v4765 = vpop.f32.mrb[0].mxu0
  %v4766 = vadd.f32 0.0, %v4765
  %v4767 = vpop.f32.mrb[0].mxu0
  %v4768 = vadd.f32 0.0, %v4767
  %4769 = vmatprep.mubr.bf16.mxu0 0
  %4770 = vmatmul.mubr.bf16.gmra.mrb[0].mxu0 %v4719
  %v4771 = vpop.f32.mrb[0].mxu0
  %v4772 = vadd.f32 0.0, %v4771
  %v4773 = vpop.f32.mrb[0].mxu0
  %v4774 = vadd.f32 0.0, %v4773
  %v4775 = vpop.f32.mrb[0].mxu0
  %v4776 = vadd.f32 0.0, %v4775
  %v4777 = vpop.f32.mrb[0].mxu0
  %v4778 = vadd.f32 0.0, %v4777
  %4779 = vmatprep.mubr.bf16.mxu0 0
  %4780 = vmatmul.mubr.bf16.gmra.mrb[0].mxu0 %v4722
  %v4781 = vpop.f32.mrb[0].mxu0
  %v4782 = vadd.f32 0.0, %v4781
  %v4783 = vpop.f32.mrb[0].mxu0
  %v4784 = vadd.f32 0.0, %v4783
  %v4785 = vpop.f32.mrb[0].mxu0
  %v4786 = vadd.f32 0.0, %v4785
  %v4787 = vpop.f32.mrb[0].mxu0
  %v4788 = vadd.f32 0.0, %v4787
  %4789 = vmatprep.mubr.bf16.mxu0 0
  %4790 = vmatmul.mubr.bf16.gmra.mrb[0].mxu0 %v4725
  %v4791 = vpop.f32.mrb[0].mxu0
  %v4792 = vadd.f32 0.0, %v4791
  %v4793 = vpop.f32.mrb[0].mxu0
  %v4794 = vadd.f32 0.0, %v4793
  %v4795 = vpop.f32.mrb[0].mxu0
  %v4796 = vadd.f32 0.0, %v4795
  %v4797 = vpop.f32.mrb[0].mxu0
  %v4798 = vadd.f32 0.0, %v4797
  %4799 = vdwg.mxu0
  %v4800 = vadd.f32 %v4642, %v4762
  %v4801 = vadd.f32 %v4643, %v4764
  %v4802 = vadd.f32 %v4644, %v4766
  %v4803 = vadd.f32 %v4645, %v4768
  %v4804 = vadd.f32 %v4646, %v4772
  %v4805 = vadd.f32 %v4647, %v4774
  %v4806 = vadd.f32 %v4648, %v4776
  %v4807 = vadd.f32 %v4649, %v4778
  %v4808 = vadd.f32 %v4650, %v4782
  %v4809 = vadd.f32 %v4651, %v4784
  %v4810 = vadd.f32 %v4652, %v4786
  %v4811 = vadd.f32 %v4653, %v4788
  %v4812 = vadd.f32 %v4654, %v4792
  %v4813 = vadd.f32 %v4655, %v4794
  %v4814 = vadd.f32 %v4656, %v4796
  %v4815 = vadd.f32 %v4657, %v4798
  %v4816 = vld [vmem:[%s8] sm:$0xff]
  %v4817 = vld [vmem:[%s8 + $0x8] sm:$0xff]
  %v4818 = vld [vmem:[%s8 + $0x10] sm:$0xff]
  %v4819 = vld [vmem:[%s8 + $0x18] sm:$0xff]
  %v4820 = vld [vmem:[%s8 + $0x20] sm:$0xff]
  %v4821 = vld [vmem:[%s8 + $0x28] sm:$0xff]
  %v4822 = vld [vmem:[%s8 + $0x30] sm:$0xff]
  %v4823 = vld [vmem:[%s8 + $0x38] sm:$0xff]
  %4825 = vset.pattern.permute.xlu0 0
  %4826 = vperm.xlu0 %4825, %v4816
  %v4827 = vpop.permute.xlu0 %4826
  %4830 = vset.pattern.permute.xlu0 0
  %4831 = vperm.xlu0 %4830, %v4817
  %v4832 = vpop.permute.xlu0 %4831
  %4835 = vset.pattern.permute.xlu0 0
  %4836 = vperm.xlu0 %4835, %v4818
  %v4837 = vpop.permute.xlu0 %4836
  %4840 = vset.pattern.permute.xlu0 0
  %4841 = vperm.xlu0 %4840, %v4819
  %v4842 = vpop.permute.xlu0 %4841
  %4845 = vset.pattern.permute.xlu0 0
  %4846 = vperm.xlu0 %4845, %v4820
  %v4847 = vpop.permute.xlu0 %4846
  %4850 = vset.pattern.permute.xlu0 0
  %4851 = vperm.xlu0 %4850, %v4821
  %v4852 = vpop.permute.xlu0 %4851
  %4855 = vset.pattern.permute.xlu0 0
  %4856 = vperm.xlu0 %4855, %v4822
  %v4857 = vpop.permute.xlu0 %4856
  %4860 = vset.pattern.permute.xlu0 0
  %4861 = vperm.xlu0 %4860, %v4823
  %v4862 = vpop.permute.xlu0 %4861
  %v4864 = vadd.f32 %v4800, %v4827
  %v4865 = vadd.f32 %v4801, %v4827
  %v4866 = vadd.f32 %v4802, %v4832
  %v4867 = vadd.f32 %v4803, %v4832
  %v4868 = vadd.f32 %v4804, %v4837
  %v4869 = vadd.f32 %v4805, %v4837
  %v4870 = vadd.f32 %v4806, %v4842
  %v4871 = vadd.f32 %v4807, %v4842
  %v4872 = vadd.f32 %v4808, %v4847
  %v4873 = vadd.f32 %v4809, %v4847
  %v4874 = vadd.f32 %v4810, %v4852
  %v4875 = vadd.f32 %v4811, %v4852
  %v4876 = vadd.f32 %v4812, %v4857
  %v4877 = vadd.f32 %v4813, %v4857
  %v4878 = vadd.f32 %v4814, %v4862
  %v4879 = vadd.f32 %v4815, %v4862
  %v4880 = vmax.f32 %v4864, 0.0
  %v4881 = vmax.f32 %v4865, 0.0
  %v4882 = vmax.f32 %v4866, 0.0
  %v4883 = vmax.f32 %v4867, 0.0
  %v4884 = vmax.f32 %v4868, 0.0
  %v4885 = vmax.f32 %v4869, 0.0
  %v4886 = vmax.f32 %v4870, 0.0
  %v4887 = vmax.f32 %v4871, 0.0
  %v4888 = vmax.f32 %v4872, 0.0
  %v4889 = vmax.f32 %v4873, 0.0
  %v4890 = vmax.f32 %v4874, 0.0
  %v4891 = vmax.f32 %v4875, 0.0
  %v4892 = vmax.f32 %v4876, 0.0
  %v4893 = vmax.f32 %v4877, 0.0
  %v4894 = vmax.f32 %v4878, 0.0
  %v4895 = vmax.f32 %v4879, 0.0
  %v4896 = vsel %vm885, %v4880, -inf
  %4897 = vmax.xlane.f32.xlu0 %v4896
  %v4898 = vpop.xlane.xlu0 %4897
  %v4899 = vsel %vm885, %v4882, -inf
  %4900 = vmax.xlane.f32.xlu0 %v4899
  %v4901 = vpop.xlane.xlu0 %4900
  %v4902 = vsel %vm885, %v4884, -inf
  %4903 = vmax.xlane.f32.xlu0 %v4902
  %v4904 = vpop.xlane.xlu0 %4903
  %v4905 = vsel %vm885, %v4886, -inf
  %4906 = vmax.xlane.f32.xlu0 %v4905
  %v4907 = vpop.xlane.xlu0 %4906
  %v4908 = vsel %vm885, %v4888, -inf
  %4909 = vmax.xlane.f32.xlu0 %v4908
  %v4910 = vpop.xlane.xlu0 %4909
  %v4911 = vsel %vm885, %v4890, -inf
  %4912 = vmax.xlane.f32.xlu0 %v4911
  %v4913 = vpop.xlane.xlu0 %4912
  %v4914 = vsel %vm885, %v4892, -inf
  %4915 = vmax.xlane.f32.xlu0 %v4914
  %v4916 = vpop.xlane.xlu0 %4915
  %v4917 = vsel %vm885, %v4894, -inf
  %4918 = vmax.xlane.f32.xlu0 %v4917
  %v4919 = vpop.xlane.xlu0 %4918
  %vm4920 = vcmask 7168
  %4921 = vst.msk [vmem:[%s9] sm:$0xff] %vm4920, %v4898
  %4922 = vst.msk [vmem:[%s9 + $0x8] sm:$0xff] %vm4920, %v4901
  %4923 = vst.msk [vmem:[%s9 + $0x10] sm:$0xff] %vm4920, %v4904
  %4924 = vst.msk [vmem:[%s9 + $0x18] sm:$0xff] %vm4920, %v4907
  %4925 = vst.msk [vmem:[%s9 + $0x20] sm:$0xff] %vm4920, %v4910
  %4926 = vst.msk [vmem:[%s9 + $0x28] sm:$0xff] %vm4920, %v4913
  %4927 = vst.msk [vmem:[%s9 + $0x30] sm:$0xff] %vm4920, %v4916
  %4928 = vst.msk [vmem:[%s9 + $0x38] sm:$0xff] %vm4920, %v4919
  %vm4929 = vcmask 130112
  %v4930 = vsel %vm4929, %v4880, -inf
  %4931 = vmax.xlane.f32.xlu0 %v4930
  %v4932 = vpop.xlane.xlu0 %4931
  %v4933 = vsel %vm4929, %v4882, -inf
  %4934 = vmax.xlane.f32.xlu0 %v4933
  %v4935 = vpop.xlane.xlu0 %4934
  %v4936 = vsel %vm4929, %v4884, -inf
  %4937 = vmax.xlane.f32.xlu0 %v4936
  %v4938 = vpop.xlane.xlu0 %4937
  %v4939 = vsel %vm4929, %v4886, -inf
  %4940 = vmax.xlane.f32.xlu0 %v4939
  %v4941 = vpop.xlane.xlu0 %4940
  %v4942 = vsel %vm4929, %v4888, -inf
  %4943 = vmax.xlane.f32.xlu0 %v4942
  %v4944 = vpop.xlane.xlu0 %4943
  %v4945 = vsel %vm4929, %v4890, -inf
  %4946 = vmax.xlane.f32.xlu0 %v4945
  %v4947 = vpop.xlane.xlu0 %4946
  %v4948 = vsel %vm4929, %v4892, -inf
  %4949 = vmax.xlane.f32.xlu0 %v4948
  %v4950 = vpop.xlane.xlu0 %4949
  %v4951 = vsel %vm4929, %v4894, -inf
  %4952 = vmax.xlane.f32.xlu0 %v4951
  %v4953 = vpop.xlane.xlu0 %4952
  %vm4954 = vcmask 15368
  %4955 = vst.msk [vmem:[%s9] sm:$0xff] %vm4954, %v4932
  %4956 = vst.msk [vmem:[%s9 + $0x8] sm:$0xff] %vm4954, %v4935
  %4957 = vst.msk [vmem:[%s9 + $0x10] sm:$0xff] %vm4954, %v4938
  %4958 = vst.msk [vmem:[%s9 + $0x18] sm:$0xff] %vm4954, %v4941
  %4959 = vst.msk [vmem:[%s9 + $0x20] sm:$0xff] %vm4954, %v4944
  %4960 = vst.msk [vmem:[%s9 + $0x28] sm:$0xff] %vm4954, %v4947
  %4961 = vst.msk [vmem:[%s9 + $0x30] sm:$0xff] %vm4954, %v4950
  %4962 = vst.msk [vmem:[%s9 + $0x38] sm:$0xff] %vm4954, %v4953
  %vm4963 = vcmask 195712
  %v4964 = vsel %vm4963, %v4880, -inf
  %4965 = vmax.xlane.f32.xlu0 %v4964
  %v4966 = vpop.xlane.xlu0 %4965
  %v4967 = vsel %vm4963, %v4882, -inf
  %4968 = vmax.xlane.f32.xlu0 %v4967
  %v4969 = vpop.xlane.xlu0 %4968
  %v4970 = vsel %vm4963, %v4884, -inf
  %4971 = vmax.xlane.f32.xlu0 %v4970
  %v4972 = vpop.xlane.xlu0 %4971
  %v4973 = vsel %vm4963, %v4886, -inf
  %4974 = vmax.xlane.f32.xlu0 %v4973
  %v4975 = vpop.xlane.xlu0 %4974
  %v4976 = vsel %vm4963, %v4888, -inf
  %4977 = vmax.xlane.f32.xlu0 %v4976
  %v4978 = vpop.xlane.xlu0 %4977
  %v4979 = vsel %vm4963, %v4890, -inf
  %4980 = vmax.xlane.f32.xlu0 %v4979
  %v4981 = vpop.xlane.xlu0 %4980
  %v4982 = vsel %vm4963, %v4892, -inf
  %4983 = vmax.xlane.f32.xlu0 %v4982
  %v4984 = vpop.xlane.xlu0 %4983
  %v4985 = vsel %vm4963, %v4894, -inf
  %4986 = vmax.xlane.f32.xlu0 %v4985
  %v4987 = vpop.xlane.xlu0 %4986
  %vm4988 = vcmask 23568
  %4989 = vst.msk [vmem:[%s9] sm:$0xff] %vm4988, %v4966
  %4990 = vst.msk [vmem:[%s9 + $0x8] sm:$0xff] %vm4988, %v4969
  %4991 = vst.msk [vmem:[%s9 + $0x10] sm:$0xff] %vm4988, %v4972
  %4992 = vst.msk [vmem:[%s9 + $0x18] sm:$0xff] %vm4988, %v4975
  %4993 = vst.msk [vmem:[%s9 + $0x20] sm:$0xff] %vm4988, %v4978
  %4994 = vst.msk [vmem:[%s9 + $0x28] sm:$0xff] %vm4988, %v4981
  %4995 = vst.msk [vmem:[%s9 + $0x30] sm:$0xff] %vm4988, %v4984
  %4996 = vst.msk [vmem:[%s9 + $0x38] sm:$0xff] %vm4988, %v4987
  %vm4997 = vcmask 359712
  %v4998 = vsel %vm4997, %v4880, -inf
  %4999 = vmax.xlane.f32.xlu0 %v4998
  %v5000 = vpop.xlane.xlu0 %4999
  %v5001 = vsel %vm4997, %v4882, -inf
  %5002 = vmax.xlane.f32.xlu0 %v5001
  %v5003 = vpop.xlane.xlu0 %5002
  %v5004 = vsel %vm4997, %v4884, -inf
  %5005 = vmax.xlane.f32.xlu0 %v5004
  %v5006 = vpop.xlane.xlu0 %5005
  %v5007 = vsel %vm4997, %v4886, -inf
  %5008 = vmax.xlane.f32.xlu0 %v5007
  %v5009 = vpop.xlane.xlu0 %5008
  %v5010 = vsel %vm4997, %v4888, -inf
  %5011 = vmax.xlane.f32.xlu0 %v5010
  %v5012 = vpop.xlane.xlu0 %5011
  %v5013 = vsel %vm4997, %v4890, -inf
  %5014 = vmax.xlane.f32.xlu0 %v5013
  %v5015 = vpop.xlane.xlu0 %5014
  %v5016 = vsel %vm4997, %v4892, -inf
  %5017 = vmax.xlane.f32.xlu0 %v5016
  %v5018 = vpop.xlane.xlu0 %5017
  %v5019 = vsel %vm4997, %v4894, -inf
  %5020 = vmax.xlane.f32.xlu0 %v5019
  %v5021 = vpop.xlane.xlu0 %5020
  %vm5022 = vcmask 31768
  %5023 = vst.msk [vmem:[%s9] sm:$0xff] %vm5022, %v5000
  %5024 = vst.msk [vmem:[%s9 + $0x8] sm:$0xff] %vm5022, %v5003
  %5025 = vst.msk [vmem:[%s9 + $0x10] sm:$0xff] %vm5022, %v5006
  %5026 = vst.msk [vmem:[%s9 + $0x18] sm:$0xff] %vm5022, %v5009
  %5027 = vst.msk [vmem:[%s9 + $0x20] sm:$0xff] %vm5022, %v5012
  %5028 = vst.msk [vmem:[%s9 + $0x28] sm:$0xff] %vm5022, %v5015
  %5029 = vst.msk [vmem:[%s9 + $0x30] sm:$0xff] %vm5022, %v5018
  %5030 = vst.msk [vmem:[%s9 + $0x38] sm:$0xff] %vm5022, %v5021
  %vm5031 = vcmask 425312
  %v5032 = vsel %vm5031, %v4880, -inf
  %5033 = vmax.xlane.f32.xlu0 %v5032
  %v5034 = vpop.xlane.xlu0 %5033
  %v5035 = vsel %vm5031, %v4882, -inf
  %5036 = vmax.xlane.f32.xlu0 %v5035
  %v5037 = vpop.xlane.xlu0 %5036
  %v5038 = vsel %vm5031, %v4884, -inf
  %5039 = vmax.xlane.f32.xlu0 %v5038
  %v5040 = vpop.xlane.xlu0 %5039
  %v5041 = vsel %vm5031, %v4886, -inf
  %5042 = vmax.xlane.f32.xlu0 %v5041
  %v5043 = vpop.xlane.xlu0 %5042
  %v5044 = vsel %vm5031, %v4888, -inf
  %5045 = vmax.xlane.f32.xlu0 %v5044
  %v5046 = vpop.xlane.xlu0 %5045
  %v5047 = vsel %vm5031, %v4890, -inf
  %5048 = vmax.xlane.f32.xlu0 %v5047
  %v5049 = vpop.xlane.xlu0 %5048
  %v5050 = vsel %vm5031, %v4892, -inf
  %5051 = vmax.xlane.f32.xlu0 %v5050
  %v5052 = vpop.xlane.xlu0 %5051
  %v5053 = vsel %vm5031, %v4894, -inf
  %5054 = vmax.xlane.f32.xlu0 %v5053
  %v5055 = vpop.xlane.xlu0 %5054
  %vm5056 = vcmask 39968
  %5057 = vst.msk [vmem:[%s9] sm:$0xff] %vm5056, %v5034
  %5058 = vst.msk [vmem:[%s9 + $0x8] sm:$0xff] %vm5056, %v5037
  %5059 = vst.msk [vmem:[%s9 + $0x10] sm:$0xff] %vm5056, %v5040
  %5060 = vst.msk [vmem:[%s9 + $0x18] sm:$0xff] %vm5056, %v5043
  %5061 = vst.msk [vmem:[%s9 + $0x20] sm:$0xff] %vm5056, %v5046
  %5062 = vst.msk [vmem:[%s9 + $0x28] sm:$0xff] %vm5056, %v5049
  %5063 = vst.msk [vmem:[%s9 + $0x30] sm:$0xff] %vm5056, %v5052
  %5064 = vst.msk [vmem:[%s9 + $0x38] sm:$0xff] %vm5056, %v5055
  %vm5065 = vcmask 490912
  %v5066 = vsel %vm5065, %v4880, -inf
  %5067 = vmax.xlane.f32.xlu0 %v5066
  %v5068 = vpop.xlane.xlu0 %5067
  %v5069 = vsel %vm5065, %v4882, -inf
  %5070 = vmax.xlane.f32.xlu0 %v5069
  %v5071 = vpop.xlane.xlu0 %5070
  %v5072 = vsel %vm5065, %v4884, -inf
  %5073 = vmax.xlane.f32.xlu0 %v5072
  %v5074 = vpop.xlane.xlu0 %5073
  %v5075 = vsel %vm5065, %v4886, -inf
  %5076 = vmax.xlane.f32.xlu0 %v5075
  %v5077 = vpop.xlane.xlu0 %5076
  %v5078 = vsel %vm5065, %v4888, -inf
  %5079 = vmax.xlane.f32.xlu0 %v5078
  %v5080 = vpop.xlane.xlu0 %5079
  %v5081 = vsel %vm5065, %v4890, -inf
  %5082 = vmax.xlane.f32.xlu0 %v5081
  %v5083 = vpop.xlane.xlu0 %5082
  %v5084 = vsel %vm5065, %v4892, -inf
  %5085 = vmax.xlane.f32.xlu0 %v5084
  %v5086 = vpop.xlane.xlu0 %5085
  %v5087 = vsel %vm5065, %v4894, -inf
  %5088 = vmax.xlane.f32.xlu0 %v5087
  %v5089 = vpop.xlane.xlu0 %5088
  %vm5090 = vcmask 48168
  %5091 = vst.msk [vmem:[%s9] sm:$0xff] %vm5090, %v5068
  %5092 = vst.msk [vmem:[%s9 + $0x8] sm:$0xff] %vm5090, %v5071
  %5093 = vst.msk [vmem:[%s9 + $0x10] sm:$0xff] %vm5090, %v5074
  %5094 = vst.msk [vmem:[%s9 + $0x18] sm:$0xff] %vm5090, %v5077
  %5095 = vst.msk [vmem:[%s9 + $0x20] sm:$0xff] %vm5090, %v5080
  %5096 = vst.msk [vmem:[%s9 + $0x28] sm:$0xff] %vm5090, %v5083
  %5097 = vst.msk [vmem:[%s9 + $0x30] sm:$0xff] %vm5090, %v5086
  %5098 = vst.msk [vmem:[%s9 + $0x38] sm:$0xff] %vm5090, %v5089
  %vm5099 = vcmask 654912
  %v5100 = vsel %vm5099, %v4880, -inf
  %5101 = vmax.xlane.f32.xlu0 %v5100
  %v5102 = vpop.xlane.xlu0 %5101
  %v5103 = vsel %vm5099, %v4882, -inf
  %5104 = vmax.xlane.f32.xlu0 %v5103
  %v5105 = vpop.xlane.xlu0 %5104
  %v5106 = vsel %vm5099, %v4884, -inf
  %5107 = vmax.xlane.f32.xlu0 %v5106
  %v5108 = vpop.xlane.xlu0 %5107
  %v5109 = vsel %vm5099, %v4886, -inf
  %5110 = vmax.xlane.f32.xlu0 %v5109
  %v5111 = vpop.xlane.xlu0 %5110
  %v5112 = vsel %vm5099, %v4888, -inf
  %5113 = vmax.xlane.f32.xlu0 %v5112
  %v5114 = vpop.xlane.xlu0 %5113
  %v5115 = vsel %vm5099, %v4890, -inf
  %5116 = vmax.xlane.f32.xlu0 %v5115
  %v5117 = vpop.xlane.xlu0 %5116
  %v5118 = vsel %vm5099, %v4892, -inf
  %5119 = vmax.xlane.f32.xlu0 %v5118
  %v5120 = vpop.xlane.xlu0 %5119
  %v5121 = vsel %vm5099, %v4894, -inf
  %5122 = vmax.xlane.f32.xlu0 %v5121
  %v5123 = vpop.xlane.xlu0 %5122
  %vm5124 = vcmask 56368
  %5125 = vst.msk [vmem:[%s9] sm:$0xff] %vm5124, %v5102
  %5126 = vst.msk [vmem:[%s9 + $0x8] sm:$0xff] %vm5124, %v5105
  %5127 = vst.msk [vmem:[%s9 + $0x10] sm:$0xff] %vm5124, %v5108
  %5128 = vst.msk [vmem:[%s9 + $0x18] sm:$0xff] %vm5124, %v5111
  %5129 = vst.msk [vmem:[%s9 + $0x20] sm:$0xff] %vm5124, %v5114
  %5130 = vst.msk [vmem:[%s9 + $0x28] sm:$0xff] %vm5124, %v5117
  %5131 = vst.msk [vmem:[%s9 + $0x30] sm:$0xff] %vm5124, %v5120
  %5132 = vst.msk [vmem:[%s9 + $0x38] sm:$0xff] %vm5124, %v5123
  %vm5133 = vcmask 720512
  %v5134 = vsel %vm5133, %v4880, -inf
  %5135 = vmax.xlane.f32.xlu0 %v5134
  %v5136 = vpop.xlane.xlu0 %5135
  %v5137 = vsel %vm5133, %v4882, -inf
  %5138 = vmax.xlane.f32.xlu0 %v5137
  %v5139 = vpop.xlane.xlu0 %5138
  %v5140 = vsel %vm5133, %v4884, -inf
  %5141 = vmax.xlane.f32.xlu0 %v5140
  %v5142 = vpop.xlane.xlu0 %5141
  %v5143 = vsel %vm5133, %v4886, -inf
  %5144 = vmax.xlane.f32.xlu0 %v5143
  %v5145 = vpop.xlane.xlu0 %5144
  %v5146 = vsel %vm5133, %v4888, -inf
  %5147 = vmax.xlane.f32.xlu0 %v5146
  %v5148 = vpop.xlane.xlu0 %5147
  %v5149 = vsel %vm5133, %v4890, -inf
  %5150 = vmax.xlane.f32.xlu0 %v5149
  %v5151 = vpop.xlane.xlu0 %5150
  %v5152 = vsel %vm5133, %v4892, -inf
  %5153 = vmax.xlane.f32.xlu0 %v5152
  %v5154 = vpop.xlane.xlu0 %5153
  %v5155 = vsel %vm5133, %v4894, -inf
  %5156 = vmax.xlane.f32.xlu0 %v5155
  %v5157 = vpop.xlane.xlu0 %5156
  %vm5158 = vcmask 64568
  %5159 = vst.msk [vmem:[%s9] sm:$0xff] %vm5158, %v5136
  %5160 = vst.msk [vmem:[%s9 + $0x8] sm:$0xff] %vm5158, %v5139
  %5161 = vst.msk [vmem:[%s9 + $0x10] sm:$0xff] %vm5158, %v5142
  %5162 = vst.msk [vmem:[%s9 + $0x18] sm:$0xff] %vm5158, %v5145
  %5163 = vst.msk [vmem:[%s9 + $0x20] sm:$0xff] %vm5158, %v5148
  %5164 = vst.msk [vmem:[%s9 + $0x28] sm:$0xff] %vm5158, %v5151
  %5165 = vst.msk [vmem:[%s9 + $0x30] sm:$0xff] %vm5158, %v5154
  %5166 = vst.msk [vmem:[%s9 + $0x38] sm:$0xff] %vm5158, %v5157
  %vm5167 = vcmask 786112
  %v5168 = vsel %vm5167, %v4880, -inf
  %5169 = vmax.xlane.f32.xlu0 %v5168
  %v5170 = vpop.xlane.xlu0 %5169
  %v5171 = vsel %vm5167, %v4882, -inf
  %5172 = vmax.xlane.f32.xlu0 %v5171
  %v5173 = vpop.xlane.xlu0 %5172
  %v5174 = vsel %vm5167, %v4884, -inf
  %5175 = vmax.xlane.f32.xlu0 %v5174
  %v5176 = vpop.xlane.xlu0 %5175
  %v5177 = vsel %vm5167, %v4886, -inf
  %5178 = vmax.xlane.f32.xlu0 %v5177
  %v5179 = vpop.xlane.xlu0 %5178
  %v5180 = vsel %vm5167, %v4888, -inf
  %5181 = vmax.xlane.f32.xlu0 %v5180
  %v5182 = vpop.xlane.xlu0 %5181
  %v5183 = vsel %vm5167, %v4890, -inf
  %5184 = vmax.xlane.f32.xlu0 %v5183
  %v5185 = vpop.xlane.xlu0 %5184
  %v5186 = vsel %vm5167, %v4892, -inf
  %5187 = vmax.xlane.f32.xlu0 %v5186
  %v5188 = vpop.xlane.xlu0 %5187
  %v5189 = vsel %vm5167, %v4894, -inf
  %5190 = vmax.xlane.f32.xlu0 %v5189
  %v5191 = vpop.xlane.xlu0 %5190
  %vm5192 = vcmask 72768
  %5193 = vst.msk [vmem:[%s9] sm:$0xff] %vm5192, %v5170
  %5194 = vst.msk [vmem:[%s9 + $0x8] sm:$0xff] %vm5192, %v5173
  %5195 = vst.msk [vmem:[%s9 + $0x10] sm:$0xff] %vm5192, %v5176
  %5196 = vst.msk [vmem:[%s9 + $0x18] sm:$0xff] %vm5192, %v5179
  %5197 = vst.msk [vmem:[%s9 + $0x20] sm:$0xff] %vm5192, %v5182
  %5198 = vst.msk [vmem:[%s9 + $0x28] sm:$0xff] %vm5192, %v5185
  %5199 = vst.msk [vmem:[%s9 + $0x30] sm:$0xff] %vm5192, %v5188
  %5200 = vst.msk [vmem:[%s9 + $0x38] sm:$0xff] %vm5192, %v5191
  %vm5201 = vcmask 950112
  %v5202 = vsel %vm5201, %v4880, -inf
  %5203 = vmax.xlane.f32.xlu0 %v5202
  %v5204 = vpop.xlane.xlu0 %5203
  %v5205 = vsel %vm5201, %v4882, -inf
  %5206 = vmax.xlane.f32.xlu0 %v5205
  %v5207 = vpop.xlane.xlu0 %5206
  %v5208 = vsel %vm5201, %v4884, -inf
  %5209 = vmax.xlane.f32.xlu0 %v5208
  %v5210 = vpop.xlane.xlu0 %5209
  %v5211 = vsel %vm5201, %v4886, -inf
  %5212 = vmax.xlane.f32.xlu0 %v5211
  %v5213 = vpop.xlane.xlu0 %5212
  %v5214 = vsel %vm5201, %v4888, -inf
  %5215 = vmax.xlane.f32.xlu0 %v5214
  %v5216 = vpop.xlane.xlu0 %5215
  %v5217 = vsel %vm5201, %v4890, -inf
  %5218 = vmax.xlane.f32.xlu0 %v5217
  %v5219 = vpop.xlane.xlu0 %5218
  %v5220 = vsel %vm5201, %v4892, -inf
  %5221 = vmax.xlane.f32.xlu0 %v5220
  %v5222 = vpop.xlane.xlu0 %5221
  %v5223 = vsel %vm5201, %v4894, -inf
  %5224 = vmax.xlane.f32.xlu0 %v5223
  %v5225 = vpop.xlane.xlu0 %5224
  %vm5226 = vcmask 80968
  %5227 = vst.msk [vmem:[%s9] sm:$0xff] %vm5226, %v5204
  %5228 = vst.msk [vmem:[%s9 + $0x8] sm:$0xff] %vm5226, %v5207
  %5229 = vst.msk [vmem:[%s9 + $0x10] sm:$0xff] %vm5226, %v5210
  %5230 = vst.msk [vmem:[%s9 + $0x18] sm:$0xff] %vm5226, %v5213
  %5231 = vst.msk [vmem:[%s9 + $0x20] sm:$0xff] %vm5226, %v5216
  %5232 = vst.msk [vmem:[%s9 + $0x28] sm:$0xff] %vm5226, %v5219
  %5233 = vst.msk [vmem:[%s9 + $0x30] sm:$0xff] %vm5226, %v5222
  %5234 = vst.msk [vmem:[%s9 + $0x38] sm:$0xff] %vm5226, %v5225
  %vm5235 = vcmask 1015712
  %v5236 = vsel %vm5235, %v4880, -inf
  %5237 = vmax.xlane.f32.xlu0 %v5236
  %v5238 = vpop.xlane.xlu0 %5237
  %v5239 = vsel %vm5235, %v4882, -inf
  %5240 = vmax.xlane.f32.xlu0 %v5239
  %v5241 = vpop.xlane.xlu0 %5240
  %v5242 = vsel %vm5235, %v4884, -inf
  %5243 = vmax.xlane.f32.xlu0 %v5242
  %v5244 = vpop.xlane.xlu0 %5243
  %v5245 = vsel %vm5235, %v4886, -inf
  %5246 = vmax.xlane.f32.xlu0 %v5245
  %v5247 = vpop.xlane.xlu0 %5246
  %v5248 = vsel %vm5235, %v4888, -inf
  %5249 = vmax.xlane.f32.xlu0 %v5248
  %v5250 = vpop.xlane.xlu0 %5249
  %v5251 = vsel %vm5235, %v4890, -inf
  %5252 = vmax.xlane.f32.xlu0 %v5251
  %v5253 = vpop.xlane.xlu0 %5252
  %v5254 = vsel %vm5235, %v4892, -inf
  %5255 = vmax.xlane.f32.xlu0 %v5254
  %v5256 = vpop.xlane.xlu0 %5255
  %v5257 = vsel %vm5235, %v4894, -inf
  %5258 = vmax.xlane.f32.xlu0 %v5257
  %v5259 = vpop.xlane.xlu0 %5258
  %vm5260 = vcmask 89168
  %5261 = vst.msk [vmem:[%s9] sm:$0xff] %vm5260, %v5238
  %5262 = vst.msk [vmem:[%s9 + $0x8] sm:$0xff] %vm5260, %v5241
  %5263 = vst.msk [vmem:[%s9 + $0x10] sm:$0xff] %vm5260, %v5244
  %5264 = vst.msk [vmem:[%s9 + $0x18] sm:$0xff] %vm5260, %v5247
  %5265 = vst.msk [vmem:[%s9 + $0x20] sm:$0xff] %vm5260, %v5250
  %5266 = vst.msk [vmem:[%s9 + $0x28] sm:$0xff] %vm5260, %v5253
  %5267 = vst.msk [vmem:[%s9 + $0x30] sm:$0xff] %vm5260, %v5256
  %5268 = vst.msk [vmem:[%s9 + $0x38] sm:$0xff] %vm5260, %v5259
  %vm5269 = vcmask 1048544
  %v5270 = vsel %vm5269, %v4880, -inf
  %vm5271 = vcmask 31744
  %v5272 = vsel %vm5271, %v4881, -inf
  %v5273 = vmax.f32 %v5270, %v5272
  %5274 = vmax.xlane.f32.xlu0 %v5273
  %v5275 = vpop.xlane.xlu0 %5274
  %v5276 = vsel %vm5269, %v4882, -inf
  %v5277 = vsel %vm5271, %v4883, -inf
  %v5278 = vmax.f32 %v5276, %v5277
  %5279 = vmax.xlane.f32.xlu0 %v5278
  %v5280 = vpop.xlane.xlu0 %5279
  %v5281 = vsel %vm5269, %v4884, -inf
  %v5282 = vsel %vm5271, %v4885, -inf
  %v5283 = vmax.f32 %v5281, %v5282
  %5284 = vmax.xlane.f32.xlu0 %v5283
  %v5285 = vpop.xlane.xlu0 %5284
  %v5286 = vsel %vm5269, %v4886, -inf
  %v5287 = vsel %vm5271, %v4887, -inf
  %v5288 = vmax.f32 %v5286, %v5287
  %5289 = vmax.xlane.f32.xlu0 %v5288
  %v5290 = vpop.xlane.xlu0 %5289
  %v5291 = vsel %vm5269, %v4888, -inf
  %v5292 = vsel %vm5271, %v4889, -inf
  %v5293 = vmax.f32 %v5291, %v5292
  %5294 = vmax.xlane.f32.xlu0 %v5293
  %v5295 = vpop.xlane.xlu0 %5294
  %v5296 = vsel %vm5269, %v4890, -inf
  %v5297 = vsel %vm5271, %v4891, -inf
  %v5298 = vmax.f32 %v5296, %v5297
  %5299 = vmax.xlane.f32.xlu0 %v5298
  %v5300 = vpop.xlane.xlu0 %5299
  %v5301 = vsel %vm5269, %v4892, -inf
  %v5302 = vsel %vm5271, %v4893, -inf
  %v5303 = vmax.f32 %v5301, %v5302
  %5304 = vmax.xlane.f32.xlu0 %v5303
  %v5305 = vpop.xlane.xlu0 %5304
  %v5306 = vsel %vm5269, %v4894, -inf
  %v5307 = vsel %vm5271, %v4895, -inf
  %v5308 = vmax.f32 %v5306, %v5307
  %5309 = vmax.xlane.f32.xlu0 %v5308
  %v5310 = vpop.xlane.xlu0 %5309
  %vm5311 = vcmask 97368
  %5312 = vst.msk [vmem:[%s9] sm:$0xff] %vm5311, %v5275
  %5313 = vst.msk [vmem:[%s9 + $0x8] sm:$0xff] %vm5311, %v5280
  %5314 = vst.msk [vmem:[%s9 + $0x10] sm:$0xff] %vm5311, %v5285
  %5315 = vst.msk [vmem:[%s9 + $0x18] sm:$0xff] %vm5311, %v5290
  %5316 = vst.msk [vmem:[%s9 + $0x20] sm:$0xff] %vm5311, %v5295
  %5317 = vst.msk [vmem:[%s9 + $0x28] sm:$0xff] %vm5311, %v5300
  %5318 = vst.msk [vmem:[%s9 + $0x30] sm:$0xff] %vm5311, %v5305
  %5319 = vst.msk [vmem:[%s9 + $0x38] sm:$0xff] %vm5311, %v5310
  // Predicated region
  $region38: #{feature_extractor.2} parent=0 // pred_check
    _
  $region39: #{feature_extractor.2} parent=0 // pred_check_branch
    %5321 = sbr.rel (0) target = $region41
  $region40: #{feature_extractor.2} parent=0 // pred_region
    _
  $region41: #{feature_extractor.2} parent=0 // pred_fallthru
    _
  // Predicated region
  $region42: #{feature_extractor.2} parent=0 // pred_check
    _
  $region43: #{feature_extractor.2} parent=0 // pred_check_branch
    %5323 = sbr.rel (0) target = $region45
  $region44: #{feature_extractor.2} parent=0 // pred_region
    _
  $region45: #{feature_extractor.2} parent=0 // pred_fallthru
    _

</llo_original>
